<compile_context>
chip_gen: v7x
topology: tpu7x:2x2x1
jax: 0.10.0
libtpu: 0.0.40
codegen_flags: <defaults>
</compile_context>

<pallas_src>
from functools import lru_cache

import jax
import jax.numpy as jnp
import numpy as np
from jax.experimental import pallas as pl
from jax.experimental.pallas import tpu as pltpu

WINDOW_SIZE = 11
SIGMA = 1.5
C1 = 0.05 ** 2
C2 = 0.08 ** 2


def _gaussian_1d(window_size: int, sigma: float) -> np.ndarray:
    """Same construction as gaussian() in the PyTorch code."""
    xs = np.arange(window_size, dtype=np.float64)
    g = np.exp(-((xs - window_size // 2) ** 2) / (2.0 * sigma ** 2))
    return (g / g.sum()).astype(np.float32)


_G1D = _gaussian_1d(WINDOW_SIZE, SIGMA)


@lru_cache(maxsize=None)
def _conv_toeplitz(H: int, W: int):
    """Banded Toeplitz matrices: R @ X @ Cm == 'same' zero-padded 11x11 Gaussian conv."""
    P = WINDOW_SIZE // 2
    R = np.zeros((H, H), np.float32)
    for y in range(H):
        for t in range(WINDOW_SIZE):
            k = y + t - P
            if 0 <= k < H:
                R[y, k] += _G1D[t]
    Cm = np.zeros((W, W), np.float32)
    for x in range(W):
        for t in range(WINDOW_SIZE):
            k = x + t - P
            if 0 <= k < W:
                Cm[k, x] += _G1D[t]
    return R, Cm


@lru_cache(maxsize=None)
def _pool_matrices(H: int, W: int):
    """Dh @ X @ Dw == F.conv2d(X, ones(2,2)/4, stride=2) (depthwise)."""
    Ho = (H - 2) // 2 + 1
    Wo = (W - 2) // 2 + 1
    Dh = np.zeros((Ho, H), np.float32)
    for i in range(Ho):
        Dh[i, 2 * i] = 0.5
        Dh[i, 2 * i + 1] = 0.5
    Dw = np.zeros((W, Wo), np.float32)
    for j in range(Wo):
        Dw[2 * j, j] = 0.5
        Dw[2 * j + 1, j] = 0.5
    return Dh, Dw


def _scale_dims(H: int, W: int):
    """Spatial dims of every scale visited by the PyTorch while-loop (width = size(2))."""
    dims = []
    h, w = H, W
    while h >= 16:
        dims.append((h, w))
        h = (h - 2) // 2 + 1
        w = (w - 2) // 2 + 1
    return tuple(dims)


def _scale_matrices(dims, NC: int):
    """Block-diagonal conv/pool matrices for every scale (built once, numpy)."""
    mats = []
    n = len(dims)
    for s, (h, w) in enumerate(dims):
        R, Cm = _conv_toeplitz(h, w)
        mats.append(np.kron(np.eye(5, dtype=np.float32), R))       # (5h, 5h)
        mats.append(np.kron(np.eye(NC, dtype=np.float32), Cm))     # (NC*w, NC*w)
        if s + 1 < n:                                              # pool only if another scale follows
            Dh, Dw = _pool_matrices(h, w)
            mats.append(np.kron(np.eye(2, dtype=np.float32), Dh))  # (2*ho, 2*h)
            mats.append(np.kron(np.eye(NC, dtype=np.float32), Dw)) # (NC*w, NC*wo)
    return mats


def _build_kernel(dims, NC: int):
    """One fused kernel: all SSIM scales + inter-scale 2x2 downsample + final reduction."""
    num_scales = len(dims)
    HIGHEST = jax.lax.Precision.HIGHEST

    def kernel(*refs):
        x1_ref, x2_ref = refs[0], refs[1]
        mat_refs = refs[2:-1]
        loss_ref = refs[-1]                       # SMEM (1,) f32

        x1 = x1_ref[...]                          # (H0, NC*W0), lane-dense
        x2 = x2_ref[...]

        result = jnp.float32(0.0)
        m = 0
        for s, (h, w) in enumerate(dims):         # static unroll over scales (shapes differ)
            Rblk = mat_refs[m][...]               # (5h, 5h)   = kron(I5, R)
            Cblk = mat_refs[m + 1][...]           # (NCw, NCw) = kron(I_NC, Cm)
            m += 2

            # All 5 conv operands for all planes in one (5h, NC*w) slab ->
            # exactly two MXU matmuls for all 5*NC depthwise convolutions.
            stacked = jnp.concatenate([x1, x2, x1 * x1, x2 * x2, x1 * x2], axis=0)
            t = jnp.dot(Rblk, stacked,
                        preferred_element_type=jnp.float32, precision=HIGHEST)
            conv = jnp.dot(t, Cblk,
                           preferred_element_type=jnp.float32, precision=HIGHEST)

            mu1 = conv[0 * h:1 * h]
            mu2 = conv[1 * h:2 * h]
            e11 = conv[2 * h:3 * h]
            e22 = conv[3 * h:4 * h]
            e12 = conv[4 * h:5 * h]

            mu1_sq = mu1 * mu1
            mu2_sq = mu2 * mu2
            mu1_mu2 = mu1 * mu2
            sigma1_sq = e11 - mu1_sq              # cancellation -> HIGHEST matmuls above
            sigma2_sq = e22 - mu2_sq
            sigma12 = e12 - mu1_mu2

            num = (2.0 * mu1_mu2 + C1) * (2.0 * sigma12 + C2)
            den = (mu1_sq + mu2_sq + C1) * (sigma1_sq + sigma2_sq + C2)
            ssim_map = num / den                  # matches PyTorch true division

            mean_s = jnp.sum(ssim_map) * np.float32(1.0 / (NC * h * w))
            result = result + (1.0 - mean_s) * 0.5   # == single_ssim

            if s + 1 < num_scales:                # fused 2x2/stride-2 average pool
                Dhblk = mat_refs[m][...]          # (2ho, 2h)
                Dwblk = mat_refs[m + 1][...]      # (NCw, NCwo)
                m += 2
                ho = (h - 2) // 2 + 1
                pstack = jnp.concatenate([x1, x2], axis=0)          # (2h, NCw)
                pt = jnp.dot(Dhblk, pstack,
                             preferred_element_type=jnp.float32, precision=HIGHEST)
                pooled = jnp.dot(pt, Dwblk,
                                 preferred_element_type=jnp.float32, precision=HIGHEST)
                x1 = pooled[0:ho]
                x2 = pooled[ho:2 * ho]

        loss_ref[0] = result * np.float32(1.0 / num_scales)

    return kernel


def ssim_loss(img1: jax.Array, img2: jax.Array) -> jax.Array:
    """Forward pass of the PyTorch SSIM module (multi-scale, size_average=True)."""
    assert img1.shape == img2.shape and img1.ndim == 4
    N, C, H, W = img1.shape
    assert H >= 16 and W >= 16, "SSIM multi-scale loop requires spatial size >= 16"
    NC = N * C

    dims = _scale_dims(H, W)
    mats_np = _scale_matrices(dims, NC)
    kernel = _build_kernel(dims, NC)

    # Lane-dense slabs: (N,C,H,W) -> (H, N*C*W).  Pure wrapper-side layout plumbing.
    x1 = jnp.transpose(img1.astype(jnp.float32), (2, 0, 1, 3)).reshape(H, NC * W)
    x2 = jnp.transpose(img2.astype(jnp.float32), (2, 0, 1, 3)).reshape(H, NC * W)

    # --- VMEM budget derived from the actual chip generation -----------------
    in_bytes = (x1.size + x2.size) * 4 + sum(m.size * 4 for m in mats_np)
    tmp_bytes = 8 * (5 * H) * (NC * W) * 4       # live temporaries at the largest scale
    est = in_bytes + tmp_bytes
    try:
        cap = int(pltpu.get_tpu_info().vmem_capacity_bytes)
    except Exception:
        cap = 64 * 1024 * 1024                   # conservative: v7x per-TensorCore VMEM
    if est > int(0.45 * cap):
        # TODO(synk): band-tiled / pltpu.roll-based conv fallback for large planes.
        raise NotImplementedError(
            f"fused SSIM kernel needs ~{est} B of VMEM (capacity {cap} B); "
            "large-plane tiling not implemented")
    vmem_limit = int(min(0.9 * cap, max(2 * est, 32 * 1024 * 1024)))

    mats = [jnp.asarray(m, jnp.float32) for m in mats_np]
    n_in = 2 + len(mats)

    loss = pl.pallas_call(
        kernel,
        out_shape=jax.ShapeDtypeStruct((1,), jnp.float32),
        # Single invocation (no grid): whole-slab residency, one launch for all scales.
        in_specs=[pl.BlockSpec(memory_space=pltpu.MemorySpace.VMEM)] * n_in,
        out_specs=pl.BlockSpec(memory_space=pltpu.MemorySpace.SMEM),
        compiler_params=pltpu.CompilerParams(vmem_limit_bytes=vmem_limit),
    )(x1, x2, *mats)

    return loss[0]


# ----------------------------- pure-JAX reference -----------------------------
def _ssim_loss_reference(img1: jax.Array, img2: jax.Array) -> jax.Array:
    """Direct lax.conv port of the PyTorch module, used only for self-checking."""
    N, C, H, W = img1.shape
    g = jnp.asarray(_G1D, jnp.float32)
    win = jnp.tile(jnp.outer(g, g)[None, None], (C, 1, 1, 1))      # (C,1,11,11)
    pool = jnp.full((C, 1, 2, 2), 0.25, jnp.float32)
    HI = jax.lax.Precision.HIGHEST

    def dwconv(x, k, stride, pad):
        return jax.lax.conv_general_dilated(
            x, k, (stride, stride), [(pad, pad), (pad, pad)],
            dimension_numbers=("NCHW", "OIHW", "NCHW"),
            feature_group_count=C, precision=HI)

    x1 = img1.astype(jnp.float32)
    x2 = img2.astype(jnp.float32)
    result, count, width = 0.0, 0, H
    while width >= 16:
        mu1 = dwconv(x1, win, 1, 5)
        mu2 = dwconv(x2, win, 1, 5)
        mu1_sq, mu2_sq, mu1_mu2 = mu1 * mu1, mu2 * mu2, mu1 * mu2
        s1 = dwconv(x1 * x1, win, 1, 5) - mu1_sq
        s2 = dwconv(x2 * x2, win, 1, 5) - mu2_sq
        s12 = dwconv(x1 * x2, win, 1, 5) - mu1_mu2
        smap = ((2 * mu1_mu2 + C1) * (2 * s12 + C2)) / ((mu1_sq + mu2_sq + C1) * (s1 + s2 + C2))
        result = result + (1.0 - jnp.mean(smap)) / 2.0
        x1 = dwconv(x1, pool, 2, 0)
        x2 = dwconv(x2, pool, 2, 0)
        width = x1.shape[2]
        count += 1
    return result / count


if __name__ == "__main__":
    key = jax.random.PRNGKey(0)
    k1, k2 = jax.random.split(key)
    # Two scales are exercised: 32x32 -> 16x16 -> (8x8 stops the loop)
    img1 = jax.random.uniform(k1, (2, 3, 32, 32), dtype=jnp.float32)
    img2 = jax.random.uniform(k2, (2, 3, 32, 32), dtype=jnp.float32)

    out = jax.jit(ssim_loss)(img1, img2)
    jax.block_until_ready(out)

    ref = _ssim_loss_reference(img1, img2)
    assert abs(float(out) - float(ref)) < 1e-3, (float(out), float(ref))
    print("KERNEL_OK")
</pallas_src>

<mosaic_0001>
module attributes {stable_mosaic.version = 11 : i64} {
  func.func @kernel(%arg0: memref<32x192xf32, #tpu.memory_space<vmem>>, %arg1: memref<32x192xf32, #tpu.memory_space<vmem>>, %arg2: memref<160x160xf32, #tpu.memory_space<vmem>>, %arg3: memref<192x192xf32, #tpu.memory_space<vmem>>, %arg4: memref<32x64xf32, #tpu.memory_space<vmem>>, %arg5: memref<192x96xf32, #tpu.memory_space<vmem>>, %arg6: memref<80x80xf32, #tpu.memory_space<vmem>>, %arg7: memref<96x96xf32, #tpu.memory_space<vmem>>, %arg8: memref<1xf32, #tpu.memory_space<smem>>) attributes {dimension_semantics = [], scalar_prefetch = 0 : i64, scratch_operands = 0 : i64, tpu.core_type = #tpu.core_type<tc>} {
    %c0 = arith.constant 0 : index
    %c0_0 = arith.constant 0 : index
    %0 = vector.load %arg0[%c0, %c0_0] : memref<32x192xf32, #tpu.memory_space<vmem>>, vector<32x192xf32>
    %c0_1 = arith.constant 0 : index
    %c0_2 = arith.constant 0 : index
    %1 = vector.load %arg1[%c0_1, %c0_2] : memref<32x192xf32, #tpu.memory_space<vmem>>, vector<32x192xf32>
    %c0_3 = arith.constant 0 : index
    %c0_4 = arith.constant 0 : index
    %2 = vector.load %arg2[%c0_3, %c0_4] : memref<160x160xf32, #tpu.memory_space<vmem>>, vector<160x160xf32>
    %c0_5 = arith.constant 0 : index
    %c0_6 = arith.constant 0 : index
    %3 = vector.load %arg3[%c0_5, %c0_6] : memref<192x192xf32, #tpu.memory_space<vmem>>, vector<192x192xf32>
    %4 = arith.mulf %0, %0 : vector<32x192xf32>
    %5 = arith.mulf %1, %1 : vector<32x192xf32>
    %6 = arith.mulf %0, %1 : vector<32x192xf32>
    %7 = tpu.concatenate %0, %1, %4, %5, %6 in 0 : vector<32x192xf32>, vector<32x192xf32>, vector<32x192xf32>, vector<32x192xf32>, vector<32x192xf32> -> vector<160x192xf32>
    %cst = arith.constant dense<0.000000e+00> : vector<160x192xf32>
    %8 = tpu.matmul %2, %7, %cst {dimension_numbers = #tpu.dot_dimension_numbers<[1], [0], [0], [1], [0, 0, 1, 1], [], []>, precision = #tpu.contract_precision<fp32>} : vector<160x160xf32>, vector<160x192xf32>, vector<160x192xf32> -> vector<160x192xf32>
    %cst_7 = arith.constant dense<0.000000e+00> : vector<160x192xf32>
    %9 = tpu.matmul %8, %3, %cst_7 {dimension_numbers = #tpu.dot_dimension_numbers<[1], [0], [0], [1], [0, 0, 1, 1], [], []>, precision = #tpu.contract_precision<fp32>} : vector<160x192xf32>, vector<192x192xf32>, vector<160x192xf32> -> vector<160x192xf32>
    %10 = vector.extract_strided_slice %9 {offsets = [0, 0], sizes = [32, 192], strides = [1, 1]} : vector<160x192xf32> to vector<32x192xf32>
    %11 = vector.extract_strided_slice %9 {offsets = [32, 0], sizes = [32, 192], strides = [1, 1]} : vector<160x192xf32> to vector<32x192xf32>
    %12 = vector.extract_strided_slice %9 {offsets = [64, 0], sizes = [32, 192], strides = [1, 1]} : vector<160x192xf32> to vector<32x192xf32>
    %13 = vector.extract_strided_slice %9 {offsets = [96, 0], sizes = [32, 192], strides = [1, 1]} : vector<160x192xf32> to vector<32x192xf32>
    %14 = vector.extract_strided_slice %9 {offsets = [128, 0], sizes = [32, 192], strides = [1, 1]} : vector<160x192xf32> to vector<32x192xf32>
    %15 = arith.mulf %10, %10 : vector<32x192xf32>
    %16 = arith.mulf %11, %11 : vector<32x192xf32>
    %17 = arith.mulf %10, %11 : vector<32x192xf32>
    %18 = arith.subf %12, %15 : vector<32x192xf32>
    %19 = arith.subf %13, %16 : vector<32x192xf32>
    %20 = arith.subf %14, %17 : vector<32x192xf32>
    %cst_8 = arith.constant 2.000000e+00 : f32
    %21 = vector.broadcast %cst_8 : f32 to vector<32x192xf32>
    %22 = arith.mulf %21, %17 : vector<32x192xf32>
    %cst_9 = arith.constant 2.500000e-03 : f32
    %23 = vector.broadcast %cst_9 : f32 to vector<32x192xf32>
    %24 = arith.addf %22, %23 : vector<32x192xf32>
    %cst_10 = arith.constant 2.000000e+00 : f32
    %25 = vector.broadcast %cst_10 : f32 to vector<32x192xf32>
    %26 = arith.mulf %25, %20 : vector<32x192xf32>
    %cst_11 = arith.constant 6.400000e-03 : f32
    %27 = vector.broadcast %cst_11 : f32 to vector<32x192xf32>
    %28 = arith.addf %26, %27 : vector<32x192xf32>
    %29 = arith.mulf %24, %28 : vector<32x192xf32>
    %30 = arith.addf %15, %16 : vector<32x192xf32>
    %cst_12 = arith.constant 2.500000e-03 : f32
    %31 = vector.broadcast %cst_12 : f32 to vector<32x192xf32>
    %32 = arith.addf %30, %31 : vector<32x192xf32>
    %33 = arith.addf %18, %19 : vector<32x192xf32>
    %cst_13 = arith.constant 6.400000e-03 : f32
    %34 = vector.broadcast %cst_13 : f32 to vector<32x192xf32>
    %35 = arith.addf %33, %34 : vector<32x192xf32>
    %36 = arith.mulf %32, %35 : vector<32x192xf32>
    %37 = arith.divf %29, %36 : vector<32x192xf32>
    %38 = vector.shape_cast %37 : vector<32x192xf32> to vector<1x32x192xf32>
    %cst_14 = arith.constant dense<0.000000e+00> : vector<1xf32>
    %39 = vector.multi_reduction <add>, %38, %cst_14 [1, 2] : vector<1x32x192xf32> to vector<1xf32>
    %40 = vector.shape_cast %39 : vector<1xf32> to vector<1x1x1xf32>
    %41 = vector.extract %40[0, 0, 0] : f32 from vector<1x1x1xf32>
    %cst_15 = arith.constant 1.62760422E-4 : f32
    %42 = arith.mulf %41, %cst_15 : f32
    %cst_16 = arith.constant 1.000000e+00 : f32
    %43 = arith.subf %cst_16, %42 : f32
    %cst_17 = arith.constant 5.000000e-01 : f32
    %44 = arith.mulf %43, %cst_17 : f32
    %cst_18 = arith.constant 0.000000e+00 : f32
    %45 = arith.addf %cst_18, %44 : f32
    %c0_19 = arith.constant 0 : index
    %c0_20 = arith.constant 0 : index
    %46 = vector.load %arg4[%c0_19, %c0_20] : memref<32x64xf32, #tpu.memory_space<vmem>>, vector<32x64xf32>
    %c0_21 = arith.constant 0 : index
    %c0_22 = arith.constant 0 : index
    %47 = vector.load %arg5[%c0_21, %c0_22] : memref<192x96xf32, #tpu.memory_space<vmem>>, vector<192x96xf32>
    %48 = tpu.concatenate %0, %1 in 0 : vector<32x192xf32>, vector<32x192xf32> -> vector<64x192xf32>
    %cst_23 = arith.constant dense<0.000000e+00> : vector<32x192xf32>
    %49 = tpu.matmul %46, %48, %cst_23 {dimension_numbers = #tpu.dot_dimension_numbers<[1], [0], [0], [1], [0, 0, 1, 1], [], []>, precision = #tpu.contract_precision<fp32>} : vector<32x64xf32>, vector<64x192xf32>, vector<32x192xf32> -> vector<32x192xf32>
    %cst_24 = arith.constant dense<0.000000e+00> : vector<32x96xf32>
    %50 = tpu.matmul %49, %47, %cst_24 {dimension_numbers = #tpu.dot_dimension_numbers<[1], [0], [0], [1], [0, 0, 1, 1], [], []>, precision = #tpu.contract_precision<fp32>} : vector<32x192xf32>, vector<192x96xf32>, vector<32x96xf32> -> vector<32x96xf32>
    %51 = vector.extract_strided_slice %50 {offsets = [0, 0], sizes = [16, 96], strides = [1, 1]} : vector<32x96xf32> to vector<16x96xf32>
    %52 = vector.extract_strided_slice %50 {offsets = [16, 0], sizes = [16, 96], strides = [1, 1]} : vector<32x96xf32> to vector<16x96xf32>
    %c0_25 = arith.constant 0 : index
    %c0_26 = arith.constant 0 : index
    %53 = vector.load %arg6[%c0_25, %c0_26] : memref<80x80xf32, #tpu.memory_space<vmem>>, vector<80x80xf32>
    %c0_27 = arith.constant 0 : index
    %c0_28 = arith.constant 0 : index
    %54 = vector.load %arg7[%c0_27, %c0_28] : memref<96x96xf32, #tpu.memory_space<vmem>>, vector<96x96xf32>
    %55 = arith.mulf %51, %51 : vector<16x96xf32>
    %56 = arith.mulf %52, %52 : vector<16x96xf32>
    %57 = arith.mulf %51, %52 : vector<16x96xf32>
    %58 = tpu.concatenate %51, %52, %55, %56, %57 in 0 : vector<16x96xf32>, vector<16x96xf32>, vector<16x96xf32>, vector<16x96xf32>, vector<16x96xf32> -> vector<80x96xf32>
    %cst_29 = arith.constant dense<0.000000e+00> : vector<80x96xf32>
    %59 = tpu.matmul %53, %58, %cst_29 {dimension_numbers = #tpu.dot_dimension_numbers<[1], [0], [0], [1], [0, 0, 1, 1], [], []>, precision = #tpu.contract_precision<fp32>} : vector<80x80xf32>, vector<80x96xf32>, vector<80x96xf32> -> vector<80x96xf32>
    %cst_30 = arith.constant dense<0.000000e+00> : vector<80x96xf32>
    %60 = tpu.matmul %59, %54, %cst_30 {dimension_numbers = #tpu.dot_dimension_numbers<[1], [0], [0], [1], [0, 0, 1, 1], [], []>, precision = #tpu.contract_precision<fp32>} : vector<80x96xf32>, vector<96x96xf32>, vector<80x96xf32> -> vector<80x96xf32>
    %61 = vector.extract_strided_slice %60 {offsets = [0, 0], sizes = [16, 96], strides = [1, 1]} : vector<80x96xf32> to vector<16x96xf32>
    %62 = vector.extract_strided_slice %60 {offsets = [16, 0], sizes = [16, 96], strides = [1, 1]} : vector<80x96xf32> to vector<16x96xf32>
    %63 = vector.extract_strided_slice %60 {offsets = [32, 0], sizes = [16, 96], strides = [1, 1]} : vector<80x96xf32> to vector<16x96xf32>
    %64 = vector.extract_strided_slice %60 {offsets = [48, 0], sizes = [16, 96], strides = [1, 1]} : vector<80x96xf32> to vector<16x96xf32>
    %65 = vector.extract_strided_slice %60 {offsets = [64, 0], sizes = [16, 96], strides = [1, 1]} : vector<80x96xf32> to vector<16x96xf32>
    %66 = arith.mulf %61, %61 : vector<16x96xf32>
    %67 = arith.mulf %62, %62 : vector<16x96xf32>
    %68 = arith.mulf %61, %62 : vector<16x96xf32>
    %69 = arith.subf %63, %66 : vector<16x96xf32>
    %70 = arith.subf %64, %67 : vector<16x96xf32>
    %71 = arith.subf %65, %68 : vector<16x96xf32>
    %cst_31 = arith.constant 2.000000e+00 : f32
    %72 = vector.broadcast %cst_31 : f32 to vector<16x96xf32>
    %73 = arith.mulf %72, %68 : vector<16x96xf32>
    %cst_32 = arith.constant 2.500000e-03 : f32
    %74 = vector.broadcast %cst_32 : f32 to vector<16x96xf32>
    %75 = arith.addf %73, %74 : vector<16x96xf32>
    %cst_33 = arith.constant 2.000000e+00 : f32
    %76 = vector.broadcast %cst_33 : f32 to vector<16x96xf32>
    %77 = arith.mulf %76, %71 : vector<16x96xf32>
    %cst_34 = arith.constant 6.400000e-03 : f32
    %78 = vector.broadcast %cst_34 : f32 to vector<16x96xf32>
    %79 = arith.addf %77, %78 : vector<16x96xf32>
    %80 = arith.mulf %75, %79 : vector<16x96xf32>
    %81 = arith.addf %66, %67 : vector<16x96xf32>
    %cst_35 = arith.constant 2.500000e-03 : f32
    %82 = vector.broadcast %cst_35 : f32 to vector<16x96xf32>
    %83 = arith.addf %81, %82 : vector<16x96xf32>
    %84 = arith.addf %69, %70 : vector<16x96xf32>
    %cst_36 = arith.constant 6.400000e-03 : f32
    %85 = vector.broadcast %cst_36 : f32 to vector<16x96xf32>
    %86 = arith.addf %84, %85 : vector<16x96xf32>
    %87 = arith.mulf %83, %86 : vector<16x96xf32>
    %88 = arith.divf %80, %87 : vector<16x96xf32>
    %89 = vector.shape_cast %88 : vector<16x96xf32> to vector<1x16x96xf32>
    %cst_37 = arith.constant dense<0.000000e+00> : vector<1xf32>
    %90 = vector.multi_reduction <add>, %89, %cst_37 [1, 2] : vector<1x16x96xf32> to vector<1xf32>
    %91 = vector.shape_cast %90 : vector<1xf32> to vector<1x1x1xf32>
    %92 = vector.extract %91[0, 0, 0] : f32 from vector<1x1x1xf32>
    %cst_38 = arith.constant 6.51041686E-4 : f32
    %93 = arith.mulf %92, %cst_38 : f32
    %cst_39 = arith.constant 1.000000e+00 : f32
    %94 = arith.subf %cst_39, %93 : f32
    %cst_40 = arith.constant 5.000000e-01 : f32
    %95 = arith.mulf %94, %cst_40 : f32
    %96 = arith.addf %45, %95 : f32
    %cst_41 = arith.constant 5.000000e-01 : f32
    %97 = arith.mulf %96, %cst_41 : f32
    %c0_42 = arith.constant 0 : index
    %98 = memref.load %arg8[%c0_42] : memref<1xf32, #tpu.memory_space<smem>>
    memref.store %97, %arg8[%c0_42] : memref<1xf32, #tpu.memory_space<smem>>
    return
  }
}

</mosaic_0001>

<llo_original>
// kernel: ssim_loss.1
$region0: #{ssim_loss.1}
  #allocation0 [shape = 'u32[]', space=smem, size = 0x4, offset = 0x4, fixed_abs, tag = 'smem constant byte address 0x4 - core index']
  #allocation1 [shape = 'u32[144,128]{1,0:T(1,128)}', space=vmem, size = 0x12000, scoped, tag = 'internal scratch']
  %s0 = inlined_call_operand.vmem [shape: f32[32,192], index: 0, kind: input, shape index: {}]
  %s1 = inlined_call_operand.vmem [shape: f32[32,192], index: 1, kind: input, shape index: {}]
  %s2 = inlined_call_operand.vmem [shape: f32[160,160], index: 2, kind: input, shape index: {}]
  %s3 = inlined_call_operand.vmem [shape: f32[192,192], index: 3, kind: input, shape index: {}]
  %s4 = inlined_call_operand.vmem [shape: f32[32,64], index: 4, kind: input, shape index: {}]
  %s5 = inlined_call_operand.vmem [shape: f32[192,96], index: 5, kind: input, shape index: {}]
  %s6 = inlined_call_operand.vmem [shape: f32[80,80], index: 6, kind: input, shape index: {}]
  %s7 = inlined_call_operand.vmem [shape: f32[96,96], index: 7, kind: input, shape index: {}]
  %s8 = inlined_call_operand.hbm [shape: f32[1], index: 8, kind: output, shape index: {}]
  %s9 = sld [smem:[#allocation0]]
  $region42: #{ssim_loss.1} parent=0
    _
  %s11 = ssub.s32 1, %s9
  %s12 = scalar_select 0, %s11, %s9
  $region1: #{ssim_loss.1} parent=0
    #allocation2 [shape = 'u8[512]{0}', space=smem, size = 0x200, scoped, tag = 'output window, operand 0, single buffered']
    #allocation3 [shape = 's32[1]{0}', space=sflag, size = 0x4, scoped, tag = 'scoped memory for ssim_loss.1']
    %13 = vsyncpa [#allocation3], 0
    // Predicated region
    $region2: #{ssim_loss.1} parent=1 // pred_check
      _
    $region3: #{ssim_loss.1} parent=1 // pred_check_branch
      %15 = sbr.rel (0) target = $region5
    $region4: #{ssim_loss.1} parent=1 // pred_region
      _
    $region5: #{ssim_loss.1} parent=1 // pred_fallthru
      _
    // Predicated region
    $region6: #{ssim_loss.1} parent=1 // pred_check
      _
    $region7: #{ssim_loss.1} parent=1 // pred_check_branch
      %17 = sbr.rel (0) target = $region9
    $region8: #{ssim_loss.1} parent=1 // pred_region
      _
    $region9: #{ssim_loss.1} parent=1 // pred_fallthru
      _
    // Predicated region
    $region10: #{ssim_loss.1} parent=1 // pred_check
      _
    $region11: #{ssim_loss.1} parent=1 // pred_check_branch
      %19 = sbr.rel (0) target = $region13
    $region12: #{ssim_loss.1} parent=1 // pred_region
      _
    $region13: #{ssim_loss.1} parent=1 // pred_fallthru
      _
    // Predicated region
    $region14: #{ssim_loss.1} parent=1 // pred_check
      _
    $region15: #{ssim_loss.1} parent=1 // pred_check_branch
      %21 = sbr.rel (0) target = $region17
    $region16: #{ssim_loss.1} parent=1 // pred_region
      _
    $region17: #{ssim_loss.1} parent=1 // pred_fallthru
      _
    // Predicated region
    $region18: #{ssim_loss.1} parent=1 // pred_check
      _
    $region19: #{ssim_loss.1} parent=1 // pred_check_branch
      %23 = sbr.rel (0) target = $region21
    $region20: #{ssim_loss.1} parent=1 // pred_region
      _
    $region21: #{ssim_loss.1} parent=1 // pred_fallthru
      _
    // Predicated region
    $region22: #{ssim_loss.1} parent=1 // pred_check
      _
    $region23: #{ssim_loss.1} parent=1 // pred_check_branch
      %25 = sbr.rel (0) target = $region25
    $region24: #{ssim_loss.1} parent=1 // pred_region
      _
    $region25: #{ssim_loss.1} parent=1 // pred_fallthru
      _
    // Predicated region
    $region26: #{ssim_loss.1} parent=1 // pred_check
      _
    $region27: #{ssim_loss.1} parent=1 // pred_check_branch
      %27 = sbr.rel (0) target = $region29
    $region28: #{ssim_loss.1} parent=1 // pred_region
      _
    $region29: #{ssim_loss.1} parent=1 // pred_fallthru
      _
    // Predicated region
    $region30: #{ssim_loss.1} parent=1 // pred_check
      _
    $region31: #{ssim_loss.1} parent=1 // pred_check_branch
      %29 = sbr.rel (0) target = $region33
    $region32: #{ssim_loss.1} parent=1 // pred_region
      _
    $region33: #{ssim_loss.1} parent=1 // pred_fallthru
      _
    %v30 = vld [vmem:[%s0] sm:$0xff]
    %v31 = vld [vmem:[%s0 + $0x8] sm:$0xff]
    %v32 = vld [vmem:[%s0 + $0x10] sm:$0xff]
    %v33 = vld [vmem:[%s0 + $0x18] sm:$0xff]
    %v34 = vld [vmem:[%s0 + $0x20] sm:$0xff]
    %v35 = vld [vmem:[%s0 + $0x28] sm:$0xff]
    %v36 = vld [vmem:[%s0 + $0x30] sm:$0xff]
    %v37 = vld [vmem:[%s0 + $0x38] sm:$0xff]
    %v38 = vld [vmem:[%s1] sm:$0xff]
    %v39 = vld [vmem:[%s1 + $0x8] sm:$0xff]
    %v40 = vld [vmem:[%s1 + $0x10] sm:$0xff]
    %v41 = vld [vmem:[%s1 + $0x18] sm:$0xff]
    %v42 = vld [vmem:[%s1 + $0x20] sm:$0xff]
    %v43 = vld [vmem:[%s1 + $0x28] sm:$0xff]
    %v44 = vld [vmem:[%s1 + $0x30] sm:$0xff]
    %v45 = vld [vmem:[%s1 + $0x38] sm:$0xff]
    %v46 = vld [vmem:[%s2] sm:$0xff]
    %v47 = vld [vmem:[%s2 + $0x8] sm:$0xff]
    %v48 = vld [vmem:[%s2 + $0x10] sm:$0xff]
    %v49 = vld [vmem:[%s2 + $0x18] sm:$0xff]
    %v50 = vld [vmem:[%s2 + $0x20] sm:$0xff]
    %v51 = vld [vmem:[%s2 + $0x28] sm:$0xff]
    %v52 = vld [vmem:[%s2 + $0x30] sm:$0xff]
    %v53 = vld [vmem:[%s2 + $0x38] sm:$0xff]
    %v54 = vld [vmem:[%s2 + $0x40] sm:$0xff]
    %v55 = vld [vmem:[%s2 + $0x48] sm:$0xff]
    %v56 = vld [vmem:[%s2 + $0x50] sm:$0xff]
    %v57 = vld [vmem:[%s2 + $0x58] sm:$0xff]
    %v58 = vld [vmem:[%s2 + $0x60] sm:$0xff]
    %v59 = vld [vmem:[%s2 + $0x68] sm:$0xff]
    %v60 = vld [vmem:[%s2 + $0x70] sm:$0xff]
    %v61 = vld [vmem:[%s2 + $0x78] sm:$0xff]
    %v62 = vld [vmem:[%s2 + $0x80] sm:$0xff]
    %v63 = vld [vmem:[%s2 + $0x88] sm:$0xff]
    %v64 = vld [vmem:[%s2 + $0x90] sm:$0xff]
    %v65 = vld [vmem:[%s2 + $0x98] sm:$0xff]
    %v66 = vld [vmem:[%s2 + $0xa0] sm:$0xff]
    %v67 = vld [vmem:[%s2 + $0xa8] sm:$0xff]
    %v68 = vld [vmem:[%s2 + $0xb0] sm:$0xff]
    %v69 = vld [vmem:[%s2 + $0xb8] sm:$0xff]
    %v70 = vld [vmem:[%s2 + $0xc0] sm:$0xff]
    %v71 = vld [vmem:[%s2 + $0xc8] sm:$0xff]
    %v72 = vld [vmem:[%s2 + $0xd0] sm:$0xff]
    %v73 = vld [vmem:[%s2 + $0xd8] sm:$0xff]
    %v74 = vld [vmem:[%s2 + $0xe0] sm:$0xff]
    %v75 = vld [vmem:[%s2 + $0xe8] sm:$0xff]
    %v76 = vld [vmem:[%s2 + $0xf0] sm:$0xff]
    %v77 = vld [vmem:[%s2 + $0xf8] sm:$0xff]
    %v78 = vld [vmem:[%s2 + $0x100] sm:$0xff]
    %v79 = vld [vmem:[%s2 + $0x108] sm:$0xff]
    %v80 = vld [vmem:[%s2 + $0x110] sm:$0xff]
    %v81 = vld [vmem:[%s2 + $0x118] sm:$0xff]
    %v82 = vld [vmem:[%s2 + $0x120] sm:$0xff]
    %v83 = vld [vmem:[%s2 + $0x128] sm:$0xff]
    %v84 = vld [vmem:[%s2 + $0x130] sm:$0xff]
    %v85 = vld [vmem:[%s2 + $0x138] sm:$0xff]
    %v86 = vld [vmem:[%s3] sm:$0xff]
    %v87 = vld [vmem:[%s3 + $0x8] sm:$0xff]
    %v88 = vld [vmem:[%s3 + $0x10] sm:$0xff]
    %v89 = vld [vmem:[%s3 + $0x18] sm:$0xff]
    %v90 = vld [vmem:[%s3 + $0x20] sm:$0xff]
    %v91 = vld [vmem:[%s3 + $0x28] sm:$0xff]
    %v92 = vld [vmem:[%s3 + $0x30] sm:$0xff]
    %v93 = vld [vmem:[%s3 + $0x38] sm:$0xff]
    %v94 = vld [vmem:[%s3 + $0x40] sm:$0xff]
    %v95 = vld [vmem:[%s3 + $0x48] sm:$0xff]
    %v96 = vld [vmem:[%s3 + $0x50] sm:$0xff]
    %v97 = vld [vmem:[%s3 + $0x58] sm:$0xff]
    %v98 = vld [vmem:[%s3 + $0x60] sm:$0xff]
    %v99 = vld [vmem:[%s3 + $0x68] sm:$0xff]
    %v100 = vld [vmem:[%s3 + $0x70] sm:$0xff]
    %v101 = vld [vmem:[%s3 + $0x78] sm:$0xff]
    %v102 = vld [vmem:[%s3 + $0x80] sm:$0xff]
    %v103 = vld [vmem:[%s3 + $0x88] sm:$0xff]
    %v104 = vld [vmem:[%s3 + $0x90] sm:$0xff]
    %v105 = vld [vmem:[%s3 + $0x98] sm:$0xff]
    %v106 = vld [vmem:[%s3 + $0xa0] sm:$0xff]
    %v107 = vld [vmem:[%s3 + $0xa8] sm:$0xff]
    %v108 = vld [vmem:[%s3 + $0xb0] sm:$0xff]
    %v109 = vld [vmem:[%s3 + $0xb8] sm:$0xff]
    %v110 = vld [vmem:[%s3 + $0xc0] sm:$0xff]
    %v111 = vld [vmem:[%s3 + $0xc8] sm:$0xff]
    %v112 = vld [vmem:[%s3 + $0xd0] sm:$0xff]
    %v113 = vld [vmem:[%s3 + $0xd8] sm:$0xff]
    %v114 = vld [vmem:[%s3 + $0xe0] sm:$0xff]
    %v115 = vld [vmem:[%s3 + $0xe8] sm:$0xff]
    %v116 = vld [vmem:[%s3 + $0xf0] sm:$0xff]
    %v117 = vld [vmem:[%s3 + $0xf8] sm:$0xff]
    %v118 = vld [vmem:[%s3 + $0x100] sm:$0xff]
    %v119 = vld [vmem:[%s3 + $0x108] sm:$0xff]
    %v120 = vld [vmem:[%s3 + $0x110] sm:$0xff]
    %v121 = vld [vmem:[%s3 + $0x118] sm:$0xff]
    %v122 = vld [vmem:[%s3 + $0x120] sm:$0xff]
    %v123 = vld [vmem:[%s3 + $0x128] sm:$0xff]
    %v124 = vld [vmem:[%s3 + $0x130] sm:$0xff]
    %v125 = vld [vmem:[%s3 + $0x138] sm:$0xff]
    %v126 = vld [vmem:[%s3 + $0x140] sm:$0xff]
    %v127 = vld [vmem:[%s3 + $0x148] sm:$0xff]
    %v128 = vld [vmem:[%s3 + $0x150] sm:$0xff]
    %v129 = vld [vmem:[%s3 + $0x158] sm:$0xff]
    %v130 = vld [vmem:[%s3 + $0x160] sm:$0xff]
    %v131 = vld [vmem:[%s3 + $0x168] sm:$0xff]
    %v132 = vld [vmem:[%s3 + $0x170] sm:$0xff]
    %v133 = vld [vmem:[%s3 + $0x178] sm:$0xff]
    %v134 = vmul.f32 %v30, %v30
    %v135 = vmul.f32 %v31, %v31
    %v136 = vmul.f32 %v32, %v32
    %v137 = vmul.f32 %v33, %v33
    %v138 = vmul.f32 %v34, %v34
    %v139 = vmul.f32 %v35, %v35
    %v140 = vmul.f32 %v36, %v36
    %v141 = vmul.f32 %v37, %v37
    %v142 = vmul.f32 %v38, %v38
    %v143 = vmul.f32 %v39, %v39
    %v144 = vmul.f32 %v40, %v40
    %v145 = vmul.f32 %v41, %v41
    %v146 = vmul.f32 %v42, %v42
    %v147 = vmul.f32 %v43, %v43
    %v148 = vmul.f32 %v44, %v44
    %v149 = vmul.f32 %v45, %v45
    %v150 = vmul.f32 %v30, %v38
    %v151 = vmul.f32 %v31, %v39
    %v152 = vmul.f32 %v32, %v40
    %v153 = vmul.f32 %v33, %v41
    %v154 = vmul.f32 %v34, %v42
    %v155 = vmul.f32 %v35, %v43
    %v156 = vmul.f32 %v36, %v44
    %v157 = vmul.f32 %v37, %v45
    %vm158 = vcmask 261120
    %v160 = vsel %vm158, %v47, 0
    %v163 = vsel %vm158, %v49, 0
    %v166 = vsel %vm158, %v51, 0
    %v169 = vsel %vm158, %v53, 0
    %v172 = vsel %vm158, %v55, 0
    %v175 = vsel %vm158, %v57, 0
    %v178 = vsel %vm158, %v59, 0
    %v181 = vsel %vm158, %v61, 0
    %v184 = vsel %vm158, %v63, 0
    %v187 = vsel %vm158, %v65, 0
    %v190 = vsel %vm158, %v67, 0
    %v193 = vsel %vm158, %v69, 0
    %v196 = vsel %vm158, %v71, 0
    %v199 = vsel %vm158, %v73, 0
    %v202 = vsel %vm158, %v75, 0
    %v205 = vsel %vm158, %v77, 0
    %v208 = vsel %vm158, %v79, 0
    %v211 = vsel %vm158, %v81, 0
    %v214 = vsel %vm158, %v83, 0
    %v217 = vsel %vm158, %v85, 0
    %v219 = vand.u32 %v31, 4294901760
    %220 = vmatprep.subr.mxu0 %v219
    %v221 = vand.u32 %v30, 4294901760
    %222 = vmatpush1.msra.mxu0 %v221
    %v223 = vand.u32 %v33, 4294901760
    %224 = vmatprep.subr.mxu0 %v223
    %v225 = vand.u32 %v32, 4294901760
    %226 = vmatpush1.msra.mxu0 %v225
    %v227 = vand.u32 %v35, 4294901760
    %228 = vmatprep.subr.mxu0 %v227
    %v229 = vand.u32 %v34, 4294901760
    %230 = vmatpush1.msra.mxu0 %v229
    %v231 = vand.u32 %v37, 4294901760
    %232 = vmatprep.subr.mxu0 %v231
    %v233 = vand.u32 %v36, 4294901760
    %234 = vmatpush1.msra.mxu0 %v233
    %v235 = vand.u32 %v39, 4294901760
    %236 = vmatprep.subr.mxu0 %v235
    %v237 = vand.u32 %v38, 4294901760
    %238 = vmatpush1.msra.mxu0 %v237
    %v239 = vand.u32 %v41, 4294901760
    %240 = vmatprep.subr.mxu0 %v239
    %v241 = vand.u32 %v40, 4294901760
    %242 = vmatpush1.msra.mxu0 %v241
    %v243 = vand.u32 %v43, 4294901760
    %244 = vmatprep.subr.mxu0 %v243
    %v245 = vand.u32 %v42, 4294901760
    %246 = vmatpush1.msra.mxu0 %v245
    %v247 = vand.u32 %v45, 4294901760
    %248 = vmatprep.subr.mxu0 %v247
    %v249 = vand.u32 %v44, 4294901760
    %250 = vmatpush1.msra.mxu0 %v249
    %v251 = vand.u32 %v135, 4294901760
    %252 = vmatprep.subr.mxu0 %v251
    %v253 = vand.u32 %v134, 4294901760
    %254 = vmatpush1.msra.mxu0 %v253
    %v255 = vand.u32 %v137, 4294901760
    %256 = vmatprep.subr.mxu0 %v255
    %v257 = vand.u32 %v136, 4294901760
    %258 = vmatpush1.msra.mxu0 %v257
    %v259 = vand.u32 %v139, 4294901760
    %260 = vmatprep.subr.mxu0 %v259
    %v261 = vand.u32 %v138, 4294901760
    %262 = vmatpush1.msra.mxu0 %v261
    %v263 = vand.u32 %v141, 4294901760
    %264 = vmatprep.subr.mxu0 %v263
    %v265 = vand.u32 %v140, 4294901760
    %266 = vmatpush1.msra.mxu0 %v265
    %v267 = vand.u32 %v143, 4294901760
    %268 = vmatprep.subr.mxu0 %v267
    %v269 = vand.u32 %v142, 4294901760
    %270 = vmatpush1.msra.mxu0 %v269
    %v271 = vand.u32 %v145, 4294901760
    %272 = vmatprep.subr.mxu0 %v271
    %v273 = vand.u32 %v144, 4294901760
    %274 = vmatpush1.msra.mxu0 %v273
    %v275 = vand.u32 %v147, 4294901760
    %276 = vmatprep.subr.mxu0 %v275
    %v277 = vand.u32 %v146, 4294901760
    %278 = vmatpush1.msra.mxu0 %v277
    %v279 = vand.u32 %v149, 4294901760
    %280 = vmatprep.subr.mxu0 %v279
    %v281 = vand.u32 %v148, 4294901760
    %282 = vmatpush1.msra.mxu0 %v281
    %v283 = vand.u32 %v151, 4294901760
    %284 = vmatprep.subr.mxu0 %v283
    %v285 = vand.u32 %v150, 4294901760
    %286 = vmatpush1.msra.mxu0 %v285
    %v287 = vand.u32 %v153, 4294901760
    %288 = vmatprep.subr.mxu0 %v287
    %v289 = vand.u32 %v152, 4294901760
    %290 = vmatpush1.msra.mxu0 %v289
    %v291 = vand.u32 %v155, 4294901760
    %292 = vmatprep.subr.mxu0 %v291
    %v293 = vand.u32 %v154, 4294901760
    %294 = vmatpush1.msra.mxu0 %v293
    %v295 = vand.u32 %v157, 4294901760
    %296 = vmatprep.subr.mxu0 %v295
    %v297 = vand.u32 %v156, 4294901760
    %298 = vmatpush1.msra.mxu0 %v297
    %299 = vmatprep.subr.mxu0 0.0
    %300 = vmatpush1.msra.mxu0 0.0
    %301 = vmatprep.subr.mxu0 0.0
    %302 = vmatpush1.msra.mxu0 0.0
    %303 = vmatprep.subr.mxu0 0.0
    %304 = vmatpush1.msra.mxu0 0.0
    %305 = vmatprep.subr.mxu0 0.0
    %306 = vmatpush1.msra.mxu0 0.0
    %307 = vmatprep.subr.mxu0 0.0
    %308 = vmatpush1.msra.mxu0 0.0
    %309 = vmatprep.subr.mxu0 0.0
    %310 = vmatpush1.msra.mxu0 0.0
    %311 = vmatprep.subr.mxu0 0.0
    %312 = vmatpush1.msra.mxu0 0.0
    %313 = vmatprep.subr.mxu0 0.0
    %314 = vmatpush1.msra.mxu0 0.0
    %315 = vmatprep.subr.mxu0 0.0
    %316 = vmatpush1.msra.mxu0 0.0
    %317 = vmatprep.subr.mxu0 0.0
    %318 = vmatpush1.msra.mxu0 0.0
    %319 = vmatprep.subr.mxu0 0.0
    %320 = vmatpush1.msra.mxu0 0.0
    %321 = vmatprep.subr.mxu0 0.0
    %322 = vmatpush1.msra.mxu0 0.0
    %v323 = vand.u32 %v160, 4294901760
    %v324 = vsub.f32 %v160, %v323
    %v325 = vand.u32 %v324, 4294901760
    %v326 = vsub.f32 %v324, %v325
    %v327 = vand.u32 %v326, 4294901760
    %328 = vmatprep.mubr.f32.mxu0 %v327
    %v329 = vand.u32 %v46, 4294901760
    %v330 = vsub.f32 %v46, %v329
    %v331 = vand.u32 %v330, 4294901760
    %v332 = vsub.f32 %v330, %v331
    %v333 = vand.u32 %v332, 4294901760
    %334 = vmatmul.mubr.f32.gmra.mrb[0].mxu0 %v333
    %v335 = vpop.f32.mrb[0].mxu0
    %v336 = vadd.f32 0.0, %v335
    %v337 = vpop.f32.mrb[0].mxu0
    %v338 = vadd.f32 0.0, %v337
    %v339 = vand.u32 %v163, 4294901760
    %v340 = vsub.f32 %v163, %v339
    %v341 = vand.u32 %v340, 4294901760
    %v342 = vsub.f32 %v340, %v341
    %v343 = vand.u32 %v342, 4294901760
    %344 = vmatprep.mubr.f32.mxu0 %v343
    %v345 = vand.u32 %v48, 4294901760
    %v346 = vsub.f32 %v48, %v345
    %v347 = vand.u32 %v346, 4294901760
    %v348 = vsub.f32 %v346, %v347
    %v349 = vand.u32 %v348, 4294901760
    %350 = vmatmul.mubr.f32.gmra.mrb[0].mxu0 %v349
    %v351 = vpop.f32.mrb[0].mxu0
    %v352 = vadd.f32 0.0, %v351
    %v353 = vpop.f32.mrb[0].mxu0
    %v354 = vadd.f32 0.0, %v353
    %v355 = vand.u32 %v166, 4294901760
    %v356 = vsub.f32 %v166, %v355
    %v357 = vand.u32 %v356, 4294901760
    %v358 = vsub.f32 %v356, %v357
    %v359 = vand.u32 %v358, 4294901760
    %360 = vmatprep.mubr.f32.mxu0 %v359
    %v361 = vand.u32 %v50, 4294901760
    %v362 = vsub.f32 %v50, %v361
    %v363 = vand.u32 %v362, 4294901760
    %v364 = vsub.f32 %v362, %v363
    %v365 = vand.u32 %v364, 4294901760
    %366 = vmatmul.mubr.f32.gmra.mrb[0].mxu0 %v365
    %v367 = vpop.f32.mrb[0].mxu0
    %v368 = vadd.f32 0.0, %v367
    %v369 = vpop.f32.mrb[0].mxu0
    %v370 = vadd.f32 0.0, %v369
    %v371 = vand.u32 %v169, 4294901760
    %v372 = vsub.f32 %v169, %v371
    %v373 = vand.u32 %v372, 4294901760
    %v374 = vsub.f32 %v372, %v373
    %v375 = vand.u32 %v374, 4294901760
    %376 = vmatprep.mubr.f32.mxu0 %v375
    %v377 = vand.u32 %v52, 4294901760
    %v378 = vsub.f32 %v52, %v377
    %v379 = vand.u32 %v378, 4294901760
    %v380 = vsub.f32 %v378, %v379
    %v381 = vand.u32 %v380, 4294901760
    %382 = vmatmul.mubr.f32.gmra.mrb[0].mxu0 %v381
    %v383 = vpop.f32.mrb[0].mxu0
    %v384 = vadd.f32 0.0, %v383
    %v385 = vpop.f32.mrb[0].mxu0
    %v386 = vadd.f32 0.0, %v385
    %v387 = vand.u32 %v172, 4294901760
    %v388 = vsub.f32 %v172, %v387
    %v389 = vand.u32 %v388, 4294901760
    %v390 = vsub.f32 %v388, %v389
    %v391 = vand.u32 %v390, 4294901760
    %392 = vmatprep.mubr.f32.mxu0 %v391
    %v393 = vand.u32 %v54, 4294901760
    %v394 = vsub.f32 %v54, %v393
    %v395 = vand.u32 %v394, 4294901760
    %v396 = vsub.f32 %v394, %v395
    %v397 = vand.u32 %v396, 4294901760
    %398 = vmatmul.mubr.f32.gmra.mrb[0].mxu0 %v397
    %v399 = vpop.f32.mrb[0].mxu0
    %v400 = vadd.f32 0.0, %v399
    %v401 = vpop.f32.mrb[0].mxu0
    %v402 = vadd.f32 0.0, %v401
    %v403 = vand.u32 %v175, 4294901760
    %v404 = vsub.f32 %v175, %v403
    %v405 = vand.u32 %v404, 4294901760
    %v406 = vsub.f32 %v404, %v405
    %v407 = vand.u32 %v406, 4294901760
    %408 = vmatprep.mubr.f32.mxu0 %v407
    %v409 = vand.u32 %v56, 4294901760
    %v410 = vsub.f32 %v56, %v409
    %v411 = vand.u32 %v410, 4294901760
    %v412 = vsub.f32 %v410, %v411
    %v413 = vand.u32 %v412, 4294901760
    %414 = vmatmul.mubr.f32.gmra.mrb[0].mxu0 %v413
    %v415 = vpop.f32.mrb[0].mxu0
    %v416 = vadd.f32 0.0, %v415
    %v417 = vpop.f32.mrb[0].mxu0
    %v418 = vadd.f32 0.0, %v417
    %v419 = vand.u32 %v178, 4294901760
    %v420 = vsub.f32 %v178, %v419
    %v421 = vand.u32 %v420, 4294901760
    %v422 = vsub.f32 %v420, %v421
    %v423 = vand.u32 %v422, 4294901760
    %424 = vmatprep.mubr.f32.mxu0 %v423
    %v425 = vand.u32 %v58, 4294901760
    %v426 = vsub.f32 %v58, %v425
    %v427 = vand.u32 %v426, 4294901760
    %v428 = vsub.f32 %v426, %v427
    %v429 = vand.u32 %v428, 4294901760
    %430 = vmatmul.mubr.f32.gmra.mrb[0].mxu0 %v429
    %v431 = vpop.f32.mrb[0].mxu0
    %v432 = vadd.f32 0.0, %v431
    %v433 = vpop.f32.mrb[0].mxu0
    %v434 = vadd.f32 0.0, %v433
    %v435 = vand.u32 %v181, 4294901760
    %v436 = vsub.f32 %v181, %v435
    %v437 = vand.u32 %v436, 4294901760
    %v438 = vsub.f32 %v436, %v437
    %v439 = vand.u32 %v438, 4294901760
    %440 = vmatprep.mubr.f32.mxu0 %v439
    %v441 = vand.u32 %v60, 4294901760
    %v442 = vsub.f32 %v60, %v441
    %v443 = vand.u32 %v442, 4294901760
    %v444 = vsub.f32 %v442, %v443
    %v445 = vand.u32 %v444, 4294901760
    %446 = vmatmul.mubr.f32.gmra.mrb[0].mxu0 %v445
    %v447 = vpop.f32.mrb[0].mxu0
    %v448 = vadd.f32 0.0, %v447
    %v449 = vpop.f32.mrb[0].mxu0
    %v450 = vadd.f32 0.0, %v449
    %v451 = vand.u32 %v184, 4294901760
    %v452 = vsub.f32 %v184, %v451
    %v453 = vand.u32 %v452, 4294901760
    %v454 = vsub.f32 %v452, %v453
    %v455 = vand.u32 %v454, 4294901760
    %456 = vmatprep.mubr.f32.mxu0 %v455
    %v457 = vand.u32 %v62, 4294901760
    %v458 = vsub.f32 %v62, %v457
    %v459 = vand.u32 %v458, 4294901760
    %v460 = vsub.f32 %v458, %v459
    %v461 = vand.u32 %v460, 4294901760
    %462 = vmatmul.mubr.f32.gmra.mrb[0].mxu0 %v461
    %v463 = vpop.f32.mrb[0].mxu0
    %v464 = vadd.f32 0.0, %v463
    %v465 = vpop.f32.mrb[0].mxu0
    %v466 = vadd.f32 0.0, %v465
    %v467 = vand.u32 %v187, 4294901760
    %v468 = vsub.f32 %v187, %v467
    %v469 = vand.u32 %v468, 4294901760
    %v470 = vsub.f32 %v468, %v469
    %v471 = vand.u32 %v470, 4294901760
    %472 = vmatprep.mubr.f32.mxu0 %v471
    %v473 = vand.u32 %v64, 4294901760
    %v474 = vsub.f32 %v64, %v473
    %v475 = vand.u32 %v474, 4294901760
    %v476 = vsub.f32 %v474, %v475
    %v477 = vand.u32 %v476, 4294901760
    %478 = vmatmul.mubr.f32.gmra.mrb[0].mxu0 %v477
    %v479 = vpop.f32.mrb[0].mxu0
    %v480 = vadd.f32 0.0, %v479
    %v481 = vpop.f32.mrb[0].mxu0
    %v482 = vadd.f32 0.0, %v481
    %v483 = vand.u32 %v190, 4294901760
    %v484 = vsub.f32 %v190, %v483
    %v485 = vand.u32 %v484, 4294901760
    %v486 = vsub.f32 %v484, %v485
    %v487 = vand.u32 %v486, 4294901760
    %488 = vmatprep.mubr.f32.mxu0 %v487
    %v489 = vand.u32 %v66, 4294901760
    %v490 = vsub.f32 %v66, %v489
    %v491 = vand.u32 %v490, 4294901760
    %v492 = vsub.f32 %v490, %v491
    %v493 = vand.u32 %v492, 4294901760
    %494 = vmatmul.mubr.f32.gmra.mrb[0].mxu0 %v493
    %v495 = vpop.f32.mrb[0].mxu0
    %v496 = vadd.f32 0.0, %v495
    %v497 = vpop.f32.mrb[0].mxu0
    %v498 = vadd.f32 0.0, %v497
    %v499 = vand.u32 %v193, 4294901760
    %v500 = vsub.f32 %v193, %v499
    %v501 = vand.u32 %v500, 4294901760
    %v502 = vsub.f32 %v500, %v501
    %v503 = vand.u32 %v502, 4294901760
    %504 = vmatprep.mubr.f32.mxu0 %v503
    %v505 = vand.u32 %v68, 4294901760
    %v506 = vsub.f32 %v68, %v505
    %v507 = vand.u32 %v506, 4294901760
    %v508 = vsub.f32 %v506, %v507
    %v509 = vand.u32 %v508, 4294901760
    %510 = vmatmul.mubr.f32.gmra.mrb[0].mxu0 %v509
    %v511 = vpop.f32.mrb[0].mxu0
    %v512 = vadd.f32 0.0, %v511
    %v513 = vpop.f32.mrb[0].mxu0
    %v514 = vadd.f32 0.0, %v513
    %v515 = vand.u32 %v196, 4294901760
    %v516 = vsub.f32 %v196, %v515
    %v517 = vand.u32 %v516, 4294901760
    %v518 = vsub.f32 %v516, %v517
    %v519 = vand.u32 %v518, 4294901760
    %520 = vmatprep.mubr.f32.mxu0 %v519
    %v521 = vand.u32 %v70, 4294901760
    %v522 = vsub.f32 %v70, %v521
    %v523 = vand.u32 %v522, 4294901760
    %v524 = vsub.f32 %v522, %v523
    %v525 = vand.u32 %v524, 4294901760
    %526 = vmatmul.mubr.f32.gmra.mrb[0].mxu0 %v525
    %v527 = vpop.f32.mrb[0].mxu0
    %v528 = vadd.f32 0.0, %v527
    %v529 = vpop.f32.mrb[0].mxu0
    %v530 = vadd.f32 0.0, %v529
    %v531 = vand.u32 %v199, 4294901760
    %v532 = vsub.f32 %v199, %v531
    %v533 = vand.u32 %v532, 4294901760
    %v534 = vsub.f32 %v532, %v533
    %v535 = vand.u32 %v534, 4294901760
    %536 = vmatprep.mubr.f32.mxu0 %v535
    %v537 = vand.u32 %v72, 4294901760
    %v538 = vsub.f32 %v72, %v537
    %v539 = vand.u32 %v538, 4294901760
    %v540 = vsub.f32 %v538, %v539
    %v541 = vand.u32 %v540, 4294901760
    %542 = vmatmul.mubr.f32.gmra.mrb[0].mxu0 %v541
    %v543 = vpop.f32.mrb[0].mxu0
    %v544 = vadd.f32 0.0, %v543
    %v545 = vpop.f32.mrb[0].mxu0
    %v546 = vadd.f32 0.0, %v545
    %v547 = vand.u32 %v202, 4294901760
    %v548 = vsub.f32 %v202, %v547
    %v549 = vand.u32 %v548, 4294901760
    %v550 = vsub.f32 %v548, %v549
    %v551 = vand.u32 %v550, 4294901760
    %552 = vmatprep.mubr.f32.mxu0 %v551
    %v553 = vand.u32 %v74, 4294901760
    %v554 = vsub.f32 %v74, %v553
    %v555 = vand.u32 %v554, 4294901760
    %v556 = vsub.f32 %v554, %v555
    %v557 = vand.u32 %v556, 4294901760
    %558 = vmatmul.mubr.f32.gmra.mrb[0].mxu0 %v557
    %v559 = vpop.f32.mrb[0].mxu0
    %v560 = vadd.f32 0.0, %v559
    %v561 = vpop.f32.mrb[0].mxu0
    %v562 = vadd.f32 0.0, %v561
    %v563 = vand.u32 %v205, 4294901760
    %v564 = vsub.f32 %v205, %v563
    %v565 = vand.u32 %v564, 4294901760
    %v566 = vsub.f32 %v564, %v565
    %v567 = vand.u32 %v566, 4294901760
    %568 = vmatprep.mubr.f32.mxu0 %v567
    %v569 = vand.u32 %v76, 4294901760
    %v570 = vsub.f32 %v76, %v569
    %v571 = vand.u32 %v570, 4294901760
    %v572 = vsub.f32 %v570, %v571
    %v573 = vand.u32 %v572, 4294901760
    %574 = vmatmul.mubr.f32.gmra.mrb[0].mxu0 %v573
    %v575 = vpop.f32.mrb[0].mxu0
    %v576 = vadd.f32 0.0, %v575
    %v577 = vpop.f32.mrb[0].mxu0
    %v578 = vadd.f32 0.0, %v577
    %v579 = vand.u32 %v208, 4294901760
    %v580 = vsub.f32 %v208, %v579
    %v581 = vand.u32 %v580, 4294901760
    %v582 = vsub.f32 %v580, %v581
    %v583 = vand.u32 %v582, 4294901760
    %584 = vmatprep.mubr.f32.mxu0 %v583
    %v585 = vand.u32 %v78, 4294901760
    %v586 = vsub.f32 %v78, %v585
    %v587 = vand.u32 %v586, 4294901760
    %v588 = vsub.f32 %v586, %v587
    %v589 = vand.u32 %v588, 4294901760
    %590 = vmatmul.mubr.f32.gmra.mrb[0].mxu0 %v589
    %v591 = vpop.f32.mrb[0].mxu0
    %v592 = vadd.f32 0.0, %v591
    %v593 = vpop.f32.mrb[0].mxu0
    %v594 = vadd.f32 0.0, %v593
    %v595 = vand.u32 %v211, 4294901760
    %v596 = vsub.f32 %v211, %v595
    %v597 = vand.u32 %v596, 4294901760
    %v598 = vsub.f32 %v596, %v597
    %v599 = vand.u32 %v598, 4294901760
    %600 = vmatprep.mubr.f32.mxu0 %v599
    %v601 = vand.u32 %v80, 4294901760
    %v602 = vsub.f32 %v80, %v601
    %v603 = vand.u32 %v602, 4294901760
    %v604 = vsub.f32 %v602, %v603
    %v605 = vand.u32 %v604, 4294901760
    %606 = vmatmul.mubr.f32.gmra.mrb[0].mxu0 %v605
    %v607 = vpop.f32.mrb[0].mxu0
    %v608 = vadd.f32 0.0, %v607
    %v609 = vpop.f32.mrb[0].mxu0
    %v610 = vadd.f32 0.0, %v609
    %v611 = vand.u32 %v214, 4294901760
    %v612 = vsub.f32 %v214, %v611
    %v613 = vand.u32 %v612, 4294901760
    %v614 = vsub.f32 %v612, %v613
    %v615 = vand.u32 %v614, 4294901760
    %616 = vmatprep.mubr.f32.mxu0 %v615
    %v617 = vand.u32 %v82, 4294901760
    %v618 = vsub.f32 %v82, %v617
    %v619 = vand.u32 %v618, 4294901760
    %v620 = vsub.f32 %v618, %v619
    %v621 = vand.u32 %v620, 4294901760
    %622 = vmatmul.mubr.f32.gmra.mrb[0].mxu0 %v621
    %v623 = vpop.f32.mrb[0].mxu0
    %v624 = vadd.f32 0.0, %v623
    %v625 = vpop.f32.mrb[0].mxu0
    %v626 = vadd.f32 0.0, %v625
    %v627 = vand.u32 %v217, 4294901760
    %v628 = vsub.f32 %v217, %v627
    %v629 = vand.u32 %v628, 4294901760
    %v630 = vsub.f32 %v628, %v629
    %v631 = vand.u32 %v630, 4294901760
    %632 = vmatprep.mubr.f32.mxu0 %v631
    %v633 = vand.u32 %v84, 4294901760
    %v634 = vsub.f32 %v84, %v633
    %v635 = vand.u32 %v634, 4294901760
    %v636 = vsub.f32 %v634, %v635
    %v637 = vand.u32 %v636, 4294901760
    %638 = vmatmul.mubr.f32.gmra.mrb[0].mxu0 %v637
    %v639 = vpop.f32.mrb[0].mxu0
    %v640 = vadd.f32 0.0, %v639
    %v641 = vpop.f32.mrb[0].mxu0
    %v642 = vadd.f32 0.0, %v641
    %643 = vdwg.mxu0
    %v644 = vand.u32 %v31, 4294901760
    %v645 = vsub.f32 %v31, %v644
    %v646 = vand.u32 %v645, 4294901760
    %v647 = vsub.f32 %v645, %v646
    %v648 = vand.u32 %v647, 4294901760
    %649 = vmatprep.subr.mxu0 %v648
    %v650 = vand.u32 %v30, 4294901760
    %v651 = vsub.f32 %v30, %v650
    %v652 = vand.u32 %v651, 4294901760
    %v653 = vsub.f32 %v651, %v652
    %v654 = vand.u32 %v653, 4294901760
    %655 = vmatpush1.msra.mxu0 %v654
    %v656 = vand.u32 %v33, 4294901760
    %v657 = vsub.f32 %v33, %v656
    %v658 = vand.u32 %v657, 4294901760
    %v659 = vsub.f32 %v657, %v658
    %v660 = vand.u32 %v659, 4294901760
    %661 = vmatprep.subr.mxu0 %v660
    %v662 = vand.u32 %v32, 4294901760
    %v663 = vsub.f32 %v32, %v662
    %v664 = vand.u32 %v663, 4294901760
    %v665 = vsub.f32 %v663, %v664
    %v666 = vand.u32 %v665, 4294901760
    %667 = vmatpush1.msra.mxu0 %v666
    %v668 = vand.u32 %v35, 4294901760
    %v669 = vsub.f32 %v35, %v668
    %v670 = vand.u32 %v669, 4294901760
    %v671 = vsub.f32 %v669, %v670
    %v672 = vand.u32 %v671, 4294901760
    %673 = vmatprep.subr.mxu0 %v672
    %v674 = vand.u32 %v34, 4294901760
    %v675 = vsub.f32 %v34, %v674
    %v676 = vand.u32 %v675, 4294901760
    %v677 = vsub.f32 %v675, %v676
    %v678 = vand.u32 %v677, 4294901760
    %679 = vmatpush1.msra.mxu0 %v678
    %v680 = vand.u32 %v37, 4294901760
    %v681 = vsub.f32 %v37, %v680
    %v682 = vand.u32 %v681, 4294901760
    %v683 = vsub.f32 %v681, %v682
    %v684 = vand.u32 %v683, 4294901760
    %685 = vmatprep.subr.mxu0 %v684
    %v686 = vand.u32 %v36, 4294901760
    %v687 = vsub.f32 %v36, %v686
    %v688 = vand.u32 %v687, 4294901760
    %v689 = vsub.f32 %v687, %v688
    %v690 = vand.u32 %v689, 4294901760
    %691 = vmatpush1.msra.mxu0 %v690
    %v692 = vand.u32 %v39, 4294901760
    %v693 = vsub.f32 %v39, %v692
    %v694 = vand.u32 %v693, 4294901760
    %v695 = vsub.f32 %v693, %v694
    %v696 = vand.u32 %v695, 4294901760
    %697 = vmatprep.subr.mxu0 %v696
    %v698 = vand.u32 %v38, 4294901760
    %v699 = vsub.f32 %v38, %v698
    %v700 = vand.u32 %v699, 4294901760
    %v701 = vsub.f32 %v699, %v700
    %v702 = vand.u32 %v701, 4294901760
    %703 = vmatpush1.msra.mxu0 %v702
    %v704 = vand.u32 %v41, 4294901760
    %v705 = vsub.f32 %v41, %v704
    %v706 = vand.u32 %v705, 4294901760
    %v707 = vsub.f32 %v705, %v706
    %v708 = vand.u32 %v707, 4294901760
    %709 = vmatprep.subr.mxu0 %v708
    %v710 = vand.u32 %v40, 4294901760
    %v711 = vsub.f32 %v40, %v710
    %v712 = vand.u32 %v711, 4294901760
    %v713 = vsub.f32 %v711, %v712
    %v714 = vand.u32 %v713, 4294901760
    %715 = vmatpush1.msra.mxu0 %v714
    %v716 = vand.u32 %v43, 4294901760
    %v717 = vsub.f32 %v43, %v716
    %v718 = vand.u32 %v717, 4294901760
    %v719 = vsub.f32 %v717, %v718
    %v720 = vand.u32 %v719, 4294901760
    %721 = vmatprep.subr.mxu0 %v720
    %v722 = vand.u32 %v42, 4294901760
    %v723 = vsub.f32 %v42, %v722
    %v724 = vand.u32 %v723, 4294901760
    %v725 = vsub.f32 %v723, %v724
    %v726 = vand.u32 %v725, 4294901760
    %727 = vmatpush1.msra.mxu0 %v726
    %v728 = vand.u32 %v45, 4294901760
    %v729 = vsub.f32 %v45, %v728
    %v730 = vand.u32 %v729, 4294901760
    %v731 = vsub.f32 %v729, %v730
    %v732 = vand.u32 %v731, 4294901760
    %733 = vmatprep.subr.mxu0 %v732
    %v734 = vand.u32 %v44, 4294901760
    %v735 = vsub.f32 %v44, %v734
    %v736 = vand.u32 %v735, 4294901760
    %v737 = vsub.f32 %v735, %v736
    %v738 = vand.u32 %v737, 4294901760
    %739 = vmatpush1.msra.mxu0 %v738
    %v740 = vand.u32 %v135, 4294901760
    %v741 = vsub.f32 %v135, %v740
    %v742 = vand.u32 %v741, 4294901760
    %v743 = vsub.f32 %v741, %v742
    %v744 = vand.u32 %v743, 4294901760
    %745 = vmatprep.subr.mxu0 %v744
    %v746 = vand.u32 %v134, 4294901760
    %v747 = vsub.f32 %v134, %v746
    %v748 = vand.u32 %v747, 4294901760
    %v749 = vsub.f32 %v747, %v748
    %v750 = vand.u32 %v749, 4294901760
    %751 = vmatpush1.msra.mxu0 %v750
    %v752 = vand.u32 %v137, 4294901760
    %v753 = vsub.f32 %v137, %v752
    %v754 = vand.u32 %v753, 4294901760
    %v755 = vsub.f32 %v753, %v754
    %v756 = vand.u32 %v755, 4294901760
    %757 = vmatprep.subr.mxu0 %v756
    %v758 = vand.u32 %v136, 4294901760
    %v759 = vsub.f32 %v136, %v758
    %v760 = vand.u32 %v759, 4294901760
    %v761 = vsub.f32 %v759, %v760
    %v762 = vand.u32 %v761, 4294901760
    %763 = vmatpush1.msra.mxu0 %v762
    %v764 = vand.u32 %v139, 4294901760
    %v765 = vsub.f32 %v139, %v764
    %v766 = vand.u32 %v765, 4294901760
    %v767 = vsub.f32 %v765, %v766
    %v768 = vand.u32 %v767, 4294901760
    %769 = vmatprep.subr.mxu0 %v768
    %v770 = vand.u32 %v138, 4294901760
    %v771 = vsub.f32 %v138, %v770
    %v772 = vand.u32 %v771, 4294901760
    %v773 = vsub.f32 %v771, %v772
    %v774 = vand.u32 %v773, 4294901760
    %775 = vmatpush1.msra.mxu0 %v774
    %v776 = vand.u32 %v141, 4294901760
    %v777 = vsub.f32 %v141, %v776
    %v778 = vand.u32 %v777, 4294901760
    %v779 = vsub.f32 %v777, %v778
    %v780 = vand.u32 %v779, 4294901760
    %781 = vmatprep.subr.mxu0 %v780
    %v782 = vand.u32 %v140, 4294901760
    %v783 = vsub.f32 %v140, %v782
    %v784 = vand.u32 %v783, 4294901760
    %v785 = vsub.f32 %v783, %v784
    %v786 = vand.u32 %v785, 4294901760
    %787 = vmatpush1.msra.mxu0 %v786
    %v788 = vand.u32 %v143, 4294901760
    %v789 = vsub.f32 %v143, %v788
    %v790 = vand.u32 %v789, 4294901760
    %v791 = vsub.f32 %v789, %v790
    %v792 = vand.u32 %v791, 4294901760
    %793 = vmatprep.subr.mxu0 %v792
    %v794 = vand.u32 %v142, 4294901760
    %v795 = vsub.f32 %v142, %v794
    %v796 = vand.u32 %v795, 4294901760
    %v797 = vsub.f32 %v795, %v796
    %v798 = vand.u32 %v797, 4294901760
    %799 = vmatpush1.msra.mxu0 %v798
    %v800 = vand.u32 %v145, 4294901760
    %v801 = vsub.f32 %v145, %v800
    %v802 = vand.u32 %v801, 4294901760
    %v803 = vsub.f32 %v801, %v802
    %v804 = vand.u32 %v803, 4294901760
    %805 = vmatprep.subr.mxu0 %v804
    %v806 = vand.u32 %v144, 4294901760
    %v807 = vsub.f32 %v144, %v806
    %v808 = vand.u32 %v807, 4294901760
    %v809 = vsub.f32 %v807, %v808
    %v810 = vand.u32 %v809, 4294901760
    %811 = vmatpush1.msra.mxu0 %v810
    %v812 = vand.u32 %v147, 4294901760
    %v813 = vsub.f32 %v147, %v812
    %v814 = vand.u32 %v813, 4294901760
    %v815 = vsub.f32 %v813, %v814
    %v816 = vand.u32 %v815, 4294901760
    %817 = vmatprep.subr.mxu0 %v816
    %v818 = vand.u32 %v146, 4294901760
    %v819 = vsub.f32 %v146, %v818
    %v820 = vand.u32 %v819, 4294901760
    %v821 = vsub.f32 %v819, %v820
    %v822 = vand.u32 %v821, 4294901760
    %823 = vmatpush1.msra.mxu0 %v822
    %v824 = vand.u32 %v149, 4294901760
    %v825 = vsub.f32 %v149, %v824
    %v826 = vand.u32 %v825, 4294901760
    %v827 = vsub.f32 %v825, %v826
    %v828 = vand.u32 %v827, 4294901760
    %829 = vmatprep.subr.mxu0 %v828
    %v830 = vand.u32 %v148, 4294901760
    %v831 = vsub.f32 %v148, %v830
    %v832 = vand.u32 %v831, 4294901760
    %v833 = vsub.f32 %v831, %v832
    %v834 = vand.u32 %v833, 4294901760
    %835 = vmatpush1.msra.mxu0 %v834
    %v836 = vand.u32 %v151, 4294901760
    %v837 = vsub.f32 %v151, %v836
    %v838 = vand.u32 %v837, 4294901760
    %v839 = vsub.f32 %v837, %v838
    %v840 = vand.u32 %v839, 4294901760
    %841 = vmatprep.subr.mxu0 %v840
    %v842 = vand.u32 %v150, 4294901760
    %v843 = vsub.f32 %v150, %v842
    %v844 = vand.u32 %v843, 4294901760
    %v845 = vsub.f32 %v843, %v844
    %v846 = vand.u32 %v845, 4294901760
    %847 = vmatpush1.msra.mxu0 %v846
    %v848 = vand.u32 %v153, 4294901760
    %v849 = vsub.f32 %v153, %v848
    %v850 = vand.u32 %v849, 4294901760
    %v851 = vsub.f32 %v849, %v850
    %v852 = vand.u32 %v851, 4294901760
    %853 = vmatprep.subr.mxu0 %v852
    %v854 = vand.u32 %v152, 4294901760
    %v855 = vsub.f32 %v152, %v854
    %v856 = vand.u32 %v855, 4294901760
    %v857 = vsub.f32 %v855, %v856
    %v858 = vand.u32 %v857, 4294901760
    %859 = vmatpush1.msra.mxu0 %v858
    %v860 = vand.u32 %v155, 4294901760
    %v861 = vsub.f32 %v155, %v860
    %v862 = vand.u32 %v861, 4294901760
    %v863 = vsub.f32 %v861, %v862
    %v864 = vand.u32 %v863, 4294901760
    %865 = vmatprep.subr.mxu0 %v864
    %v866 = vand.u32 %v154, 4294901760
    %v867 = vsub.f32 %v154, %v866
    %v868 = vand.u32 %v867, 4294901760
    %v869 = vsub.f32 %v867, %v868
    %v870 = vand.u32 %v869, 4294901760
    %871 = vmatpush1.msra.mxu0 %v870
    %v872 = vand.u32 %v157, 4294901760
    %v873 = vsub.f32 %v157, %v872
    %v874 = vand.u32 %v873, 4294901760
    %v875 = vsub.f32 %v873, %v874
    %v876 = vand.u32 %v875, 4294901760
    %877 = vmatprep.subr.mxu0 %v876
    %v878 = vand.u32 %v156, 4294901760
    %v879 = vsub.f32 %v156, %v878
    %v880 = vand.u32 %v879, 4294901760
    %v881 = vsub.f32 %v879, %v880
    %v882 = vand.u32 %v881, 4294901760
    %883 = vmatpush1.msra.mxu0 %v882
    %884 = vmatprep.subr.mxu0 0.0
    %885 = vmatpush1.msra.mxu0 0.0
    %886 = vmatprep.subr.mxu0 0.0
    %887 = vmatpush1.msra.mxu0 0.0
    %888 = vmatprep.subr.mxu0 0.0
    %889 = vmatpush1.msra.mxu0 0.0
    %890 = vmatprep.subr.mxu0 0.0
    %891 = vmatpush1.msra.mxu0 0.0
    %892 = vmatprep.subr.mxu0 0.0
    %893 = vmatpush1.msra.mxu0 0.0
    %894 = vmatprep.subr.mxu0 0.0
    %895 = vmatpush1.msra.mxu0 0.0
    %896 = vmatprep.subr.mxu0 0.0
    %897 = vmatpush1.msra.mxu0 0.0
    %898 = vmatprep.subr.mxu0 0.0
    %899 = vmatpush1.msra.mxu0 0.0
    %900 = vmatprep.subr.mxu0 0.0
    %901 = vmatpush1.msra.mxu0 0.0
    %902 = vmatprep.subr.mxu0 0.0
    %903 = vmatpush1.msra.mxu0 0.0
    %904 = vmatprep.subr.mxu0 0.0
    %905 = vmatpush1.msra.mxu0 0.0
    %906 = vmatprep.subr.mxu0 0.0
    %907 = vmatpush1.msra.mxu0 0.0
    %v908 = vand.u32 %v160, 4294901760
    %909 = vmatprep.mubr.f32.mxu0 %v908
    %v910 = vand.u32 %v46, 4294901760
    %911 = vmatmul.mubr.f32.gmra.mrb[0].mxu0 %v910
    %v912 = vpop.f32.mrb[0].mxu0
    %v913 = vadd.f32 %v336, %v912
    %v914 = vpop.f32.mrb[0].mxu0
    %v915 = vadd.f32 %v338, %v914
    %v916 = vand.u32 %v163, 4294901760
    %917 = vmatprep.mubr.f32.mxu0 %v916
    %v918 = vand.u32 %v48, 4294901760
    %919 = vmatmul.mubr.f32.gmra.mrb[0].mxu0 %v918
    %v920 = vpop.f32.mrb[0].mxu0
    %v921 = vadd.f32 %v352, %v920
    %v922 = vpop.f32.mrb[0].mxu0
    %v923 = vadd.f32 %v354, %v922
    %v924 = vand.u32 %v166, 4294901760
    %925 = vmatprep.mubr.f32.mxu0 %v924
    %v926 = vand.u32 %v50, 4294901760
    %927 = vmatmul.mubr.f32.gmra.mrb[0].mxu0 %v926
    %v928 = vpop.f32.mrb[0].mxu0
    %v929 = vadd.f32 %v368, %v928
    %v930 = vpop.f32.mrb[0].mxu0
    %v931 = vadd.f32 %v370, %v930
    %v932 = vand.u32 %v169, 4294901760
    %933 = vmatprep.mubr.f32.mxu0 %v932
    %v934 = vand.u32 %v52, 4294901760
    %935 = vmatmul.mubr.f32.gmra.mrb[0].mxu0 %v934
    %v936 = vpop.f32.mrb[0].mxu0
    %v937 = vadd.f32 %v384, %v936
    %v938 = vpop.f32.mrb[0].mxu0
    %v939 = vadd.f32 %v386, %v938
    %v940 = vand.u32 %v172, 4294901760
    %941 = vmatprep.mubr.f32.mxu0 %v940
    %v942 = vand.u32 %v54, 4294901760
    %943 = vmatmul.mubr.f32.gmra.mrb[0].mxu0 %v942
    %v944 = vpop.f32.mrb[0].mxu0
    %v945 = vadd.f32 %v400, %v944
    %v946 = vpop.f32.mrb[0].mxu0
    %v947 = vadd.f32 %v402, %v946
    %v948 = vand.u32 %v175, 4294901760
    %949 = vmatprep.mubr.f32.mxu0 %v948
    %v950 = vand.u32 %v56, 4294901760
    %951 = vmatmul.mubr.f32.gmra.mrb[0].mxu0 %v950
    %v952 = vpop.f32.mrb[0].mxu0
    %v953 = vadd.f32 %v416, %v952
    %v954 = vpop.f32.mrb[0].mxu0
    %v955 = vadd.f32 %v418, %v954
    %v956 = vand.u32 %v178, 4294901760
    %957 = vmatprep.mubr.f32.mxu0 %v956
    %v958 = vand.u32 %v58, 4294901760
    %959 = vmatmul.mubr.f32.gmra.mrb[0].mxu0 %v958
    %v960 = vpop.f32.mrb[0].mxu0
    %v961 = vadd.f32 %v432, %v960
    %v962 = vpop.f32.mrb[0].mxu0
    %v963 = vadd.f32 %v434, %v962
    %v964 = vand.u32 %v181, 4294901760
    %965 = vmatprep.mubr.f32.mxu0 %v964
    %v966 = vand.u32 %v60, 4294901760
    %967 = vmatmul.mubr.f32.gmra.mrb[0].mxu0 %v966
    %v968 = vpop.f32.mrb[0].mxu0
    %v969 = vadd.f32 %v448, %v968
    %v970 = vpop.f32.mrb[0].mxu0
    %v971 = vadd.f32 %v450, %v970
    %v972 = vand.u32 %v184, 4294901760
    %973 = vmatprep.mubr.f32.mxu0 %v972
    %v974 = vand.u32 %v62, 4294901760
    %975 = vmatmul.mubr.f32.gmra.mrb[0].mxu0 %v974
    %v976 = vpop.f32.mrb[0].mxu0
    %v977 = vadd.f32 %v464, %v976
    %v978 = vpop.f32.mrb[0].mxu0
    %v979 = vadd.f32 %v466, %v978
    %v980 = vand.u32 %v187, 4294901760
    %981 = vmatprep.mubr.f32.mxu0 %v980
    %v982 = vand.u32 %v64, 4294901760
    %983 = vmatmul.mubr.f32.gmra.mrb[0].mxu0 %v982
    %v984 = vpop.f32.mrb[0].mxu0
    %v985 = vadd.f32 %v480, %v984
    %v986 = vpop.f32.mrb[0].mxu0
    %v987 = vadd.f32 %v482, %v986
    %v988 = vand.u32 %v190, 4294901760
    %989 = vmatprep.mubr.f32.mxu0 %v988
    %v990 = vand.u32 %v66, 4294901760
    %991 = vmatmul.mubr.f32.gmra.mrb[0].mxu0 %v990
    %v992 = vpop.f32.mrb[0].mxu0
    %v993 = vadd.f32 %v496, %v992
    %v994 = vpop.f32.mrb[0].mxu0
    %v995 = vadd.f32 %v498, %v994
    %v996 = vand.u32 %v193, 4294901760
    %997 = vmatprep.mubr.f32.mxu0 %v996
    %v998 = vand.u32 %v68, 4294901760
    %999 = vmatmul.mubr.f32.gmra.mrb[0].mxu0 %v998
    %v1000 = vpop.f32.mrb[0].mxu0
    %v1001 = vadd.f32 %v512, %v1000
    %v1002 = vpop.f32.mrb[0].mxu0
    %v1003 = vadd.f32 %v514, %v1002
    %v1004 = vand.u32 %v196, 4294901760
    %1005 = vmatprep.mubr.f32.mxu0 %v1004
    %v1006 = vand.u32 %v70, 4294901760
    %1007 = vmatmul.mubr.f32.gmra.mrb[0].mxu0 %v1006
    %v1008 = vpop.f32.mrb[0].mxu0
    %v1009 = vadd.f32 %v528, %v1008
    %v1010 = vpop.f32.mrb[0].mxu0
    %v1011 = vadd.f32 %v530, %v1010
    %v1012 = vand.u32 %v199, 4294901760
    %1013 = vmatprep.mubr.f32.mxu0 %v1012
    %v1014 = vand.u32 %v72, 4294901760
    %1015 = vmatmul.mubr.f32.gmra.mrb[0].mxu0 %v1014
    %v1016 = vpop.f32.mrb[0].mxu0
    %v1017 = vadd.f32 %v544, %v1016
    %v1018 = vpop.f32.mrb[0].mxu0
    %v1019 = vadd.f32 %v546, %v1018
    %v1020 = vand.u32 %v202, 4294901760
    %1021 = vmatprep.mubr.f32.mxu0 %v1020
    %v1022 = vand.u32 %v74, 4294901760
    %1023 = vmatmul.mubr.f32.gmra.mrb[0].mxu0 %v1022
    %v1024 = vpop.f32.mrb[0].mxu0
    %v1025 = vadd.f32 %v560, %v1024
    %v1026 = vpop.f32.mrb[0].mxu0
    %v1027 = vadd.f32 %v562, %v1026
    %v1028 = vand.u32 %v205, 4294901760
    %1029 = vmatprep.mubr.f32.mxu0 %v1028
    %v1030 = vand.u32 %v76, 4294901760
    %1031 = vmatmul.mubr.f32.gmra.mrb[0].mxu0 %v1030
    %v1032 = vpop.f32.mrb[0].mxu0
    %v1033 = vadd.f32 %v576, %v1032
    %v1034 = vpop.f32.mrb[0].mxu0
    %v1035 = vadd.f32 %v578, %v1034
    %v1036 = vand.u32 %v208, 4294901760
    %1037 = vmatprep.mubr.f32.mxu0 %v1036
    %v1038 = vand.u32 %v78, 4294901760
    %1039 = vmatmul.mubr.f32.gmra.mrb[0].mxu0 %v1038
    %v1040 = vpop.f32.mrb[0].mxu0
    %v1041 = vadd.f32 %v592, %v1040
    %v1042 = vpop.f32.mrb[0].mxu0
    %v1043 = vadd.f32 %v594, %v1042
    %v1044 = vand.u32 %v211, 4294901760
    %1045 = vmatprep.mubr.f32.mxu0 %v1044
    %v1046 = vand.u32 %v80, 4294901760
    %1047 = vmatmul.mubr.f32.gmra.mrb[0].mxu0 %v1046
    %v1048 = vpop.f32.mrb[0].mxu0
    %v1049 = vadd.f32 %v608, %v1048
    %v1050 = vpop.f32.mrb[0].mxu0
    %v1051 = vadd.f32 %v610, %v1050
    %v1052 = vand.u32 %v214, 4294901760
    %1053 = vmatprep.mubr.f32.mxu0 %v1052
    %v1054 = vand.u32 %v82, 4294901760
    %1055 = vmatmul.mubr.f32.gmra.mrb[0].mxu0 %v1054
    %v1056 = vpop.f32.mrb[0].mxu0
    %v1057 = vadd.f32 %v624, %v1056
    %v1058 = vpop.f32.mrb[0].mxu0
    %v1059 = vadd.f32 %v626, %v1058
    %v1060 = vand.u32 %v217, 4294901760
    %1061 = vmatprep.mubr.f32.mxu0 %v1060
    %v1062 = vand.u32 %v84, 4294901760
    %1063 = vmatmul.mubr.f32.gmra.mrb[0].mxu0 %v1062
    %v1064 = vpop.f32.mrb[0].mxu0
    %v1065 = vadd.f32 %v640, %v1064
    %v1066 = vpop.f32.mrb[0].mxu0
    %v1067 = vadd.f32 %v642, %v1066
    %1068 = vdwg.mxu0
    %v1069 = vand.u32 %v31, 4294901760
    %v1070 = vsub.f32 %v31, %v1069
    %1071 = vmatprep.subr.mxu0 %v1070
    %v1072 = vand.u32 %v30, 4294901760
    %v1073 = vsub.f32 %v30, %v1072
    %1074 = vmatpush1.msra.mxu0 %v1073
    %v1075 = vand.u32 %v33, 4294901760
    %v1076 = vsub.f32 %v33, %v1075
    %1077 = vmatprep.subr.mxu0 %v1076
    %v1078 = vand.u32 %v32, 4294901760
    %v1079 = vsub.f32 %v32, %v1078
    %1080 = vmatpush1.msra.mxu0 %v1079
    %v1081 = vand.u32 %v35, 4294901760
    %v1082 = vsub.f32 %v35, %v1081
    %1083 = vmatprep.subr.mxu0 %v1082
    %v1084 = vand.u32 %v34, 4294901760
    %v1085 = vsub.f32 %v34, %v1084
    %1086 = vmatpush1.msra.mxu0 %v1085
    %v1087 = vand.u32 %v37, 4294901760
    %v1088 = vsub.f32 %v37, %v1087
    %1089 = vmatprep.subr.mxu0 %v1088
    %v1090 = vand.u32 %v36, 4294901760
    %v1091 = vsub.f32 %v36, %v1090
    %1092 = vmatpush1.msra.mxu0 %v1091
    %v1093 = vand.u32 %v39, 4294901760
    %v1094 = vsub.f32 %v39, %v1093
    %1095 = vmatprep.subr.mxu0 %v1094
    %v1096 = vand.u32 %v38, 4294901760
    %v1097 = vsub.f32 %v38, %v1096
    %1098 = vmatpush1.msra.mxu0 %v1097
    %v1099 = vand.u32 %v41, 4294901760
    %v1100 = vsub.f32 %v41, %v1099
    %1101 = vmatprep.subr.mxu0 %v1100
    %v1102 = vand.u32 %v40, 4294901760
    %v1103 = vsub.f32 %v40, %v1102
    %1104 = vmatpush1.msra.mxu0 %v1103
    %v1105 = vand.u32 %v43, 4294901760
    %v1106 = vsub.f32 %v43, %v1105
    %1107 = vmatprep.subr.mxu0 %v1106
    %v1108 = vand.u32 %v42, 4294901760
    %v1109 = vsub.f32 %v42, %v1108
    %1110 = vmatpush1.msra.mxu0 %v1109
    %v1111 = vand.u32 %v45, 4294901760
    %v1112 = vsub.f32 %v45, %v1111
    %1113 = vmatprep.subr.mxu0 %v1112
    %v1114 = vand.u32 %v44, 4294901760
    %v1115 = vsub.f32 %v44, %v1114
    %1116 = vmatpush1.msra.mxu0 %v1115
    %v1117 = vand.u32 %v135, 4294901760
    %v1118 = vsub.f32 %v135, %v1117
    %1119 = vmatprep.subr.mxu0 %v1118
    %v1120 = vand.u32 %v134, 4294901760
    %v1121 = vsub.f32 %v134, %v1120
    %1122 = vmatpush1.msra.mxu0 %v1121
    %v1123 = vand.u32 %v137, 4294901760
    %v1124 = vsub.f32 %v137, %v1123
    %1125 = vmatprep.subr.mxu0 %v1124
    %v1126 = vand.u32 %v136, 4294901760
    %v1127 = vsub.f32 %v136, %v1126
    %1128 = vmatpush1.msra.mxu0 %v1127
    %v1129 = vand.u32 %v139, 4294901760
    %v1130 = vsub.f32 %v139, %v1129
    %1131 = vmatprep.subr.mxu0 %v1130
    %v1132 = vand.u32 %v138, 4294901760
    %v1133 = vsub.f32 %v138, %v1132
    %1134 = vmatpush1.msra.mxu0 %v1133
    %v1135 = vand.u32 %v141, 4294901760
    %v1136 = vsub.f32 %v141, %v1135
    %1137 = vmatprep.subr.mxu0 %v1136
    %v1138 = vand.u32 %v140, 4294901760
    %v1139 = vsub.f32 %v140, %v1138
    %1140 = vmatpush1.msra.mxu0 %v1139
    %v1141 = vand.u32 %v143, 4294901760
    %v1142 = vsub.f32 %v143, %v1141
    %1143 = vmatprep.subr.mxu0 %v1142
    %v1144 = vand.u32 %v142, 4294901760
    %v1145 = vsub.f32 %v142, %v1144
    %1146 = vmatpush1.msra.mxu0 %v1145
    %v1147 = vand.u32 %v145, 4294901760
    %v1148 = vsub.f32 %v145, %v1147
    %1149 = vmatprep.subr.mxu0 %v1148
    %v1150 = vand.u32 %v144, 4294901760
    %v1151 = vsub.f32 %v144, %v1150
    %1152 = vmatpush1.msra.mxu0 %v1151
    %v1153 = vand.u32 %v147, 4294901760
    %v1154 = vsub.f32 %v147, %v1153
    %1155 = vmatprep.subr.mxu0 %v1154
    %v1156 = vand.u32 %v146, 4294901760
    %v1157 = vsub.f32 %v146, %v1156
    %1158 = vmatpush1.msra.mxu0 %v1157
    %v1159 = vand.u32 %v149, 4294901760
    %v1160 = vsub.f32 %v149, %v1159
    %1161 = vmatprep.subr.mxu0 %v1160
    %v1162 = vand.u32 %v148, 4294901760
    %v1163 = vsub.f32 %v148, %v1162
    %1164 = vmatpush1.msra.mxu0 %v1163
    %v1165 = vand.u32 %v151, 4294901760
    %v1166 = vsub.f32 %v151, %v1165
    %1167 = vmatprep.subr.mxu0 %v1166
    %v1168 = vand.u32 %v150, 4294901760
    %v1169 = vsub.f32 %v150, %v1168
    %1170 = vmatpush1.msra.mxu0 %v1169
    %v1171 = vand.u32 %v153, 4294901760
    %v1172 = vsub.f32 %v153, %v1171
    %1173 = vmatprep.subr.mxu0 %v1172
    %v1174 = vand.u32 %v152, 4294901760
    %v1175 = vsub.f32 %v152, %v1174
    %1176 = vmatpush1.msra.mxu0 %v1175
    %v1177 = vand.u32 %v155, 4294901760
    %v1178 = vsub.f32 %v155, %v1177
    %1179 = vmatprep.subr.mxu0 %v1178
    %v1180 = vand.u32 %v154, 4294901760
    %v1181 = vsub.f32 %v154, %v1180
    %1182 = vmatpush1.msra.mxu0 %v1181
    %v1183 = vand.u32 %v157, 4294901760
    %v1184 = vsub.f32 %v157, %v1183
    %1185 = vmatprep.subr.mxu0 %v1184
    %v1186 = vand.u32 %v156, 4294901760
    %v1187 = vsub.f32 %v156, %v1186
    %1188 = vmatpush1.msra.mxu0 %v1187
    %1189 = vmatprep.subr.mxu0 0.0
    %1190 = vmatpush1.msra.mxu0 0.0
    %1191 = vmatprep.subr.mxu0 0.0
    %1192 = vmatpush1.msra.mxu0 0.0
    %1193 = vmatprep.subr.mxu0 0.0
    %1194 = vmatpush1.msra.mxu0 0.0
    %1195 = vmatprep.subr.mxu0 0.0
    %1196 = vmatpush1.msra.mxu0 0.0
    %1197 = vmatprep.subr.mxu0 0.0
    %1198 = vmatpush1.msra.mxu0 0.0
    %1199 = vmatprep.subr.mxu0 0.0
    %1200 = vmatpush1.msra.mxu0 0.0
    %1201 = vmatprep.subr.mxu0 0.0
    %1202 = vmatpush1.msra.mxu0 0.0
    %1203 = vmatprep.subr.mxu0 0.0
    %1204 = vmatpush1.msra.mxu0 0.0
    %1205 = vmatprep.subr.mxu0 0.0
    %1206 = vmatpush1.msra.mxu0 0.0
    %1207 = vmatprep.subr.mxu0 0.0
    %1208 = vmatpush1.msra.mxu0 0.0
    %1209 = vmatprep.subr.mxu0 0.0
    %1210 = vmatpush1.msra.mxu0 0.0
    %1211 = vmatprep.subr.mxu0 0.0
    %1212 = vmatpush1.msra.mxu0 0.0
    %v1213 = vand.u32 %v160, 4294901760
    %v1214 = vsub.f32 %v160, %v1213
    %1215 = vmatprep.mubr.f32.mxu0 %v1214
    %v1216 = vand.u32 %v46, 4294901760
    %v1217 = vsub.f32 %v46, %v1216
    %1218 = vmatmul.mubr.f32.gmra.mrb[0].mxu0 %v1217
    %v1219 = vpop.f32.mrb[0].mxu0
    %v1220 = vadd.f32 %v913, %v1219
    %v1221 = vpop.f32.mrb[0].mxu0
    %v1222 = vadd.f32 %v915, %v1221
    %v1223 = vand.u32 %v163, 4294901760
    %v1224 = vsub.f32 %v163, %v1223
    %1225 = vmatprep.mubr.f32.mxu0 %v1224
    %v1226 = vand.u32 %v48, 4294901760
    %v1227 = vsub.f32 %v48, %v1226
    %1228 = vmatmul.mubr.f32.gmra.mrb[0].mxu0 %v1227
    %v1229 = vpop.f32.mrb[0].mxu0
    %v1230 = vadd.f32 %v921, %v1229
    %v1231 = vpop.f32.mrb[0].mxu0
    %v1232 = vadd.f32 %v923, %v1231
    %v1233 = vand.u32 %v166, 4294901760
    %v1234 = vsub.f32 %v166, %v1233
    %1235 = vmatprep.mubr.f32.mxu0 %v1234
    %v1236 = vand.u32 %v50, 4294901760
    %v1237 = vsub.f32 %v50, %v1236
    %1238 = vmatmul.mubr.f32.gmra.mrb[0].mxu0 %v1237
    %v1239 = vpop.f32.mrb[0].mxu0
    %v1240 = vadd.f32 %v929, %v1239
    %v1241 = vpop.f32.mrb[0].mxu0
    %v1242 = vadd.f32 %v931, %v1241
    %v1243 = vand.u32 %v169, 4294901760
    %v1244 = vsub.f32 %v169, %v1243
    %1245 = vmatprep.mubr.f32.mxu0 %v1244
    %v1246 = vand.u32 %v52, 4294901760
    %v1247 = vsub.f32 %v52, %v1246
    %1248 = vmatmul.mubr.f32.gmra.mrb[0].mxu0 %v1247
    %v1249 = vpop.f32.mrb[0].mxu0
    %v1250 = vadd.f32 %v937, %v1249
    %v1251 = vpop.f32.mrb[0].mxu0
    %v1252 = vadd.f32 %v939, %v1251
    %v1253 = vand.u32 %v172, 4294901760
    %v1254 = vsub.f32 %v172, %v1253
    %1255 = vmatprep.mubr.f32.mxu0 %v1254
    %v1256 = vand.u32 %v54, 4294901760
    %v1257 = vsub.f32 %v54, %v1256
    %1258 = vmatmul.mubr.f32.gmra.mrb[0].mxu0 %v1257
    %v1259 = vpop.f32.mrb[0].mxu0
    %v1260 = vadd.f32 %v945, %v1259
    %v1261 = vpop.f32.mrb[0].mxu0
    %v1262 = vadd.f32 %v947, %v1261
    %v1263 = vand.u32 %v175, 4294901760
    %v1264 = vsub.f32 %v175, %v1263
    %1265 = vmatprep.mubr.f32.mxu0 %v1264
    %v1266 = vand.u32 %v56, 4294901760
    %v1267 = vsub.f32 %v56, %v1266
    %1268 = vmatmul.mubr.f32.gmra.mrb[0].mxu0 %v1267
    %v1269 = vpop.f32.mrb[0].mxu0
    %v1270 = vadd.f32 %v953, %v1269
    %v1271 = vpop.f32.mrb[0].mxu0
    %v1272 = vadd.f32 %v955, %v1271
    %v1273 = vand.u32 %v178, 4294901760
    %v1274 = vsub.f32 %v178, %v1273
    %1275 = vmatprep.mubr.f32.mxu0 %v1274
    %v1276 = vand.u32 %v58, 4294901760
    %v1277 = vsub.f32 %v58, %v1276
    %1278 = vmatmul.mubr.f32.gmra.mrb[0].mxu0 %v1277
    %v1279 = vpop.f32.mrb[0].mxu0
    %v1280 = vadd.f32 %v961, %v1279
    %v1281 = vpop.f32.mrb[0].mxu0
    %v1282 = vadd.f32 %v963, %v1281
    %v1283 = vand.u32 %v181, 4294901760
    %v1284 = vsub.f32 %v181, %v1283
    %1285 = vmatprep.mubr.f32.mxu0 %v1284
    %v1286 = vand.u32 %v60, 4294901760
    %v1287 = vsub.f32 %v60, %v1286
    %1288 = vmatmul.mubr.f32.gmra.mrb[0].mxu0 %v1287
    %v1289 = vpop.f32.mrb[0].mxu0
    %v1290 = vadd.f32 %v969, %v1289
    %v1291 = vpop.f32.mrb[0].mxu0
    %v1292 = vadd.f32 %v971, %v1291
    %v1293 = vand.u32 %v184, 4294901760
    %v1294 = vsub.f32 %v184, %v1293
    %1295 = vmatprep.mubr.f32.mxu0 %v1294
    %v1296 = vand.u32 %v62, 4294901760
    %v1297 = vsub.f32 %v62, %v1296
    %1298 = vmatmul.mubr.f32.gmra.mrb[0].mxu0 %v1297
    %v1299 = vpop.f32.mrb[0].mxu0
    %v1300 = vadd.f32 %v977, %v1299
    %v1301 = vpop.f32.mrb[0].mxu0
    %v1302 = vadd.f32 %v979, %v1301
    %v1303 = vand.u32 %v187, 4294901760
    %v1304 = vsub.f32 %v187, %v1303
    %1305 = vmatprep.mubr.f32.mxu0 %v1304
    %v1306 = vand.u32 %v64, 4294901760
    %v1307 = vsub.f32 %v64, %v1306
    %1308 = vmatmul.mubr.f32.gmra.mrb[0].mxu0 %v1307
    %v1309 = vpop.f32.mrb[0].mxu0
    %v1310 = vadd.f32 %v985, %v1309
    %v1311 = vpop.f32.mrb[0].mxu0
    %v1312 = vadd.f32 %v987, %v1311
    %v1313 = vand.u32 %v190, 4294901760
    %v1314 = vsub.f32 %v190, %v1313
    %1315 = vmatprep.mubr.f32.mxu0 %v1314
    %v1316 = vand.u32 %v66, 4294901760
    %v1317 = vsub.f32 %v66, %v1316
    %1318 = vmatmul.mubr.f32.gmra.mrb[0].mxu0 %v1317
    %v1319 = vpop.f32.mrb[0].mxu0
    %v1320 = vadd.f32 %v993, %v1319
    %v1321 = vpop.f32.mrb[0].mxu0
    %v1322 = vadd.f32 %v995, %v1321
    %v1323 = vand.u32 %v193, 4294901760
    %v1324 = vsub.f32 %v193, %v1323
    %1325 = vmatprep.mubr.f32.mxu0 %v1324
    %v1326 = vand.u32 %v68, 4294901760
    %v1327 = vsub.f32 %v68, %v1326
    %1328 = vmatmul.mubr.f32.gmra.mrb[0].mxu0 %v1327
    %v1329 = vpop.f32.mrb[0].mxu0
    %v1330 = vadd.f32 %v1001, %v1329
    %v1331 = vpop.f32.mrb[0].mxu0
    %v1332 = vadd.f32 %v1003, %v1331
    %v1333 = vand.u32 %v196, 4294901760
    %v1334 = vsub.f32 %v196, %v1333
    %1335 = vmatprep.mubr.f32.mxu0 %v1334
    %v1336 = vand.u32 %v70, 4294901760
    %v1337 = vsub.f32 %v70, %v1336
    %1338 = vmatmul.mubr.f32.gmra.mrb[0].mxu0 %v1337
    %v1339 = vpop.f32.mrb[0].mxu0
    %v1340 = vadd.f32 %v1009, %v1339
    %v1341 = vpop.f32.mrb[0].mxu0
    %v1342 = vadd.f32 %v1011, %v1341
    %v1343 = vand.u32 %v199, 4294901760
    %v1344 = vsub.f32 %v199, %v1343
    %1345 = vmatprep.mubr.f32.mxu0 %v1344
    %v1346 = vand.u32 %v72, 4294901760
    %v1347 = vsub.f32 %v72, %v1346
    %1348 = vmatmul.mubr.f32.gmra.mrb[0].mxu0 %v1347
    %v1349 = vpop.f32.mrb[0].mxu0
    %v1350 = vadd.f32 %v1017, %v1349
    %v1351 = vpop.f32.mrb[0].mxu0
    %v1352 = vadd.f32 %v1019, %v1351
    %v1353 = vand.u32 %v202, 4294901760
    %v1354 = vsub.f32 %v202, %v1353
    %1355 = vmatprep.mubr.f32.mxu0 %v1354
    %v1356 = vand.u32 %v74, 4294901760
    %v1357 = vsub.f32 %v74, %v1356
    %1358 = vmatmul.mubr.f32.gmra.mrb[0].mxu0 %v1357
    %v1359 = vpop.f32.mrb[0].mxu0
    %v1360 = vadd.f32 %v1025, %v1359
    %v1361 = vpop.f32.mrb[0].mxu0
    %v1362 = vadd.f32 %v1027, %v1361
    %v1363 = vand.u32 %v205, 4294901760
    %v1364 = vsub.f32 %v205, %v1363
    %1365 = vmatprep.mubr.f32.mxu0 %v1364
    %v1366 = vand.u32 %v76, 4294901760
    %v1367 = vsub.f32 %v76, %v1366
    %1368 = vmatmul.mubr.f32.gmra.mrb[0].mxu0 %v1367
    %v1369 = vpop.f32.mrb[0].mxu0
    %v1370 = vadd.f32 %v1033, %v1369
    %v1371 = vpop.f32.mrb[0].mxu0
    %v1372 = vadd.f32 %v1035, %v1371
    %v1373 = vand.u32 %v208, 4294901760
    %v1374 = vsub.f32 %v208, %v1373
    %1375 = vmatprep.mubr.f32.mxu0 %v1374
    %v1376 = vand.u32 %v78, 4294901760
    %v1377 = vsub.f32 %v78, %v1376
    %1378 = vmatmul.mubr.f32.gmra.mrb[0].mxu0 %v1377
    %v1379 = vpop.f32.mrb[0].mxu0
    %v1380 = vadd.f32 %v1041, %v1379
    %v1381 = vpop.f32.mrb[0].mxu0
    %v1382 = vadd.f32 %v1043, %v1381
    %v1383 = vand.u32 %v211, 4294901760
    %v1384 = vsub.f32 %v211, %v1383
    %1385 = vmatprep.mubr.f32.mxu0 %v1384
    %v1386 = vand.u32 %v80, 4294901760
    %v1387 = vsub.f32 %v80, %v1386
    %1388 = vmatmul.mubr.f32.gmra.mrb[0].mxu0 %v1387
    %v1389 = vpop.f32.mrb[0].mxu0
    %v1390 = vadd.f32 %v1049, %v1389
    %v1391 = vpop.f32.mrb[0].mxu0
    %v1392 = vadd.f32 %v1051, %v1391
    %v1393 = vand.u32 %v214, 4294901760
    %v1394 = vsub.f32 %v214, %v1393
    %1395 = vmatprep.mubr.f32.mxu0 %v1394
    %v1396 = vand.u32 %v82, 4294901760
    %v1397 = vsub.f32 %v82, %v1396
    %1398 = vmatmul.mubr.f32.gmra.mrb[0].mxu0 %v1397
    %v1399 = vpop.f32.mrb[0].mxu0
    %v1400 = vadd.f32 %v1057, %v1399
    %v1401 = vpop.f32.mrb[0].mxu0
    %v1402 = vadd.f32 %v1059, %v1401
    %v1403 = vand.u32 %v217, 4294901760
    %v1404 = vsub.f32 %v217, %v1403
    %1405 = vmatprep.mubr.f32.mxu0 %v1404
    %v1406 = vand.u32 %v84, 4294901760
    %v1407 = vsub.f32 %v84, %v1406
    %1408 = vmatmul.mubr.f32.gmra.mrb[0].mxu0 %v1407
    %v1409 = vpop.f32.mrb[0].mxu0
    %v1410 = vadd.f32 %v1065, %v1409
    %v1411 = vpop.f32.mrb[0].mxu0
    %v1412 = vadd.f32 %v1067, %v1411
    %1413 = vdwg.mxu0
    %v1414 = vand.u32 %v31, 4294901760
    %1415 = vmatprep.subr.mxu0 %v1414
    %v1416 = vand.u32 %v30, 4294901760
    %1417 = vmatpush1.msra.mxu0 %v1416
    %v1418 = vand.u32 %v33, 4294901760
    %1419 = vmatprep.subr.mxu0 %v1418
    %v1420 = vand.u32 %v32, 4294901760
    %1421 = vmatpush1.msra.mxu0 %v1420
    %v1422 = vand.u32 %v35, 4294901760
    %1423 = vmatprep.subr.mxu0 %v1422
    %v1424 = vand.u32 %v34, 4294901760
    %1425 = vmatpush1.msra.mxu0 %v1424
    %v1426 = vand.u32 %v37, 4294901760
    %1427 = vmatprep.subr.mxu0 %v1426
    %v1428 = vand.u32 %v36, 4294901760
    %1429 = vmatpush1.msra.mxu0 %v1428
    %v1430 = vand.u32 %v39, 4294901760
    %1431 = vmatprep.subr.mxu0 %v1430
    %v1432 = vand.u32 %v38, 4294901760
    %1433 = vmatpush1.msra.mxu0 %v1432
    %v1434 = vand.u32 %v41, 4294901760
    %1435 = vmatprep.subr.mxu0 %v1434
    %v1436 = vand.u32 %v40, 4294901760
    %1437 = vmatpush1.msra.mxu0 %v1436
    %v1438 = vand.u32 %v43, 4294901760
    %1439 = vmatprep.subr.mxu0 %v1438
    %v1440 = vand.u32 %v42, 4294901760
    %1441 = vmatpush1.msra.mxu0 %v1440
    %v1442 = vand.u32 %v45, 4294901760
    %1443 = vmatprep.subr.mxu0 %v1442
    %v1444 = vand.u32 %v44, 4294901760
    %1445 = vmatpush1.msra.mxu0 %v1444
    %v1446 = vand.u32 %v135, 4294901760
    %1447 = vmatprep.subr.mxu0 %v1446
    %v1448 = vand.u32 %v134, 4294901760
    %1449 = vmatpush1.msra.mxu0 %v1448
    %v1450 = vand.u32 %v137, 4294901760
    %1451 = vmatprep.subr.mxu0 %v1450
    %v1452 = vand.u32 %v136, 4294901760
    %1453 = vmatpush1.msra.mxu0 %v1452
    %v1454 = vand.u32 %v139, 4294901760
    %1455 = vmatprep.subr.mxu0 %v1454
    %v1456 = vand.u32 %v138, 4294901760
    %1457 = vmatpush1.msra.mxu0 %v1456
    %v1458 = vand.u32 %v141, 4294901760
    %1459 = vmatprep.subr.mxu0 %v1458
    %v1460 = vand.u32 %v140, 4294901760
    %1461 = vmatpush1.msra.mxu0 %v1460
    %v1462 = vand.u32 %v143, 4294901760
    %1463 = vmatprep.subr.mxu0 %v1462
    %v1464 = vand.u32 %v142, 4294901760
    %1465 = vmatpush1.msra.mxu0 %v1464
    %v1466 = vand.u32 %v145, 4294901760
    %1467 = vmatprep.subr.mxu0 %v1466
    %v1468 = vand.u32 %v144, 4294901760
    %1469 = vmatpush1.msra.mxu0 %v1468
    %v1470 = vand.u32 %v147, 4294901760
    %1471 = vmatprep.subr.mxu0 %v1470
    %v1472 = vand.u32 %v146, 4294901760
    %1473 = vmatpush1.msra.mxu0 %v1472
    %v1474 = vand.u32 %v149, 4294901760
    %1475 = vmatprep.subr.mxu0 %v1474
    %v1476 = vand.u32 %v148, 4294901760
    %1477 = vmatpush1.msra.mxu0 %v1476
    %v1478 = vand.u32 %v151, 4294901760
    %1479 = vmatprep.subr.mxu0 %v1478
    %v1480 = vand.u32 %v150, 4294901760
    %1481 = vmatpush1.msra.mxu0 %v1480
    %v1482 = vand.u32 %v153, 4294901760
    %1483 = vmatprep.subr.mxu0 %v1482
    %v1484 = vand.u32 %v152, 4294901760
    %1485 = vmatpush1.msra.mxu0 %v1484
    %v1486 = vand.u32 %v155, 4294901760
    %1487 = vmatprep.subr.mxu0 %v1486
    %v1488 = vand.u32 %v154, 4294901760
    %1489 = vmatpush1.msra.mxu0 %v1488
    %v1490 = vand.u32 %v157, 4294901760
    %1491 = vmatprep.subr.mxu0 %v1490
    %v1492 = vand.u32 %v156, 4294901760
    %1493 = vmatpush1.msra.mxu0 %v1492
    %1494 = vmatprep.subr.mxu0 0.0
    %1495 = vmatpush1.msra.mxu0 0.0
    %1496 = vmatprep.subr.mxu0 0.0
    %1497 = vmatpush1.msra.mxu0 0.0
    %1498 = vmatprep.subr.mxu0 0.0
    %1499 = vmatpush1.msra.mxu0 0.0
    %1500 = vmatprep.subr.mxu0 0.0
    %1501 = vmatpush1.msra.mxu0 0.0
    %1502 = vmatprep.subr.mxu0 0.0
    %1503 = vmatpush1.msra.mxu0 0.0
    %1504 = vmatprep.subr.mxu0 0.0
    %1505 = vmatpush1.msra.mxu0 0.0
    %1506 = vmatprep.subr.mxu0 0.0
    %1507 = vmatpush1.msra.mxu0 0.0
    %1508 = vmatprep.subr.mxu0 0.0
    %1509 = vmatpush1.msra.mxu0 0.0
    %1510 = vmatprep.subr.mxu0 0.0
    %1511 = vmatpush1.msra.mxu0 0.0
    %1512 = vmatprep.subr.mxu0 0.0
    %1513 = vmatpush1.msra.mxu0 0.0
    %1514 = vmatprep.subr.mxu0 0.0
    %1515 = vmatpush1.msra.mxu0 0.0
    %1516 = vmatprep.subr.mxu0 0.0
    %1517 = vmatpush1.msra.mxu0 0.0
    %v1518 = vand.u32 %v160, 4294901760
    %v1519 = vsub.f32 %v160, %v1518
    %v1520 = vand.u32 %v1519, 4294901760
    %1521 = vmatprep.mubr.f32.mxu0 %v1520
    %v1522 = vand.u32 %v46, 4294901760
    %v1523 = vsub.f32 %v46, %v1522
    %v1524 = vand.u32 %v1523, 4294901760
    %1525 = vmatmul.mubr.f32.gmra.mrb[0].mxu0 %v1524
    %v1526 = vpop.f32.mrb[0].mxu0
    %v1527 = vadd.f32 %v1220, %v1526
    %v1528 = vpop.f32.mrb[0].mxu0
    %v1529 = vadd.f32 %v1222, %v1528
    %v1530 = vand.u32 %v163, 4294901760
    %v1531 = vsub.f32 %v163, %v1530
    %v1532 = vand.u32 %v1531, 4294901760
    %1533 = vmatprep.mubr.f32.mxu0 %v1532
    %v1534 = vand.u32 %v48, 4294901760
    %v1535 = vsub.f32 %v48, %v1534
    %v1536 = vand.u32 %v1535, 4294901760
    %1537 = vmatmul.mubr.f32.gmra.mrb[0].mxu0 %v1536
    %v1538 = vpop.f32.mrb[0].mxu0
    %v1539 = vadd.f32 %v1230, %v1538
    %v1540 = vpop.f32.mrb[0].mxu0
    %v1541 = vadd.f32 %v1232, %v1540
    %v1542 = vand.u32 %v166, 4294901760
    %v1543 = vsub.f32 %v166, %v1542
    %v1544 = vand.u32 %v1543, 4294901760
    %1545 = vmatprep.mubr.f32.mxu0 %v1544
    %v1546 = vand.u32 %v50, 4294901760
    %v1547 = vsub.f32 %v50, %v1546
    %v1548 = vand.u32 %v1547, 4294901760
    %1549 = vmatmul.mubr.f32.gmra.mrb[0].mxu0 %v1548
    %v1550 = vpop.f32.mrb[0].mxu0
    %v1551 = vadd.f32 %v1240, %v1550
    %v1552 = vpop.f32.mrb[0].mxu0
    %v1553 = vadd.f32 %v1242, %v1552
    %v1554 = vand.u32 %v169, 4294901760
    %v1555 = vsub.f32 %v169, %v1554
    %v1556 = vand.u32 %v1555, 4294901760
    %1557 = vmatprep.mubr.f32.mxu0 %v1556
    %v1558 = vand.u32 %v52, 4294901760
    %v1559 = vsub.f32 %v52, %v1558
    %v1560 = vand.u32 %v1559, 4294901760
    %1561 = vmatmul.mubr.f32.gmra.mrb[0].mxu0 %v1560
    %v1562 = vpop.f32.mrb[0].mxu0
    %v1563 = vadd.f32 %v1250, %v1562
    %v1564 = vpop.f32.mrb[0].mxu0
    %v1565 = vadd.f32 %v1252, %v1564
    %v1566 = vand.u32 %v172, 4294901760
    %v1567 = vsub.f32 %v172, %v1566
    %v1568 = vand.u32 %v1567, 4294901760
    %1569 = vmatprep.mubr.f32.mxu0 %v1568
    %v1570 = vand.u32 %v54, 4294901760
    %v1571 = vsub.f32 %v54, %v1570
    %v1572 = vand.u32 %v1571, 4294901760
    %1573 = vmatmul.mubr.f32.gmra.mrb[0].mxu0 %v1572
    %v1574 = vpop.f32.mrb[0].mxu0
    %v1575 = vadd.f32 %v1260, %v1574
    %v1576 = vpop.f32.mrb[0].mxu0
    %v1577 = vadd.f32 %v1262, %v1576
    %v1578 = vand.u32 %v175, 4294901760
    %v1579 = vsub.f32 %v175, %v1578
    %v1580 = vand.u32 %v1579, 4294901760
    %1581 = vmatprep.mubr.f32.mxu0 %v1580
    %v1582 = vand.u32 %v56, 4294901760
    %v1583 = vsub.f32 %v56, %v1582
    %v1584 = vand.u32 %v1583, 4294901760
    %1585 = vmatmul.mubr.f32.gmra.mrb[0].mxu0 %v1584
    %v1586 = vpop.f32.mrb[0].mxu0
    %v1587 = vadd.f32 %v1270, %v1586
    %v1588 = vpop.f32.mrb[0].mxu0
    %v1589 = vadd.f32 %v1272, %v1588
    %v1590 = vand.u32 %v178, 4294901760
    %v1591 = vsub.f32 %v178, %v1590
    %v1592 = vand.u32 %v1591, 4294901760
    %1593 = vmatprep.mubr.f32.mxu0 %v1592
    %v1594 = vand.u32 %v58, 4294901760
    %v1595 = vsub.f32 %v58, %v1594
    %v1596 = vand.u32 %v1595, 4294901760
    %1597 = vmatmul.mubr.f32.gmra.mrb[0].mxu0 %v1596
    %v1598 = vpop.f32.mrb[0].mxu0
    %v1599 = vadd.f32 %v1280, %v1598
    %v1600 = vpop.f32.mrb[0].mxu0
    %v1601 = vadd.f32 %v1282, %v1600
    %v1602 = vand.u32 %v181, 4294901760
    %v1603 = vsub.f32 %v181, %v1602
    %v1604 = vand.u32 %v1603, 4294901760
    %1605 = vmatprep.mubr.f32.mxu0 %v1604
    %v1606 = vand.u32 %v60, 4294901760
    %v1607 = vsub.f32 %v60, %v1606
    %v1608 = vand.u32 %v1607, 4294901760
    %1609 = vmatmul.mubr.f32.gmra.mrb[0].mxu0 %v1608
    %v1610 = vpop.f32.mrb[0].mxu0
    %v1611 = vadd.f32 %v1290, %v1610
    %v1612 = vpop.f32.mrb[0].mxu0
    %v1613 = vadd.f32 %v1292, %v1612
    %v1614 = vand.u32 %v184, 4294901760
    %v1615 = vsub.f32 %v184, %v1614
    %v1616 = vand.u32 %v1615, 4294901760
    %1617 = vmatprep.mubr.f32.mxu0 %v1616
    %v1618 = vand.u32 %v62, 4294901760
    %v1619 = vsub.f32 %v62, %v1618
    %v1620 = vand.u32 %v1619, 4294901760
    %1621 = vmatmul.mubr.f32.gmra.mrb[0].mxu0 %v1620
    %v1622 = vpop.f32.mrb[0].mxu0
    %v1623 = vadd.f32 %v1300, %v1622
    %v1624 = vpop.f32.mrb[0].mxu0
    %v1625 = vadd.f32 %v1302, %v1624
    %v1626 = vand.u32 %v187, 4294901760
    %v1627 = vsub.f32 %v187, %v1626
    %v1628 = vand.u32 %v1627, 4294901760
    %1629 = vmatprep.mubr.f32.mxu0 %v1628
    %v1630 = vand.u32 %v64, 4294901760
    %v1631 = vsub.f32 %v64, %v1630
    %v1632 = vand.u32 %v1631, 4294901760
    %1633 = vmatmul.mubr.f32.gmra.mrb[0].mxu0 %v1632
    %v1634 = vpop.f32.mrb[0].mxu0
    %v1635 = vadd.f32 %v1310, %v1634
    %v1636 = vpop.f32.mrb[0].mxu0
    %v1637 = vadd.f32 %v1312, %v1636
    %v1638 = vand.u32 %v190, 4294901760
    %v1639 = vsub.f32 %v190, %v1638
    %v1640 = vand.u32 %v1639, 4294901760
    %1641 = vmatprep.mubr.f32.mxu0 %v1640
    %v1642 = vand.u32 %v66, 4294901760
    %v1643 = vsub.f32 %v66, %v1642
    %v1644 = vand.u32 %v1643, 4294901760
    %1645 = vmatmul.mubr.f32.gmra.mrb[0].mxu0 %v1644
    %v1646 = vpop.f32.mrb[0].mxu0
    %v1647 = vadd.f32 %v1320, %v1646
    %v1648 = vpop.f32.mrb[0].mxu0
    %v1649 = vadd.f32 %v1322, %v1648
    %v1650 = vand.u32 %v193, 4294901760
    %v1651 = vsub.f32 %v193, %v1650
    %v1652 = vand.u32 %v1651, 4294901760
    %1653 = vmatprep.mubr.f32.mxu0 %v1652
    %v1654 = vand.u32 %v68, 4294901760
    %v1655 = vsub.f32 %v68, %v1654
    %v1656 = vand.u32 %v1655, 4294901760
    %1657 = vmatmul.mubr.f32.gmra.mrb[0].mxu0 %v1656
    %v1658 = vpop.f32.mrb[0].mxu0
    %v1659 = vadd.f32 %v1330, %v1658
    %v1660 = vpop.f32.mrb[0].mxu0
    %v1661 = vadd.f32 %v1332, %v1660
    %v1662 = vand.u32 %v196, 4294901760
    %v1663 = vsub.f32 %v196, %v1662
    %v1664 = vand.u32 %v1663, 4294901760
    %1665 = vmatprep.mubr.f32.mxu0 %v1664
    %v1666 = vand.u32 %v70, 4294901760
    %v1667 = vsub.f32 %v70, %v1666
    %v1668 = vand.u32 %v1667, 4294901760
    %1669 = vmatmul.mubr.f32.gmra.mrb[0].mxu0 %v1668
    %v1670 = vpop.f32.mrb[0].mxu0
    %v1671 = vadd.f32 %v1340, %v1670
    %v1672 = vpop.f32.mrb[0].mxu0
    %v1673 = vadd.f32 %v1342, %v1672
    %v1674 = vand.u32 %v199, 4294901760
    %v1675 = vsub.f32 %v199, %v1674
    %v1676 = vand.u32 %v1675, 4294901760
    %1677 = vmatprep.mubr.f32.mxu0 %v1676
    %v1678 = vand.u32 %v72, 4294901760
    %v1679 = vsub.f32 %v72, %v1678
    %v1680 = vand.u32 %v1679, 4294901760
    %1681 = vmatmul.mubr.f32.gmra.mrb[0].mxu0 %v1680
    %v1682 = vpop.f32.mrb[0].mxu0
    %v1683 = vadd.f32 %v1350, %v1682
    %v1684 = vpop.f32.mrb[0].mxu0
    %v1685 = vadd.f32 %v1352, %v1684
    %v1686 = vand.u32 %v202, 4294901760
    %v1687 = vsub.f32 %v202, %v1686
    %v1688 = vand.u32 %v1687, 4294901760
    %1689 = vmatprep.mubr.f32.mxu0 %v1688
    %v1690 = vand.u32 %v74, 4294901760
    %v1691 = vsub.f32 %v74, %v1690
    %v1692 = vand.u32 %v1691, 4294901760
    %1693 = vmatmul.mubr.f32.gmra.mrb[0].mxu0 %v1692
    %v1694 = vpop.f32.mrb[0].mxu0
    %v1695 = vadd.f32 %v1360, %v1694
    %v1696 = vpop.f32.mrb[0].mxu0
    %v1697 = vadd.f32 %v1362, %v1696
    %v1698 = vand.u32 %v205, 4294901760
    %v1699 = vsub.f32 %v205, %v1698
    %v1700 = vand.u32 %v1699, 4294901760
    %1701 = vmatprep.mubr.f32.mxu0 %v1700
    %v1702 = vand.u32 %v76, 4294901760
    %v1703 = vsub.f32 %v76, %v1702
    %v1704 = vand.u32 %v1703, 4294901760
    %1705 = vmatmul.mubr.f32.gmra.mrb[0].mxu0 %v1704
    %v1706 = vpop.f32.mrb[0].mxu0
    %v1707 = vadd.f32 %v1370, %v1706
    %v1708 = vpop.f32.mrb[0].mxu0
    %v1709 = vadd.f32 %v1372, %v1708
    %v1710 = vand.u32 %v208, 4294901760
    %v1711 = vsub.f32 %v208, %v1710
    %v1712 = vand.u32 %v1711, 4294901760
    %1713 = vmatprep.mubr.f32.mxu0 %v1712
    %v1714 = vand.u32 %v78, 4294901760
    %v1715 = vsub.f32 %v78, %v1714
    %v1716 = vand.u32 %v1715, 4294901760
    %1717 = vmatmul.mubr.f32.gmra.mrb[0].mxu0 %v1716
    %v1718 = vpop.f32.mrb[0].mxu0
    %v1719 = vadd.f32 %v1380, %v1718
    %v1720 = vpop.f32.mrb[0].mxu0
    %v1721 = vadd.f32 %v1382, %v1720
    %v1722 = vand.u32 %v211, 4294901760
    %v1723 = vsub.f32 %v211, %v1722
    %v1724 = vand.u32 %v1723, 4294901760
    %1725 = vmatprep.mubr.f32.mxu0 %v1724
    %v1726 = vand.u32 %v80, 4294901760
    %v1727 = vsub.f32 %v80, %v1726
    %v1728 = vand.u32 %v1727, 4294901760
    %1729 = vmatmul.mubr.f32.gmra.mrb[0].mxu0 %v1728
    %v1730 = vpop.f32.mrb[0].mxu0
    %v1731 = vadd.f32 %v1390, %v1730
    %v1732 = vpop.f32.mrb[0].mxu0
    %v1733 = vadd.f32 %v1392, %v1732
    %v1734 = vand.u32 %v214, 4294901760
    %v1735 = vsub.f32 %v214, %v1734
    %v1736 = vand.u32 %v1735, 4294901760
    %1737 = vmatprep.mubr.f32.mxu0 %v1736
    %v1738 = vand.u32 %v82, 4294901760
    %v1739 = vsub.f32 %v82, %v1738
    %v1740 = vand.u32 %v1739, 4294901760
    %1741 = vmatmul.mubr.f32.gmra.mrb[0].mxu0 %v1740
    %v1742 = vpop.f32.mrb[0].mxu0
    %v1743 = vadd.f32 %v1400, %v1742
    %v1744 = vpop.f32.mrb[0].mxu0
    %v1745 = vadd.f32 %v1402, %v1744
    %v1746 = vand.u32 %v217, 4294901760
    %v1747 = vsub.f32 %v217, %v1746
    %v1748 = vand.u32 %v1747, 4294901760
    %1749 = vmatprep.mubr.f32.mxu0 %v1748
    %v1750 = vand.u32 %v84, 4294901760
    %v1751 = vsub.f32 %v84, %v1750
    %v1752 = vand.u32 %v1751, 4294901760
    %1753 = vmatmul.mubr.f32.gmra.mrb[0].mxu0 %v1752
    %v1754 = vpop.f32.mrb[0].mxu0
    %v1755 = vadd.f32 %v1410, %v1754
    %v1756 = vpop.f32.mrb[0].mxu0
    %v1757 = vadd.f32 %v1412, %v1756
    %1758 = vdwg.mxu0
    %v1759 = vand.u32 %v31, 4294901760
    %v1760 = vsub.f32 %v31, %v1759
    %v1761 = vand.u32 %v1760, 4294901760
    %1762 = vmatprep.subr.mxu0 %v1761
    %v1763 = vand.u32 %v30, 4294901760
    %v1764 = vsub.f32 %v30, %v1763
    %v1765 = vand.u32 %v1764, 4294901760
    %1766 = vmatpush1.msra.mxu0 %v1765
    %v1767 = vand.u32 %v33, 4294901760
    %v1768 = vsub.f32 %v33, %v1767
    %v1769 = vand.u32 %v1768, 4294901760
    %1770 = vmatprep.subr.mxu0 %v1769
    %v1771 = vand.u32 %v32, 4294901760
    %v1772 = vsub.f32 %v32, %v1771
    %v1773 = vand.u32 %v1772, 4294901760
    %1774 = vmatpush1.msra.mxu0 %v1773
    %v1775 = vand.u32 %v35, 4294901760
    %v1776 = vsub.f32 %v35, %v1775
    %v1777 = vand.u32 %v1776, 4294901760
    %1778 = vmatprep.subr.mxu0 %v1777
    %v1779 = vand.u32 %v34, 4294901760
    %v1780 = vsub.f32 %v34, %v1779
    %v1781 = vand.u32 %v1780, 4294901760
    %1782 = vmatpush1.msra.mxu0 %v1781
    %v1783 = vand.u32 %v37, 4294901760
    %v1784 = vsub.f32 %v37, %v1783
    %v1785 = vand.u32 %v1784, 4294901760
    %1786 = vmatprep.subr.mxu0 %v1785
    %v1787 = vand.u32 %v36, 4294901760
    %v1788 = vsub.f32 %v36, %v1787
    %v1789 = vand.u32 %v1788, 4294901760
    %1790 = vmatpush1.msra.mxu0 %v1789
    %v1791 = vand.u32 %v39, 4294901760
    %v1792 = vsub.f32 %v39, %v1791
    %v1793 = vand.u32 %v1792, 4294901760
    %1794 = vmatprep.subr.mxu0 %v1793
    %v1795 = vand.u32 %v38, 4294901760
    %v1796 = vsub.f32 %v38, %v1795
    %v1797 = vand.u32 %v1796, 4294901760
    %1798 = vmatpush1.msra.mxu0 %v1797
    %v1799 = vand.u32 %v41, 4294901760
    %v1800 = vsub.f32 %v41, %v1799
    %v1801 = vand.u32 %v1800, 4294901760
    %1802 = vmatprep.subr.mxu0 %v1801
    %v1803 = vand.u32 %v40, 4294901760
    %v1804 = vsub.f32 %v40, %v1803
    %v1805 = vand.u32 %v1804, 4294901760
    %1806 = vmatpush1.msra.mxu0 %v1805
    %v1807 = vand.u32 %v43, 4294901760
    %v1808 = vsub.f32 %v43, %v1807
    %v1809 = vand.u32 %v1808, 4294901760
    %1810 = vmatprep.subr.mxu0 %v1809
    %v1811 = vand.u32 %v42, 4294901760
    %v1812 = vsub.f32 %v42, %v1811
    %v1813 = vand.u32 %v1812, 4294901760
    %1814 = vmatpush1.msra.mxu0 %v1813
    %v1815 = vand.u32 %v45, 4294901760
    %v1816 = vsub.f32 %v45, %v1815
    %v1817 = vand.u32 %v1816, 4294901760
    %1818 = vmatprep.subr.mxu0 %v1817
    %v1819 = vand.u32 %v44, 4294901760
    %v1820 = vsub.f32 %v44, %v1819
    %v1821 = vand.u32 %v1820, 4294901760
    %1822 = vmatpush1.msra.mxu0 %v1821
    %v1823 = vand.u32 %v135, 4294901760
    %v1824 = vsub.f32 %v135, %v1823
    %v1825 = vand.u32 %v1824, 4294901760
    %1826 = vmatprep.subr.mxu0 %v1825
    %v1827 = vand.u32 %v134, 4294901760
    %v1828 = vsub.f32 %v134, %v1827
    %v1829 = vand.u32 %v1828, 4294901760
    %1830 = vmatpush1.msra.mxu0 %v1829
    %v1831 = vand.u32 %v137, 4294901760
    %v1832 = vsub.f32 %v137, %v1831
    %v1833 = vand.u32 %v1832, 4294901760
    %1834 = vmatprep.subr.mxu0 %v1833
    %v1835 = vand.u32 %v136, 4294901760
    %v1836 = vsub.f32 %v136, %v1835
    %v1837 = vand.u32 %v1836, 4294901760
    %1838 = vmatpush1.msra.mxu0 %v1837
    %v1839 = vand.u32 %v139, 4294901760
    %v1840 = vsub.f32 %v139, %v1839
    %v1841 = vand.u32 %v1840, 4294901760
    %1842 = vmatprep.subr.mxu0 %v1841
    %v1843 = vand.u32 %v138, 4294901760
    %v1844 = vsub.f32 %v138, %v1843
    %v1845 = vand.u32 %v1844, 4294901760
    %1846 = vmatpush1.msra.mxu0 %v1845
    %v1847 = vand.u32 %v141, 4294901760
    %v1848 = vsub.f32 %v141, %v1847
    %v1849 = vand.u32 %v1848, 4294901760
    %1850 = vmatprep.subr.mxu0 %v1849
    %v1851 = vand.u32 %v140, 4294901760
    %v1852 = vsub.f32 %v140, %v1851
    %v1853 = vand.u32 %v1852, 4294901760
    %1854 = vmatpush1.msra.mxu0 %v1853
    %v1855 = vand.u32 %v143, 4294901760
    %v1856 = vsub.f32 %v143, %v1855
    %v1857 = vand.u32 %v1856, 4294901760
    %1858 = vmatprep.subr.mxu0 %v1857
    %v1859 = vand.u32 %v142, 4294901760
    %v1860 = vsub.f32 %v142, %v1859
    %v1861 = vand.u32 %v1860, 4294901760
    %1862 = vmatpush1.msra.mxu0 %v1861
    %v1863 = vand.u32 %v145, 4294901760
    %v1864 = vsub.f32 %v145, %v1863
    %v1865 = vand.u32 %v1864, 4294901760
    %1866 = vmatprep.subr.mxu0 %v1865
    %v1867 = vand.u32 %v144, 4294901760
    %v1868 = vsub.f32 %v144, %v1867
    %v1869 = vand.u32 %v1868, 4294901760
    %1870 = vmatpush1.msra.mxu0 %v1869
    %v1871 = vand.u32 %v147, 4294901760
    %v1872 = vsub.f32 %v147, %v1871
    %v1873 = vand.u32 %v1872, 4294901760
    %1874 = vmatprep.subr.mxu0 %v1873
    %v1875 = vand.u32 %v146, 4294901760
    %v1876 = vsub.f32 %v146, %v1875
    %v1877 = vand.u32 %v1876, 4294901760
    %1878 = vmatpush1.msra.mxu0 %v1877
    %v1879 = vand.u32 %v149, 4294901760
    %v1880 = vsub.f32 %v149, %v1879
    %v1881 = vand.u32 %v1880, 4294901760
    %1882 = vmatprep.subr.mxu0 %v1881
    %v1883 = vand.u32 %v148, 4294901760
    %v1884 = vsub.f32 %v148, %v1883
    %v1885 = vand.u32 %v1884, 4294901760
    %1886 = vmatpush1.msra.mxu0 %v1885
    %v1887 = vand.u32 %v151, 4294901760
    %v1888 = vsub.f32 %v151, %v1887
    %v1889 = vand.u32 %v1888, 4294901760
    %1890 = vmatprep.subr.mxu0 %v1889
    %v1891 = vand.u32 %v150, 4294901760
    %v1892 = vsub.f32 %v150, %v1891
    %v1893 = vand.u32 %v1892, 4294901760
    %1894 = vmatpush1.msra.mxu0 %v1893
    %v1895 = vand.u32 %v153, 4294901760
    %v1896 = vsub.f32 %v153, %v1895
    %v1897 = vand.u32 %v1896, 4294901760
    %1898 = vmatprep.subr.mxu0 %v1897
    %v1899 = vand.u32 %v152, 4294901760
    %v1900 = vsub.f32 %v152, %v1899
    %v1901 = vand.u32 %v1900, 4294901760
    %1902 = vmatpush1.msra.mxu0 %v1901
    %v1903 = vand.u32 %v155, 4294901760
    %v1904 = vsub.f32 %v155, %v1903
    %v1905 = vand.u32 %v1904, 4294901760
    %1906 = vmatprep.subr.mxu0 %v1905
    %v1907 = vand.u32 %v154, 4294901760
    %v1908 = vsub.f32 %v154, %v1907
    %v1909 = vand.u32 %v1908, 4294901760
    %1910 = vmatpush1.msra.mxu0 %v1909
    %v1911 = vand.u32 %v157, 4294901760
    %v1912 = vsub.f32 %v157, %v1911
    %v1913 = vand.u32 %v1912, 4294901760
    %1914 = vmatprep.subr.mxu0 %v1913
    %v1915 = vand.u32 %v156, 4294901760
    %v1916 = vsub.f32 %v156, %v1915
    %v1917 = vand.u32 %v1916, 4294901760
    %1918 = vmatpush1.msra.mxu0 %v1917
    %1919 = vmatprep.subr.mxu0 0.0
    %1920 = vmatpush1.msra.mxu0 0.0
    %1921 = vmatprep.subr.mxu0 0.0
    %1922 = vmatpush1.msra.mxu0 0.0
    %1923 = vmatprep.subr.mxu0 0.0
    %1924 = vmatpush1.msra.mxu0 0.0
    %1925 = vmatprep.subr.mxu0 0.0
    %1926 = vmatpush1.msra.mxu0 0.0
    %1927 = vmatprep.subr.mxu0 0.0
    %1928 = vmatpush1.msra.mxu0 0.0
    %1929 = vmatprep.subr.mxu0 0.0
    %1930 = vmatpush1.msra.mxu0 0.0
    %1931 = vmatprep.subr.mxu0 0.0
    %1932 = vmatpush1.msra.mxu0 0.0
    %1933 = vmatprep.subr.mxu0 0.0
    %1934 = vmatpush1.msra.mxu0 0.0
    %1935 = vmatprep.subr.mxu0 0.0
    %1936 = vmatpush1.msra.mxu0 0.0
    %1937 = vmatprep.subr.mxu0 0.0
    %1938 = vmatpush1.msra.mxu0 0.0
    %1939 = vmatprep.subr.mxu0 0.0
    %1940 = vmatpush1.msra.mxu0 0.0
    %1941 = vmatprep.subr.mxu0 0.0
    %1942 = vmatpush1.msra.mxu0 0.0
    %v1943 = vand.u32 %v160, 4294901760
    %1944 = vmatprep.mubr.f32.mxu0 %v1943
    %v1945 = vand.u32 %v46, 4294901760
    %1946 = vmatmul.mubr.f32.gmra.mrb[0].mxu0 %v1945
    %v1947 = vpop.f32.mrb[0].mxu0
    %v1948 = vadd.f32 %v1527, %v1947
    %v1949 = vpop.f32.mrb[0].mxu0
    %v1950 = vadd.f32 %v1529, %v1949
    %v1951 = vand.u32 %v163, 4294901760
    %1952 = vmatprep.mubr.f32.mxu0 %v1951
    %v1953 = vand.u32 %v48, 4294901760
    %1954 = vmatmul.mubr.f32.gmra.mrb[0].mxu0 %v1953
    %v1955 = vpop.f32.mrb[0].mxu0
    %v1956 = vadd.f32 %v1539, %v1955
    %v1957 = vpop.f32.mrb[0].mxu0
    %v1958 = vadd.f32 %v1541, %v1957
    %v1959 = vand.u32 %v166, 4294901760
    %1960 = vmatprep.mubr.f32.mxu0 %v1959
    %v1961 = vand.u32 %v50, 4294901760
    %1962 = vmatmul.mubr.f32.gmra.mrb[0].mxu0 %v1961
    %v1963 = vpop.f32.mrb[0].mxu0
    %v1964 = vadd.f32 %v1551, %v1963
    %v1965 = vpop.f32.mrb[0].mxu0
    %v1966 = vadd.f32 %v1553, %v1965
    %v1967 = vand.u32 %v169, 4294901760
    %1968 = vmatprep.mubr.f32.mxu0 %v1967
    %v1969 = vand.u32 %v52, 4294901760
    %1970 = vmatmul.mubr.f32.gmra.mrb[0].mxu0 %v1969
    %v1971 = vpop.f32.mrb[0].mxu0
    %v1972 = vadd.f32 %v1563, %v1971
    %v1973 = vpop.f32.mrb[0].mxu0
    %v1974 = vadd.f32 %v1565, %v1973
    %v1975 = vand.u32 %v172, 4294901760
    %1976 = vmatprep.mubr.f32.mxu0 %v1975
    %v1977 = vand.u32 %v54, 4294901760
    %1978 = vmatmul.mubr.f32.gmra.mrb[0].mxu0 %v1977
    %v1979 = vpop.f32.mrb[0].mxu0
    %v1980 = vadd.f32 %v1575, %v1979
    %v1981 = vpop.f32.mrb[0].mxu0
    %v1982 = vadd.f32 %v1577, %v1981
    %v1983 = vand.u32 %v175, 4294901760
    %1984 = vmatprep.mubr.f32.mxu0 %v1983
    %v1985 = vand.u32 %v56, 4294901760
    %1986 = vmatmul.mubr.f32.gmra.mrb[0].mxu0 %v1985
    %v1987 = vpop.f32.mrb[0].mxu0
    %v1988 = vadd.f32 %v1587, %v1987
    %v1989 = vpop.f32.mrb[0].mxu0
    %v1990 = vadd.f32 %v1589, %v1989
    %v1991 = vand.u32 %v178, 4294901760
    %1992 = vmatprep.mubr.f32.mxu0 %v1991
    %v1993 = vand.u32 %v58, 4294901760
    %1994 = vmatmul.mubr.f32.gmra.mrb[0].mxu0 %v1993
    %v1995 = vpop.f32.mrb[0].mxu0
    %v1996 = vadd.f32 %v1599, %v1995
    %v1997 = vpop.f32.mrb[0].mxu0
    %v1998 = vadd.f32 %v1601, %v1997
    %v1999 = vand.u32 %v181, 4294901760
    %2000 = vmatprep.mubr.f32.mxu0 %v1999
    %v2001 = vand.u32 %v60, 4294901760
    %2002 = vmatmul.mubr.f32.gmra.mrb[0].mxu0 %v2001
    %v2003 = vpop.f32.mrb[0].mxu0
    %v2004 = vadd.f32 %v1611, %v2003
    %v2005 = vpop.f32.mrb[0].mxu0
    %v2006 = vadd.f32 %v1613, %v2005
    %v2007 = vand.u32 %v184, 4294901760
    %2008 = vmatprep.mubr.f32.mxu0 %v2007
    %v2009 = vand.u32 %v62, 4294901760
    %2010 = vmatmul.mubr.f32.gmra.mrb[0].mxu0 %v2009
    %v2011 = vpop.f32.mrb[0].mxu0
    %v2012 = vadd.f32 %v1623, %v2011
    %v2013 = vpop.f32.mrb[0].mxu0
    %v2014 = vadd.f32 %v1625, %v2013
    %v2015 = vand.u32 %v187, 4294901760
    %2016 = vmatprep.mubr.f32.mxu0 %v2015
    %v2017 = vand.u32 %v64, 4294901760
    %2018 = vmatmul.mubr.f32.gmra.mrb[0].mxu0 %v2017
    %v2019 = vpop.f32.mrb[0].mxu0
    %v2020 = vadd.f32 %v1635, %v2019
    %v2021 = vpop.f32.mrb[0].mxu0
    %v2022 = vadd.f32 %v1637, %v2021
    %v2023 = vand.u32 %v190, 4294901760
    %2024 = vmatprep.mubr.f32.mxu0 %v2023
    %v2025 = vand.u32 %v66, 4294901760
    %2026 = vmatmul.mubr.f32.gmra.mrb[0].mxu0 %v2025
    %v2027 = vpop.f32.mrb[0].mxu0
    %v2028 = vadd.f32 %v1647, %v2027
    %v2029 = vpop.f32.mrb[0].mxu0
    %v2030 = vadd.f32 %v1649, %v2029
    %v2031 = vand.u32 %v193, 4294901760
    %2032 = vmatprep.mubr.f32.mxu0 %v2031
    %v2033 = vand.u32 %v68, 4294901760
    %2034 = vmatmul.mubr.f32.gmra.mrb[0].mxu0 %v2033
    %v2035 = vpop.f32.mrb[0].mxu0
    %v2036 = vadd.f32 %v1659, %v2035
    %v2037 = vpop.f32.mrb[0].mxu0
    %v2038 = vadd.f32 %v1661, %v2037
    %v2039 = vand.u32 %v196, 4294901760
    %2040 = vmatprep.mubr.f32.mxu0 %v2039
    %v2041 = vand.u32 %v70, 4294901760
    %2042 = vmatmul.mubr.f32.gmra.mrb[0].mxu0 %v2041
    %v2043 = vpop.f32.mrb[0].mxu0
    %v2044 = vadd.f32 %v1671, %v2043
    %v2045 = vpop.f32.mrb[0].mxu0
    %v2046 = vadd.f32 %v1673, %v2045
    %v2047 = vand.u32 %v199, 4294901760
    %2048 = vmatprep.mubr.f32.mxu0 %v2047
    %v2049 = vand.u32 %v72, 4294901760
    %2050 = vmatmul.mubr.f32.gmra.mrb[0].mxu0 %v2049
    %v2051 = vpop.f32.mrb[0].mxu0
    %v2052 = vadd.f32 %v1683, %v2051
    %v2053 = vpop.f32.mrb[0].mxu0
    %v2054 = vadd.f32 %v1685, %v2053
    %v2055 = vand.u32 %v202, 4294901760
    %2056 = vmatprep.mubr.f32.mxu0 %v2055
    %v2057 = vand.u32 %v74, 4294901760
    %2058 = vmatmul.mubr.f32.gmra.mrb[0].mxu0 %v2057
    %v2059 = vpop.f32.mrb[0].mxu0
    %v2060 = vadd.f32 %v1695, %v2059
    %v2061 = vpop.f32.mrb[0].mxu0
    %v2062 = vadd.f32 %v1697, %v2061
    %v2063 = vand.u32 %v205, 4294901760
    %2064 = vmatprep.mubr.f32.mxu0 %v2063
    %v2065 = vand.u32 %v76, 4294901760
    %2066 = vmatmul.mubr.f32.gmra.mrb[0].mxu0 %v2065
    %v2067 = vpop.f32.mrb[0].mxu0
    %v2068 = vadd.f32 %v1707, %v2067
    %v2069 = vpop.f32.mrb[0].mxu0
    %v2070 = vadd.f32 %v1709, %v2069
    %v2071 = vand.u32 %v208, 4294901760
    %2072 = vmatprep.mubr.f32.mxu0 %v2071
    %v2073 = vand.u32 %v78, 4294901760
    %2074 = vmatmul.mubr.f32.gmra.mrb[0].mxu0 %v2073
    %v2075 = vpop.f32.mrb[0].mxu0
    %v2076 = vadd.f32 %v1719, %v2075
    %v2077 = vpop.f32.mrb[0].mxu0
    %v2078 = vadd.f32 %v1721, %v2077
    %v2079 = vand.u32 %v211, 4294901760
    %2080 = vmatprep.mubr.f32.mxu0 %v2079
    %v2081 = vand.u32 %v80, 4294901760
    %2082 = vmatmul.mubr.f32.gmra.mrb[0].mxu0 %v2081
    %v2083 = vpop.f32.mrb[0].mxu0
    %v2084 = vadd.f32 %v1731, %v2083
    %v2085 = vpop.f32.mrb[0].mxu0
    %v2086 = vadd.f32 %v1733, %v2085
    %v2087 = vand.u32 %v214, 4294901760
    %2088 = vmatprep.mubr.f32.mxu0 %v2087
    %v2089 = vand.u32 %v82, 4294901760
    %2090 = vmatmul.mubr.f32.gmra.mrb[0].mxu0 %v2089
    %v2091 = vpop.f32.mrb[0].mxu0
    %v2092 = vadd.f32 %v1743, %v2091
    %v2093 = vpop.f32.mrb[0].mxu0
    %v2094 = vadd.f32 %v1745, %v2093
    %v2095 = vand.u32 %v217, 4294901760
    %2096 = vmatprep.mubr.f32.mxu0 %v2095
    %v2097 = vand.u32 %v84, 4294901760
    %2098 = vmatmul.mubr.f32.gmra.mrb[0].mxu0 %v2097
    %v2099 = vpop.f32.mrb[0].mxu0
    %v2100 = vadd.f32 %v1755, %v2099
    %v2101 = vpop.f32.mrb[0].mxu0
    %v2102 = vadd.f32 %v1757, %v2101
    %2103 = vdwg.mxu0
    %v2104 = vand.u32 %v31, 4294901760
    %2105 = vmatprep.subr.mxu0 %v2104
    %v2106 = vand.u32 %v30, 4294901760
    %2107 = vmatpush1.msra.mxu0 %v2106
    %v2108 = vand.u32 %v33, 4294901760
    %2109 = vmatprep.subr.mxu0 %v2108
    %v2110 = vand.u32 %v32, 4294901760
    %2111 = vmatpush1.msra.mxu0 %v2110
    %v2112 = vand.u32 %v35, 4294901760
    %2113 = vmatprep.subr.mxu0 %v2112
    %v2114 = vand.u32 %v34, 4294901760
    %2115 = vmatpush1.msra.mxu0 %v2114
    %v2116 = vand.u32 %v37, 4294901760
    %2117 = vmatprep.subr.mxu0 %v2116
    %v2118 = vand.u32 %v36, 4294901760
    %2119 = vmatpush1.msra.mxu0 %v2118
    %v2120 = vand.u32 %v39, 4294901760
    %2121 = vmatprep.subr.mxu0 %v2120
    %v2122 = vand.u32 %v38, 4294901760
    %2123 = vmatpush1.msra.mxu0 %v2122
    %v2124 = vand.u32 %v41, 4294901760
    %2125 = vmatprep.subr.mxu0 %v2124
    %v2126 = vand.u32 %v40, 4294901760
    %2127 = vmatpush1.msra.mxu0 %v2126
    %v2128 = vand.u32 %v43, 4294901760
    %2129 = vmatprep.subr.mxu0 %v2128
    %v2130 = vand.u32 %v42, 4294901760
    %2131 = vmatpush1.msra.mxu0 %v2130
    %v2132 = vand.u32 %v45, 4294901760
    %2133 = vmatprep.subr.mxu0 %v2132
    %v2134 = vand.u32 %v44, 4294901760
    %2135 = vmatpush1.msra.mxu0 %v2134
    %v2136 = vand.u32 %v135, 4294901760
    %2137 = vmatprep.subr.mxu0 %v2136
    %v2138 = vand.u32 %v134, 4294901760
    %2139 = vmatpush1.msra.mxu0 %v2138
    %v2140 = vand.u32 %v137, 4294901760
    %2141 = vmatprep.subr.mxu0 %v2140
    %v2142 = vand.u32 %v136, 4294901760
    %2143 = vmatpush1.msra.mxu0 %v2142
    %v2144 = vand.u32 %v139, 4294901760
    %2145 = vmatprep.subr.mxu0 %v2144
    %v2146 = vand.u32 %v138, 4294901760
    %2147 = vmatpush1.msra.mxu0 %v2146
    %v2148 = vand.u32 %v141, 4294901760
    %2149 = vmatprep.subr.mxu0 %v2148
    %v2150 = vand.u32 %v140, 4294901760
    %2151 = vmatpush1.msra.mxu0 %v2150
    %v2152 = vand.u32 %v143, 4294901760
    %2153 = vmatprep.subr.mxu0 %v2152
    %v2154 = vand.u32 %v142, 4294901760
    %2155 = vmatpush1.msra.mxu0 %v2154
    %v2156 = vand.u32 %v145, 4294901760
    %2157 = vmatprep.subr.mxu0 %v2156
    %v2158 = vand.u32 %v144, 4294901760
    %2159 = vmatpush1.msra.mxu0 %v2158
    %v2160 = vand.u32 %v147, 4294901760
    %2161 = vmatprep.subr.mxu0 %v2160
    %v2162 = vand.u32 %v146, 4294901760
    %2163 = vmatpush1.msra.mxu0 %v2162
    %v2164 = vand.u32 %v149, 4294901760
    %2165 = vmatprep.subr.mxu0 %v2164
    %v2166 = vand.u32 %v148, 4294901760
    %2167 = vmatpush1.msra.mxu0 %v2166
    %v2168 = vand.u32 %v151, 4294901760
    %2169 = vmatprep.subr.mxu0 %v2168
    %v2170 = vand.u32 %v150, 4294901760
    %2171 = vmatpush1.msra.mxu0 %v2170
    %v2172 = vand.u32 %v153, 4294901760
    %2173 = vmatprep.subr.mxu0 %v2172
    %v2174 = vand.u32 %v152, 4294901760
    %2175 = vmatpush1.msra.mxu0 %v2174
    %v2176 = vand.u32 %v155, 4294901760
    %2177 = vmatprep.subr.mxu0 %v2176
    %v2178 = vand.u32 %v154, 4294901760
    %2179 = vmatpush1.msra.mxu0 %v2178
    %v2180 = vand.u32 %v157, 4294901760
    %2181 = vmatprep.subr.mxu0 %v2180
    %v2182 = vand.u32 %v156, 4294901760
    %2183 = vmatpush1.msra.mxu0 %v2182
    %2184 = vmatprep.subr.mxu0 0.0
    %2185 = vmatpush1.msra.mxu0 0.0
    %2186 = vmatprep.subr.mxu0 0.0
    %2187 = vmatpush1.msra.mxu0 0.0
    %2188 = vmatprep.subr.mxu0 0.0
    %2189 = vmatpush1.msra.mxu0 0.0
    %2190 = vmatprep.subr.mxu0 0.0
    %2191 = vmatpush1.msra.mxu0 0.0
    %2192 = vmatprep.subr.mxu0 0.0
    %2193 = vmatpush1.msra.mxu0 0.0
    %2194 = vmatprep.subr.mxu0 0.0
    %2195 = vmatpush1.msra.mxu0 0.0
    %2196 = vmatprep.subr.mxu0 0.0
    %2197 = vmatpush1.msra.mxu0 0.0
    %2198 = vmatprep.subr.mxu0 0.0
    %2199 = vmatpush1.msra.mxu0 0.0
    %2200 = vmatprep.subr.mxu0 0.0
    %2201 = vmatpush1.msra.mxu0 0.0
    %2202 = vmatprep.subr.mxu0 0.0
    %2203 = vmatpush1.msra.mxu0 0.0
    %2204 = vmatprep.subr.mxu0 0.0
    %2205 = vmatpush1.msra.mxu0 0.0
    %2206 = vmatprep.subr.mxu0 0.0
    %2207 = vmatpush1.msra.mxu0 0.0
    %v2208 = vand.u32 %v160, 4294901760
    %2209 = vmatprep.mubr.f32.mxu0 %v2208
    %v2210 = vand.u32 %v46, 4294901760
    %2211 = vmatmul.mubr.f32.gmra.mrb[0].mxu0 %v2210
    %v2212 = vpop.f32.mrb[0].mxu0
    %v2213 = vadd.f32 %v1948, %v2212
    %v2214 = vpop.f32.mrb[0].mxu0
    %v2215 = vadd.f32 %v1950, %v2214
    %v2216 = vand.u32 %v163, 4294901760
    %2217 = vmatprep.mubr.f32.mxu0 %v2216
    %v2218 = vand.u32 %v48, 4294901760
    %2219 = vmatmul.mubr.f32.gmra.mrb[0].mxu0 %v2218
    %v2220 = vpop.f32.mrb[0].mxu0
    %v2221 = vadd.f32 %v1956, %v2220
    %v2222 = vpop.f32.mrb[0].mxu0
    %v2223 = vadd.f32 %v1958, %v2222
    %v2224 = vand.u32 %v166, 4294901760
    %2225 = vmatprep.mubr.f32.mxu0 %v2224
    %v2226 = vand.u32 %v50, 4294901760
    %2227 = vmatmul.mubr.f32.gmra.mrb[0].mxu0 %v2226
    %v2228 = vpop.f32.mrb[0].mxu0
    %v2229 = vadd.f32 %v1964, %v2228
    %v2230 = vpop.f32.mrb[0].mxu0
    %v2231 = vadd.f32 %v1966, %v2230
    %v2232 = vand.u32 %v169, 4294901760
    %2233 = vmatprep.mubr.f32.mxu0 %v2232
    %v2234 = vand.u32 %v52, 4294901760
    %2235 = vmatmul.mubr.f32.gmra.mrb[0].mxu0 %v2234
    %v2236 = vpop.f32.mrb[0].mxu0
    %v2237 = vadd.f32 %v1972, %v2236
    %v2238 = vpop.f32.mrb[0].mxu0
    %v2239 = vadd.f32 %v1974, %v2238
    %v2240 = vand.u32 %v172, 4294901760
    %2241 = vmatprep.mubr.f32.mxu0 %v2240
    %v2242 = vand.u32 %v54, 4294901760
    %2243 = vmatmul.mubr.f32.gmra.mrb[0].mxu0 %v2242
    %v2244 = vpop.f32.mrb[0].mxu0
    %v2245 = vadd.f32 %v1980, %v2244
    %v2246 = vpop.f32.mrb[0].mxu0
    %v2247 = vadd.f32 %v1982, %v2246
    %v2248 = vand.u32 %v175, 4294901760
    %2249 = vmatprep.mubr.f32.mxu0 %v2248
    %v2250 = vand.u32 %v56, 4294901760
    %2251 = vmatmul.mubr.f32.gmra.mrb[0].mxu0 %v2250
    %v2252 = vpop.f32.mrb[0].mxu0
    %v2253 = vadd.f32 %v1988, %v2252
    %v2254 = vpop.f32.mrb[0].mxu0
    %v2255 = vadd.f32 %v1990, %v2254
    %v2256 = vand.u32 %v178, 4294901760
    %2257 = vmatprep.mubr.f32.mxu0 %v2256
    %v2258 = vand.u32 %v58, 4294901760
    %2259 = vmatmul.mubr.f32.gmra.mrb[0].mxu0 %v2258
    %v2260 = vpop.f32.mrb[0].mxu0
    %v2261 = vadd.f32 %v1996, %v2260
    %v2262 = vpop.f32.mrb[0].mxu0
    %v2263 = vadd.f32 %v1998, %v2262
    %v2264 = vand.u32 %v181, 4294901760
    %2265 = vmatprep.mubr.f32.mxu0 %v2264
    %v2266 = vand.u32 %v60, 4294901760
    %2267 = vmatmul.mubr.f32.gmra.mrb[0].mxu0 %v2266
    %v2268 = vpop.f32.mrb[0].mxu0
    %v2269 = vadd.f32 %v2004, %v2268
    %v2270 = vpop.f32.mrb[0].mxu0
    %v2271 = vadd.f32 %v2006, %v2270
    %v2272 = vand.u32 %v184, 4294901760
    %2273 = vmatprep.mubr.f32.mxu0 %v2272
    %v2274 = vand.u32 %v62, 4294901760
    %2275 = vmatmul.mubr.f32.gmra.mrb[0].mxu0 %v2274
    %v2276 = vpop.f32.mrb[0].mxu0
    %v2277 = vadd.f32 %v2012, %v2276
    %v2278 = vpop.f32.mrb[0].mxu0
    %v2279 = vadd.f32 %v2014, %v2278
    %v2280 = vand.u32 %v187, 4294901760
    %2281 = vmatprep.mubr.f32.mxu0 %v2280
    %v2282 = vand.u32 %v64, 4294901760
    %2283 = vmatmul.mubr.f32.gmra.mrb[0].mxu0 %v2282
    %v2284 = vpop.f32.mrb[0].mxu0
    %v2285 = vadd.f32 %v2020, %v2284
    %v2286 = vpop.f32.mrb[0].mxu0
    %v2287 = vadd.f32 %v2022, %v2286
    %v2288 = vand.u32 %v190, 4294901760
    %2289 = vmatprep.mubr.f32.mxu0 %v2288
    %v2290 = vand.u32 %v66, 4294901760
    %2291 = vmatmul.mubr.f32.gmra.mrb[0].mxu0 %v2290
    %v2292 = vpop.f32.mrb[0].mxu0
    %v2293 = vadd.f32 %v2028, %v2292
    %v2294 = vpop.f32.mrb[0].mxu0
    %v2295 = vadd.f32 %v2030, %v2294
    %v2296 = vand.u32 %v193, 4294901760
    %2297 = vmatprep.mubr.f32.mxu0 %v2296
    %v2298 = vand.u32 %v68, 4294901760
    %2299 = vmatmul.mubr.f32.gmra.mrb[0].mxu0 %v2298
    %v2300 = vpop.f32.mrb[0].mxu0
    %v2301 = vadd.f32 %v2036, %v2300
    %v2302 = vpop.f32.mrb[0].mxu0
    %v2303 = vadd.f32 %v2038, %v2302
    %v2304 = vand.u32 %v196, 4294901760
    %2305 = vmatprep.mubr.f32.mxu0 %v2304
    %v2306 = vand.u32 %v70, 4294901760
    %2307 = vmatmul.mubr.f32.gmra.mrb[0].mxu0 %v2306
    %v2308 = vpop.f32.mrb[0].mxu0
    %v2309 = vadd.f32 %v2044, %v2308
    %v2310 = vpop.f32.mrb[0].mxu0
    %v2311 = vadd.f32 %v2046, %v2310
    %v2312 = vand.u32 %v199, 4294901760
    %2313 = vmatprep.mubr.f32.mxu0 %v2312
    %v2314 = vand.u32 %v72, 4294901760
    %2315 = vmatmul.mubr.f32.gmra.mrb[0].mxu0 %v2314
    %v2316 = vpop.f32.mrb[0].mxu0
    %v2317 = vadd.f32 %v2052, %v2316
    %v2318 = vpop.f32.mrb[0].mxu0
    %v2319 = vadd.f32 %v2054, %v2318
    %v2320 = vand.u32 %v202, 4294901760
    %2321 = vmatprep.mubr.f32.mxu0 %v2320
    %v2322 = vand.u32 %v74, 4294901760
    %2323 = vmatmul.mubr.f32.gmra.mrb[0].mxu0 %v2322
    %v2324 = vpop.f32.mrb[0].mxu0
    %v2325 = vadd.f32 %v2060, %v2324
    %v2326 = vpop.f32.mrb[0].mxu0
    %v2327 = vadd.f32 %v2062, %v2326
    %v2328 = vand.u32 %v205, 4294901760
    %2329 = vmatprep.mubr.f32.mxu0 %v2328
    %v2330 = vand.u32 %v76, 4294901760
    %2331 = vmatmul.mubr.f32.gmra.mrb[0].mxu0 %v2330
    %v2332 = vpop.f32.mrb[0].mxu0
    %v2333 = vadd.f32 %v2068, %v2332
    %v2334 = vpop.f32.mrb[0].mxu0
    %v2335 = vadd.f32 %v2070, %v2334
    %v2336 = vand.u32 %v208, 4294901760
    %2337 = vmatprep.mubr.f32.mxu0 %v2336
    %v2338 = vand.u32 %v78, 4294901760
    %2339 = vmatmul.mubr.f32.gmra.mrb[0].mxu0 %v2338
    %v2340 = vpop.f32.mrb[0].mxu0
    %v2341 = vadd.f32 %v2076, %v2340
    %v2342 = vpop.f32.mrb[0].mxu0
    %v2343 = vadd.f32 %v2078, %v2342
    %v2344 = vand.u32 %v211, 4294901760
    %2345 = vmatprep.mubr.f32.mxu0 %v2344
    %v2346 = vand.u32 %v80, 4294901760
    %2347 = vmatmul.mubr.f32.gmra.mrb[0].mxu0 %v2346
    %v2348 = vpop.f32.mrb[0].mxu0
    %v2349 = vadd.f32 %v2084, %v2348
    %v2350 = vpop.f32.mrb[0].mxu0
    %v2351 = vadd.f32 %v2086, %v2350
    %v2352 = vand.u32 %v214, 4294901760
    %2353 = vmatprep.mubr.f32.mxu0 %v2352
    %v2354 = vand.u32 %v82, 4294901760
    %2355 = vmatmul.mubr.f32.gmra.mrb[0].mxu0 %v2354
    %v2356 = vpop.f32.mrb[0].mxu0
    %v2357 = vadd.f32 %v2092, %v2356
    %v2358 = vpop.f32.mrb[0].mxu0
    %v2359 = vadd.f32 %v2094, %v2358
    %v2360 = vand.u32 %v217, 4294901760
    %2361 = vmatprep.mubr.f32.mxu0 %v2360
    %v2362 = vand.u32 %v84, 4294901760
    %2363 = vmatmul.mubr.f32.gmra.mrb[0].mxu0 %v2362
    %v2364 = vpop.f32.mrb[0].mxu0
    %v2365 = vadd.f32 %v2100, %v2364
    %v2366 = vpop.f32.mrb[0].mxu0
    %v2367 = vadd.f32 %v2102, %v2366
    %2368 = vdwg.mxu0
    %vm2369 = vcmask 523264
    %v2371 = vsel %vm2369, %v2215, 0
    %v2374 = vsel %vm2369, %v2223, 0
    %v2377 = vsel %vm2369, %v2231, 0
    %v2380 = vsel %vm2369, %v2239, 0
    %v2383 = vsel %vm2369, %v2247, 0
    %v2386 = vsel %vm2369, %v2255, 0
    %v2389 = vsel %vm2369, %v2263, 0
    %v2392 = vsel %vm2369, %v2271, 0
    %v2395 = vsel %vm2369, %v2279, 0
    %v2398 = vsel %vm2369, %v2287, 0
    %v2401 = vsel %vm2369, %v2295, 0
    %v2404 = vsel %vm2369, %v2303, 0
    %v2407 = vsel %vm2369, %v2311, 0
    %v2410 = vsel %vm2369, %v2319, 0
    %v2413 = vsel %vm2369, %v2327, 0
    %v2416 = vsel %vm2369, %v2335, 0
    %v2419 = vsel %vm2369, %v2343, 0
    %v2422 = vsel %vm2369, %v2351, 0
    %v2425 = vsel %vm2369, %v2359, 0
    %v2428 = vsel %vm2369, %v2367, 0
    %v2430 = vand.u32 %v87, 4294901760
    %2431 = vmatprep.subr.mxu0 %v2430
    %v2432 = vand.u32 %v86, 4294901760
    %2433 = vmatpush1.msra.mxu0 %v2432
    %v2434 = vand.u32 %v89, 4294901760
    %2435 = vmatprep.subr.mxu0 %v2434
    %v2436 = vand.u32 %v88, 4294901760
    %2437 = vmatpush1.msra.mxu0 %v2436
    %v2438 = vand.u32 %v91, 4294901760
    %2439 = vmatprep.subr.mxu0 %v2438
    %v2440 = vand.u32 %v90, 4294901760
    %2441 = vmatpush1.msra.mxu0 %v2440
    %v2442 = vand.u32 %v93, 4294901760
    %2443 = vmatprep.subr.mxu0 %v2442
    %v2444 = vand.u32 %v92, 4294901760
    %2445 = vmatpush1.msra.mxu0 %v2444
    %v2446 = vand.u32 %v95, 4294901760
    %2447 = vmatprep.subr.mxu0 %v2446
    %v2448 = vand.u32 %v94, 4294901760
    %2449 = vmatpush1.msra.mxu0 %v2448
    %v2450 = vand.u32 %v97, 4294901760
    %2451 = vmatprep.subr.mxu0 %v2450
    %v2452 = vand.u32 %v96, 4294901760
    %2453 = vmatpush1.msra.mxu0 %v2452
    %v2454 = vand.u32 %v99, 4294901760
    %2455 = vmatprep.subr.mxu0 %v2454
    %v2456 = vand.u32 %v98, 4294901760
    %2457 = vmatpush1.msra.mxu0 %v2456
    %v2458 = vand.u32 %v101, 4294901760
    %2459 = vmatprep.subr.mxu0 %v2458
    %v2460 = vand.u32 %v100, 4294901760
    %2461 = vmatpush1.msra.mxu0 %v2460
    %v2462 = vand.u32 %v103, 4294901760
    %2463 = vmatprep.subr.mxu0 %v2462
    %v2464 = vand.u32 %v102, 4294901760
    %2465 = vmatpush1.msra.mxu0 %v2464
    %v2466 = vand.u32 %v105, 4294901760
    %2467 = vmatprep.subr.mxu0 %v2466
    %v2468 = vand.u32 %v104, 4294901760
    %2469 = vmatpush1.msra.mxu0 %v2468
    %v2470 = vand.u32 %v107, 4294901760
    %2471 = vmatprep.subr.mxu0 %v2470
    %v2472 = vand.u32 %v106, 4294901760
    %2473 = vmatpush1.msra.mxu0 %v2472
    %v2474 = vand.u32 %v109, 4294901760
    %2475 = vmatprep.subr.mxu0 %v2474
    %v2476 = vand.u32 %v108, 4294901760
    %2477 = vmatpush1.msra.mxu0 %v2476
    %v2478 = vand.u32 %v111, 4294901760
    %2479 = vmatprep.subr.mxu0 %v2478
    %v2480 = vand.u32 %v110, 4294901760
    %2481 = vmatpush1.msra.mxu0 %v2480
    %v2482 = vand.u32 %v113, 4294901760
    %2483 = vmatprep.subr.mxu0 %v2482
    %v2484 = vand.u32 %v112, 4294901760
    %2485 = vmatpush1.msra.mxu0 %v2484
    %v2486 = vand.u32 %v115, 4294901760
    %2487 = vmatprep.subr.mxu0 %v2486
    %v2488 = vand.u32 %v114, 4294901760
    %2489 = vmatpush1.msra.mxu0 %v2488
    %v2490 = vand.u32 %v117, 4294901760
    %2491 = vmatprep.subr.mxu0 %v2490
    %v2492 = vand.u32 %v116, 4294901760
    %2493 = vmatpush1.msra.mxu0 %v2492
    %v2494 = vand.u32 %v119, 4294901760
    %2495 = vmatprep.subr.mxu0 %v2494
    %v2496 = vand.u32 %v118, 4294901760
    %2497 = vmatpush1.msra.mxu0 %v2496
    %v2498 = vand.u32 %v121, 4294901760
    %2499 = vmatprep.subr.mxu0 %v2498
    %v2500 = vand.u32 %v120, 4294901760
    %2501 = vmatpush1.msra.mxu0 %v2500
    %v2502 = vand.u32 %v123, 4294901760
    %2503 = vmatprep.subr.mxu0 %v2502
    %v2504 = vand.u32 %v122, 4294901760
    %2505 = vmatpush1.msra.mxu0 %v2504
    %v2506 = vand.u32 %v125, 4294901760
    %2507 = vmatprep.subr.mxu0 %v2506
    %v2508 = vand.u32 %v124, 4294901760
    %2509 = vmatpush1.msra.mxu0 %v2508
    %v2510 = vand.u32 %v127, 4294901760
    %2511 = vmatprep.subr.mxu0 %v2510
    %v2512 = vand.u32 %v126, 4294901760
    %2513 = vmatpush1.msra.mxu0 %v2512
    %v2514 = vand.u32 %v129, 4294901760
    %2515 = vmatprep.subr.mxu0 %v2514
    %v2516 = vand.u32 %v128, 4294901760
    %2517 = vmatpush1.msra.mxu0 %v2516
    %v2518 = vand.u32 %v131, 4294901760
    %2519 = vmatprep.subr.mxu0 %v2518
    %v2520 = vand.u32 %v130, 4294901760
    %2521 = vmatpush1.msra.mxu0 %v2520
    %v2522 = vand.u32 %v133, 4294901760
    %2523 = vmatprep.subr.mxu0 %v2522
    %v2524 = vand.u32 %v132, 4294901760
    %2525 = vmatpush1.msra.mxu0 %v2524
    %2526 = vmatprep.subr.mxu0 0.0
    %2527 = vmatpush1.msra.mxu0 0.0
    %2528 = vmatprep.subr.mxu0 0.0
    %2529 = vmatpush1.msra.mxu0 0.0
    %2530 = vmatprep.subr.mxu0 0.0
    %2531 = vmatpush1.msra.mxu0 0.0
    %2532 = vmatprep.subr.mxu0 0.0
    %2533 = vmatpush1.msra.mxu0 0.0
    %2534 = vmatprep.subr.mxu0 0.0
    %2535 = vmatpush1.msra.mxu0 0.0
    %2536 = vmatprep.subr.mxu0 0.0
    %2537 = vmatpush1.msra.mxu0 0.0
    %2538 = vmatprep.subr.mxu0 0.0
    %2539 = vmatpush1.msra.mxu0 0.0
    %2540 = vmatprep.subr.mxu0 0.0
    %2541 = vmatpush1.msra.mxu0 0.0
    %v2542 = vand.u32 %v2371, 4294901760
    %v2543 = vsub.f32 %v2371, %v2542
    %v2544 = vand.u32 %v2543, 4294901760
    %v2545 = vsub.f32 %v2543, %v2544
    %v2546 = vand.u32 %v2545, 4294901760
    %2547 = vmatprep.mubr.f32.mxu0 %v2546
    %v2548 = vand.u32 %v2213, 4294901760
    %v2549 = vsub.f32 %v2213, %v2548
    %v2550 = vand.u32 %v2549, 4294901760
    %v2551 = vsub.f32 %v2549, %v2550
    %v2552 = vand.u32 %v2551, 4294901760
    %2553 = vmatmul.mubr.f32.gmra.mrb[0].mxu0 %v2552
    %v2554 = vpop.f32.mrb[0].mxu0
    %v2555 = vadd.f32 0.0, %v2554
    %v2556 = vpop.f32.mrb[0].mxu0
    %v2557 = vadd.f32 0.0, %v2556
    %v2558 = vand.u32 %v2374, 4294901760
    %v2559 = vsub.f32 %v2374, %v2558
    %v2560 = vand.u32 %v2559, 4294901760
    %v2561 = vsub.f32 %v2559, %v2560
    %v2562 = vand.u32 %v2561, 4294901760
    %2563 = vmatprep.mubr.f32.mxu0 %v2562
    %v2564 = vand.u32 %v2221, 4294901760
    %v2565 = vsub.f32 %v2221, %v2564
    %v2566 = vand.u32 %v2565, 4294901760
    %v2567 = vsub.f32 %v2565, %v2566
    %v2568 = vand.u32 %v2567, 4294901760
    %2569 = vmatmul.mubr.f32.gmra.mrb[0].mxu0 %v2568
    %v2570 = vpop.f32.mrb[0].mxu0
    %v2571 = vadd.f32 0.0, %v2570
    %v2572 = vpop.f32.mrb[0].mxu0
    %v2573 = vadd.f32 0.0, %v2572
    %v2574 = vand.u32 %v2377, 4294901760
    %v2575 = vsub.f32 %v2377, %v2574
    %v2576 = vand.u32 %v2575, 4294901760
    %v2577 = vsub.f32 %v2575, %v2576
    %v2578 = vand.u32 %v2577, 4294901760
    %2579 = vmatprep.mubr.f32.mxu0 %v2578
    %v2580 = vand.u32 %v2229, 4294901760
    %v2581 = vsub.f32 %v2229, %v2580
    %v2582 = vand.u32 %v2581, 4294901760
    %v2583 = vsub.f32 %v2581, %v2582
    %v2584 = vand.u32 %v2583, 4294901760
    %2585 = vmatmul.mubr.f32.gmra.mrb[0].mxu0 %v2584
    %v2586 = vpop.f32.mrb[0].mxu0
    %v2587 = vadd.f32 0.0, %v2586
    %v2588 = vpop.f32.mrb[0].mxu0
    %v2589 = vadd.f32 0.0, %v2588
    %v2590 = vand.u32 %v2380, 4294901760
    %v2591 = vsub.f32 %v2380, %v2590
    %v2592 = vand.u32 %v2591, 4294901760
    %v2593 = vsub.f32 %v2591, %v2592
    %v2594 = vand.u32 %v2593, 4294901760
    %2595 = vmatprep.mubr.f32.mxu0 %v2594
    %v2596 = vand.u32 %v2237, 4294901760
    %v2597 = vsub.f32 %v2237, %v2596
    %v2598 = vand.u32 %v2597, 4294901760
    %v2599 = vsub.f32 %v2597, %v2598
    %v2600 = vand.u32 %v2599, 4294901760
    %2601 = vmatmul.mubr.f32.gmra.mrb[0].mxu0 %v2600
    %v2602 = vpop.f32.mrb[0].mxu0
    %v2603 = vadd.f32 0.0, %v2602
    %v2604 = vpop.f32.mrb[0].mxu0
    %v2605 = vadd.f32 0.0, %v2604
    %v2606 = vand.u32 %v2383, 4294901760
    %v2607 = vsub.f32 %v2383, %v2606
    %v2608 = vand.u32 %v2607, 4294901760
    %v2609 = vsub.f32 %v2607, %v2608
    %v2610 = vand.u32 %v2609, 4294901760
    %2611 = vmatprep.mubr.f32.mxu0 %v2610
    %v2612 = vand.u32 %v2245, 4294901760
    %v2613 = vsub.f32 %v2245, %v2612
    %v2614 = vand.u32 %v2613, 4294901760
    %v2615 = vsub.f32 %v2613, %v2614
    %v2616 = vand.u32 %v2615, 4294901760
    %2617 = vmatmul.mubr.f32.gmra.mrb[0].mxu0 %v2616
    %v2618 = vpop.f32.mrb[0].mxu0
    %v2619 = vadd.f32 0.0, %v2618
    %v2620 = vpop.f32.mrb[0].mxu0
    %v2621 = vadd.f32 0.0, %v2620
    %v2622 = vand.u32 %v2386, 4294901760
    %v2623 = vsub.f32 %v2386, %v2622
    %v2624 = vand.u32 %v2623, 4294901760
    %v2625 = vsub.f32 %v2623, %v2624
    %v2626 = vand.u32 %v2625, 4294901760
    %2627 = vmatprep.mubr.f32.mxu0 %v2626
    %v2628 = vand.u32 %v2253, 4294901760
    %v2629 = vsub.f32 %v2253, %v2628
    %v2630 = vand.u32 %v2629, 4294901760
    %v2631 = vsub.f32 %v2629, %v2630
    %v2632 = vand.u32 %v2631, 4294901760
    %2633 = vmatmul.mubr.f32.gmra.mrb[0].mxu0 %v2632
    %v2634 = vpop.f32.mrb[0].mxu0
    %v2635 = vadd.f32 0.0, %v2634
    %v2636 = vpop.f32.mrb[0].mxu0
    %v2637 = vadd.f32 0.0, %v2636
    %v2638 = vand.u32 %v2389, 4294901760
    %v2639 = vsub.f32 %v2389, %v2638
    %v2640 = vand.u32 %v2639, 4294901760
    %v2641 = vsub.f32 %v2639, %v2640
    %v2642 = vand.u32 %v2641, 4294901760
    %2643 = vmatprep.mubr.f32.mxu0 %v2642
    %v2644 = vand.u32 %v2261, 4294901760
    %v2645 = vsub.f32 %v2261, %v2644
    %v2646 = vand.u32 %v2645, 4294901760
    %v2647 = vsub.f32 %v2645, %v2646
    %v2648 = vand.u32 %v2647, 4294901760
    %2649 = vmatmul.mubr.f32.gmra.mrb[0].mxu0 %v2648
    %v2650 = vpop.f32.mrb[0].mxu0
    %v2651 = vadd.f32 0.0, %v2650
    %v2652 = vpop.f32.mrb[0].mxu0
    %v2653 = vadd.f32 0.0, %v2652
    %v2654 = vand.u32 %v2392, 4294901760
    %v2655 = vsub.f32 %v2392, %v2654
    %v2656 = vand.u32 %v2655, 4294901760
    %v2657 = vsub.f32 %v2655, %v2656
    %v2658 = vand.u32 %v2657, 4294901760
    %2659 = vmatprep.mubr.f32.mxu0 %v2658
    %v2660 = vand.u32 %v2269, 4294901760
    %v2661 = vsub.f32 %v2269, %v2660
    %v2662 = vand.u32 %v2661, 4294901760
    %v2663 = vsub.f32 %v2661, %v2662
    %v2664 = vand.u32 %v2663, 4294901760
    %2665 = vmatmul.mubr.f32.gmra.mrb[0].mxu0 %v2664
    %v2666 = vpop.f32.mrb[0].mxu0
    %v2667 = vadd.f32 0.0, %v2666
    %v2668 = vpop.f32.mrb[0].mxu0
    %v2669 = vadd.f32 0.0, %v2668
    %v2670 = vand.u32 %v2395, 4294901760
    %v2671 = vsub.f32 %v2395, %v2670
    %v2672 = vand.u32 %v2671, 4294901760
    %v2673 = vsub.f32 %v2671, %v2672
    %v2674 = vand.u32 %v2673, 4294901760
    %2675 = vmatprep.mubr.f32.mxu0 %v2674
    %v2676 = vand.u32 %v2277, 4294901760
    %v2677 = vsub.f32 %v2277, %v2676
    %v2678 = vand.u32 %v2677, 4294901760
    %v2679 = vsub.f32 %v2677, %v2678
    %v2680 = vand.u32 %v2679, 4294901760
    %2681 = vmatmul.mubr.f32.gmra.mrb[0].mxu0 %v2680
    %v2682 = vpop.f32.mrb[0].mxu0
    %v2683 = vadd.f32 0.0, %v2682
    %v2684 = vpop.f32.mrb[0].mxu0
    %v2685 = vadd.f32 0.0, %v2684
    %v2686 = vand.u32 %v2398, 4294901760
    %v2687 = vsub.f32 %v2398, %v2686
    %v2688 = vand.u32 %v2687, 4294901760
    %v2689 = vsub.f32 %v2687, %v2688
    %v2690 = vand.u32 %v2689, 4294901760
    %2691 = vmatprep.mubr.f32.mxu0 %v2690
    %v2692 = vand.u32 %v2285, 4294901760
    %v2693 = vsub.f32 %v2285, %v2692
    %v2694 = vand.u32 %v2693, 4294901760
    %v2695 = vsub.f32 %v2693, %v2694
    %v2696 = vand.u32 %v2695, 4294901760
    %2697 = vmatmul.mubr.f32.gmra.mrb[0].mxu0 %v2696
    %v2698 = vpop.f32.mrb[0].mxu0
    %v2699 = vadd.f32 0.0, %v2698
    %v2700 = vpop.f32.mrb[0].mxu0
    %v2701 = vadd.f32 0.0, %v2700
    %v2702 = vand.u32 %v2401, 4294901760
    %v2703 = vsub.f32 %v2401, %v2702
    %v2704 = vand.u32 %v2703, 4294901760
    %v2705 = vsub.f32 %v2703, %v2704
    %v2706 = vand.u32 %v2705, 4294901760
    %2707 = vmatprep.mubr.f32.mxu0 %v2706
    %v2708 = vand.u32 %v2293, 4294901760
    %v2709 = vsub.f32 %v2293, %v2708
    %v2710 = vand.u32 %v2709, 4294901760
    %v2711 = vsub.f32 %v2709, %v2710
    %v2712 = vand.u32 %v2711, 4294901760
    %2713 = vmatmul.mubr.f32.gmra.mrb[0].mxu0 %v2712
    %v2714 = vpop.f32.mrb[0].mxu0
    %v2715 = vadd.f32 0.0, %v2714
    %v2716 = vpop.f32.mrb[0].mxu0
    %v2717 = vadd.f32 0.0, %v2716
    %v2718 = vand.u32 %v2404, 4294901760
    %v2719 = vsub.f32 %v2404, %v2718
    %v2720 = vand.u32 %v2719, 4294901760
    %v2721 = vsub.f32 %v2719, %v2720
    %v2722 = vand.u32 %v2721, 4294901760
    %2723 = vmatprep.mubr.f32.mxu0 %v2722
    %v2724 = vand.u32 %v2301, 4294901760
    %v2725 = vsub.f32 %v2301, %v2724
    %v2726 = vand.u32 %v2725, 4294901760
    %v2727 = vsub.f32 %v2725, %v2726
    %v2728 = vand.u32 %v2727, 4294901760
    %2729 = vmatmul.mubr.f32.gmra.mrb[0].mxu0 %v2728
    %v2730 = vpop.f32.mrb[0].mxu0
    %v2731 = vadd.f32 0.0, %v2730
    %v2732 = vpop.f32.mrb[0].mxu0
    %v2733 = vadd.f32 0.0, %v2732
    %v2734 = vand.u32 %v2407, 4294901760
    %v2735 = vsub.f32 %v2407, %v2734
    %v2736 = vand.u32 %v2735, 4294901760
    %v2737 = vsub.f32 %v2735, %v2736
    %v2738 = vand.u32 %v2737, 4294901760
    %2739 = vmatprep.mubr.f32.mxu0 %v2738
    %v2740 = vand.u32 %v2309, 4294901760
    %v2741 = vsub.f32 %v2309, %v2740
    %v2742 = vand.u32 %v2741, 4294901760
    %v2743 = vsub.f32 %v2741, %v2742
    %v2744 = vand.u32 %v2743, 4294901760
    %2745 = vmatmul.mubr.f32.gmra.mrb[0].mxu0 %v2744
    %v2746 = vpop.f32.mrb[0].mxu0
    %v2747 = vadd.f32 0.0, %v2746
    %v2748 = vpop.f32.mrb[0].mxu0
    %v2749 = vadd.f32 0.0, %v2748
    %v2750 = vand.u32 %v2410, 4294901760
    %v2751 = vsub.f32 %v2410, %v2750
    %v2752 = vand.u32 %v2751, 4294901760
    %v2753 = vsub.f32 %v2751, %v2752
    %v2754 = vand.u32 %v2753, 4294901760
    %2755 = vmatprep.mubr.f32.mxu0 %v2754
    %v2756 = vand.u32 %v2317, 4294901760
    %v2757 = vsub.f32 %v2317, %v2756
    %v2758 = vand.u32 %v2757, 4294901760
    %v2759 = vsub.f32 %v2757, %v2758
    %v2760 = vand.u32 %v2759, 4294901760
    %2761 = vmatmul.mubr.f32.gmra.mrb[0].mxu0 %v2760
    %v2762 = vpop.f32.mrb[0].mxu0
    %v2763 = vadd.f32 0.0, %v2762
    %v2764 = vpop.f32.mrb[0].mxu0
    %v2765 = vadd.f32 0.0, %v2764
    %v2766 = vand.u32 %v2413, 4294901760
    %v2767 = vsub.f32 %v2413, %v2766
    %v2768 = vand.u32 %v2767, 4294901760
    %v2769 = vsub.f32 %v2767, %v2768
    %v2770 = vand.u32 %v2769, 4294901760
    %2771 = vmatprep.mubr.f32.mxu0 %v2770
    %v2772 = vand.u32 %v2325, 4294901760
    %v2773 = vsub.f32 %v2325, %v2772
    %v2774 = vand.u32 %v2773, 4294901760
    %v2775 = vsub.f32 %v2773, %v2774
    %v2776 = vand.u32 %v2775, 4294901760
    %2777 = vmatmul.mubr.f32.gmra.mrb[0].mxu0 %v2776
    %v2778 = vpop.f32.mrb[0].mxu0
    %v2779 = vadd.f32 0.0, %v2778
    %v2780 = vpop.f32.mrb[0].mxu0
    %v2781 = vadd.f32 0.0, %v2780
    %v2782 = vand.u32 %v2416, 4294901760
    %v2783 = vsub.f32 %v2416, %v2782
    %v2784 = vand.u32 %v2783, 4294901760
    %v2785 = vsub.f32 %v2783, %v2784
    %v2786 = vand.u32 %v2785, 4294901760
    %2787 = vmatprep.mubr.f32.mxu0 %v2786
    %v2788 = vand.u32 %v2333, 4294901760
    %v2789 = vsub.f32 %v2333, %v2788
    %v2790 = vand.u32 %v2789, 4294901760
    %v2791 = vsub.f32 %v2789, %v2790
    %v2792 = vand.u32 %v2791, 4294901760
    %2793 = vmatmul.mubr.f32.gmra.mrb[0].mxu0 %v2792
    %v2794 = vpop.f32.mrb[0].mxu0
    %v2795 = vadd.f32 0.0, %v2794
    %v2796 = vpop.f32.mrb[0].mxu0
    %v2797 = vadd.f32 0.0, %v2796
    %v2798 = vand.u32 %v2419, 4294901760
    %v2799 = vsub.f32 %v2419, %v2798
    %v2800 = vand.u32 %v2799, 4294901760
    %v2801 = vsub.f32 %v2799, %v2800
    %v2802 = vand.u32 %v2801, 4294901760
    %2803 = vmatprep.mubr.f32.mxu0 %v2802
    %v2804 = vand.u32 %v2341, 4294901760
    %v2805 = vsub.f32 %v2341, %v2804
    %v2806 = vand.u32 %v2805, 4294901760
    %v2807 = vsub.f32 %v2805, %v2806
    %v2808 = vand.u32 %v2807, 4294901760
    %2809 = vmatmul.mubr.f32.gmra.mrb[0].mxu0 %v2808
    %v2810 = vpop.f32.mrb[0].mxu0
    %v2811 = vadd.f32 0.0, %v2810
    %v2812 = vpop.f32.mrb[0].mxu0
    %v2813 = vadd.f32 0.0, %v2812
    %v2814 = vand.u32 %v2422, 4294901760
    %v2815 = vsub.f32 %v2422, %v2814
    %v2816 = vand.u32 %v2815, 4294901760
    %v2817 = vsub.f32 %v2815, %v2816
    %v2818 = vand.u32 %v2817, 4294901760
    %2819 = vmatprep.mubr.f32.mxu0 %v2818
    %v2820 = vand.u32 %v2349, 4294901760
    %v2821 = vsub.f32 %v2349, %v2820
    %v2822 = vand.u32 %v2821, 4294901760
    %v2823 = vsub.f32 %v2821, %v2822
    %v2824 = vand.u32 %v2823, 4294901760
    %2825 = vmatmul.mubr.f32.gmra.mrb[0].mxu0 %v2824
    %v2826 = vpop.f32.mrb[0].mxu0
    %v2827 = vadd.f32 0.0, %v2826
    %v2828 = vpop.f32.mrb[0].mxu0
    %v2829 = vadd.f32 0.0, %v2828
    %v2830 = vand.u32 %v2425, 4294901760
    %v2831 = vsub.f32 %v2425, %v2830
    %v2832 = vand.u32 %v2831, 4294901760
    %v2833 = vsub.f32 %v2831, %v2832
    %v2834 = vand.u32 %v2833, 4294901760
    %2835 = vmatprep.mubr.f32.mxu0 %v2834
    %v2836 = vand.u32 %v2357, 4294901760
    %v2837 = vsub.f32 %v2357, %v2836
    %v2838 = vand.u32 %v2837, 4294901760
    %v2839 = vsub.f32 %v2837, %v2838
    %v2840 = vand.u32 %v2839, 4294901760
    %2841 = vmatmul.mubr.f32.gmra.mrb[0].mxu0 %v2840
    %v2842 = vpop.f32.mrb[0].mxu0
    %v2843 = vadd.f32 0.0, %v2842
    %v2844 = vpop.f32.mrb[0].mxu0
    %v2845 = vadd.f32 0.0, %v2844
    %v2846 = vand.u32 %v2428, 4294901760
    %v2847 = vsub.f32 %v2428, %v2846
    %v2848 = vand.u32 %v2847, 4294901760
    %v2849 = vsub.f32 %v2847, %v2848
    %v2850 = vand.u32 %v2849, 4294901760
    %2851 = vmatprep.mubr.f32.mxu0 %v2850
    %v2852 = vand.u32 %v2365, 4294901760
    %v2853 = vsub.f32 %v2365, %v2852
    %v2854 = vand.u32 %v2853, 4294901760
    %v2855 = vsub.f32 %v2853, %v2854
    %v2856 = vand.u32 %v2855, 4294901760
    %2857 = vmatmul.mubr.f32.gmra.mrb[0].mxu0 %v2856
    %v2858 = vpop.f32.mrb[0].mxu0
    %v2859 = vadd.f32 0.0, %v2858
    %v2860 = vpop.f32.mrb[0].mxu0
    %v2861 = vadd.f32 0.0, %v2860
    %2862 = vdwg.mxu0
    %v2863 = vand.u32 %v87, 4294901760
    %v2864 = vsub.f32 %v87, %v2863
    %v2865 = vand.u32 %v2864, 4294901760
    %v2866 = vsub.f32 %v2864, %v2865
    %v2867 = vand.u32 %v2866, 4294901760
    %2868 = vmatprep.subr.mxu0 %v2867
    %v2869 = vand.u32 %v86, 4294901760
    %v2870 = vsub.f32 %v86, %v2869
    %v2871 = vand.u32 %v2870, 4294901760
    %v2872 = vsub.f32 %v2870, %v2871
    %v2873 = vand.u32 %v2872, 4294901760
    %2874 = vmatpush1.msra.mxu0 %v2873
    %v2875 = vand.u32 %v89, 4294901760
    %v2876 = vsub.f32 %v89, %v2875
    %v2877 = vand.u32 %v2876, 4294901760
    %v2878 = vsub.f32 %v2876, %v2877
    %v2879 = vand.u32 %v2878, 4294901760
    %2880 = vmatprep.subr.mxu0 %v2879
    %v2881 = vand.u32 %v88, 4294901760
    %v2882 = vsub.f32 %v88, %v2881
    %v2883 = vand.u32 %v2882, 4294901760
    %v2884 = vsub.f32 %v2882, %v2883
    %v2885 = vand.u32 %v2884, 4294901760
    %2886 = vmatpush1.msra.mxu0 %v2885
    %v2887 = vand.u32 %v91, 4294901760
    %v2888 = vsub.f32 %v91, %v2887
    %v2889 = vand.u32 %v2888, 4294901760
    %v2890 = vsub.f32 %v2888, %v2889
    %v2891 = vand.u32 %v2890, 4294901760
    %2892 = vmatprep.subr.mxu0 %v2891
    %v2893 = vand.u32 %v90, 4294901760
    %v2894 = vsub.f32 %v90, %v2893
    %v2895 = vand.u32 %v2894, 4294901760
    %v2896 = vsub.f32 %v2894, %v2895
    %v2897 = vand.u32 %v2896, 4294901760
    %2898 = vmatpush1.msra.mxu0 %v2897
    %v2899 = vand.u32 %v93, 4294901760
    %v2900 = vsub.f32 %v93, %v2899
    %v2901 = vand.u32 %v2900, 4294901760
    %v2902 = vsub.f32 %v2900, %v2901
    %v2903 = vand.u32 %v2902, 4294901760
    %2904 = vmatprep.subr.mxu0 %v2903
    %v2905 = vand.u32 %v92, 4294901760
    %v2906 = vsub.f32 %v92, %v2905
    %v2907 = vand.u32 %v2906, 4294901760
    %v2908 = vsub.f32 %v2906, %v2907
    %v2909 = vand.u32 %v2908, 4294901760
    %2910 = vmatpush1.msra.mxu0 %v2909
    %v2911 = vand.u32 %v95, 4294901760
    %v2912 = vsub.f32 %v95, %v2911
    %v2913 = vand.u32 %v2912, 4294901760
    %v2914 = vsub.f32 %v2912, %v2913
    %v2915 = vand.u32 %v2914, 4294901760
    %2916 = vmatprep.subr.mxu0 %v2915
    %v2917 = vand.u32 %v94, 4294901760
    %v2918 = vsub.f32 %v94, %v2917
    %v2919 = vand.u32 %v2918, 4294901760
    %v2920 = vsub.f32 %v2918, %v2919
    %v2921 = vand.u32 %v2920, 4294901760
    %2922 = vmatpush1.msra.mxu0 %v2921
    %v2923 = vand.u32 %v97, 4294901760
    %v2924 = vsub.f32 %v97, %v2923
    %v2925 = vand.u32 %v2924, 4294901760
    %v2926 = vsub.f32 %v2924, %v2925
    %v2927 = vand.u32 %v2926, 4294901760
    %2928 = vmatprep.subr.mxu0 %v2927
    %v2929 = vand.u32 %v96, 4294901760
    %v2930 = vsub.f32 %v96, %v2929
    %v2931 = vand.u32 %v2930, 4294901760
    %v2932 = vsub.f32 %v2930, %v2931
    %v2933 = vand.u32 %v2932, 4294901760
    %2934 = vmatpush1.msra.mxu0 %v2933
    %v2935 = vand.u32 %v99, 4294901760
    %v2936 = vsub.f32 %v99, %v2935
    %v2937 = vand.u32 %v2936, 4294901760
    %v2938 = vsub.f32 %v2936, %v2937
    %v2939 = vand.u32 %v2938, 4294901760
    %2940 = vmatprep.subr.mxu0 %v2939
    %v2941 = vand.u32 %v98, 4294901760
    %v2942 = vsub.f32 %v98, %v2941
    %v2943 = vand.u32 %v2942, 4294901760
    %v2944 = vsub.f32 %v2942, %v2943
    %v2945 = vand.u32 %v2944, 4294901760
    %2946 = vmatpush1.msra.mxu0 %v2945
    %v2947 = vand.u32 %v101, 4294901760
    %v2948 = vsub.f32 %v101, %v2947
    %v2949 = vand.u32 %v2948, 4294901760
    %v2950 = vsub.f32 %v2948, %v2949
    %v2951 = vand.u32 %v2950, 4294901760
    %2952 = vmatprep.subr.mxu0 %v2951
    %v2953 = vand.u32 %v100, 4294901760
    %v2954 = vsub.f32 %v100, %v2953
    %v2955 = vand.u32 %v2954, 4294901760
    %v2956 = vsub.f32 %v2954, %v2955
    %v2957 = vand.u32 %v2956, 4294901760
    %2958 = vmatpush1.msra.mxu0 %v2957
    %v2959 = vand.u32 %v103, 4294901760
    %v2960 = vsub.f32 %v103, %v2959
    %v2961 = vand.u32 %v2960, 4294901760
    %v2962 = vsub.f32 %v2960, %v2961
    %v2963 = vand.u32 %v2962, 4294901760
    %2964 = vmatprep.subr.mxu0 %v2963
    %v2965 = vand.u32 %v102, 4294901760
    %v2966 = vsub.f32 %v102, %v2965
    %v2967 = vand.u32 %v2966, 4294901760
    %v2968 = vsub.f32 %v2966, %v2967
    %v2969 = vand.u32 %v2968, 4294901760
    %2970 = vmatpush1.msra.mxu0 %v2969
    %v2971 = vand.u32 %v105, 4294901760
    %v2972 = vsub.f32 %v105, %v2971
    %v2973 = vand.u32 %v2972, 4294901760
    %v2974 = vsub.f32 %v2972, %v2973
    %v2975 = vand.u32 %v2974, 4294901760
    %2976 = vmatprep.subr.mxu0 %v2975
    %v2977 = vand.u32 %v104, 4294901760
    %v2978 = vsub.f32 %v104, %v2977
    %v2979 = vand.u32 %v2978, 4294901760
    %v2980 = vsub.f32 %v2978, %v2979
    %v2981 = vand.u32 %v2980, 4294901760
    %2982 = vmatpush1.msra.mxu0 %v2981
    %v2983 = vand.u32 %v107, 4294901760
    %v2984 = vsub.f32 %v107, %v2983
    %v2985 = vand.u32 %v2984, 4294901760
    %v2986 = vsub.f32 %v2984, %v2985
    %v2987 = vand.u32 %v2986, 4294901760
    %2988 = vmatprep.subr.mxu0 %v2987
    %v2989 = vand.u32 %v106, 4294901760
    %v2990 = vsub.f32 %v106, %v2989
    %v2991 = vand.u32 %v2990, 4294901760
    %v2992 = vsub.f32 %v2990, %v2991
    %v2993 = vand.u32 %v2992, 4294901760
    %2994 = vmatpush1.msra.mxu0 %v2993
    %v2995 = vand.u32 %v109, 4294901760
    %v2996 = vsub.f32 %v109, %v2995
    %v2997 = vand.u32 %v2996, 4294901760
    %v2998 = vsub.f32 %v2996, %v2997
    %v2999 = vand.u32 %v2998, 4294901760
    %3000 = vmatprep.subr.mxu0 %v2999
    %v3001 = vand.u32 %v108, 4294901760
    %v3002 = vsub.f32 %v108, %v3001
    %v3003 = vand.u32 %v3002, 4294901760
    %v3004 = vsub.f32 %v3002, %v3003
    %v3005 = vand.u32 %v3004, 4294901760
    %3006 = vmatpush1.msra.mxu0 %v3005
    %v3007 = vand.u32 %v111, 4294901760
    %v3008 = vsub.f32 %v111, %v3007
    %v3009 = vand.u32 %v3008, 4294901760
    %v3010 = vsub.f32 %v3008, %v3009
    %v3011 = vand.u32 %v3010, 4294901760
    %3012 = vmatprep.subr.mxu0 %v3011
    %v3013 = vand.u32 %v110, 4294901760
    %v3014 = vsub.f32 %v110, %v3013
    %v3015 = vand.u32 %v3014, 4294901760
    %v3016 = vsub.f32 %v3014, %v3015
    %v3017 = vand.u32 %v3016, 4294901760
    %3018 = vmatpush1.msra.mxu0 %v3017
    %v3019 = vand.u32 %v113, 4294901760
    %v3020 = vsub.f32 %v113, %v3019
    %v3021 = vand.u32 %v3020, 4294901760
    %v3022 = vsub.f32 %v3020, %v3021
    %v3023 = vand.u32 %v3022, 4294901760
    %3024 = vmatprep.subr.mxu0 %v3023
    %v3025 = vand.u32 %v112, 4294901760
    %v3026 = vsub.f32 %v112, %v3025
    %v3027 = vand.u32 %v3026, 4294901760
    %v3028 = vsub.f32 %v3026, %v3027
    %v3029 = vand.u32 %v3028, 4294901760
    %3030 = vmatpush1.msra.mxu0 %v3029
    %v3031 = vand.u32 %v115, 4294901760
    %v3032 = vsub.f32 %v115, %v3031
    %v3033 = vand.u32 %v3032, 4294901760
    %v3034 = vsub.f32 %v3032, %v3033
    %v3035 = vand.u32 %v3034, 4294901760
    %3036 = vmatprep.subr.mxu0 %v3035
    %v3037 = vand.u32 %v114, 4294901760
    %v3038 = vsub.f32 %v114, %v3037
    %v3039 = vand.u32 %v3038, 4294901760
    %v3040 = vsub.f32 %v3038, %v3039
    %v3041 = vand.u32 %v3040, 4294901760
    %3042 = vmatpush1.msra.mxu0 %v3041
    %v3043 = vand.u32 %v117, 4294901760
    %v3044 = vsub.f32 %v117, %v3043
    %v3045 = vand.u32 %v3044, 4294901760
    %v3046 = vsub.f32 %v3044, %v3045
    %v3047 = vand.u32 %v3046, 4294901760
    %3048 = vmatprep.subr.mxu0 %v3047
    %v3049 = vand.u32 %v116, 4294901760
    %v3050 = vsub.f32 %v116, %v3049
    %v3051 = vand.u32 %v3050, 4294901760
    %v3052 = vsub.f32 %v3050, %v3051
    %v3053 = vand.u32 %v3052, 4294901760
    %3054 = vmatpush1.msra.mxu0 %v3053
    %v3055 = vand.u32 %v119, 4294901760
    %v3056 = vsub.f32 %v119, %v3055
    %v3057 = vand.u32 %v3056, 4294901760
    %v3058 = vsub.f32 %v3056, %v3057
    %v3059 = vand.u32 %v3058, 4294901760
    %3060 = vmatprep.subr.mxu0 %v3059
    %v3061 = vand.u32 %v118, 4294901760
    %v3062 = vsub.f32 %v118, %v3061
    %v3063 = vand.u32 %v3062, 4294901760
    %v3064 = vsub.f32 %v3062, %v3063
    %v3065 = vand.u32 %v3064, 4294901760
    %3066 = vmatpush1.msra.mxu0 %v3065
    %v3067 = vand.u32 %v121, 4294901760
    %v3068 = vsub.f32 %v121, %v3067
    %v3069 = vand.u32 %v3068, 4294901760
    %v3070 = vsub.f32 %v3068, %v3069
    %v3071 = vand.u32 %v3070, 4294901760
    %3072 = vmatprep.subr.mxu0 %v3071
    %v3073 = vand.u32 %v120, 4294901760
    %v3074 = vsub.f32 %v120, %v3073
    %v3075 = vand.u32 %v3074, 4294901760
    %v3076 = vsub.f32 %v3074, %v3075
    %v3077 = vand.u32 %v3076, 4294901760
    %3078 = vmatpush1.msra.mxu0 %v3077
    %v3079 = vand.u32 %v123, 4294901760
    %v3080 = vsub.f32 %v123, %v3079
    %v3081 = vand.u32 %v3080, 4294901760
    %v3082 = vsub.f32 %v3080, %v3081
    %v3083 = vand.u32 %v3082, 4294901760
    %3084 = vmatprep.subr.mxu0 %v3083
    %v3085 = vand.u32 %v122, 4294901760
    %v3086 = vsub.f32 %v122, %v3085
    %v3087 = vand.u32 %v3086, 4294901760
    %v3088 = vsub.f32 %v3086, %v3087
    %v3089 = vand.u32 %v3088, 4294901760
    %3090 = vmatpush1.msra.mxu0 %v3089
    %v3091 = vand.u32 %v125, 4294901760
    %v3092 = vsub.f32 %v125, %v3091
    %v3093 = vand.u32 %v3092, 4294901760
    %v3094 = vsub.f32 %v3092, %v3093
    %v3095 = vand.u32 %v3094, 4294901760
    %3096 = vmatprep.subr.mxu0 %v3095
    %v3097 = vand.u32 %v124, 4294901760
    %v3098 = vsub.f32 %v124, %v3097
    %v3099 = vand.u32 %v3098, 4294901760
    %v3100 = vsub.f32 %v3098, %v3099
    %v3101 = vand.u32 %v3100, 4294901760
    %3102 = vmatpush1.msra.mxu0 %v3101
    %v3103 = vand.u32 %v127, 4294901760
    %v3104 = vsub.f32 %v127, %v3103
    %v3105 = vand.u32 %v3104, 4294901760
    %v3106 = vsub.f32 %v3104, %v3105
    %v3107 = vand.u32 %v3106, 4294901760
    %3108 = vmatprep.subr.mxu0 %v3107
    %v3109 = vand.u32 %v126, 4294901760
    %v3110 = vsub.f32 %v126, %v3109
    %v3111 = vand.u32 %v3110, 4294901760
    %v3112 = vsub.f32 %v3110, %v3111
    %v3113 = vand.u32 %v3112, 4294901760
    %3114 = vmatpush1.msra.mxu0 %v3113
    %v3115 = vand.u32 %v129, 4294901760
    %v3116 = vsub.f32 %v129, %v3115
    %v3117 = vand.u32 %v3116, 4294901760
    %v3118 = vsub.f32 %v3116, %v3117
    %v3119 = vand.u32 %v3118, 4294901760
    %3120 = vmatprep.subr.mxu0 %v3119
    %v3121 = vand.u32 %v128, 4294901760
    %v3122 = vsub.f32 %v128, %v3121
    %v3123 = vand.u32 %v3122, 4294901760
    %v3124 = vsub.f32 %v3122, %v3123
    %v3125 = vand.u32 %v3124, 4294901760
    %3126 = vmatpush1.msra.mxu0 %v3125
    %v3127 = vand.u32 %v131, 4294901760
    %v3128 = vsub.f32 %v131, %v3127
    %v3129 = vand.u32 %v3128, 4294901760
    %v3130 = vsub.f32 %v3128, %v3129
    %v3131 = vand.u32 %v3130, 4294901760
    %3132 = vmatprep.subr.mxu0 %v3131
    %v3133 = vand.u32 %v130, 4294901760
    %v3134 = vsub.f32 %v130, %v3133
    %v3135 = vand.u32 %v3134, 4294901760
    %v3136 = vsub.f32 %v3134, %v3135
    %v3137 = vand.u32 %v3136, 4294901760
    %3138 = vmatpush1.msra.mxu0 %v3137
    %v3139 = vand.u32 %v133, 4294901760
    %v3140 = vsub.f32 %v133, %v3139
    %v3141 = vand.u32 %v3140, 4294901760
    %v3142 = vsub.f32 %v3140, %v3141
    %v3143 = vand.u32 %v3142, 4294901760
    %3144 = vmatprep.subr.mxu0 %v3143
    %v3145 = vand.u32 %v132, 4294901760
    %v3146 = vsub.f32 %v132, %v3145
    %v3147 = vand.u32 %v3146, 4294901760
    %v3148 = vsub.f32 %v3146, %v3147
    %v3149 = vand.u32 %v3148, 4294901760
    %3150 = vmatpush1.msra.mxu0 %v3149
    %3151 = vmatprep.subr.mxu0 0.0
    %3152 = vmatpush1.msra.mxu0 0.0
    %3153 = vmatprep.subr.mxu0 0.0
    %3154 = vmatpush1.msra.mxu0 0.0
    %3155 = vmatprep.subr.mxu0 0.0
    %3156 = vmatpush1.msra.mxu0 0.0
    %3157 = vmatprep.subr.mxu0 0.0
    %3158 = vmatpush1.msra.mxu0 0.0
    %3159 = vmatprep.subr.mxu0 0.0
    %3160 = vmatpush1.msra.mxu0 0.0
    %3161 = vmatprep.subr.mxu0 0.0
    %3162 = vmatpush1.msra.mxu0 0.0
    %3163 = vmatprep.subr.mxu0 0.0
    %3164 = vmatpush1.msra.mxu0 0.0
    %3165 = vmatprep.subr.mxu0 0.0
    %3166 = vmatpush1.msra.mxu0 0.0
    %v3167 = vand.u32 %v2371, 4294901760
    %3168 = vmatprep.mubr.f32.mxu0 %v3167
    %v3169 = vand.u32 %v2213, 4294901760
    %3170 = vmatmul.mubr.f32.gmra.mrb[0].mxu0 %v3169
    %v3171 = vpop.f32.mrb[0].mxu0
    %v3172 = vadd.f32 %v2555, %v3171
    %v3173 = vpop.f32.mrb[0].mxu0
    %v3174 = vadd.f32 %v2557, %v3173
    %v3175 = vand.u32 %v2374, 4294901760
    %3176 = vmatprep.mubr.f32.mxu0 %v3175
    %v3177 = vand.u32 %v2221, 4294901760
    %3178 = vmatmul.mubr.f32.gmra.mrb[0].mxu0 %v3177
    %v3179 = vpop.f32.mrb[0].mxu0
    %v3180 = vadd.f32 %v2571, %v3179
    %v3181 = vpop.f32.mrb[0].mxu0
    %v3182 = vadd.f32 %v2573, %v3181
    %v3183 = vand.u32 %v2377, 4294901760
    %3184 = vmatprep.mubr.f32.mxu0 %v3183
    %v3185 = vand.u32 %v2229, 4294901760
    %3186 = vmatmul.mubr.f32.gmra.mrb[0].mxu0 %v3185
    %v3187 = vpop.f32.mrb[0].mxu0
    %v3188 = vadd.f32 %v2587, %v3187
    %v3189 = vpop.f32.mrb[0].mxu0
    %v3190 = vadd.f32 %v2589, %v3189
    %v3191 = vand.u32 %v2380, 4294901760
    %3192 = vmatprep.mubr.f32.mxu0 %v3191
    %v3193 = vand.u32 %v2237, 4294901760
    %3194 = vmatmul.mubr.f32.gmra.mrb[0].mxu0 %v3193
    %v3195 = vpop.f32.mrb[0].mxu0
    %v3196 = vadd.f32 %v2603, %v3195
    %v3197 = vpop.f32.mrb[0].mxu0
    %v3198 = vadd.f32 %v2605, %v3197
    %v3199 = vand.u32 %v2383, 4294901760
    %3200 = vmatprep.mubr.f32.mxu0 %v3199
    %v3201 = vand.u32 %v2245, 4294901760
    %3202 = vmatmul.mubr.f32.gmra.mrb[0].mxu0 %v3201
    %v3203 = vpop.f32.mrb[0].mxu0
    %v3204 = vadd.f32 %v2619, %v3203
    %v3205 = vpop.f32.mrb[0].mxu0
    %v3206 = vadd.f32 %v2621, %v3205
    %v3207 = vand.u32 %v2386, 4294901760
    %3208 = vmatprep.mubr.f32.mxu0 %v3207
    %v3209 = vand.u32 %v2253, 4294901760
    %3210 = vmatmul.mubr.f32.gmra.mrb[0].mxu0 %v3209
    %v3211 = vpop.f32.mrb[0].mxu0
    %v3212 = vadd.f32 %v2635, %v3211
    %v3213 = vpop.f32.mrb[0].mxu0
    %v3214 = vadd.f32 %v2637, %v3213
    %v3215 = vand.u32 %v2389, 4294901760
    %3216 = vmatprep.mubr.f32.mxu0 %v3215
    %v3217 = vand.u32 %v2261, 4294901760
    %3218 = vmatmul.mubr.f32.gmra.mrb[0].mxu0 %v3217
    %v3219 = vpop.f32.mrb[0].mxu0
    %v3220 = vadd.f32 %v2651, %v3219
    %v3221 = vpop.f32.mrb[0].mxu0
    %v3222 = vadd.f32 %v2653, %v3221
    %v3223 = vand.u32 %v2392, 4294901760
    %3224 = vmatprep.mubr.f32.mxu0 %v3223
    %v3225 = vand.u32 %v2269, 4294901760
    %3226 = vmatmul.mubr.f32.gmra.mrb[0].mxu0 %v3225
    %v3227 = vpop.f32.mrb[0].mxu0
    %v3228 = vadd.f32 %v2667, %v3227
    %v3229 = vpop.f32.mrb[0].mxu0
    %v3230 = vadd.f32 %v2669, %v3229
    %v3231 = vand.u32 %v2395, 4294901760
    %3232 = vmatprep.mubr.f32.mxu0 %v3231
    %v3233 = vand.u32 %v2277, 4294901760
    %3234 = vmatmul.mubr.f32.gmra.mrb[0].mxu0 %v3233
    %v3235 = vpop.f32.mrb[0].mxu0
    %v3236 = vadd.f32 %v2683, %v3235
    %v3237 = vpop.f32.mrb[0].mxu0
    %v3238 = vadd.f32 %v2685, %v3237
    %v3239 = vand.u32 %v2398, 4294901760
    %3240 = vmatprep.mubr.f32.mxu0 %v3239
    %v3241 = vand.u32 %v2285, 4294901760
    %3242 = vmatmul.mubr.f32.gmra.mrb[0].mxu0 %v3241
    %v3243 = vpop.f32.mrb[0].mxu0
    %v3244 = vadd.f32 %v2699, %v3243
    %v3245 = vpop.f32.mrb[0].mxu0
    %v3246 = vadd.f32 %v2701, %v3245
    %v3247 = vand.u32 %v2401, 4294901760
    %3248 = vmatprep.mubr.f32.mxu0 %v3247
    %v3249 = vand.u32 %v2293, 4294901760
    %3250 = vmatmul.mubr.f32.gmra.mrb[0].mxu0 %v3249
    %v3251 = vpop.f32.mrb[0].mxu0
    %v3252 = vadd.f32 %v2715, %v3251
    %v3253 = vpop.f32.mrb[0].mxu0
    %v3254 = vadd.f32 %v2717, %v3253
    %v3255 = vand.u32 %v2404, 4294901760
    %3256 = vmatprep.mubr.f32.mxu0 %v3255
    %v3257 = vand.u32 %v2301, 4294901760
    %3258 = vmatmul.mubr.f32.gmra.mrb[0].mxu0 %v3257
    %v3259 = vpop.f32.mrb[0].mxu0
    %v3260 = vadd.f32 %v2731, %v3259
    %v3261 = vpop.f32.mrb[0].mxu0
    %v3262 = vadd.f32 %v2733, %v3261
    %v3263 = vand.u32 %v2407, 4294901760
    %3264 = vmatprep.mubr.f32.mxu0 %v3263
    %v3265 = vand.u32 %v2309, 4294901760
    %3266 = vmatmul.mubr.f32.gmra.mrb[0].mxu0 %v3265
    %v3267 = vpop.f32.mrb[0].mxu0
    %v3268 = vadd.f32 %v2747, %v3267
    %v3269 = vpop.f32.mrb[0].mxu0
    %v3270 = vadd.f32 %v2749, %v3269
    %v3271 = vand.u32 %v2410, 4294901760
    %3272 = vmatprep.mubr.f32.mxu0 %v3271
    %v3273 = vand.u32 %v2317, 4294901760
    %3274 = vmatmul.mubr.f32.gmra.mrb[0].mxu0 %v3273
    %v3275 = vpop.f32.mrb[0].mxu0
    %v3276 = vadd.f32 %v2763, %v3275
    %v3277 = vpop.f32.mrb[0].mxu0
    %v3278 = vadd.f32 %v2765, %v3277
    %v3279 = vand.u32 %v2413, 4294901760
    %3280 = vmatprep.mubr.f32.mxu0 %v3279
    %v3281 = vand.u32 %v2325, 4294901760
    %3282 = vmatmul.mubr.f32.gmra.mrb[0].mxu0 %v3281
    %v3283 = vpop.f32.mrb[0].mxu0
    %v3284 = vadd.f32 %v2779, %v3283
    %v3285 = vpop.f32.mrb[0].mxu0
    %v3286 = vadd.f32 %v2781, %v3285
    %v3287 = vand.u32 %v2416, 4294901760
    %3288 = vmatprep.mubr.f32.mxu0 %v3287
    %v3289 = vand.u32 %v2333, 4294901760
    %3290 = vmatmul.mubr.f32.gmra.mrb[0].mxu0 %v3289
    %v3291 = vpop.f32.mrb[0].mxu0
    %v3292 = vadd.f32 %v2795, %v3291
    %v3293 = vpop.f32.mrb[0].mxu0
    %v3294 = vadd.f32 %v2797, %v3293
    %v3295 = vand.u32 %v2419, 4294901760
    %3296 = vmatprep.mubr.f32.mxu0 %v3295
    %v3297 = vand.u32 %v2341, 4294901760
    %3298 = vmatmul.mubr.f32.gmra.mrb[0].mxu0 %v3297
    %v3299 = vpop.f32.mrb[0].mxu0
    %v3300 = vadd.f32 %v2811, %v3299
    %v3301 = vpop.f32.mrb[0].mxu0
    %v3302 = vadd.f32 %v2813, %v3301
    %v3303 = vand.u32 %v2422, 4294901760
    %3304 = vmatprep.mubr.f32.mxu0 %v3303
    %v3305 = vand.u32 %v2349, 4294901760
    %3306 = vmatmul.mubr.f32.gmra.mrb[0].mxu0 %v3305
    %v3307 = vpop.f32.mrb[0].mxu0
    %v3308 = vadd.f32 %v2827, %v3307
    %v3309 = vpop.f32.mrb[0].mxu0
    %v3310 = vadd.f32 %v2829, %v3309
    %v3311 = vand.u32 %v2425, 4294901760
    %3312 = vmatprep.mubr.f32.mxu0 %v3311
    %v3313 = vand.u32 %v2357, 4294901760
    %3314 = vmatmul.mubr.f32.gmra.mrb[0].mxu0 %v3313
    %v3315 = vpop.f32.mrb[0].mxu0
    %v3316 = vadd.f32 %v2843, %v3315
    %v3317 = vpop.f32.mrb[0].mxu0
    %v3318 = vadd.f32 %v2845, %v3317
    %v3319 = vand.u32 %v2428, 4294901760
    %3320 = vmatprep.mubr.f32.mxu0 %v3319
    %v3321 = vand.u32 %v2365, 4294901760
    %3322 = vmatmul.mubr.f32.gmra.mrb[0].mxu0 %v3321
    %v3323 = vpop.f32.mrb[0].mxu0
    %v3324 = vadd.f32 %v2859, %v3323
    %v3325 = vpop.f32.mrb[0].mxu0
    %v3326 = vadd.f32 %v2861, %v3325
    %3327 = vdwg.mxu0
    %v3328 = vand.u32 %v87, 4294901760
    %v3329 = vsub.f32 %v87, %v3328
    %3330 = vmatprep.subr.mxu0 %v3329
    %v3331 = vand.u32 %v86, 4294901760
    %v3332 = vsub.f32 %v86, %v3331
    %3333 = vmatpush1.msra.mxu0 %v3332
    %v3334 = vand.u32 %v89, 4294901760
    %v3335 = vsub.f32 %v89, %v3334
    %3336 = vmatprep.subr.mxu0 %v3335
    %v3337 = vand.u32 %v88, 4294901760
    %v3338 = vsub.f32 %v88, %v3337
    %3339 = vmatpush1.msra.mxu0 %v3338
    %v3340 = vand.u32 %v91, 4294901760
    %v3341 = vsub.f32 %v91, %v3340
    %3342 = vmatprep.subr.mxu0 %v3341
    %v3343 = vand.u32 %v90, 4294901760
    %v3344 = vsub.f32 %v90, %v3343
    %3345 = vmatpush1.msra.mxu0 %v3344
    %v3346 = vand.u32 %v93, 4294901760
    %v3347 = vsub.f32 %v93, %v3346
    %3348 = vmatprep.subr.mxu0 %v3347
    %v3349 = vand.u32 %v92, 4294901760
    %v3350 = vsub.f32 %v92, %v3349
    %3351 = vmatpush1.msra.mxu0 %v3350
    %v3352 = vand.u32 %v95, 4294901760
    %v3353 = vsub.f32 %v95, %v3352
    %3354 = vmatprep.subr.mxu0 %v3353
    %v3355 = vand.u32 %v94, 4294901760
    %v3356 = vsub.f32 %v94, %v3355
    %3357 = vmatpush1.msra.mxu0 %v3356
    %v3358 = vand.u32 %v97, 4294901760
    %v3359 = vsub.f32 %v97, %v3358
    %3360 = vmatprep.subr.mxu0 %v3359
    %v3361 = vand.u32 %v96, 4294901760
    %v3362 = vsub.f32 %v96, %v3361
    %3363 = vmatpush1.msra.mxu0 %v3362
    %v3364 = vand.u32 %v99, 4294901760
    %v3365 = vsub.f32 %v99, %v3364
    %3366 = vmatprep.subr.mxu0 %v3365
    %v3367 = vand.u32 %v98, 4294901760
    %v3368 = vsub.f32 %v98, %v3367
    %3369 = vmatpush1.msra.mxu0 %v3368
    %v3370 = vand.u32 %v101, 4294901760
    %v3371 = vsub.f32 %v101, %v3370
    %3372 = vmatprep.subr.mxu0 %v3371
    %v3373 = vand.u32 %v100, 4294901760
    %v3374 = vsub.f32 %v100, %v3373
    %3375 = vmatpush1.msra.mxu0 %v3374
    %v3376 = vand.u32 %v103, 4294901760
    %v3377 = vsub.f32 %v103, %v3376
    %3378 = vmatprep.subr.mxu0 %v3377
    %v3379 = vand.u32 %v102, 4294901760
    %v3380 = vsub.f32 %v102, %v3379
    %3381 = vmatpush1.msra.mxu0 %v3380
    %v3382 = vand.u32 %v105, 4294901760
    %v3383 = vsub.f32 %v105, %v3382
    %3384 = vmatprep.subr.mxu0 %v3383
    %v3385 = vand.u32 %v104, 4294901760
    %v3386 = vsub.f32 %v104, %v3385
    %3387 = vmatpush1.msra.mxu0 %v3386
    %v3388 = vand.u32 %v107, 4294901760
    %v3389 = vsub.f32 %v107, %v3388
    %3390 = vmatprep.subr.mxu0 %v3389
    %v3391 = vand.u32 %v106, 4294901760
    %v3392 = vsub.f32 %v106, %v3391
    %3393 = vmatpush1.msra.mxu0 %v3392
    %v3394 = vand.u32 %v109, 4294901760
    %v3395 = vsub.f32 %v109, %v3394
    %3396 = vmatprep.subr.mxu0 %v3395
    %v3397 = vand.u32 %v108, 4294901760
    %v3398 = vsub.f32 %v108, %v3397
    %3399 = vmatpush1.msra.mxu0 %v3398
    %v3400 = vand.u32 %v111, 4294901760
    %v3401 = vsub.f32 %v111, %v3400
    %3402 = vmatprep.subr.mxu0 %v3401
    %v3403 = vand.u32 %v110, 4294901760
    %v3404 = vsub.f32 %v110, %v3403
    %3405 = vmatpush1.msra.mxu0 %v3404
    %v3406 = vand.u32 %v113, 4294901760
    %v3407 = vsub.f32 %v113, %v3406
    %3408 = vmatprep.subr.mxu0 %v3407
    %v3409 = vand.u32 %v112, 4294901760
    %v3410 = vsub.f32 %v112, %v3409
    %3411 = vmatpush1.msra.mxu0 %v3410
    %v3412 = vand.u32 %v115, 4294901760
    %v3413 = vsub.f32 %v115, %v3412
    %3414 = vmatprep.subr.mxu0 %v3413
    %v3415 = vand.u32 %v114, 4294901760
    %v3416 = vsub.f32 %v114, %v3415
    %3417 = vmatpush1.msra.mxu0 %v3416
    %v3418 = vand.u32 %v117, 4294901760
    %v3419 = vsub.f32 %v117, %v3418
    %3420 = vmatprep.subr.mxu0 %v3419
    %v3421 = vand.u32 %v116, 4294901760
    %v3422 = vsub.f32 %v116, %v3421
    %3423 = vmatpush1.msra.mxu0 %v3422
    %v3424 = vand.u32 %v119, 4294901760
    %v3425 = vsub.f32 %v119, %v3424
    %3426 = vmatprep.subr.mxu0 %v3425
    %v3427 = vand.u32 %v118, 4294901760
    %v3428 = vsub.f32 %v118, %v3427
    %3429 = vmatpush1.msra.mxu0 %v3428
    %v3430 = vand.u32 %v121, 4294901760
    %v3431 = vsub.f32 %v121, %v3430
    %3432 = vmatprep.subr.mxu0 %v3431
    %v3433 = vand.u32 %v120, 4294901760
    %v3434 = vsub.f32 %v120, %v3433
    %3435 = vmatpush1.msra.mxu0 %v3434
    %v3436 = vand.u32 %v123, 4294901760
    %v3437 = vsub.f32 %v123, %v3436
    %3438 = vmatprep.subr.mxu0 %v3437
    %v3439 = vand.u32 %v122, 4294901760
    %v3440 = vsub.f32 %v122, %v3439
    %3441 = vmatpush1.msra.mxu0 %v3440
    %v3442 = vand.u32 %v125, 4294901760
    %v3443 = vsub.f32 %v125, %v3442
    %3444 = vmatprep.subr.mxu0 %v3443
    %v3445 = vand.u32 %v124, 4294901760
    %v3446 = vsub.f32 %v124, %v3445
    %3447 = vmatpush1.msra.mxu0 %v3446
    %v3448 = vand.u32 %v127, 4294901760
    %v3449 = vsub.f32 %v127, %v3448
    %3450 = vmatprep.subr.mxu0 %v3449
    %v3451 = vand.u32 %v126, 4294901760
    %v3452 = vsub.f32 %v126, %v3451
    %3453 = vmatpush1.msra.mxu0 %v3452
    %v3454 = vand.u32 %v129, 4294901760
    %v3455 = vsub.f32 %v129, %v3454
    %3456 = vmatprep.subr.mxu0 %v3455
    %v3457 = vand.u32 %v128, 4294901760
    %v3458 = vsub.f32 %v128, %v3457
    %3459 = vmatpush1.msra.mxu0 %v3458
    %v3460 = vand.u32 %v131, 4294901760
    %v3461 = vsub.f32 %v131, %v3460
    %3462 = vmatprep.subr.mxu0 %v3461
    %v3463 = vand.u32 %v130, 4294901760
    %v3464 = vsub.f32 %v130, %v3463
    %3465 = vmatpush1.msra.mxu0 %v3464
    %v3466 = vand.u32 %v133, 4294901760
    %v3467 = vsub.f32 %v133, %v3466
    %3468 = vmatprep.subr.mxu0 %v3467
    %v3469 = vand.u32 %v132, 4294901760
    %v3470 = vsub.f32 %v132, %v3469
    %3471 = vmatpush1.msra.mxu0 %v3470
    %3472 = vmatprep.subr.mxu0 0.0
    %3473 = vmatpush1.msra.mxu0 0.0
    %3474 = vmatprep.subr.mxu0 0.0
    %3475 = vmatpush1.msra.mxu0 0.0
    %3476 = vmatprep.subr.mxu0 0.0
    %3477 = vmatpush1.msra.mxu0 0.0
    %3478 = vmatprep.subr.mxu0 0.0
    %3479 = vmatpush1.msra.mxu0 0.0
    %3480 = vmatprep.subr.mxu0 0.0
    %3481 = vmatpush1.msra.mxu0 0.0
    %3482 = vmatprep.subr.mxu0 0.0
    %3483 = vmatpush1.msra.mxu0 0.0
    %3484 = vmatprep.subr.mxu0 0.0
    %3485 = vmatpush1.msra.mxu0 0.0
    %3486 = vmatprep.subr.mxu0 0.0
    %3487 = vmatpush1.msra.mxu0 0.0
    %v3488 = vand.u32 %v2371, 4294901760
    %v3489 = vsub.f32 %v2371, %v3488
    %3490 = vmatprep.mubr.f32.mxu0 %v3489
    %v3491 = vand.u32 %v2213, 4294901760
    %v3492 = vsub.f32 %v2213, %v3491
    %3493 = vmatmul.mubr.f32.gmra.mrb[0].mxu0 %v3492
    %v3494 = vpop.f32.mrb[0].mxu0
    %v3495 = vadd.f32 %v3172, %v3494
    %v3496 = vpop.f32.mrb[0].mxu0
    %v3497 = vadd.f32 %v3174, %v3496
    %v3498 = vand.u32 %v2374, 4294901760
    %v3499 = vsub.f32 %v2374, %v3498
    %3500 = vmatprep.mubr.f32.mxu0 %v3499
    %v3501 = vand.u32 %v2221, 4294901760
    %v3502 = vsub.f32 %v2221, %v3501
    %3503 = vmatmul.mubr.f32.gmra.mrb[0].mxu0 %v3502
    %v3504 = vpop.f32.mrb[0].mxu0
    %v3505 = vadd.f32 %v3180, %v3504
    %v3506 = vpop.f32.mrb[0].mxu0
    %v3507 = vadd.f32 %v3182, %v3506
    %v3508 = vand.u32 %v2377, 4294901760
    %v3509 = vsub.f32 %v2377, %v3508
    %3510 = vmatprep.mubr.f32.mxu0 %v3509
    %v3511 = vand.u32 %v2229, 4294901760
    %v3512 = vsub.f32 %v2229, %v3511
    %3513 = vmatmul.mubr.f32.gmra.mrb[0].mxu0 %v3512
    %v3514 = vpop.f32.mrb[0].mxu0
    %v3515 = vadd.f32 %v3188, %v3514
    %v3516 = vpop.f32.mrb[0].mxu0
    %v3517 = vadd.f32 %v3190, %v3516
    %v3518 = vand.u32 %v2380, 4294901760
    %v3519 = vsub.f32 %v2380, %v3518
    %3520 = vmatprep.mubr.f32.mxu0 %v3519
    %v3521 = vand.u32 %v2237, 4294901760
    %v3522 = vsub.f32 %v2237, %v3521
    %3523 = vmatmul.mubr.f32.gmra.mrb[0].mxu0 %v3522
    %v3524 = vpop.f32.mrb[0].mxu0
    %v3525 = vadd.f32 %v3196, %v3524
    %v3526 = vpop.f32.mrb[0].mxu0
    %v3527 = vadd.f32 %v3198, %v3526
    %v3528 = vand.u32 %v2383, 4294901760
    %v3529 = vsub.f32 %v2383, %v3528
    %3530 = vmatprep.mubr.f32.mxu0 %v3529
    %v3531 = vand.u32 %v2245, 4294901760
    %v3532 = vsub.f32 %v2245, %v3531
    %3533 = vmatmul.mubr.f32.gmra.mrb[0].mxu0 %v3532
    %v3534 = vpop.f32.mrb[0].mxu0
    %v3535 = vadd.f32 %v3204, %v3534
    %v3536 = vpop.f32.mrb[0].mxu0
    %v3537 = vadd.f32 %v3206, %v3536
    %v3538 = vand.u32 %v2386, 4294901760
    %v3539 = vsub.f32 %v2386, %v3538
    %3540 = vmatprep.mubr.f32.mxu0 %v3539
    %v3541 = vand.u32 %v2253, 4294901760
    %v3542 = vsub.f32 %v2253, %v3541
    %3543 = vmatmul.mubr.f32.gmra.mrb[0].mxu0 %v3542
    %v3544 = vpop.f32.mrb[0].mxu0
    %v3545 = vadd.f32 %v3212, %v3544
    %v3546 = vpop.f32.mrb[0].mxu0
    %v3547 = vadd.f32 %v3214, %v3546
    %v3548 = vand.u32 %v2389, 4294901760
    %v3549 = vsub.f32 %v2389, %v3548
    %3550 = vmatprep.mubr.f32.mxu0 %v3549
    %v3551 = vand.u32 %v2261, 4294901760
    %v3552 = vsub.f32 %v2261, %v3551
    %3553 = vmatmul.mubr.f32.gmra.mrb[0].mxu0 %v3552
    %v3554 = vpop.f32.mrb[0].mxu0
    %v3555 = vadd.f32 %v3220, %v3554
    %v3556 = vpop.f32.mrb[0].mxu0
    %v3557 = vadd.f32 %v3222, %v3556
    %v3558 = vand.u32 %v2392, 4294901760
    %v3559 = vsub.f32 %v2392, %v3558
    %3560 = vmatprep.mubr.f32.mxu0 %v3559
    %v3561 = vand.u32 %v2269, 4294901760
    %v3562 = vsub.f32 %v2269, %v3561
    %3563 = vmatmul.mubr.f32.gmra.mrb[0].mxu0 %v3562
    %v3564 = vpop.f32.mrb[0].mxu0
    %v3565 = vadd.f32 %v3228, %v3564
    %v3566 = vpop.f32.mrb[0].mxu0
    %v3567 = vadd.f32 %v3230, %v3566
    %v3568 = vand.u32 %v2395, 4294901760
    %v3569 = vsub.f32 %v2395, %v3568
    %3570 = vmatprep.mubr.f32.mxu0 %v3569
    %v3571 = vand.u32 %v2277, 4294901760
    %v3572 = vsub.f32 %v2277, %v3571
    %3573 = vmatmul.mubr.f32.gmra.mrb[0].mxu0 %v3572
    %v3574 = vpop.f32.mrb[0].mxu0
    %v3575 = vadd.f32 %v3236, %v3574
    %v3576 = vpop.f32.mrb[0].mxu0
    %v3577 = vadd.f32 %v3238, %v3576
    %v3578 = vand.u32 %v2398, 4294901760
    %v3579 = vsub.f32 %v2398, %v3578
    %3580 = vmatprep.mubr.f32.mxu0 %v3579
    %v3581 = vand.u32 %v2285, 4294901760
    %v3582 = vsub.f32 %v2285, %v3581
    %3583 = vmatmul.mubr.f32.gmra.mrb[0].mxu0 %v3582
    %v3584 = vpop.f32.mrb[0].mxu0
    %v3585 = vadd.f32 %v3244, %v3584
    %v3586 = vpop.f32.mrb[0].mxu0
    %v3587 = vadd.f32 %v3246, %v3586
    %v3588 = vand.u32 %v2401, 4294901760
    %v3589 = vsub.f32 %v2401, %v3588
    %3590 = vmatprep.mubr.f32.mxu0 %v3589
    %v3591 = vand.u32 %v2293, 4294901760
    %v3592 = vsub.f32 %v2293, %v3591
    %3593 = vmatmul.mubr.f32.gmra.mrb[0].mxu0 %v3592
    %v3594 = vpop.f32.mrb[0].mxu0
    %v3595 = vadd.f32 %v3252, %v3594
    %v3596 = vpop.f32.mrb[0].mxu0
    %v3597 = vadd.f32 %v3254, %v3596
    %v3598 = vand.u32 %v2404, 4294901760
    %v3599 = vsub.f32 %v2404, %v3598
    %3600 = vmatprep.mubr.f32.mxu0 %v3599
    %v3601 = vand.u32 %v2301, 4294901760
    %v3602 = vsub.f32 %v2301, %v3601
    %3603 = vmatmul.mubr.f32.gmra.mrb[0].mxu0 %v3602
    %v3604 = vpop.f32.mrb[0].mxu0
    %v3605 = vadd.f32 %v3260, %v3604
    %v3606 = vpop.f32.mrb[0].mxu0
    %v3607 = vadd.f32 %v3262, %v3606
    %v3608 = vand.u32 %v2407, 4294901760
    %v3609 = vsub.f32 %v2407, %v3608
    %3610 = vmatprep.mubr.f32.mxu0 %v3609
    %v3611 = vand.u32 %v2309, 4294901760
    %v3612 = vsub.f32 %v2309, %v3611
    %3613 = vmatmul.mubr.f32.gmra.mrb[0].mxu0 %v3612
    %v3614 = vpop.f32.mrb[0].mxu0
    %v3615 = vadd.f32 %v3268, %v3614
    %v3616 = vpop.f32.mrb[0].mxu0
    %v3617 = vadd.f32 %v3270, %v3616
    %v3618 = vand.u32 %v2410, 4294901760
    %v3619 = vsub.f32 %v2410, %v3618
    %3620 = vmatprep.mubr.f32.mxu0 %v3619
    %v3621 = vand.u32 %v2317, 4294901760
    %v3622 = vsub.f32 %v2317, %v3621
    %3623 = vmatmul.mubr.f32.gmra.mrb[0].mxu0 %v3622
    %v3624 = vpop.f32.mrb[0].mxu0
    %v3625 = vadd.f32 %v3276, %v3624
    %v3626 = vpop.f32.mrb[0].mxu0
    %v3627 = vadd.f32 %v3278, %v3626
    %v3628 = vand.u32 %v2413, 4294901760
    %v3629 = vsub.f32 %v2413, %v3628
    %3630 = vmatprep.mubr.f32.mxu0 %v3629
    %v3631 = vand.u32 %v2325, 4294901760
    %v3632 = vsub.f32 %v2325, %v3631
    %3633 = vmatmul.mubr.f32.gmra.mrb[0].mxu0 %v3632
    %v3634 = vpop.f32.mrb[0].mxu0
    %v3635 = vadd.f32 %v3284, %v3634
    %v3636 = vpop.f32.mrb[0].mxu0
    %v3637 = vadd.f32 %v3286, %v3636
    %v3638 = vand.u32 %v2416, 4294901760
    %v3639 = vsub.f32 %v2416, %v3638
    %3640 = vmatprep.mubr.f32.mxu0 %v3639
    %v3641 = vand.u32 %v2333, 4294901760
    %v3642 = vsub.f32 %v2333, %v3641
    %3643 = vmatmul.mubr.f32.gmra.mrb[0].mxu0 %v3642
    %v3644 = vpop.f32.mrb[0].mxu0
    %v3645 = vadd.f32 %v3292, %v3644
    %v3646 = vpop.f32.mrb[0].mxu0
    %v3647 = vadd.f32 %v3294, %v3646
    %v3648 = vand.u32 %v2419, 4294901760
    %v3649 = vsub.f32 %v2419, %v3648
    %3650 = vmatprep.mubr.f32.mxu0 %v3649
    %v3651 = vand.u32 %v2341, 4294901760
    %v3652 = vsub.f32 %v2341, %v3651
    %3653 = vmatmul.mubr.f32.gmra.mrb[0].mxu0 %v3652
    %v3654 = vpop.f32.mrb[0].mxu0
    %v3655 = vadd.f32 %v3300, %v3654
    %v3656 = vpop.f32.mrb[0].mxu0
    %v3657 = vadd.f32 %v3302, %v3656
    %v3658 = vand.u32 %v2422, 4294901760
    %v3659 = vsub.f32 %v2422, %v3658
    %3660 = vmatprep.mubr.f32.mxu0 %v3659
    %v3661 = vand.u32 %v2349, 4294901760
    %v3662 = vsub.f32 %v2349, %v3661
    %3663 = vmatmul.mubr.f32.gmra.mrb[0].mxu0 %v3662
    %v3664 = vpop.f32.mrb[0].mxu0
    %v3665 = vadd.f32 %v3308, %v3664
    %v3666 = vpop.f32.mrb[0].mxu0
    %v3667 = vadd.f32 %v3310, %v3666
    %v3668 = vand.u32 %v2425, 4294901760
    %v3669 = vsub.f32 %v2425, %v3668
    %3670 = vmatprep.mubr.f32.mxu0 %v3669
    %v3671 = vand.u32 %v2357, 4294901760
    %v3672 = vsub.f32 %v2357, %v3671
    %3673 = vmatmul.mubr.f32.gmra.mrb[0].mxu0 %v3672
    %v3674 = vpop.f32.mrb[0].mxu0
    %v3675 = vadd.f32 %v3316, %v3674
    %v3676 = vpop.f32.mrb[0].mxu0
    %v3677 = vadd.f32 %v3318, %v3676
    %v3678 = vand.u32 %v2428, 4294901760
    %v3679 = vsub.f32 %v2428, %v3678
    %3680 = vmatprep.mubr.f32.mxu0 %v3679
    %v3681 = vand.u32 %v2365, 4294901760
    %v3682 = vsub.f32 %v2365, %v3681
    %3683 = vmatmul.mubr.f32.gmra.mrb[0].mxu0 %v3682
    %v3684 = vpop.f32.mrb[0].mxu0
    %v3685 = vadd.f32 %v3324, %v3684
    %v3686 = vpop.f32.mrb[0].mxu0
    %v3687 = vadd.f32 %v3326, %v3686
    %3688 = vdwg.mxu0
    %v3689 = vand.u32 %v87, 4294901760
    %3690 = vmatprep.subr.mxu0 %v3689
    %v3691 = vand.u32 %v86, 4294901760
    %3692 = vmatpush1.msra.mxu0 %v3691
    %v3693 = vand.u32 %v89, 4294901760
    %3694 = vmatprep.subr.mxu0 %v3693
    %v3695 = vand.u32 %v88, 4294901760
    %3696 = vmatpush1.msra.mxu0 %v3695
    %v3697 = vand.u32 %v91, 4294901760
    %3698 = vmatprep.subr.mxu0 %v3697
    %v3699 = vand.u32 %v90, 4294901760
    %3700 = vmatpush1.msra.mxu0 %v3699
    %v3701 = vand.u32 %v93, 4294901760
    %3702 = vmatprep.subr.mxu0 %v3701
    %v3703 = vand.u32 %v92, 4294901760
    %3704 = vmatpush1.msra.mxu0 %v3703
    %v3705 = vand.u32 %v95, 4294901760
    %3706 = vmatprep.subr.mxu0 %v3705
    %v3707 = vand.u32 %v94, 4294901760
    %3708 = vmatpush1.msra.mxu0 %v3707
    %v3709 = vand.u32 %v97, 4294901760
    %3710 = vmatprep.subr.mxu0 %v3709
    %v3711 = vand.u32 %v96, 4294901760
    %3712 = vmatpush1.msra.mxu0 %v3711
    %v3713 = vand.u32 %v99, 4294901760
    %3714 = vmatprep.subr.mxu0 %v3713
    %v3715 = vand.u32 %v98, 4294901760
    %3716 = vmatpush1.msra.mxu0 %v3715
    %v3717 = vand.u32 %v101, 4294901760
    %3718 = vmatprep.subr.mxu0 %v3717
    %v3719 = vand.u32 %v100, 4294901760
    %3720 = vmatpush1.msra.mxu0 %v3719
    %v3721 = vand.u32 %v103, 4294901760
    %3722 = vmatprep.subr.mxu0 %v3721
    %v3723 = vand.u32 %v102, 4294901760
    %3724 = vmatpush1.msra.mxu0 %v3723
    %v3725 = vand.u32 %v105, 4294901760
    %3726 = vmatprep.subr.mxu0 %v3725
    %v3727 = vand.u32 %v104, 4294901760
    %3728 = vmatpush1.msra.mxu0 %v3727
    %v3729 = vand.u32 %v107, 4294901760
    %3730 = vmatprep.subr.mxu0 %v3729
    %v3731 = vand.u32 %v106, 4294901760
    %3732 = vmatpush1.msra.mxu0 %v3731
    %v3733 = vand.u32 %v109, 4294901760
    %3734 = vmatprep.subr.mxu0 %v3733
    %v3735 = vand.u32 %v108, 4294901760
    %3736 = vmatpush1.msra.mxu0 %v3735
    %v3737 = vand.u32 %v111, 4294901760
    %3738 = vmatprep.subr.mxu0 %v3737
    %v3739 = vand.u32 %v110, 4294901760
    %3740 = vmatpush1.msra.mxu0 %v3739
    %v3741 = vand.u32 %v113, 4294901760
    %3742 = vmatprep.subr.mxu0 %v3741
    %v3743 = vand.u32 %v112, 4294901760
    %3744 = vmatpush1.msra.mxu0 %v3743
    %v3745 = vand.u32 %v115, 4294901760
    %3746 = vmatprep.subr.mxu0 %v3745
    %v3747 = vand.u32 %v114, 4294901760
    %3748 = vmatpush1.msra.mxu0 %v3747
    %v3749 = vand.u32 %v117, 4294901760
    %3750 = vmatprep.subr.mxu0 %v3749
    %v3751 = vand.u32 %v116, 4294901760
    %3752 = vmatpush1.msra.mxu0 %v3751
    %v3753 = vand.u32 %v119, 4294901760
    %3754 = vmatprep.subr.mxu0 %v3753
    %v3755 = vand.u32 %v118, 4294901760
    %3756 = vmatpush1.msra.mxu0 %v3755
    %v3757 = vand.u32 %v121, 4294901760
    %3758 = vmatprep.subr.mxu0 %v3757
    %v3759 = vand.u32 %v120, 4294901760
    %3760 = vmatpush1.msra.mxu0 %v3759
    %v3761 = vand.u32 %v123, 4294901760
    %3762 = vmatprep.subr.mxu0 %v3761
    %v3763 = vand.u32 %v122, 4294901760
    %3764 = vmatpush1.msra.mxu0 %v3763
    %v3765 = vand.u32 %v125, 4294901760
    %3766 = vmatprep.subr.mxu0 %v3765
    %v3767 = vand.u32 %v124, 4294901760
    %3768 = vmatpush1.msra.mxu0 %v3767
    %v3769 = vand.u32 %v127, 4294901760
    %3770 = vmatprep.subr.mxu0 %v3769
    %v3771 = vand.u32 %v126, 4294901760
    %3772 = vmatpush1.msra.mxu0 %v3771
    %v3773 = vand.u32 %v129, 4294901760
    %3774 = vmatprep.subr.mxu0 %v3773
    %v3775 = vand.u32 %v128, 4294901760
    %3776 = vmatpush1.msra.mxu0 %v3775
    %v3777 = vand.u32 %v131, 4294901760
    %3778 = vmatprep.subr.mxu0 %v3777
    %v3779 = vand.u32 %v130, 4294901760
    %3780 = vmatpush1.msra.mxu0 %v3779
    %v3781 = vand.u32 %v133, 4294901760
    %3782 = vmatprep.subr.mxu0 %v3781
    %v3783 = vand.u32 %v132, 4294901760
    %3784 = vmatpush1.msra.mxu0 %v3783
    %3785 = vmatprep.subr.mxu0 0.0
    %3786 = vmatpush1.msra.mxu0 0.0
    %3787 = vmatprep.subr.mxu0 0.0
    %3788 = vmatpush1.msra.mxu0 0.0
    %3789 = vmatprep.subr.mxu0 0.0
    %3790 = vmatpush1.msra.mxu0 0.0
    %3791 = vmatprep.subr.mxu0 0.0
    %3792 = vmatpush1.msra.mxu0 0.0
    %3793 = vmatprep.subr.mxu0 0.0
    %3794 = vmatpush1.msra.mxu0 0.0
    %3795 = vmatprep.subr.mxu0 0.0
    %3796 = vmatpush1.msra.mxu0 0.0
    %3797 = vmatprep.subr.mxu0 0.0
    %3798 = vmatpush1.msra.mxu0 0.0
    %3799 = vmatprep.subr.mxu0 0.0
    %3800 = vmatpush1.msra.mxu0 0.0
    %v3801 = vand.u32 %v2371, 4294901760
    %v3802 = vsub.f32 %v2371, %v3801
    %v3803 = vand.u32 %v3802, 4294901760
    %3804 = vmatprep.mubr.f32.mxu0 %v3803
    %v3805 = vand.u32 %v2213, 4294901760
    %v3806 = vsub.f32 %v2213, %v3805
    %v3807 = vand.u32 %v3806, 4294901760
    %3808 = vmatmul.mubr.f32.gmra.mrb[0].mxu0 %v3807
    %v3809 = vpop.f32.mrb[0].mxu0
    %v3810 = vadd.f32 %v3495, %v3809
    %v3811 = vpop.f32.mrb[0].mxu0
    %v3812 = vadd.f32 %v3497, %v3811
    %v3813 = vand.u32 %v2374, 4294901760
    %v3814 = vsub.f32 %v2374, %v3813
    %v3815 = vand.u32 %v3814, 4294901760
    %3816 = vmatprep.mubr.f32.mxu0 %v3815
    %v3817 = vand.u32 %v2221, 4294901760
    %v3818 = vsub.f32 %v2221, %v3817
    %v3819 = vand.u32 %v3818, 4294901760
    %3820 = vmatmul.mubr.f32.gmra.mrb[0].mxu0 %v3819
    %v3821 = vpop.f32.mrb[0].mxu0
    %v3822 = vadd.f32 %v3505, %v3821
    %v3823 = vpop.f32.mrb[0].mxu0
    %v3824 = vadd.f32 %v3507, %v3823
    %v3825 = vand.u32 %v2377, 4294901760
    %v3826 = vsub.f32 %v2377, %v3825
    %v3827 = vand.u32 %v3826, 4294901760
    %3828 = vmatprep.mubr.f32.mxu0 %v3827
    %v3829 = vand.u32 %v2229, 4294901760
    %v3830 = vsub.f32 %v2229, %v3829
    %v3831 = vand.u32 %v3830, 4294901760
    %3832 = vmatmul.mubr.f32.gmra.mrb[0].mxu0 %v3831
    %v3833 = vpop.f32.mrb[0].mxu0
    %v3834 = vadd.f32 %v3515, %v3833
    %v3835 = vpop.f32.mrb[0].mxu0
    %v3836 = vadd.f32 %v3517, %v3835
    %v3837 = vand.u32 %v2380, 4294901760
    %v3838 = vsub.f32 %v2380, %v3837
    %v3839 = vand.u32 %v3838, 4294901760
    %3840 = vmatprep.mubr.f32.mxu0 %v3839
    %v3841 = vand.u32 %v2237, 4294901760
    %v3842 = vsub.f32 %v2237, %v3841
    %v3843 = vand.u32 %v3842, 4294901760
    %3844 = vmatmul.mubr.f32.gmra.mrb[0].mxu0 %v3843
    %v3845 = vpop.f32.mrb[0].mxu0
    %v3846 = vadd.f32 %v3525, %v3845
    %v3847 = vpop.f32.mrb[0].mxu0
    %v3848 = vadd.f32 %v3527, %v3847
    %v3849 = vand.u32 %v2383, 4294901760
    %v3850 = vsub.f32 %v2383, %v3849
    %v3851 = vand.u32 %v3850, 4294901760
    %3852 = vmatprep.mubr.f32.mxu0 %v3851
    %v3853 = vand.u32 %v2245, 4294901760
    %v3854 = vsub.f32 %v2245, %v3853
    %v3855 = vand.u32 %v3854, 4294901760
    %3856 = vmatmul.mubr.f32.gmra.mrb[0].mxu0 %v3855
    %v3857 = vpop.f32.mrb[0].mxu0
    %v3858 = vadd.f32 %v3535, %v3857
    %v3859 = vpop.f32.mrb[0].mxu0
    %v3860 = vadd.f32 %v3537, %v3859
    %v3861 = vand.u32 %v2386, 4294901760
    %v3862 = vsub.f32 %v2386, %v3861
    %v3863 = vand.u32 %v3862, 4294901760
    %3864 = vmatprep.mubr.f32.mxu0 %v3863
    %v3865 = vand.u32 %v2253, 4294901760
    %v3866 = vsub.f32 %v2253, %v3865
    %v3867 = vand.u32 %v3866, 4294901760
    %3868 = vmatmul.mubr.f32.gmra.mrb[0].mxu0 %v3867
    %v3869 = vpop.f32.mrb[0].mxu0
    %v3870 = vadd.f32 %v3545, %v3869
    %v3871 = vpop.f32.mrb[0].mxu0
    %v3872 = vadd.f32 %v3547, %v3871
    %v3873 = vand.u32 %v2389, 4294901760
    %v3874 = vsub.f32 %v2389, %v3873
    %v3875 = vand.u32 %v3874, 4294901760
    %3876 = vmatprep.mubr.f32.mxu0 %v3875
    %v3877 = vand.u32 %v2261, 4294901760
    %v3878 = vsub.f32 %v2261, %v3877
    %v3879 = vand.u32 %v3878, 4294901760
    %3880 = vmatmul.mubr.f32.gmra.mrb[0].mxu0 %v3879
    %v3881 = vpop.f32.mrb[0].mxu0
    %v3882 = vadd.f32 %v3555, %v3881
    %v3883 = vpop.f32.mrb[0].mxu0
    %v3884 = vadd.f32 %v3557, %v3883
    %v3885 = vand.u32 %v2392, 4294901760
    %v3886 = vsub.f32 %v2392, %v3885
    %v3887 = vand.u32 %v3886, 4294901760
    %3888 = vmatprep.mubr.f32.mxu0 %v3887
    %v3889 = vand.u32 %v2269, 4294901760
    %v3890 = vsub.f32 %v2269, %v3889
    %v3891 = vand.u32 %v3890, 4294901760
    %3892 = vmatmul.mubr.f32.gmra.mrb[0].mxu0 %v3891
    %v3893 = vpop.f32.mrb[0].mxu0
    %v3894 = vadd.f32 %v3565, %v3893
    %v3895 = vpop.f32.mrb[0].mxu0
    %v3896 = vadd.f32 %v3567, %v3895
    %v3897 = vand.u32 %v2395, 4294901760
    %v3898 = vsub.f32 %v2395, %v3897
    %v3899 = vand.u32 %v3898, 4294901760
    %3900 = vmatprep.mubr.f32.mxu0 %v3899
    %v3901 = vand.u32 %v2277, 4294901760
    %v3902 = vsub.f32 %v2277, %v3901
    %v3903 = vand.u32 %v3902, 4294901760
    %3904 = vmatmul.mubr.f32.gmra.mrb[0].mxu0 %v3903
    %v3905 = vpop.f32.mrb[0].mxu0
    %v3906 = vadd.f32 %v3575, %v3905
    %v3907 = vpop.f32.mrb[0].mxu0
    %v3908 = vadd.f32 %v3577, %v3907
    %v3909 = vand.u32 %v2398, 4294901760
    %v3910 = vsub.f32 %v2398, %v3909
    %v3911 = vand.u32 %v3910, 4294901760
    %3912 = vmatprep.mubr.f32.mxu0 %v3911
    %v3913 = vand.u32 %v2285, 4294901760
    %v3914 = vsub.f32 %v2285, %v3913
    %v3915 = vand.u32 %v3914, 4294901760
    %3916 = vmatmul.mubr.f32.gmra.mrb[0].mxu0 %v3915
    %v3917 = vpop.f32.mrb[0].mxu0
    %v3918 = vadd.f32 %v3585, %v3917
    %v3919 = vpop.f32.mrb[0].mxu0
    %v3920 = vadd.f32 %v3587, %v3919
    %v3921 = vand.u32 %v2401, 4294901760
    %v3922 = vsub.f32 %v2401, %v3921
    %v3923 = vand.u32 %v3922, 4294901760
    %3924 = vmatprep.mubr.f32.mxu0 %v3923
    %v3925 = vand.u32 %v2293, 4294901760
    %v3926 = vsub.f32 %v2293, %v3925
    %v3927 = vand.u32 %v3926, 4294901760
    %3928 = vmatmul.mubr.f32.gmra.mrb[0].mxu0 %v3927
    %v3929 = vpop.f32.mrb[0].mxu0
    %v3930 = vadd.f32 %v3595, %v3929
    %v3931 = vpop.f32.mrb[0].mxu0
    %v3932 = vadd.f32 %v3597, %v3931
    %v3933 = vand.u32 %v2404, 4294901760
    %v3934 = vsub.f32 %v2404, %v3933
    %v3935 = vand.u32 %v3934, 4294901760
    %3936 = vmatprep.mubr.f32.mxu0 %v3935
    %v3937 = vand.u32 %v2301, 4294901760
    %v3938 = vsub.f32 %v2301, %v3937
    %v3939 = vand.u32 %v3938, 4294901760
    %3940 = vmatmul.mubr.f32.gmra.mrb[0].mxu0 %v3939
    %v3941 = vpop.f32.mrb[0].mxu0
    %v3942 = vadd.f32 %v3605, %v3941
    %v3943 = vpop.f32.mrb[0].mxu0
    %v3944 = vadd.f32 %v3607, %v3943
    %v3945 = vand.u32 %v2407, 4294901760
    %v3946 = vsub.f32 %v2407, %v3945
    %v3947 = vand.u32 %v3946, 4294901760
    %3948 = vmatprep.mubr.f32.mxu0 %v3947
    %v3949 = vand.u32 %v2309, 4294901760
    %v3950 = vsub.f32 %v2309, %v3949
    %v3951 = vand.u32 %v3950, 4294901760
    %3952 = vmatmul.mubr.f32.gmra.mrb[0].mxu0 %v3951
    %v3953 = vpop.f32.mrb[0].mxu0
    %v3954 = vadd.f32 %v3615, %v3953
    %v3955 = vpop.f32.mrb[0].mxu0
    %v3956 = vadd.f32 %v3617, %v3955
    %v3957 = vand.u32 %v2410, 4294901760
    %v3958 = vsub.f32 %v2410, %v3957
    %v3959 = vand.u32 %v3958, 4294901760
    %3960 = vmatprep.mubr.f32.mxu0 %v3959
    %v3961 = vand.u32 %v2317, 4294901760
    %v3962 = vsub.f32 %v2317, %v3961
    %v3963 = vand.u32 %v3962, 4294901760
    %3964 = vmatmul.mubr.f32.gmra.mrb[0].mxu0 %v3963
    %v3965 = vpop.f32.mrb[0].mxu0
    %v3966 = vadd.f32 %v3625, %v3965
    %v3967 = vpop.f32.mrb[0].mxu0
    %v3968 = vadd.f32 %v3627, %v3967
    %v3969 = vand.u32 %v2413, 4294901760
    %v3970 = vsub.f32 %v2413, %v3969
    %v3971 = vand.u32 %v3970, 4294901760
    %3972 = vmatprep.mubr.f32.mxu0 %v3971
    %v3973 = vand.u32 %v2325, 4294901760
    %v3974 = vsub.f32 %v2325, %v3973
    %v3975 = vand.u32 %v3974, 4294901760
    %3976 = vmatmul.mubr.f32.gmra.mrb[0].mxu0 %v3975
    %v3977 = vpop.f32.mrb[0].mxu0
    %v3978 = vadd.f32 %v3635, %v3977
    %v3979 = vpop.f32.mrb[0].mxu0
    %v3980 = vadd.f32 %v3637, %v3979
    %v3981 = vand.u32 %v2416, 4294901760
    %v3982 = vsub.f32 %v2416, %v3981
    %v3983 = vand.u32 %v3982, 4294901760
    %3984 = vmatprep.mubr.f32.mxu0 %v3983
    %v3985 = vand.u32 %v2333, 4294901760
    %v3986 = vsub.f32 %v2333, %v3985
    %v3987 = vand.u32 %v3986, 4294901760
    %3988 = vmatmul.mubr.f32.gmra.mrb[0].mxu0 %v3987
    %v3989 = vpop.f32.mrb[0].mxu0
    %v3990 = vadd.f32 %v3645, %v3989
    %v3991 = vpop.f32.mrb[0].mxu0
    %v3992 = vadd.f32 %v3647, %v3991
    %v3993 = vand.u32 %v2419, 4294901760
    %v3994 = vsub.f32 %v2419, %v3993
    %v3995 = vand.u32 %v3994, 4294901760
    %3996 = vmatprep.mubr.f32.mxu0 %v3995
    %v3997 = vand.u32 %v2341, 4294901760
    %v3998 = vsub.f32 %v2341, %v3997
    %v3999 = vand.u32 %v3998, 4294901760
    %4000 = vmatmul.mubr.f32.gmra.mrb[0].mxu0 %v3999
    %v4001 = vpop.f32.mrb[0].mxu0
    %v4002 = vadd.f32 %v3655, %v4001
    %v4003 = vpop.f32.mrb[0].mxu0
    %v4004 = vadd.f32 %v3657, %v4003
    %v4005 = vand.u32 %v2422, 4294901760
    %v4006 = vsub.f32 %v2422, %v4005
    %v4007 = vand.u32 %v4006, 4294901760
    %4008 = vmatprep.mubr.f32.mxu0 %v4007
    %v4009 = vand.u32 %v2349, 4294901760
    %v4010 = vsub.f32 %v2349, %v4009
    %v4011 = vand.u32 %v4010, 4294901760
    %4012 = vmatmul.mubr.f32.gmra.mrb[0].mxu0 %v4011
    %v4013 = vpop.f32.mrb[0].mxu0
    %v4014 = vadd.f32 %v3665, %v4013
    %v4015 = vpop.f32.mrb[0].mxu0
    %v4016 = vadd.f32 %v3667, %v4015
    %v4017 = vand.u32 %v2425, 4294901760
    %v4018 = vsub.f32 %v2425, %v4017
    %v4019 = vand.u32 %v4018, 4294901760
    %4020 = vmatprep.mubr.f32.mxu0 %v4019
    %v4021 = vand.u32 %v2357, 4294901760
    %v4022 = vsub.f32 %v2357, %v4021
    %v4023 = vand.u32 %v4022, 4294901760
    %4024 = vmatmul.mubr.f32.gmra.mrb[0].mxu0 %v4023
    %v4025 = vpop.f32.mrb[0].mxu0
    %v4026 = vadd.f32 %v3675, %v4025
    %v4027 = vpop.f32.mrb[0].mxu0
    %v4028 = vadd.f32 %v3677, %v4027
    %v4029 = vand.u32 %v2428, 4294901760
    %v4030 = vsub.f32 %v2428, %v4029
    %v4031 = vand.u32 %v4030, 4294901760
    %4032 = vmatprep.mubr.f32.mxu0 %v4031
    %v4033 = vand.u32 %v2365, 4294901760
    %v4034 = vsub.f32 %v2365, %v4033
    %v4035 = vand.u32 %v4034, 4294901760
    %4036 = vmatmul.mubr.f32.gmra.mrb[0].mxu0 %v4035
    %v4037 = vpop.f32.mrb[0].mxu0
    %v4038 = vadd.f32 %v3685, %v4037
    %v4039 = vpop.f32.mrb[0].mxu0
    %v4040 = vadd.f32 %v3687, %v4039
    %4041 = vdwg.mxu0
    %v4042 = vand.u32 %v87, 4294901760
    %v4043 = vsub.f32 %v87, %v4042
    %v4044 = vand.u32 %v4043, 4294901760
    %4045 = vmatprep.subr.mxu0 %v4044
    %v4046 = vand.u32 %v86, 4294901760
    %v4047 = vsub.f32 %v86, %v4046
    %v4048 = vand.u32 %v4047, 4294901760
    %4049 = vmatpush1.msra.mxu0 %v4048
    %v4050 = vand.u32 %v89, 4294901760
    %v4051 = vsub.f32 %v89, %v4050
    %v4052 = vand.u32 %v4051, 4294901760
    %4053 = vmatprep.subr.mxu0 %v4052
    %v4054 = vand.u32 %v88, 4294901760
    %v4055 = vsub.f32 %v88, %v4054
    %v4056 = vand.u32 %v4055, 4294901760
    %4057 = vmatpush1.msra.mxu0 %v4056
    %v4058 = vand.u32 %v91, 4294901760
    %v4059 = vsub.f32 %v91, %v4058
    %v4060 = vand.u32 %v4059, 4294901760
    %4061 = vmatprep.subr.mxu0 %v4060
    %v4062 = vand.u32 %v90, 4294901760
    %v4063 = vsub.f32 %v90, %v4062
    %v4064 = vand.u32 %v4063, 4294901760
    %4065 = vmatpush1.msra.mxu0 %v4064
    %v4066 = vand.u32 %v93, 4294901760
    %v4067 = vsub.f32 %v93, %v4066
    %v4068 = vand.u32 %v4067, 4294901760
    %4069 = vmatprep.subr.mxu0 %v4068
    %v4070 = vand.u32 %v92, 4294901760
    %v4071 = vsub.f32 %v92, %v4070
    %v4072 = vand.u32 %v4071, 4294901760
    %4073 = vmatpush1.msra.mxu0 %v4072
    %v4074 = vand.u32 %v95, 4294901760
    %v4075 = vsub.f32 %v95, %v4074
    %v4076 = vand.u32 %v4075, 4294901760
    %4077 = vmatprep.subr.mxu0 %v4076
    %v4078 = vand.u32 %v94, 4294901760
    %v4079 = vsub.f32 %v94, %v4078
    %v4080 = vand.u32 %v4079, 4294901760
    %4081 = vmatpush1.msra.mxu0 %v4080
    %v4082 = vand.u32 %v97, 4294901760
    %v4083 = vsub.f32 %v97, %v4082
    %v4084 = vand.u32 %v4083, 4294901760
    %4085 = vmatprep.subr.mxu0 %v4084
    %v4086 = vand.u32 %v96, 4294901760
    %v4087 = vsub.f32 %v96, %v4086
    %v4088 = vand.u32 %v4087, 4294901760
    %4089 = vmatpush1.msra.mxu0 %v4088
    %v4090 = vand.u32 %v99, 4294901760
    %v4091 = vsub.f32 %v99, %v4090
    %v4092 = vand.u32 %v4091, 4294901760
    %4093 = vmatprep.subr.mxu0 %v4092
    %v4094 = vand.u32 %v98, 4294901760
    %v4095 = vsub.f32 %v98, %v4094
    %v4096 = vand.u32 %v4095, 4294901760
    %4097 = vmatpush1.msra.mxu0 %v4096
    %v4098 = vand.u32 %v101, 4294901760
    %v4099 = vsub.f32 %v101, %v4098
    %v4100 = vand.u32 %v4099, 4294901760
    %4101 = vmatprep.subr.mxu0 %v4100
    %v4102 = vand.u32 %v100, 4294901760
    %v4103 = vsub.f32 %v100, %v4102
    %v4104 = vand.u32 %v4103, 4294901760
    %4105 = vmatpush1.msra.mxu0 %v4104
    %v4106 = vand.u32 %v103, 4294901760
    %v4107 = vsub.f32 %v103, %v4106
    %v4108 = vand.u32 %v4107, 4294901760
    %4109 = vmatprep.subr.mxu0 %v4108
    %v4110 = vand.u32 %v102, 4294901760
    %v4111 = vsub.f32 %v102, %v4110
    %v4112 = vand.u32 %v4111, 4294901760
    %4113 = vmatpush1.msra.mxu0 %v4112
    %v4114 = vand.u32 %v105, 4294901760
    %v4115 = vsub.f32 %v105, %v4114
    %v4116 = vand.u32 %v4115, 4294901760
    %4117 = vmatprep.subr.mxu0 %v4116
    %v4118 = vand.u32 %v104, 4294901760
    %v4119 = vsub.f32 %v104, %v4118
    %v4120 = vand.u32 %v4119, 4294901760
    %4121 = vmatpush1.msra.mxu0 %v4120
    %v4122 = vand.u32 %v107, 4294901760
    %v4123 = vsub.f32 %v107, %v4122
    %v4124 = vand.u32 %v4123, 4294901760
    %4125 = vmatprep.subr.mxu0 %v4124
    %v4126 = vand.u32 %v106, 4294901760
    %v4127 = vsub.f32 %v106, %v4126
    %v4128 = vand.u32 %v4127, 4294901760
    %4129 = vmatpush1.msra.mxu0 %v4128
    %v4130 = vand.u32 %v109, 4294901760
    %v4131 = vsub.f32 %v109, %v4130
    %v4132 = vand.u32 %v4131, 4294901760
    %4133 = vmatprep.subr.mxu0 %v4132
    %v4134 = vand.u32 %v108, 4294901760
    %v4135 = vsub.f32 %v108, %v4134
    %v4136 = vand.u32 %v4135, 4294901760
    %4137 = vmatpush1.msra.mxu0 %v4136
    %v4138 = vand.u32 %v111, 4294901760
    %v4139 = vsub.f32 %v111, %v4138
    %v4140 = vand.u32 %v4139, 4294901760
    %4141 = vmatprep.subr.mxu0 %v4140
    %v4142 = vand.u32 %v110, 4294901760
    %v4143 = vsub.f32 %v110, %v4142
    %v4144 = vand.u32 %v4143, 4294901760
    %4145 = vmatpush1.msra.mxu0 %v4144
    %v4146 = vand.u32 %v113, 4294901760
    %v4147 = vsub.f32 %v113, %v4146
    %v4148 = vand.u32 %v4147, 4294901760
    %4149 = vmatprep.subr.mxu0 %v4148
    %v4150 = vand.u32 %v112, 4294901760
    %v4151 = vsub.f32 %v112, %v4150
    %v4152 = vand.u32 %v4151, 4294901760
    %4153 = vmatpush1.msra.mxu0 %v4152
    %v4154 = vand.u32 %v115, 4294901760
    %v4155 = vsub.f32 %v115, %v4154
    %v4156 = vand.u32 %v4155, 4294901760
    %4157 = vmatprep.subr.mxu0 %v4156
    %v4158 = vand.u32 %v114, 4294901760
    %v4159 = vsub.f32 %v114, %v4158
    %v4160 = vand.u32 %v4159, 4294901760
    %4161 = vmatpush1.msra.mxu0 %v4160
    %v4162 = vand.u32 %v117, 4294901760
    %v4163 = vsub.f32 %v117, %v4162
    %v4164 = vand.u32 %v4163, 4294901760
    %4165 = vmatprep.subr.mxu0 %v4164
    %v4166 = vand.u32 %v116, 4294901760
    %v4167 = vsub.f32 %v116, %v4166
    %v4168 = vand.u32 %v4167, 4294901760
    %4169 = vmatpush1.msra.mxu0 %v4168
    %v4170 = vand.u32 %v119, 4294901760
    %v4171 = vsub.f32 %v119, %v4170
    %v4172 = vand.u32 %v4171, 4294901760
    %4173 = vmatprep.subr.mxu0 %v4172
    %v4174 = vand.u32 %v118, 4294901760
    %v4175 = vsub.f32 %v118, %v4174
    %v4176 = vand.u32 %v4175, 4294901760
    %4177 = vmatpush1.msra.mxu0 %v4176
    %v4178 = vand.u32 %v121, 4294901760
    %v4179 = vsub.f32 %v121, %v4178
    %v4180 = vand.u32 %v4179, 4294901760
    %4181 = vmatprep.subr.mxu0 %v4180
    %v4182 = vand.u32 %v120, 4294901760
    %v4183 = vsub.f32 %v120, %v4182
    %v4184 = vand.u32 %v4183, 4294901760
    %4185 = vmatpush1.msra.mxu0 %v4184
    %v4186 = vand.u32 %v123, 4294901760
    %v4187 = vsub.f32 %v123, %v4186
    %v4188 = vand.u32 %v4187, 4294901760
    %4189 = vmatprep.subr.mxu0 %v4188
    %v4190 = vand.u32 %v122, 4294901760
    %v4191 = vsub.f32 %v122, %v4190
    %v4192 = vand.u32 %v4191, 4294901760
    %4193 = vmatpush1.msra.mxu0 %v4192
    %v4194 = vand.u32 %v125, 4294901760
    %v4195 = vsub.f32 %v125, %v4194
    %v4196 = vand.u32 %v4195, 4294901760
    %4197 = vmatprep.subr.mxu0 %v4196
    %v4198 = vand.u32 %v124, 4294901760
    %v4199 = vsub.f32 %v124, %v4198
    %v4200 = vand.u32 %v4199, 4294901760
    %4201 = vmatpush1.msra.mxu0 %v4200
    %v4202 = vand.u32 %v127, 4294901760
    %v4203 = vsub.f32 %v127, %v4202
    %v4204 = vand.u32 %v4203, 4294901760
    %4205 = vmatprep.subr.mxu0 %v4204
    %v4206 = vand.u32 %v126, 4294901760
    %v4207 = vsub.f32 %v126, %v4206
    %v4208 = vand.u32 %v4207, 4294901760
    %4209 = vmatpush1.msra.mxu0 %v4208
    %v4210 = vand.u32 %v129, 4294901760
    %v4211 = vsub.f32 %v129, %v4210
    %v4212 = vand.u32 %v4211, 4294901760
    %4213 = vmatprep.subr.mxu0 %v4212
    %v4214 = vand.u32 %v128, 4294901760
    %v4215 = vsub.f32 %v128, %v4214
    %v4216 = vand.u32 %v4215, 4294901760
    %4217 = vmatpush1.msra.mxu0 %v4216
    %v4218 = vand.u32 %v131, 4294901760
    %v4219 = vsub.f32 %v131, %v4218
    %v4220 = vand.u32 %v4219, 4294901760
    %4221 = vmatprep.subr.mxu0 %v4220
    %v4222 = vand.u32 %v130, 4294901760
    %v4223 = vsub.f32 %v130, %v4222
    %v4224 = vand.u32 %v4223, 4294901760
    %4225 = vmatpush1.msra.mxu0 %v4224
    %v4226 = vand.u32 %v133, 4294901760
    %v4227 = vsub.f32 %v133, %v4226
    %v4228 = vand.u32 %v4227, 4294901760
    %4229 = vmatprep.subr.mxu0 %v4228
    %v4230 = vand.u32 %v132, 4294901760
    %v4231 = vsub.f32 %v132, %v4230
    %v4232 = vand.u32 %v4231, 4294901760
    %4233 = vmatpush1.msra.mxu0 %v4232
    %4234 = vmatprep.subr.mxu0 0.0
    %4235 = vmatpush1.msra.mxu0 0.0
    %4236 = vmatprep.subr.mxu0 0.0
    %4237 = vmatpush1.msra.mxu0 0.0
    %4238 = vmatprep.subr.mxu0 0.0
    %4239 = vmatpush1.msra.mxu0 0.0
    %4240 = vmatprep.subr.mxu0 0.0
    %4241 = vmatpush1.msra.mxu0 0.0
    %4242 = vmatprep.subr.mxu0 0.0
    %4243 = vmatpush1.msra.mxu0 0.0
    %4244 = vmatprep.subr.mxu0 0.0
    %4245 = vmatpush1.msra.mxu0 0.0
    %4246 = vmatprep.subr.mxu0 0.0
    %4247 = vmatpush1.msra.mxu0 0.0
    %4248 = vmatprep.subr.mxu0 0.0
    %4249 = vmatpush1.msra.mxu0 0.0
    %v4250 = vand.u32 %v2371, 4294901760
    %4251 = vmatprep.mubr.f32.mxu0 %v4250
    %v4252 = vand.u32 %v2213, 4294901760
    %4253 = vmatmul.mubr.f32.gmra.mrb[0].mxu0 %v4252
    %v4254 = vpop.f32.mrb[0].mxu0
    %v4255 = vadd.f32 %v3810, %v4254
    %v4256 = vpop.f32.mrb[0].mxu0
    %v4257 = vadd.f32 %v3812, %v4256
    %v4258 = vand.u32 %v2374, 4294901760
    %4259 = vmatprep.mubr.f32.mxu0 %v4258
    %v4260 = vand.u32 %v2221, 4294901760
    %4261 = vmatmul.mubr.f32.gmra.mrb[0].mxu0 %v4260
    %v4262 = vpop.f32.mrb[0].mxu0
    %v4263 = vadd.f32 %v3822, %v4262
    %v4264 = vpop.f32.mrb[0].mxu0
    %v4265 = vadd.f32 %v3824, %v4264
    %v4266 = vand.u32 %v2377, 4294901760
    %4267 = vmatprep.mubr.f32.mxu0 %v4266
    %v4268 = vand.u32 %v2229, 4294901760
    %4269 = vmatmul.mubr.f32.gmra.mrb[0].mxu0 %v4268
    %v4270 = vpop.f32.mrb[0].mxu0
    %v4271 = vadd.f32 %v3834, %v4270
    %v4272 = vpop.f32.mrb[0].mxu0
    %v4273 = vadd.f32 %v3836, %v4272
    %v4274 = vand.u32 %v2380, 4294901760
    %4275 = vmatprep.mubr.f32.mxu0 %v4274
    %v4276 = vand.u32 %v2237, 4294901760
    %4277 = vmatmul.mubr.f32.gmra.mrb[0].mxu0 %v4276
    %v4278 = vpop.f32.mrb[0].mxu0
    %v4279 = vadd.f32 %v3846, %v4278
    %v4280 = vpop.f32.mrb[0].mxu0
    %v4281 = vadd.f32 %v3848, %v4280
    %v4282 = vand.u32 %v2383, 4294901760
    %4283 = vmatprep.mubr.f32.mxu0 %v4282
    %v4284 = vand.u32 %v2245, 4294901760
    %4285 = vmatmul.mubr.f32.gmra.mrb[0].mxu0 %v4284
    %v4286 = vpop.f32.mrb[0].mxu0
    %v4287 = vadd.f32 %v3858, %v4286
    %v4288 = vpop.f32.mrb[0].mxu0
    %v4289 = vadd.f32 %v3860, %v4288
    %v4290 = vand.u32 %v2386, 4294901760
    %4291 = vmatprep.mubr.f32.mxu0 %v4290
    %v4292 = vand.u32 %v2253, 4294901760
    %4293 = vmatmul.mubr.f32.gmra.mrb[0].mxu0 %v4292
    %v4294 = vpop.f32.mrb[0].mxu0
    %v4295 = vadd.f32 %v3870, %v4294
    %v4296 = vpop.f32.mrb[0].mxu0
    %v4297 = vadd.f32 %v3872, %v4296
    %v4298 = vand.u32 %v2389, 4294901760
    %4299 = vmatprep.mubr.f32.mxu0 %v4298
    %v4300 = vand.u32 %v2261, 4294901760
    %4301 = vmatmul.mubr.f32.gmra.mrb[0].mxu0 %v4300
    %v4302 = vpop.f32.mrb[0].mxu0
    %v4303 = vadd.f32 %v3882, %v4302
    %v4304 = vpop.f32.mrb[0].mxu0
    %v4305 = vadd.f32 %v3884, %v4304
    %v4306 = vand.u32 %v2392, 4294901760
    %4307 = vmatprep.mubr.f32.mxu0 %v4306
    %v4308 = vand.u32 %v2269, 4294901760
    %4309 = vmatmul.mubr.f32.gmra.mrb[0].mxu0 %v4308
    %v4310 = vpop.f32.mrb[0].mxu0
    %v4311 = vadd.f32 %v3894, %v4310
    %v4312 = vpop.f32.mrb[0].mxu0
    %v4313 = vadd.f32 %v3896, %v4312
    %v4314 = vand.u32 %v2395, 4294901760
    %4315 = vmatprep.mubr.f32.mxu0 %v4314
    %v4316 = vand.u32 %v2277, 4294901760
    %4317 = vmatmul.mubr.f32.gmra.mrb[0].mxu0 %v4316
    %v4318 = vpop.f32.mrb[0].mxu0
    %v4319 = vadd.f32 %v3906, %v4318
    %v4320 = vpop.f32.mrb[0].mxu0
    %v4321 = vadd.f32 %v3908, %v4320
    %v4322 = vand.u32 %v2398, 4294901760
    %4323 = vmatprep.mubr.f32.mxu0 %v4322
    %v4324 = vand.u32 %v2285, 4294901760
    %4325 = vmatmul.mubr.f32.gmra.mrb[0].mxu0 %v4324
    %v4326 = vpop.f32.mrb[0].mxu0
    %v4327 = vadd.f32 %v3918, %v4326
    %v4328 = vpop.f32.mrb[0].mxu0
    %v4329 = vadd.f32 %v3920, %v4328
    %v4330 = vand.u32 %v2401, 4294901760
    %4331 = vmatprep.mubr.f32.mxu0 %v4330
    %v4332 = vand.u32 %v2293, 4294901760
    %4333 = vmatmul.mubr.f32.gmra.mrb[0].mxu0 %v4332
    %v4334 = vpop.f32.mrb[0].mxu0
    %v4335 = vadd.f32 %v3930, %v4334
    %v4336 = vpop.f32.mrb[0].mxu0
    %v4337 = vadd.f32 %v3932, %v4336
    %v4338 = vand.u32 %v2404, 4294901760
    %4339 = vmatprep.mubr.f32.mxu0 %v4338
    %v4340 = vand.u32 %v2301, 4294901760
    %4341 = vmatmul.mubr.f32.gmra.mrb[0].mxu0 %v4340
    %v4342 = vpop.f32.mrb[0].mxu0
    %v4343 = vadd.f32 %v3942, %v4342
    %v4344 = vpop.f32.mrb[0].mxu0
    %v4345 = vadd.f32 %v3944, %v4344
    %v4346 = vand.u32 %v2407, 4294901760
    %4347 = vmatprep.mubr.f32.mxu0 %v4346
    %v4348 = vand.u32 %v2309, 4294901760
    %4349 = vmatmul.mubr.f32.gmra.mrb[0].mxu0 %v4348
    %v4350 = vpop.f32.mrb[0].mxu0
    %v4351 = vadd.f32 %v3954, %v4350
    %v4352 = vpop.f32.mrb[0].mxu0
    %v4353 = vadd.f32 %v3956, %v4352
    %v4354 = vand.u32 %v2410, 4294901760
    %4355 = vmatprep.mubr.f32.mxu0 %v4354
    %v4356 = vand.u32 %v2317, 4294901760
    %4357 = vmatmul.mubr.f32.gmra.mrb[0].mxu0 %v4356
    %v4358 = vpop.f32.mrb[0].mxu0
    %v4359 = vadd.f32 %v3966, %v4358
    %v4360 = vpop.f32.mrb[0].mxu0
    %v4361 = vadd.f32 %v3968, %v4360
    %v4362 = vand.u32 %v2413, 4294901760
    %4363 = vmatprep.mubr.f32.mxu0 %v4362
    %v4364 = vand.u32 %v2325, 4294901760
    %4365 = vmatmul.mubr.f32.gmra.mrb[0].mxu0 %v4364
    %v4366 = vpop.f32.mrb[0].mxu0
    %v4367 = vadd.f32 %v3978, %v4366
    %v4368 = vpop.f32.mrb[0].mxu0
    %v4369 = vadd.f32 %v3980, %v4368
    %v4370 = vand.u32 %v2416, 4294901760
    %4371 = vmatprep.mubr.f32.mxu0 %v4370
    %v4372 = vand.u32 %v2333, 4294901760
    %4373 = vmatmul.mubr.f32.gmra.mrb[0].mxu0 %v4372
    %v4374 = vpop.f32.mrb[0].mxu0
    %v4375 = vadd.f32 %v3990, %v4374
    %v4376 = vpop.f32.mrb[0].mxu0
    %v4377 = vadd.f32 %v3992, %v4376
    %v4378 = vand.u32 %v2419, 4294901760
    %4379 = vmatprep.mubr.f32.mxu0 %v4378
    %v4380 = vand.u32 %v2341, 4294901760
    %4381 = vmatmul.mubr.f32.gmra.mrb[0].mxu0 %v4380
    %v4382 = vpop.f32.mrb[0].mxu0
    %v4383 = vadd.f32 %v4002, %v4382
    %v4384 = vpop.f32.mrb[0].mxu0
    %v4385 = vadd.f32 %v4004, %v4384
    %v4386 = vand.u32 %v2422, 4294901760
    %4387 = vmatprep.mubr.f32.mxu0 %v4386
    %v4388 = vand.u32 %v2349, 4294901760
    %4389 = vmatmul.mubr.f32.gmra.mrb[0].mxu0 %v4388
    %v4390 = vpop.f32.mrb[0].mxu0
    %v4391 = vadd.f32 %v4014, %v4390
    %v4392 = vpop.f32.mrb[0].mxu0
    %v4393 = vadd.f32 %v4016, %v4392
    %v4394 = vand.u32 %v2425, 4294901760
    %4395 = vmatprep.mubr.f32.mxu0 %v4394
    %v4396 = vand.u32 %v2357, 4294901760
    %4397 = vmatmul.mubr.f32.gmra.mrb[0].mxu0 %v4396
    %v4398 = vpop.f32.mrb[0].mxu0
    %v4399 = vadd.f32 %v4026, %v4398
    %v4400 = vpop.f32.mrb[0].mxu0
    %v4401 = vadd.f32 %v4028, %v4400
    %v4402 = vand.u32 %v2428, 4294901760
    %4403 = vmatprep.mubr.f32.mxu0 %v4402
    %v4404 = vand.u32 %v2365, 4294901760
    %4405 = vmatmul.mubr.f32.gmra.mrb[0].mxu0 %v4404
    %v4406 = vpop.f32.mrb[0].mxu0
    %v4407 = vadd.f32 %v4038, %v4406
    %v4408 = vpop.f32.mrb[0].mxu0
    %v4409 = vadd.f32 %v4040, %v4408
    %4410 = vdwg.mxu0
    %v4411 = vand.u32 %v87, 4294901760
    %4412 = vmatprep.subr.mxu0 %v4411
    %v4413 = vand.u32 %v86, 4294901760
    %4414 = vmatpush1.msra.mxu0 %v4413
    %v4415 = vand.u32 %v89, 4294901760
    %4416 = vmatprep.subr.mxu0 %v4415
    %v4417 = vand.u32 %v88, 4294901760
    %4418 = vmatpush1.msra.mxu0 %v4417
    %v4419 = vand.u32 %v91, 4294901760
    %4420 = vmatprep.subr.mxu0 %v4419
    %v4421 = vand.u32 %v90, 4294901760
    %4422 = vmatpush1.msra.mxu0 %v4421
    %v4423 = vand.u32 %v93, 4294901760
    %4424 = vmatprep.subr.mxu0 %v4423
    %v4425 = vand.u32 %v92, 4294901760
    %4426 = vmatpush1.msra.mxu0 %v4425
    %v4427 = vand.u32 %v95, 4294901760
    %4428 = vmatprep.subr.mxu0 %v4427
    %v4429 = vand.u32 %v94, 4294901760
    %4430 = vmatpush1.msra.mxu0 %v4429
    %v4431 = vand.u32 %v97, 4294901760
    %4432 = vmatprep.subr.mxu0 %v4431
    %v4433 = vand.u32 %v96, 4294901760
    %4434 = vmatpush1.msra.mxu0 %v4433
    %v4435 = vand.u32 %v99, 4294901760
    %4436 = vmatprep.subr.mxu0 %v4435
    %v4437 = vand.u32 %v98, 4294901760
    %4438 = vmatpush1.msra.mxu0 %v4437
    %v4439 = vand.u32 %v101, 4294901760
    %4440 = vmatprep.subr.mxu0 %v4439
    %v4441 = vand.u32 %v100, 4294901760
    %4442 = vmatpush1.msra.mxu0 %v4441
    %v4443 = vand.u32 %v103, 4294901760
    %4444 = vmatprep.subr.mxu0 %v4443
    %v4445 = vand.u32 %v102, 4294901760
    %4446 = vmatpush1.msra.mxu0 %v4445
    %v4447 = vand.u32 %v105, 4294901760
    %4448 = vmatprep.subr.mxu0 %v4447
    %v4449 = vand.u32 %v104, 4294901760
    %4450 = vmatpush1.msra.mxu0 %v4449
    %v4451 = vand.u32 %v107, 4294901760
    %4452 = vmatprep.subr.mxu0 %v4451
    %v4453 = vand.u32 %v106, 4294901760
    %4454 = vmatpush1.msra.mxu0 %v4453
    %v4455 = vand.u32 %v109, 4294901760
    %4456 = vmatprep.subr.mxu0 %v4455
    %v4457 = vand.u32 %v108, 4294901760
    %4458 = vmatpush1.msra.mxu0 %v4457
    %v4459 = vand.u32 %v111, 4294901760
    %4460 = vmatprep.subr.mxu0 %v4459
    %v4461 = vand.u32 %v110, 4294901760
    %4462 = vmatpush1.msra.mxu0 %v4461
    %v4463 = vand.u32 %v113, 4294901760
    %4464 = vmatprep.subr.mxu0 %v4463
    %v4465 = vand.u32 %v112, 4294901760
    %4466 = vmatpush1.msra.mxu0 %v4465
    %v4467 = vand.u32 %v115, 4294901760
    %4468 = vmatprep.subr.mxu0 %v4467
    %v4469 = vand.u32 %v114, 4294901760
    %4470 = vmatpush1.msra.mxu0 %v4469
    %v4471 = vand.u32 %v117, 4294901760
    %4472 = vmatprep.subr.mxu0 %v4471
    %v4473 = vand.u32 %v116, 4294901760
    %4474 = vmatpush1.msra.mxu0 %v4473
    %v4475 = vand.u32 %v119, 4294901760
    %4476 = vmatprep.subr.mxu0 %v4475
    %v4477 = vand.u32 %v118, 4294901760
    %4478 = vmatpush1.msra.mxu0 %v4477
    %v4479 = vand.u32 %v121, 4294901760
    %4480 = vmatprep.subr.mxu0 %v4479
    %v4481 = vand.u32 %v120, 4294901760
    %4482 = vmatpush1.msra.mxu0 %v4481
    %v4483 = vand.u32 %v123, 4294901760
    %4484 = vmatprep.subr.mxu0 %v4483
    %v4485 = vand.u32 %v122, 4294901760
    %4486 = vmatpush1.msra.mxu0 %v4485
    %v4487 = vand.u32 %v125, 4294901760
    %4488 = vmatprep.subr.mxu0 %v4487
    %v4489 = vand.u32 %v124, 4294901760
    %4490 = vmatpush1.msra.mxu0 %v4489
    %v4491 = vand.u32 %v127, 4294901760
    %4492 = vmatprep.subr.mxu0 %v4491
    %v4493 = vand.u32 %v126, 4294901760
    %4494 = vmatpush1.msra.mxu0 %v4493
    %v4495 = vand.u32 %v129, 4294901760
    %4496 = vmatprep.subr.mxu0 %v4495
    %v4497 = vand.u32 %v128, 4294901760
    %4498 = vmatpush1.msra.mxu0 %v4497
    %v4499 = vand.u32 %v131, 4294901760
    %4500 = vmatprep.subr.mxu0 %v4499
    %v4501 = vand.u32 %v130, 4294901760
    %4502 = vmatpush1.msra.mxu0 %v4501
    %v4503 = vand.u32 %v133, 4294901760
    %4504 = vmatprep.subr.mxu0 %v4503
    %v4505 = vand.u32 %v132, 4294901760
    %4506 = vmatpush1.msra.mxu0 %v4505
    %4507 = vmatprep.subr.mxu0 0.0
    %4508 = vmatpush1.msra.mxu0 0.0
    %4509 = vmatprep.subr.mxu0 0.0
    %4510 = vmatpush1.msra.mxu0 0.0
    %4511 = vmatprep.subr.mxu0 0.0
    %4512 = vmatpush1.msra.mxu0 0.0
    %4513 = vmatprep.subr.mxu0 0.0
    %4514 = vmatpush1.msra.mxu0 0.0
    %4515 = vmatprep.subr.mxu0 0.0
    %4516 = vmatpush1.msra.mxu0 0.0
    %4517 = vmatprep.subr.mxu0 0.0
    %4518 = vmatpush1.msra.mxu0 0.0
    %4519 = vmatprep.subr.mxu0 0.0
    %4520 = vmatpush1.msra.mxu0 0.0
    %4521 = vmatprep.subr.mxu0 0.0
    %4522 = vmatpush1.msra.mxu0 0.0
    %v4523 = vand.u32 %v2371, 4294901760
    %4524 = vmatprep.mubr.f32.mxu0 %v4523
    %v4525 = vand.u32 %v2213, 4294901760
    %4526 = vmatmul.mubr.f32.gmra.mrb[0].mxu0 %v4525
    %v4527 = vpop.f32.mrb[0].mxu0
    %v4528 = vadd.f32 %v4255, %v4527
    %v4529 = vpop.f32.mrb[0].mxu0
    %v4530 = vadd.f32 %v4257, %v4529
    %v4531 = vand.u32 %v2374, 4294901760
    %4532 = vmatprep.mubr.f32.mxu0 %v4531
    %v4533 = vand.u32 %v2221, 4294901760
    %4534 = vmatmul.mubr.f32.gmra.mrb[0].mxu0 %v4533
    %v4535 = vpop.f32.mrb[0].mxu0
    %v4536 = vadd.f32 %v4263, %v4535
    %v4537 = vpop.f32.mrb[0].mxu0
    %v4538 = vadd.f32 %v4265, %v4537
    %v4539 = vand.u32 %v2377, 4294901760
    %4540 = vmatprep.mubr.f32.mxu0 %v4539
    %v4541 = vand.u32 %v2229, 4294901760
    %4542 = vmatmul.mubr.f32.gmra.mrb[0].mxu0 %v4541
    %v4543 = vpop.f32.mrb[0].mxu0
    %v4544 = vadd.f32 %v4271, %v4543
    %v4545 = vpop.f32.mrb[0].mxu0
    %v4546 = vadd.f32 %v4273, %v4545
    %v4547 = vand.u32 %v2380, 4294901760
    %4548 = vmatprep.mubr.f32.mxu0 %v4547
    %v4549 = vand.u32 %v2237, 4294901760
    %4550 = vmatmul.mubr.f32.gmra.mrb[0].mxu0 %v4549
    %v4551 = vpop.f32.mrb[0].mxu0
    %v4552 = vadd.f32 %v4279, %v4551
    %v4553 = vpop.f32.mrb[0].mxu0
    %v4554 = vadd.f32 %v4281, %v4553
    %v4555 = vand.u32 %v2383, 4294901760
    %4556 = vmatprep.mubr.f32.mxu0 %v4555
    %v4557 = vand.u32 %v2245, 4294901760
    %4558 = vmatmul.mubr.f32.gmra.mrb[0].mxu0 %v4557
    %v4559 = vpop.f32.mrb[0].mxu0
    %v4560 = vadd.f32 %v4287, %v4559
    %v4561 = vpop.f32.mrb[0].mxu0
    %v4562 = vadd.f32 %v4289, %v4561
    %v4563 = vand.u32 %v2386, 4294901760
    %4564 = vmatprep.mubr.f32.mxu0 %v4563
    %v4565 = vand.u32 %v2253, 4294901760
    %4566 = vmatmul.mubr.f32.gmra.mrb[0].mxu0 %v4565
    %v4567 = vpop.f32.mrb[0].mxu0
    %v4568 = vadd.f32 %v4295, %v4567
    %v4569 = vpop.f32.mrb[0].mxu0
    %v4570 = vadd.f32 %v4297, %v4569
    %v4571 = vand.u32 %v2389, 4294901760
    %4572 = vmatprep.mubr.f32.mxu0 %v4571
    %v4573 = vand.u32 %v2261, 4294901760
    %4574 = vmatmul.mubr.f32.gmra.mrb[0].mxu0 %v4573
    %v4575 = vpop.f32.mrb[0].mxu0
    %v4576 = vadd.f32 %v4303, %v4575
    %v4577 = vpop.f32.mrb[0].mxu0
    %v4578 = vadd.f32 %v4305, %v4577
    %v4579 = vand.u32 %v2392, 4294901760
    %4580 = vmatprep.mubr.f32.mxu0 %v4579
    %v4581 = vand.u32 %v2269, 4294901760
    %4582 = vmatmul.mubr.f32.gmra.mrb[0].mxu0 %v4581
    %v4583 = vpop.f32.mrb[0].mxu0
    %v4584 = vadd.f32 %v4311, %v4583
    %v4585 = vpop.f32.mrb[0].mxu0
    %v4586 = vadd.f32 %v4313, %v4585
    %v4587 = vand.u32 %v2395, 4294901760
    %4588 = vmatprep.mubr.f32.mxu0 %v4587
    %v4589 = vand.u32 %v2277, 4294901760
    %4590 = vmatmul.mubr.f32.gmra.mrb[0].mxu0 %v4589
    %v4591 = vpop.f32.mrb[0].mxu0
    %v4592 = vadd.f32 %v4319, %v4591
    %v4593 = vpop.f32.mrb[0].mxu0
    %v4594 = vadd.f32 %v4321, %v4593
    %v4595 = vand.u32 %v2398, 4294901760
    %4596 = vmatprep.mubr.f32.mxu0 %v4595
    %v4597 = vand.u32 %v2285, 4294901760
    %4598 = vmatmul.mubr.f32.gmra.mrb[0].mxu0 %v4597
    %v4599 = vpop.f32.mrb[0].mxu0
    %v4600 = vadd.f32 %v4327, %v4599
    %v4601 = vpop.f32.mrb[0].mxu0
    %v4602 = vadd.f32 %v4329, %v4601
    %v4603 = vand.u32 %v2401, 4294901760
    %4604 = vmatprep.mubr.f32.mxu0 %v4603
    %v4605 = vand.u32 %v2293, 4294901760
    %4606 = vmatmul.mubr.f32.gmra.mrb[0].mxu0 %v4605
    %v4607 = vpop.f32.mrb[0].mxu0
    %v4608 = vadd.f32 %v4335, %v4607
    %v4609 = vpop.f32.mrb[0].mxu0
    %v4610 = vadd.f32 %v4337, %v4609
    %v4611 = vand.u32 %v2404, 4294901760
    %4612 = vmatprep.mubr.f32.mxu0 %v4611
    %v4613 = vand.u32 %v2301, 4294901760
    %4614 = vmatmul.mubr.f32.gmra.mrb[0].mxu0 %v4613
    %v4615 = vpop.f32.mrb[0].mxu0
    %v4616 = vadd.f32 %v4343, %v4615
    %v4617 = vpop.f32.mrb[0].mxu0
    %v4618 = vadd.f32 %v4345, %v4617
    %v4619 = vand.u32 %v2407, 4294901760
    %4620 = vmatprep.mubr.f32.mxu0 %v4619
    %v4621 = vand.u32 %v2309, 4294901760
    %4622 = vmatmul.mubr.f32.gmra.mrb[0].mxu0 %v4621
    %v4623 = vpop.f32.mrb[0].mxu0
    %v4624 = vadd.f32 %v4351, %v4623
    %v4625 = vpop.f32.mrb[0].mxu0
    %v4626 = vadd.f32 %v4353, %v4625
    %v4627 = vand.u32 %v2410, 4294901760
    %4628 = vmatprep.mubr.f32.mxu0 %v4627
    %v4629 = vand.u32 %v2317, 4294901760
    %4630 = vmatmul.mubr.f32.gmra.mrb[0].mxu0 %v4629
    %v4631 = vpop.f32.mrb[0].mxu0
    %v4632 = vadd.f32 %v4359, %v4631
    %v4633 = vpop.f32.mrb[0].mxu0
    %v4634 = vadd.f32 %v4361, %v4633
    %v4635 = vand.u32 %v2413, 4294901760
    %4636 = vmatprep.mubr.f32.mxu0 %v4635
    %v4637 = vand.u32 %v2325, 4294901760
    %4638 = vmatmul.mubr.f32.gmra.mrb[0].mxu0 %v4637
    %v4639 = vpop.f32.mrb[0].mxu0
    %v4640 = vadd.f32 %v4367, %v4639
    %v4641 = vpop.f32.mrb[0].mxu0
    %v4642 = vadd.f32 %v4369, %v4641
    %v4643 = vand.u32 %v2416, 4294901760
    %4644 = vmatprep.mubr.f32.mxu0 %v4643
    %v4645 = vand.u32 %v2333, 4294901760
    %4646 = vmatmul.mubr.f32.gmra.mrb[0].mxu0 %v4645
    %v4647 = vpop.f32.mrb[0].mxu0
    %v4648 = vadd.f32 %v4375, %v4647
    %v4649 = vpop.f32.mrb[0].mxu0
    %v4650 = vadd.f32 %v4377, %v4649
    %v4651 = vand.u32 %v2419, 4294901760
    %4652 = vmatprep.mubr.f32.mxu0 %v4651
    %v4653 = vand.u32 %v2341, 4294901760
    %4654 = vmatmul.mubr.f32.gmra.mrb[0].mxu0 %v4653
    %v4655 = vpop.f32.mrb[0].mxu0
    %v4656 = vadd.f32 %v4383, %v4655
    %v4657 = vpop.f32.mrb[0].mxu0
    %v4658 = vadd.f32 %v4385, %v4657
    %v4659 = vand.u32 %v2422, 4294901760
    %4660 = vmatprep.mubr.f32.mxu0 %v4659
    %v4661 = vand.u32 %v2349, 4294901760
    %4662 = vmatmul.mubr.f32.gmra.mrb[0].mxu0 %v4661
    %v4663 = vpop.f32.mrb[0].mxu0
    %v4664 = vadd.f32 %v4391, %v4663
    %v4665 = vpop.f32.mrb[0].mxu0
    %v4666 = vadd.f32 %v4393, %v4665
    %v4667 = vand.u32 %v2425, 4294901760
    %4668 = vmatprep.mubr.f32.mxu0 %v4667
    %v4669 = vand.u32 %v2357, 4294901760
    %4670 = vmatmul.mubr.f32.gmra.mrb[0].mxu0 %v4669
    %v4671 = vpop.f32.mrb[0].mxu0
    %v4672 = vadd.f32 %v4399, %v4671
    %v4673 = vpop.f32.mrb[0].mxu0
    %v4674 = vadd.f32 %v4401, %v4673
    %v4675 = vand.u32 %v2428, 4294901760
    %4676 = vmatprep.mubr.f32.mxu0 %v4675
    %v4677 = vand.u32 %v2365, 4294901760
    %4678 = vmatmul.mubr.f32.gmra.mrb[0].mxu0 %v4677
    %v4679 = vpop.f32.mrb[0].mxu0
    %v4680 = vadd.f32 %v4407, %v4679
    %v4681 = vpop.f32.mrb[0].mxu0
    %v4682 = vadd.f32 %v4409, %v4681
    %4683 = vdwg.mxu0
    %v4684 = vmul.f32 %v4528, %v4528
    %v4685 = vmul.f32 %v4530, %v4530
    %v4686 = vmul.f32 %v4536, %v4536
    %v4687 = vmul.f32 %v4538, %v4538
    %v4688 = vmul.f32 %v4544, %v4544
    %v4689 = vmul.f32 %v4546, %v4546
    %v4690 = vmul.f32 %v4552, %v4552
    %v4691 = vmul.f32 %v4554, %v4554
    %v4692 = vmul.f32 %v4560, %v4560
    %v4693 = vmul.f32 %v4562, %v4562
    %v4694 = vmul.f32 %v4568, %v4568
    %v4695 = vmul.f32 %v4570, %v4570
    %v4696 = vmul.f32 %v4576, %v4576
    %v4697 = vmul.f32 %v4578, %v4578
    %v4698 = vmul.f32 %v4584, %v4584
    %v4699 = vmul.f32 %v4586, %v4586
    %v4700 = vmul.f32 %v4528, %v4560
    %v4701 = vmul.f32 %v4530, %v4562
    %v4702 = vmul.f32 %v4536, %v4568
    %v4703 = vmul.f32 %v4538, %v4570
    %v4704 = vmul.f32 %v4544, %v4576
    %v4705 = vmul.f32 %v4546, %v4578
    %v4706 = vmul.f32 %v4552, %v4584
    %v4707 = vmul.f32 %v4554, %v4586
    %v4708 = vsub.f32 %v4592, %v4684
    %v4709 = vsub.f32 %v4594, %v4685
    %v4710 = vsub.f32 %v4600, %v4686
    %v4711 = vsub.f32 %v4602, %v4687
    %v4712 = vsub.f32 %v4608, %v4688
    %v4713 = vsub.f32 %v4610, %v4689
    %v4714 = vsub.f32 %v4616, %v4690
    %v4715 = vsub.f32 %v4618, %v4691
    %v4716 = vsub.f32 %v4624, %v4692
    %v4717 = vsub.f32 %v4626, %v4693
    %v4718 = vsub.f32 %v4632, %v4694
    %v4719 = vsub.f32 %v4634, %v4695
    %v4720 = vsub.f32 %v4640, %v4696
    %v4721 = vsub.f32 %v4642, %v4697
    %v4722 = vsub.f32 %v4648, %v4698
    %v4723 = vsub.f32 %v4650, %v4699
    %v4724 = vsub.f32 %v4656, %v4700
    %v4725 = vsub.f32 %v4658, %v4701
    %v4726 = vsub.f32 %v4664, %v4702
    %v4727 = vsub.f32 %v4666, %v4703
    %v4728 = vsub.f32 %v4672, %v4704
    %v4729 = vsub.f32 %v4674, %v4705
    %v4730 = vsub.f32 %v4680, %v4706
    %v4731 = vsub.f32 %v4682, %v4707
    %v4732 = vmul.f32 %v4700, 2.0
    %v4733 = vmul.f32 %v4701, 2.0
    %v4734 = vmul.f32 %v4702, 2.0
    %v4735 = vmul.f32 %v4703, 2.0
    %v4736 = vmul.f32 %v4704, 2.0
    %v4737 = vmul.f32 %v4705, 2.0
    %v4738 = vmul.f32 %v4706, 2.0
    %v4739 = vmul.f32 %v4707, 2.0
    %v4740 = vadd.f32 %v4732, 0.0025
    %v4741 = vadd.f32 %v4733, 0.0025
    %v4742 = vadd.f32 %v4734, 0.0025
    %v4743 = vadd.f32 %v4735, 0.0025
    %v4744 = vadd.f32 %v4736, 0.0025
    %v4745 = vadd.f32 %v4737, 0.0025
    %v4746 = vadd.f32 %v4738, 0.0025
    %v4747 = vadd.f32 %v4739, 0.0025
    %v4748 = vmul.f32 %v4724, 2.0
    %v4749 = vmul.f32 %v4725, 2.0
    %v4750 = vmul.f32 %v4726, 2.0
    %v4751 = vmul.f32 %v4727, 2.0
    %v4752 = vmul.f32 %v4728, 2.0
    %v4753 = vmul.f32 %v4729, 2.0
    %v4754 = vmul.f32 %v4730, 2.0
    %v4755 = vmul.f32 %v4731, 2.0
    %v4756 = vadd.f32 %v4748, 0.0064
    %v4757 = vadd.f32 %v4749, 0.0064
    %v4758 = vadd.f32 %v4750, 0.0064
    %v4759 = vadd.f32 %v4751, 0.0064
    %v4760 = vadd.f32 %v4752, 0.0064
    %v4761 = vadd.f32 %v4753, 0.0064
    %v4762 = vadd.f32 %v4754, 0.0064
    %v4763 = vadd.f32 %v4755, 0.0064
    %v4764 = vmul.f32 %v4740, %v4756
    %v4765 = vmul.f32 %v4741, %v4757
    %v4766 = vmul.f32 %v4742, %v4758
    %v4767 = vmul.f32 %v4743, %v4759
    %v4768 = vmul.f32 %v4744, %v4760
    %v4769 = vmul.f32 %v4745, %v4761
    %v4770 = vmul.f32 %v4746, %v4762
    %v4771 = vmul.f32 %v4747, %v4763
    %v4772 = vadd.f32 %v4684, %v4692
    %v4773 = vadd.f32 %v4685, %v4693
    %v4774 = vadd.f32 %v4686, %v4694
    %v4775 = vadd.f32 %v4687, %v4695
    %v4776 = vadd.f32 %v4688, %v4696
    %v4777 = vadd.f32 %v4689, %v4697
    %v4778 = vadd.f32 %v4690, %v4698
    %v4779 = vadd.f32 %v4691, %v4699
    %v4780 = vadd.f32 %v4772, 0.0025
    %v4781 = vadd.f32 %v4773, 0.0025
    %v4782 = vadd.f32 %v4774, 0.0025
    %v4783 = vadd.f32 %v4775, 0.0025
    %v4784 = vadd.f32 %v4776, 0.0025
    %v4785 = vadd.f32 %v4777, 0.0025
    %v4786 = vadd.f32 %v4778, 0.0025
    %v4787 = vadd.f32 %v4779, 0.0025
    %v4788 = vadd.f32 %v4708, %v4716
    %v4789 = vadd.f32 %v4709, %v4717
    %v4790 = vadd.f32 %v4710, %v4718
    %v4791 = vadd.f32 %v4711, %v4719
    %v4792 = vadd.f32 %v4712, %v4720
    %v4793 = vadd.f32 %v4713, %v4721
    %v4794 = vadd.f32 %v4714, %v4722
    %v4795 = vadd.f32 %v4715, %v4723
    %v4796 = vadd.f32 %v4788, 0.0064
    %v4797 = vadd.f32 %v4789, 0.0064
    %v4798 = vadd.f32 %v4790, 0.0064
    %v4799 = vadd.f32 %v4791, 0.0064
    %v4800 = vadd.f32 %v4792, 0.0064
    %v4801 = vadd.f32 %v4793, 0.0064
    %v4802 = vadd.f32 %v4794, 0.0064
    %v4803 = vadd.f32 %v4795, 0.0064
    %v4804 = vmul.f32 %v4780, %v4796
    %v4805 = vmul.f32 %v4781, %v4797
    %v4806 = vmul.f32 %v4782, %v4798
    %v4807 = vmul.f32 %v4783, %v4799
    %v4808 = vmul.f32 %v4784, %v4800
    %v4809 = vmul.f32 %v4785, %v4801
    %v4810 = vmul.f32 %v4786, %v4802
    %v4811 = vmul.f32 %v4787, %v4803
    %v4812 = vrcp.pop %v4804
    %v4813 = vmul.f32 %v4764, %v4812
    %v4814 = vrcp.pop %v4805
    %v4815 = vmul.f32 %v4765, %v4814
    %v4816 = vrcp.pop %v4806
    %v4817 = vmul.f32 %v4766, %v4816
    %v4818 = vrcp.pop %v4807
    %v4819 = vmul.f32 %v4767, %v4818
    %v4820 = vrcp.pop %v4808
    %v4821 = vmul.f32 %v4768, %v4820
    %v4822 = vrcp.pop %v4809
    %v4823 = vmul.f32 %v4769, %v4822
    %v4824 = vrcp.pop %v4810
    %v4825 = vmul.f32 %v4770, %v4824
    %v4826 = vrcp.pop %v4811
    %v4827 = vmul.f32 %v4771, %v4826
    %v4828 = vsel %vm2369, %v4815, 0.0
    %v4829 = vadd.f32 %v4813, %v4828
    %v4830 = vadd.f32 %v4829, %v4817
    %v4831 = vsel %vm2369, %v4819, 0.0
    %v4832 = vadd.f32 %v4830, %v4831
    %v4833 = vadd.f32 %v4832, %v4821
    %v4834 = vsel %vm2369, %v4823, 0.0
    %v4835 = vadd.f32 %v4833, %v4834
    %v4836 = vadd.f32 %v4835, %v4825
    %v4837 = vsel %vm2369, %v4827, 0.0
    %v4838 = vadd.f32 %v4836, %v4837
    %4839 = vadd.xlane.f32.xlu0 %v4838
    %v4840 = vpop.xlane.xlu0 %4839
    %v4841 = vrot.slane %v4840, 4
    %v4842 = vadd.f32 %v4840, %v4841
    %v4843 = vrot.slane %v4842, 2
    %v4844 = vadd.f32 %v4842, %v4843
    %v4845 = vrot.slane %v4844, 1
    %v4846 = vadd.f32 %v4844, %v4845
    %s4847 = vtos %v4846
    %s4848 = smul.f32 %s4847, 0.00016276042
    %s4849 = ssub.f32 1.0, %s4848
    %s4850 = smul.f32 %s4849, 0.5
    %s4851 = sadd.f32 %s4850, 0.0
    %v4852 = vld [vmem:[%s4] sm:$0xff]
    %v4853 = vld [vmem:[%s4 + $0x8] sm:$0xff]
    %v4854 = vld [vmem:[%s4 + $0x10] sm:$0xff]
    %v4855 = vld [vmem:[%s4 + $0x18] sm:$0xff]
    %v4856 = vld [vmem:[%s5] sm:$0xff]
    %v4857 = vld [vmem:[%s5 + $0x8] sm:$0xff]
    %v4858 = vld [vmem:[%s5 + $0x10] sm:$0xff]
    %v4859 = vld [vmem:[%s5 + $0x18] sm:$0xff]
    %v4860 = vld [vmem:[%s5 + $0x20] sm:$0xff]
    %v4861 = vld [vmem:[%s5 + $0x28] sm:$0xff]
    %v4862 = vld [vmem:[%s5 + $0x30] sm:$0xff]
    %v4863 = vld [vmem:[%s5 + $0x38] sm:$0xff]
    %v4864 = vld [vmem:[%s5 + $0x40] sm:$0xff]
    %v4865 = vld [vmem:[%s5 + $0x48] sm:$0xff]
    %v4866 = vld [vmem:[%s5 + $0x50] sm:$0xff]
    %v4867 = vld [vmem:[%s5 + $0x58] sm:$0xff]
    %v4868 = vld [vmem:[%s5 + $0x60] sm:$0xff]
    %v4869 = vld [vmem:[%s5 + $0x68] sm:$0xff]
    %v4870 = vld [vmem:[%s5 + $0x70] sm:$0xff]
    %v4871 = vld [vmem:[%s5 + $0x78] sm:$0xff]
    %v4872 = vld [vmem:[%s5 + $0x80] sm:$0xff]
    %v4873 = vld [vmem:[%s5 + $0x88] sm:$0xff]
    %v4874 = vld [vmem:[%s5 + $0x90] sm:$0xff]
    %v4875 = vld [vmem:[%s5 + $0x98] sm:$0xff]
    %v4876 = vld [vmem:[%s5 + $0xa0] sm:$0xff]
    %v4877 = vld [vmem:[%s5 + $0xa8] sm:$0xff]
    %v4878 = vld [vmem:[%s5 + $0xb0] sm:$0xff]
    %v4879 = vld [vmem:[%s5 + $0xb8] sm:$0xff]
    %v4881 = vsel %vm2369, %v4852, 0
    %v4884 = vsel %vm2369, %v4853, 0
    %v4887 = vsel %vm2369, %v4854, 0
    %v4890 = vsel %vm2369, %v4855, 0
    %v4892 = vand.u32 %v31, 4294901760
    %4893 = vmatprep.subr.mxu0 %v4892
    %v4894 = vand.u32 %v30, 4294901760
    %4895 = vmatpush1.msra.mxu0 %v4894
    %v4896 = vand.u32 %v33, 4294901760
    %4897 = vmatprep.subr.mxu0 %v4896
    %v4898 = vand.u32 %v32, 4294901760
    %4899 = vmatpush1.msra.mxu0 %v4898
    %v4900 = vand.u32 %v35, 4294901760
    %4901 = vmatprep.subr.mxu0 %v4900
    %v4902 = vand.u32 %v34, 4294901760
    %4903 = vmatpush1.msra.mxu0 %v4902
    %v4904 = vand.u32 %v37, 4294901760
    %4905 = vmatprep.subr.mxu0 %v4904
    %v4906 = vand.u32 %v36, 4294901760
    %4907 = vmatpush1.msra.mxu0 %v4906
    %v4908 = vand.u32 %v39, 4294901760
    %4909 = vmatprep.subr.mxu0 %v4908
    %v4910 = vand.u32 %v38, 4294901760
    %4911 = vmatpush1.msra.mxu0 %v4910
    %v4912 = vand.u32 %v41, 4294901760
    %4913 = vmatprep.subr.mxu0 %v4912
    %v4914 = vand.u32 %v40, 4294901760
    %4915 = vmatpush1.msra.mxu0 %v4914
    %v4916 = vand.u32 %v43, 4294901760
    %4917 = vmatprep.subr.mxu0 %v4916
    %v4918 = vand.u32 %v42, 4294901760
    %4919 = vmatpush1.msra.mxu0 %v4918
    %v4920 = vand.u32 %v45, 4294901760
    %4921 = vmatprep.subr.mxu0 %v4920
    %v4922 = vand.u32 %v44, 4294901760
    %4923 = vmatpush1.msra.mxu0 %v4922
    %4924 = vmatprep.subr.mxu0 0.0
    %4925 = vmatpush1.msra.mxu0 0.0
    %4926 = vmatprep.subr.mxu0 0.0
    %4927 = vmatpush1.msra.mxu0 0.0
    %4928 = vmatprep.subr.mxu0 0.0
    %4929 = vmatpush1.msra.mxu0 0.0
    %4930 = vmatprep.subr.mxu0 0.0
    %4931 = vmatpush1.msra.mxu0 0.0
    %4932 = vmatprep.subr.mxu0 0.0
    %4933 = vmatpush1.msra.mxu0 0.0
    %4934 = vmatprep.subr.mxu0 0.0
    %4935 = vmatpush1.msra.mxu0 0.0
    %4936 = vmatprep.subr.mxu0 0.0
    %4937 = vmatpush1.msra.mxu0 0.0
    %4938 = vmatprep.subr.mxu0 0.0
    %4939 = vmatpush1.msra.mxu0 0.0
    %4940 = vmatprep.subr.mxu0 0.0
    %4941 = vmatpush1.msra.mxu0 0.0
    %4942 = vmatprep.subr.mxu0 0.0
    %4943 = vmatpush1.msra.mxu0 0.0
    %4944 = vmatprep.subr.mxu0 0.0
    %4945 = vmatpush1.msra.mxu0 0.0
    %4946 = vmatprep.subr.mxu0 0.0
    %4947 = vmatpush1.msra.mxu0 0.0
    %4948 = vmatprep.subr.mxu0 0.0
    %4949 = vmatpush1.msra.mxu0 0.0
    %4950 = vmatprep.subr.mxu0 0.0
    %4951 = vmatpush1.msra.mxu0 0.0
    %4952 = vmatprep.subr.mxu0 0.0
    %4953 = vmatpush1.msra.mxu0 0.0
    %4954 = vmatprep.subr.mxu0 0.0
    %4955 = vmatpush1.msra.mxu0 0.0
    %4956 = vmatprep.subr.mxu0 0.0
    %4957 = vmatpush1.msra.mxu0 0.0
    %4958 = vmatprep.subr.mxu0 0.0
    %4959 = vmatpush1.msra.mxu0 0.0
    %4960 = vmatprep.subr.mxu0 0.0
    %4961 = vmatpush1.msra.mxu0 0.0
    %4962 = vmatprep.subr.mxu0 0.0
    %4963 = vmatpush1.msra.mxu0 0.0
    %4964 = vmatprep.subr.mxu0 0.0
    %4965 = vmatpush1.msra.mxu0 0.0
    %4966 = vmatprep.subr.mxu0 0.0
    %4967 = vmatpush1.msra.mxu0 0.0
    %4968 = vmatprep.subr.mxu0 0.0
    %4969 = vmatpush1.msra.mxu0 0.0
    %4970 = vmatprep.subr.mxu0 0.0
    %4971 = vmatpush1.msra.mxu0 0.0
    %4972 = vmatprep.mubr.f32.mxu0 0.0
    %v4973 = vand.u32 %v4881, 4294901760
    %v4974 = vsub.f32 %v4881, %v4973
    %v4975 = vand.u32 %v4974, 4294901760
    %v4976 = vsub.f32 %v4974, %v4975
    %v4977 = vand.u32 %v4976, 4294901760
    %4978 = vmatmul.mubr.f32.gmra.mrb[0].mxu0 %v4977
    %v4979 = vpop.f32.mrb[0].mxu0
    %v4980 = vadd.f32 0.0, %v4979
    %v4981 = vpop.f32.mrb[0].mxu0
    %v4982 = vadd.f32 0.0, %v4981
    %4983 = vmatprep.mubr.f32.mxu0 0.0
    %v4984 = vand.u32 %v4884, 4294901760
    %v4985 = vsub.f32 %v4884, %v4984
    %v4986 = vand.u32 %v4985, 4294901760
    %v4987 = vsub.f32 %v4985, %v4986
    %v4988 = vand.u32 %v4987, 4294901760
    %4989 = vmatmul.mubr.f32.gmra.mrb[0].mxu0 %v4988
    %v4990 = vpop.f32.mrb[0].mxu0
    %v4991 = vadd.f32 0.0, %v4990
    %v4992 = vpop.f32.mrb[0].mxu0
    %v4993 = vadd.f32 0.0, %v4992
    %4994 = vmatprep.mubr.f32.mxu0 0.0
    %v4995 = vand.u32 %v4887, 4294901760
    %v4996 = vsub.f32 %v4887, %v4995
    %v4997 = vand.u32 %v4996, 4294901760
    %v4998 = vsub.f32 %v4996, %v4997
    %v4999 = vand.u32 %v4998, 4294901760
    %5000 = vmatmul.mubr.f32.gmra.mrb[0].mxu0 %v4999
    %v5001 = vpop.f32.mrb[0].mxu0
    %v5002 = vadd.f32 0.0, %v5001
    %v5003 = vpop.f32.mrb[0].mxu0
    %v5004 = vadd.f32 0.0, %v5003
    %5005 = vmatprep.mubr.f32.mxu0 0.0
    %v5006 = vand.u32 %v4890, 4294901760
    %v5007 = vsub.f32 %v4890, %v5006
    %v5008 = vand.u32 %v5007, 4294901760
    %v5009 = vsub.f32 %v5007, %v5008
    %v5010 = vand.u32 %v5009, 4294901760
    %5011 = vmatmul.mubr.f32.gmra.mrb[0].mxu0 %v5010
    %v5012 = vpop.f32.mrb[0].mxu0
    %v5013 = vadd.f32 0.0, %v5012
    %v5014 = vpop.f32.mrb[0].mxu0
    %v5015 = vadd.f32 0.0, %v5014
    %5016 = vdwg.mxu0
    %v5017 = vand.u32 %v31, 4294901760
    %v5018 = vsub.f32 %v31, %v5017
    %v5019 = vand.u32 %v5018, 4294901760
    %v5020 = vsub.f32 %v5018, %v5019
    %v5021 = vand.u32 %v5020, 4294901760
    %5022 = vmatprep.subr.mxu0 %v5021
    %v5023 = vand.u32 %v30, 4294901760
    %v5024 = vsub.f32 %v30, %v5023
    %v5025 = vand.u32 %v5024, 4294901760
    %v5026 = vsub.f32 %v5024, %v5025
    %v5027 = vand.u32 %v5026, 4294901760
    %5028 = vmatpush1.msra.mxu0 %v5027
    %v5029 = vand.u32 %v33, 4294901760
    %v5030 = vsub.f32 %v33, %v5029
    %v5031 = vand.u32 %v5030, 4294901760
    %v5032 = vsub.f32 %v5030, %v5031
    %v5033 = vand.u32 %v5032, 4294901760
    %5034 = vmatprep.subr.mxu0 %v5033
    %v5035 = vand.u32 %v32, 4294901760
    %v5036 = vsub.f32 %v32, %v5035
    %v5037 = vand.u32 %v5036, 4294901760
    %v5038 = vsub.f32 %v5036, %v5037
    %v5039 = vand.u32 %v5038, 4294901760
    %5040 = vmatpush1.msra.mxu0 %v5039
    %v5041 = vand.u32 %v35, 4294901760
    %v5042 = vsub.f32 %v35, %v5041
    %v5043 = vand.u32 %v5042, 4294901760
    %v5044 = vsub.f32 %v5042, %v5043
    %v5045 = vand.u32 %v5044, 4294901760
    %5046 = vmatprep.subr.mxu0 %v5045
    %v5047 = vand.u32 %v34, 4294901760
    %v5048 = vsub.f32 %v34, %v5047
    %v5049 = vand.u32 %v5048, 4294901760
    %v5050 = vsub.f32 %v5048, %v5049
    %v5051 = vand.u32 %v5050, 4294901760
    %5052 = vmatpush1.msra.mxu0 %v5051
    %v5053 = vand.u32 %v37, 4294901760
    %v5054 = vsub.f32 %v37, %v5053
    %v5055 = vand.u32 %v5054, 4294901760
    %v5056 = vsub.f32 %v5054, %v5055
    %v5057 = vand.u32 %v5056, 4294901760
    %5058 = vmatprep.subr.mxu0 %v5057
    %v5059 = vand.u32 %v36, 4294901760
    %v5060 = vsub.f32 %v36, %v5059
    %v5061 = vand.u32 %v5060, 4294901760
    %v5062 = vsub.f32 %v5060, %v5061
    %v5063 = vand.u32 %v5062, 4294901760
    %5064 = vmatpush1.msra.mxu0 %v5063
    %v5065 = vand.u32 %v39, 4294901760
    %v5066 = vsub.f32 %v39, %v5065
    %v5067 = vand.u32 %v5066, 4294901760
    %v5068 = vsub.f32 %v5066, %v5067
    %v5069 = vand.u32 %v5068, 4294901760
    %5070 = vmatprep.subr.mxu0 %v5069
    %v5071 = vand.u32 %v38, 4294901760
    %v5072 = vsub.f32 %v38, %v5071
    %v5073 = vand.u32 %v5072, 4294901760
    %v5074 = vsub.f32 %v5072, %v5073
    %v5075 = vand.u32 %v5074, 4294901760
    %5076 = vmatpush1.msra.mxu0 %v5075
    %v5077 = vand.u32 %v41, 4294901760
    %v5078 = vsub.f32 %v41, %v5077
    %v5079 = vand.u32 %v5078, 4294901760
    %v5080 = vsub.f32 %v5078, %v5079
    %v5081 = vand.u32 %v5080, 4294901760
    %5082 = vmatprep.subr.mxu0 %v5081
    %v5083 = vand.u32 %v40, 4294901760
    %v5084 = vsub.f32 %v40, %v5083
    %v5085 = vand.u32 %v5084, 4294901760
    %v5086 = vsub.f32 %v5084, %v5085
    %v5087 = vand.u32 %v5086, 4294901760
    %5088 = vmatpush1.msra.mxu0 %v5087
    %v5089 = vand.u32 %v43, 4294901760
    %v5090 = vsub.f32 %v43, %v5089
    %v5091 = vand.u32 %v5090, 4294901760
    %v5092 = vsub.f32 %v5090, %v5091
    %v5093 = vand.u32 %v5092, 4294901760
    %5094 = vmatprep.subr.mxu0 %v5093
    %v5095 = vand.u32 %v42, 4294901760
    %v5096 = vsub.f32 %v42, %v5095
    %v5097 = vand.u32 %v5096, 4294901760
    %v5098 = vsub.f32 %v5096, %v5097
    %v5099 = vand.u32 %v5098, 4294901760
    %5100 = vmatpush1.msra.mxu0 %v5099
    %v5101 = vand.u32 %v45, 4294901760
    %v5102 = vsub.f32 %v45, %v5101
    %v5103 = vand.u32 %v5102, 4294901760
    %v5104 = vsub.f32 %v5102, %v5103
    %v5105 = vand.u32 %v5104, 4294901760
    %5106 = vmatprep.subr.mxu0 %v5105
    %v5107 = vand.u32 %v44, 4294901760
    %v5108 = vsub.f32 %v44, %v5107
    %v5109 = vand.u32 %v5108, 4294901760
    %v5110 = vsub.f32 %v5108, %v5109
    %v5111 = vand.u32 %v5110, 4294901760
    %5112 = vmatpush1.msra.mxu0 %v5111
    %5113 = vmatprep.subr.mxu0 0.0
    %5114 = vmatpush1.msra.mxu0 0.0
    %5115 = vmatprep.subr.mxu0 0.0
    %5116 = vmatpush1.msra.mxu0 0.0
    %5117 = vmatprep.subr.mxu0 0.0
    %5118 = vmatpush1.msra.mxu0 0.0
    %5119 = vmatprep.subr.mxu0 0.0
    %5120 = vmatpush1.msra.mxu0 0.0
    %5121 = vmatprep.subr.mxu0 0.0
    %5122 = vmatpush1.msra.mxu0 0.0
    %5123 = vmatprep.subr.mxu0 0.0
    %5124 = vmatpush1.msra.mxu0 0.0
    %5125 = vmatprep.subr.mxu0 0.0
    %5126 = vmatpush1.msra.mxu0 0.0
    %5127 = vmatprep.subr.mxu0 0.0
    %5128 = vmatpush1.msra.mxu0 0.0
    %5129 = vmatprep.subr.mxu0 0.0
    %5130 = vmatpush1.msra.mxu0 0.0
    %5131 = vmatprep.subr.mxu0 0.0
    %5132 = vmatpush1.msra.mxu0 0.0
    %5133 = vmatprep.subr.mxu0 0.0
    %5134 = vmatpush1.msra.mxu0 0.0
    %5135 = vmatprep.subr.mxu0 0.0
    %5136 = vmatpush1.msra.mxu0 0.0
    %5137 = vmatprep.subr.mxu0 0.0
    %5138 = vmatpush1.msra.mxu0 0.0
    %5139 = vmatprep.subr.mxu0 0.0
    %5140 = vmatpush1.msra.mxu0 0.0
    %5141 = vmatprep.subr.mxu0 0.0
    %5142 = vmatpush1.msra.mxu0 0.0
    %5143 = vmatprep.subr.mxu0 0.0
    %5144 = vmatpush1.msra.mxu0 0.0
    %5145 = vmatprep.subr.mxu0 0.0
    %5146 = vmatpush1.msra.mxu0 0.0
    %5147 = vmatprep.subr.mxu0 0.0
    %5148 = vmatpush1.msra.mxu0 0.0
    %5149 = vmatprep.subr.mxu0 0.0
    %5150 = vmatpush1.msra.mxu0 0.0
    %5151 = vmatprep.subr.mxu0 0.0
    %5152 = vmatpush1.msra.mxu0 0.0
    %5153 = vmatprep.subr.mxu0 0.0
    %5154 = vmatpush1.msra.mxu0 0.0
    %5155 = vmatprep.subr.mxu0 0.0
    %5156 = vmatpush1.msra.mxu0 0.0
    %5157 = vmatprep.subr.mxu0 0.0
    %5158 = vmatpush1.msra.mxu0 0.0
    %5159 = vmatprep.subr.mxu0 0.0
    %5160 = vmatpush1.msra.mxu0 0.0
    %5161 = vmatprep.mubr.f32.mxu0 0.0
    %v5162 = vand.u32 %v4881, 4294901760
    %5163 = vmatmul.mubr.f32.gmra.mrb[0].mxu0 %v5162
    %v5164 = vpop.f32.mrb[0].mxu0
    %v5165 = vadd.f32 %v4980, %v5164
    %v5166 = vpop.f32.mrb[0].mxu0
    %v5167 = vadd.f32 %v4982, %v5166
    %5168 = vmatprep.mubr.f32.mxu0 0.0
    %v5169 = vand.u32 %v4884, 4294901760
    %5170 = vmatmul.mubr.f32.gmra.mrb[0].mxu0 %v5169
    %v5171 = vpop.f32.mrb[0].mxu0
    %v5172 = vadd.f32 %v4991, %v5171
    %v5173 = vpop.f32.mrb[0].mxu0
    %v5174 = vadd.f32 %v4993, %v5173
    %5175 = vmatprep.mubr.f32.mxu0 0.0
    %v5176 = vand.u32 %v4887, 4294901760
    %5177 = vmatmul.mubr.f32.gmra.mrb[0].mxu0 %v5176
    %v5178 = vpop.f32.mrb[0].mxu0
    %v5179 = vadd.f32 %v5002, %v5178
    %v5180 = vpop.f32.mrb[0].mxu0
    %v5181 = vadd.f32 %v5004, %v5180
    %5182 = vmatprep.mubr.f32.mxu0 0.0
    %v5183 = vand.u32 %v4890, 4294901760
    %5184 = vmatmul.mubr.f32.gmra.mrb[0].mxu0 %v5183
    %v5185 = vpop.f32.mrb[0].mxu0
    %v5186 = vadd.f32 %v5013, %v5185
    %v5187 = vpop.f32.mrb[0].mxu0
    %v5188 = vadd.f32 %v5015, %v5187
    %5189 = vdwg.mxu0
    %v5190 = vand.u32 %v31, 4294901760
    %v5191 = vsub.f32 %v31, %v5190
    %5192 = vmatprep.subr.mxu0 %v5191
    %v5193 = vand.u32 %v30, 4294901760
    %v5194 = vsub.f32 %v30, %v5193
    %5195 = vmatpush1.msra.mxu0 %v5194
    %v5196 = vand.u32 %v33, 4294901760
    %v5197 = vsub.f32 %v33, %v5196
    %5198 = vmatprep.subr.mxu0 %v5197
    %v5199 = vand.u32 %v32, 4294901760
    %v5200 = vsub.f32 %v32, %v5199
    %5201 = vmatpush1.msra.mxu0 %v5200
    %v5202 = vand.u32 %v35, 4294901760
    %v5203 = vsub.f32 %v35, %v5202
    %5204 = vmatprep.subr.mxu0 %v5203
    %v5205 = vand.u32 %v34, 4294901760
    %v5206 = vsub.f32 %v34, %v5205
    %5207 = vmatpush1.msra.mxu0 %v5206
    %v5208 = vand.u32 %v37, 4294901760
    %v5209 = vsub.f32 %v37, %v5208
    %5210 = vmatprep.subr.mxu0 %v5209
    %v5211 = vand.u32 %v36, 4294901760
    %v5212 = vsub.f32 %v36, %v5211
    %5213 = vmatpush1.msra.mxu0 %v5212
    %v5214 = vand.u32 %v39, 4294901760
    %v5215 = vsub.f32 %v39, %v5214
    %5216 = vmatprep.subr.mxu0 %v5215
    %v5217 = vand.u32 %v38, 4294901760
    %v5218 = vsub.f32 %v38, %v5217
    %5219 = vmatpush1.msra.mxu0 %v5218
    %v5220 = vand.u32 %v41, 4294901760
    %v5221 = vsub.f32 %v41, %v5220
    %5222 = vmatprep.subr.mxu0 %v5221
    %v5223 = vand.u32 %v40, 4294901760
    %v5224 = vsub.f32 %v40, %v5223
    %5225 = vmatpush1.msra.mxu0 %v5224
    %v5226 = vand.u32 %v43, 4294901760
    %v5227 = vsub.f32 %v43, %v5226
    %5228 = vmatprep.subr.mxu0 %v5227
    %v5229 = vand.u32 %v42, 4294901760
    %v5230 = vsub.f32 %v42, %v5229
    %5231 = vmatpush1.msra.mxu0 %v5230
    %v5232 = vand.u32 %v45, 4294901760
    %v5233 = vsub.f32 %v45, %v5232
    %5234 = vmatprep.subr.mxu0 %v5233
    %v5235 = vand.u32 %v44, 4294901760
    %v5236 = vsub.f32 %v44, %v5235
    %5237 = vmatpush1.msra.mxu0 %v5236
    %5238 = vmatprep.subr.mxu0 0.0
    %5239 = vmatpush1.msra.mxu0 0.0
    %5240 = vmatprep.subr.mxu0 0.0
    %5241 = vmatpush1.msra.mxu0 0.0
    %5242 = vmatprep.subr.mxu0 0.0
    %5243 = vmatpush1.msra.mxu0 0.0
    %5244 = vmatprep.subr.mxu0 0.0
    %5245 = vmatpush1.msra.mxu0 0.0
    %5246 = vmatprep.subr.mxu0 0.0
    %5247 = vmatpush1.msra.mxu0 0.0
    %5248 = vmatprep.subr.mxu0 0.0
    %5249 = vmatpush1.msra.mxu0 0.0
    %5250 = vmatprep.subr.mxu0 0.0
    %5251 = vmatpush1.msra.mxu0 0.0
    %5252 = vmatprep.subr.mxu0 0.0
    %5253 = vmatpush1.msra.mxu0 0.0
    %5254 = vmatprep.subr.mxu0 0.0
    %5255 = vmatpush1.msra.mxu0 0.0
    %5256 = vmatprep.subr.mxu0 0.0
    %5257 = vmatpush1.msra.mxu0 0.0
    %5258 = vmatprep.subr.mxu0 0.0
    %5259 = vmatpush1.msra.mxu0 0.0
    %5260 = vmatprep.subr.mxu0 0.0
    %5261 = vmatpush1.msra.mxu0 0.0
    %5262 = vmatprep.subr.mxu0 0.0
    %5263 = vmatpush1.msra.mxu0 0.0
    %5264 = vmatprep.subr.mxu0 0.0
    %5265 = vmatpush1.msra.mxu0 0.0
    %5266 = vmatprep.subr.mxu0 0.0
    %5267 = vmatpush1.msra.mxu0 0.0
    %5268 = vmatprep.subr.mxu0 0.0
    %5269 = vmatpush1.msra.mxu0 0.0
    %5270 = vmatprep.subr.mxu0 0.0
    %5271 = vmatpush1.msra.mxu0 0.0
    %5272 = vmatprep.subr.mxu0 0.0
    %5273 = vmatpush1.msra.mxu0 0.0
    %5274 = vmatprep.subr.mxu0 0.0
    %5275 = vmatpush1.msra.mxu0 0.0
    %5276 = vmatprep.subr.mxu0 0.0
    %5277 = vmatpush1.msra.mxu0 0.0
    %5278 = vmatprep.subr.mxu0 0.0
    %5279 = vmatpush1.msra.mxu0 0.0
    %5280 = vmatprep.subr.mxu0 0.0
    %5281 = vmatpush1.msra.mxu0 0.0
    %5282 = vmatprep.subr.mxu0 0.0
    %5283 = vmatpush1.msra.mxu0 0.0
    %5284 = vmatprep.subr.mxu0 0.0
    %5285 = vmatpush1.msra.mxu0 0.0
    %5286 = vmatprep.mubr.f32.mxu0 0.0
    %v5287 = vand.u32 %v4881, 4294901760
    %v5288 = vsub.f32 %v4881, %v5287
    %5289 = vmatmul.mubr.f32.gmra.mrb[0].mxu0 %v5288
    %v5290 = vpop.f32.mrb[0].mxu0
    %v5291 = vadd.f32 %v5165, %v5290
    %v5292 = vpop.f32.mrb[0].mxu0
    %v5293 = vadd.f32 %v5167, %v5292
    %5294 = vmatprep.mubr.f32.mxu0 0.0
    %v5295 = vand.u32 %v4884, 4294901760
    %v5296 = vsub.f32 %v4884, %v5295
    %5297 = vmatmul.mubr.f32.gmra.mrb[0].mxu0 %v5296
    %v5298 = vpop.f32.mrb[0].mxu0
    %v5299 = vadd.f32 %v5172, %v5298
    %v5300 = vpop.f32.mrb[0].mxu0
    %v5301 = vadd.f32 %v5174, %v5300
    %5302 = vmatprep.mubr.f32.mxu0 0.0
    %v5303 = vand.u32 %v4887, 4294901760
    %v5304 = vsub.f32 %v4887, %v5303
    %5305 = vmatmul.mubr.f32.gmra.mrb[0].mxu0 %v5304
    %v5306 = vpop.f32.mrb[0].mxu0
    %v5307 = vadd.f32 %v5179, %v5306
    %v5308 = vpop.f32.mrb[0].mxu0
    %v5309 = vadd.f32 %v5181, %v5308
    %5310 = vmatprep.mubr.f32.mxu0 0.0
    %v5311 = vand.u32 %v4890, 4294901760
    %v5312 = vsub.f32 %v4890, %v5311
    %5313 = vmatmul.mubr.f32.gmra.mrb[0].mxu0 %v5312
    %v5314 = vpop.f32.mrb[0].mxu0
    %v5315 = vadd.f32 %v5186, %v5314
    %v5316 = vpop.f32.mrb[0].mxu0
    %v5317 = vadd.f32 %v5188, %v5316
    %5318 = vdwg.mxu0
    %v5319 = vand.u32 %v31, 4294901760
    %5320 = vmatprep.subr.mxu0 %v5319
    %v5321 = vand.u32 %v30, 4294901760
    %5322 = vmatpush1.msra.mxu0 %v5321
    %v5323 = vand.u32 %v33, 4294901760
    %5324 = vmatprep.subr.mxu0 %v5323
    %v5325 = vand.u32 %v32, 4294901760
    %5326 = vmatpush1.msra.mxu0 %v5325
    %v5327 = vand.u32 %v35, 4294901760
    %5328 = vmatprep.subr.mxu0 %v5327
    %v5329 = vand.u32 %v34, 4294901760
    %5330 = vmatpush1.msra.mxu0 %v5329
    %v5331 = vand.u32 %v37, 4294901760
    %5332 = vmatprep.subr.mxu0 %v5331
    %v5333 = vand.u32 %v36, 4294901760
    %5334 = vmatpush1.msra.mxu0 %v5333
    %v5335 = vand.u32 %v39, 4294901760
    %5336 = vmatprep.subr.mxu0 %v5335
    %v5337 = vand.u32 %v38, 4294901760
    %5338 = vmatpush1.msra.mxu0 %v5337
    %v5339 = vand.u32 %v41, 4294901760
    %5340 = vmatprep.subr.mxu0 %v5339
    %v5341 = vand.u32 %v40, 4294901760
    %5342 = vmatpush1.msra.mxu0 %v5341
    %v5343 = vand.u32 %v43, 4294901760
    %5344 = vmatprep.subr.mxu0 %v5343
    %v5345 = vand.u32 %v42, 4294901760
    %5346 = vmatpush1.msra.mxu0 %v5345
    %v5347 = vand.u32 %v45, 4294901760
    %5348 = vmatprep.subr.mxu0 %v5347
    %v5349 = vand.u32 %v44, 4294901760
    %5350 = vmatpush1.msra.mxu0 %v5349
    %5351 = vmatprep.subr.mxu0 0.0
    %5352 = vmatpush1.msra.mxu0 0.0
    %5353 = vmatprep.subr.mxu0 0.0
    %5354 = vmatpush1.msra.mxu0 0.0
    %5355 = vmatprep.subr.mxu0 0.0
    %5356 = vmatpush1.msra.mxu0 0.0
    %5357 = vmatprep.subr.mxu0 0.0
    %5358 = vmatpush1.msra.mxu0 0.0
    %5359 = vmatprep.subr.mxu0 0.0
    %5360 = vmatpush1.msra.mxu0 0.0
    %5361 = vmatprep.subr.mxu0 0.0
    %5362 = vmatpush1.msra.mxu0 0.0
    %5363 = vmatprep.subr.mxu0 0.0
    %5364 = vmatpush1.msra.mxu0 0.0
    %5365 = vmatprep.subr.mxu0 0.0
    %5366 = vmatpush1.msra.mxu0 0.0
    %5367 = vmatprep.subr.mxu0 0.0
    %5368 = vmatpush1.msra.mxu0 0.0
    %5369 = vmatprep.subr.mxu0 0.0
    %5370 = vmatpush1.msra.mxu0 0.0
    %5371 = vmatprep.subr.mxu0 0.0
    %5372 = vmatpush1.msra.mxu0 0.0
    %5373 = vmatprep.subr.mxu0 0.0
    %5374 = vmatpush1.msra.mxu0 0.0
    %5375 = vmatprep.subr.mxu0 0.0
    %5376 = vmatpush1.msra.mxu0 0.0
    %5377 = vmatprep.subr.mxu0 0.0
    %5378 = vmatpush1.msra.mxu0 0.0
    %5379 = vmatprep.subr.mxu0 0.0
    %5380 = vmatpush1.msra.mxu0 0.0
    %5381 = vmatprep.subr.mxu0 0.0
    %5382 = vmatpush1.msra.mxu0 0.0
    %5383 = vmatprep.subr.mxu0 0.0
    %5384 = vmatpush1.msra.mxu0 0.0
    %5385 = vmatprep.subr.mxu0 0.0
    %5386 = vmatpush1.msra.mxu0 0.0
    %5387 = vmatprep.subr.mxu0 0.0
    %5388 = vmatpush1.msra.mxu0 0.0
    %5389 = vmatprep.subr.mxu0 0.0
    %5390 = vmatpush1.msra.mxu0 0.0
    %5391 = vmatprep.subr.mxu0 0.0
    %5392 = vmatpush1.msra.mxu0 0.0
    %5393 = vmatprep.subr.mxu0 0.0
    %5394 = vmatpush1.msra.mxu0 0.0
    %5395 = vmatprep.subr.mxu0 0.0
    %5396 = vmatpush1.msra.mxu0 0.0
    %5397 = vmatprep.subr.mxu0 0.0
    %5398 = vmatpush1.msra.mxu0 0.0
    %5399 = vmatprep.mubr.f32.mxu0 0.0
    %v5400 = vand.u32 %v4881, 4294901760
    %v5401 = vsub.f32 %v4881, %v5400
    %v5402 = vand.u32 %v5401, 4294901760
    %5403 = vmatmul.mubr.f32.gmra.mrb[0].mxu0 %v5402
    %v5404 = vpop.f32.mrb[0].mxu0
    %v5405 = vadd.f32 %v5291, %v5404
    %v5406 = vpop.f32.mrb[0].mxu0
    %v5407 = vadd.f32 %v5293, %v5406
    %5408 = vmatprep.mubr.f32.mxu0 0.0
    %v5409 = vand.u32 %v4884, 4294901760
    %v5410 = vsub.f32 %v4884, %v5409
    %v5411 = vand.u32 %v5410, 4294901760
    %5412 = vmatmul.mubr.f32.gmra.mrb[0].mxu0 %v5411
    %v5413 = vpop.f32.mrb[0].mxu0
    %v5414 = vadd.f32 %v5299, %v5413
    %v5415 = vpop.f32.mrb[0].mxu0
    %v5416 = vadd.f32 %v5301, %v5415
    %5417 = vmatprep.mubr.f32.mxu0 0.0
    %v5418 = vand.u32 %v4887, 4294901760
    %v5419 = vsub.f32 %v4887, %v5418
    %v5420 = vand.u32 %v5419, 4294901760
    %5421 = vmatmul.mubr.f32.gmra.mrb[0].mxu0 %v5420
    %v5422 = vpop.f32.mrb[0].mxu0
    %v5423 = vadd.f32 %v5307, %v5422
    %v5424 = vpop.f32.mrb[0].mxu0
    %v5425 = vadd.f32 %v5309, %v5424
    %5426 = vmatprep.mubr.f32.mxu0 0.0
    %v5427 = vand.u32 %v4890, 4294901760
    %v5428 = vsub.f32 %v4890, %v5427
    %v5429 = vand.u32 %v5428, 4294901760
    %5430 = vmatmul.mubr.f32.gmra.mrb[0].mxu0 %v5429
    %v5431 = vpop.f32.mrb[0].mxu0
    %v5432 = vadd.f32 %v5315, %v5431
    %v5433 = vpop.f32.mrb[0].mxu0
    %v5434 = vadd.f32 %v5317, %v5433
    %5435 = vdwg.mxu0
    %v5436 = vand.u32 %v31, 4294901760
    %v5437 = vsub.f32 %v31, %v5436
    %v5438 = vand.u32 %v5437, 4294901760
    %5439 = vmatprep.subr.mxu0 %v5438
    %v5440 = vand.u32 %v30, 4294901760
    %v5441 = vsub.f32 %v30, %v5440
    %v5442 = vand.u32 %v5441, 4294901760
    %5443 = vmatpush1.msra.mxu0 %v5442
    %v5444 = vand.u32 %v33, 4294901760
    %v5445 = vsub.f32 %v33, %v5444
    %v5446 = vand.u32 %v5445, 4294901760
    %5447 = vmatprep.subr.mxu0 %v5446
    %v5448 = vand.u32 %v32, 4294901760
    %v5449 = vsub.f32 %v32, %v5448
    %v5450 = vand.u32 %v5449, 4294901760
    %5451 = vmatpush1.msra.mxu0 %v5450
    %v5452 = vand.u32 %v35, 4294901760
    %v5453 = vsub.f32 %v35, %v5452
    %v5454 = vand.u32 %v5453, 4294901760
    %5455 = vmatprep.subr.mxu0 %v5454
    %v5456 = vand.u32 %v34, 4294901760
    %v5457 = vsub.f32 %v34, %v5456
    %v5458 = vand.u32 %v5457, 4294901760
    %5459 = vmatpush1.msra.mxu0 %v5458
    %v5460 = vand.u32 %v37, 4294901760
    %v5461 = vsub.f32 %v37, %v5460
    %v5462 = vand.u32 %v5461, 4294901760
    %5463 = vmatprep.subr.mxu0 %v5462
    %v5464 = vand.u32 %v36, 4294901760
    %v5465 = vsub.f32 %v36, %v5464
    %v5466 = vand.u32 %v5465, 4294901760
    %5467 = vmatpush1.msra.mxu0 %v5466
    %v5468 = vand.u32 %v39, 4294901760
    %v5469 = vsub.f32 %v39, %v5468
    %v5470 = vand.u32 %v5469, 4294901760
    %5471 = vmatprep.subr.mxu0 %v5470
    %v5472 = vand.u32 %v38, 4294901760
    %v5473 = vsub.f32 %v38, %v5472
    %v5474 = vand.u32 %v5473, 4294901760
    %5475 = vmatpush1.msra.mxu0 %v5474
    %v5476 = vand.u32 %v41, 4294901760
    %v5477 = vsub.f32 %v41, %v5476
    %v5478 = vand.u32 %v5477, 4294901760
    %5479 = vmatprep.subr.mxu0 %v5478
    %v5480 = vand.u32 %v40, 4294901760
    %v5481 = vsub.f32 %v40, %v5480
    %v5482 = vand.u32 %v5481, 4294901760
    %5483 = vmatpush1.msra.mxu0 %v5482
    %v5484 = vand.u32 %v43, 4294901760
    %v5485 = vsub.f32 %v43, %v5484
    %v5486 = vand.u32 %v5485, 4294901760
    %5487 = vmatprep.subr.mxu0 %v5486
    %v5488 = vand.u32 %v42, 4294901760
    %v5489 = vsub.f32 %v42, %v5488
    %v5490 = vand.u32 %v5489, 4294901760
    %5491 = vmatpush1.msra.mxu0 %v5490
    %v5492 = vand.u32 %v45, 4294901760
    %v5493 = vsub.f32 %v45, %v5492
    %v5494 = vand.u32 %v5493, 4294901760
    %5495 = vmatprep.subr.mxu0 %v5494
    %v5496 = vand.u32 %v44, 4294901760
    %v5497 = vsub.f32 %v44, %v5496
    %v5498 = vand.u32 %v5497, 4294901760
    %5499 = vmatpush1.msra.mxu0 %v5498
    %5500 = vmatprep.subr.mxu0 0.0
    %5501 = vmatpush1.msra.mxu0 0.0
    %5502 = vmatprep.subr.mxu0 0.0
    %5503 = vmatpush1.msra.mxu0 0.0
    %5504 = vmatprep.subr.mxu0 0.0
    %5505 = vmatpush1.msra.mxu0 0.0
    %5506 = vmatprep.subr.mxu0 0.0
    %5507 = vmatpush1.msra.mxu0 0.0
    %5508 = vmatprep.subr.mxu0 0.0
    %5509 = vmatpush1.msra.mxu0 0.0
    %5510 = vmatprep.subr.mxu0 0.0
    %5511 = vmatpush1.msra.mxu0 0.0
    %5512 = vmatprep.subr.mxu0 0.0
    %5513 = vmatpush1.msra.mxu0 0.0
    %5514 = vmatprep.subr.mxu0 0.0
    %5515 = vmatpush1.msra.mxu0 0.0
    %5516 = vmatprep.subr.mxu0 0.0
    %5517 = vmatpush1.msra.mxu0 0.0
    %5518 = vmatprep.subr.mxu0 0.0
    %5519 = vmatpush1.msra.mxu0 0.0
    %5520 = vmatprep.subr.mxu0 0.0
    %5521 = vmatpush1.msra.mxu0 0.0
    %5522 = vmatprep.subr.mxu0 0.0
    %5523 = vmatpush1.msra.mxu0 0.0
    %5524 = vmatprep.subr.mxu0 0.0
    %5525 = vmatpush1.msra.mxu0 0.0
    %5526 = vmatprep.subr.mxu0 0.0
    %5527 = vmatpush1.msra.mxu0 0.0
    %5528 = vmatprep.subr.mxu0 0.0
    %5529 = vmatpush1.msra.mxu0 0.0
    %5530 = vmatprep.subr.mxu0 0.0
    %5531 = vmatpush1.msra.mxu0 0.0
    %5532 = vmatprep.subr.mxu0 0.0
    %5533 = vmatpush1.msra.mxu0 0.0
    %5534 = vmatprep.subr.mxu0 0.0
    %5535 = vmatpush1.msra.mxu0 0.0
    %5536 = vmatprep.subr.mxu0 0.0
    %5537 = vmatpush1.msra.mxu0 0.0
    %5538 = vmatprep.subr.mxu0 0.0
    %5539 = vmatpush1.msra.mxu0 0.0
    %5540 = vmatprep.subr.mxu0 0.0
    %5541 = vmatpush1.msra.mxu0 0.0
    %5542 = vmatprep.subr.mxu0 0.0
    %5543 = vmatpush1.msra.mxu0 0.0
    %5544 = vmatprep.subr.mxu0 0.0
    %5545 = vmatpush1.msra.mxu0 0.0
    %5546 = vmatprep.subr.mxu0 0.0
    %5547 = vmatpush1.msra.mxu0 0.0
    %5548 = vmatprep.mubr.f32.mxu0 0.0
    %v5549 = vand.u32 %v4881, 4294901760
    %5550 = vmatmul.mubr.f32.gmra.mrb[0].mxu0 %v5549
    %v5551 = vpop.f32.mrb[0].mxu0
    %v5552 = vadd.f32 %v5405, %v5551
    %v5553 = vpop.f32.mrb[0].mxu0
    %v5554 = vadd.f32 %v5407, %v5553
    %5555 = vmatprep.mubr.f32.mxu0 0.0
    %v5556 = vand.u32 %v4884, 4294901760
    %5557 = vmatmul.mubr.f32.gmra.mrb[0].mxu0 %v5556
    %v5558 = vpop.f32.mrb[0].mxu0
    %v5559 = vadd.f32 %v5414, %v5558
    %v5560 = vpop.f32.mrb[0].mxu0
    %v5561 = vadd.f32 %v5416, %v5560
    %5562 = vmatprep.mubr.f32.mxu0 0.0
    %v5563 = vand.u32 %v4887, 4294901760
    %5564 = vmatmul.mubr.f32.gmra.mrb[0].mxu0 %v5563
    %v5565 = vpop.f32.mrb[0].mxu0
    %v5566 = vadd.f32 %v5423, %v5565
    %v5567 = vpop.f32.mrb[0].mxu0
    %v5568 = vadd.f32 %v5425, %v5567
    %5569 = vmatprep.mubr.f32.mxu0 0.0
    %v5570 = vand.u32 %v4890, 4294901760
    %5571 = vmatmul.mubr.f32.gmra.mrb[0].mxu0 %v5570
    %v5572 = vpop.f32.mrb[0].mxu0
    %v5573 = vadd.f32 %v5432, %v5572
    %v5574 = vpop.f32.mrb[0].mxu0
    %v5575 = vadd.f32 %v5434, %v5574
    %5576 = vdwg.mxu0
    %v5577 = vand.u32 %v31, 4294901760
    %5578 = vmatprep.subr.mxu0 %v5577
    %v5579 = vand.u32 %v30, 4294901760
    %5580 = vmatpush1.msra.mxu0 %v5579
    %v5581 = vand.u32 %v33, 4294901760
    %5582 = vmatprep.subr.mxu0 %v5581
    %v5583 = vand.u32 %v32, 4294901760
    %5584 = vmatpush1.msra.mxu0 %v5583
    %v5585 = vand.u32 %v35, 4294901760
    %5586 = vmatprep.subr.mxu0 %v5585
    %v5587 = vand.u32 %v34, 4294901760
    %5588 = vmatpush1.msra.mxu0 %v5587
    %v5589 = vand.u32 %v37, 4294901760
    %5590 = vmatprep.subr.mxu0 %v5589
    %v5591 = vand.u32 %v36, 4294901760
    %5592 = vmatpush1.msra.mxu0 %v5591
    %v5593 = vand.u32 %v39, 4294901760
    %5594 = vmatprep.subr.mxu0 %v5593
    %v5595 = vand.u32 %v38, 4294901760
    %5596 = vmatpush1.msra.mxu0 %v5595
    %v5597 = vand.u32 %v41, 4294901760
    %5598 = vmatprep.subr.mxu0 %v5597
    %v5599 = vand.u32 %v40, 4294901760
    %5600 = vmatpush1.msra.mxu0 %v5599
    %v5601 = vand.u32 %v43, 4294901760
    %5602 = vmatprep.subr.mxu0 %v5601
    %v5603 = vand.u32 %v42, 4294901760
    %5604 = vmatpush1.msra.mxu0 %v5603
    %v5605 = vand.u32 %v45, 4294901760
    %5606 = vmatprep.subr.mxu0 %v5605
    %v5607 = vand.u32 %v44, 4294901760
    %5608 = vmatpush1.msra.mxu0 %v5607
    %5609 = vmatprep.subr.mxu0 0.0
    %5610 = vmatpush1.msra.mxu0 0.0
    %5611 = vmatprep.subr.mxu0 0.0
    %5612 = vmatpush1.msra.mxu0 0.0
    %5613 = vmatprep.subr.mxu0 0.0
    %5614 = vmatpush1.msra.mxu0 0.0
    %5615 = vmatprep.subr.mxu0 0.0
    %5616 = vmatpush1.msra.mxu0 0.0
    %5617 = vmatprep.subr.mxu0 0.0
    %5618 = vmatpush1.msra.mxu0 0.0
    %5619 = vmatprep.subr.mxu0 0.0
    %5620 = vmatpush1.msra.mxu0 0.0
    %5621 = vmatprep.subr.mxu0 0.0
    %5622 = vmatpush1.msra.mxu0 0.0
    %5623 = vmatprep.subr.mxu0 0.0
    %5624 = vmatpush1.msra.mxu0 0.0
    %5625 = vmatprep.subr.mxu0 0.0
    %5626 = vmatpush1.msra.mxu0 0.0
    %5627 = vmatprep.subr.mxu0 0.0
    %5628 = vmatpush1.msra.mxu0 0.0
    %5629 = vmatprep.subr.mxu0 0.0
    %5630 = vmatpush1.msra.mxu0 0.0
    %5631 = vmatprep.subr.mxu0 0.0
    %5632 = vmatpush1.msra.mxu0 0.0
    %5633 = vmatprep.subr.mxu0 0.0
    %5634 = vmatpush1.msra.mxu0 0.0
    %5635 = vmatprep.subr.mxu0 0.0
    %5636 = vmatpush1.msra.mxu0 0.0
    %5637 = vmatprep.subr.mxu0 0.0
    %5638 = vmatpush1.msra.mxu0 0.0
    %5639 = vmatprep.subr.mxu0 0.0
    %5640 = vmatpush1.msra.mxu0 0.0
    %5641 = vmatprep.subr.mxu0 0.0
    %5642 = vmatpush1.msra.mxu0 0.0
    %5643 = vmatprep.subr.mxu0 0.0
    %5644 = vmatpush1.msra.mxu0 0.0
    %5645 = vmatprep.subr.mxu0 0.0
    %5646 = vmatpush1.msra.mxu0 0.0
    %5647 = vmatprep.subr.mxu0 0.0
    %5648 = vmatpush1.msra.mxu0 0.0
    %5649 = vmatprep.subr.mxu0 0.0
    %5650 = vmatpush1.msra.mxu0 0.0
    %5651 = vmatprep.subr.mxu0 0.0
    %5652 = vmatpush1.msra.mxu0 0.0
    %5653 = vmatprep.subr.mxu0 0.0
    %5654 = vmatpush1.msra.mxu0 0.0
    %5655 = vmatprep.subr.mxu0 0.0
    %5656 = vmatpush1.msra.mxu0 0.0
    %5657 = vmatprep.mubr.f32.mxu0 0.0
    %v5658 = vand.u32 %v4881, 4294901760
    %5659 = vmatmul.mubr.f32.gmra.mrb[0].mxu0 %v5658
    %v5660 = vpop.f32.mrb[0].mxu0
    %v5661 = vadd.f32 %v5552, %v5660
    %v5662 = vpop.f32.mrb[0].mxu0
    %v5663 = vadd.f32 %v5554, %v5662
    %5664 = vmatprep.mubr.f32.mxu0 0.0
    %v5665 = vand.u32 %v4884, 4294901760
    %5666 = vmatmul.mubr.f32.gmra.mrb[0].mxu0 %v5665
    %v5667 = vpop.f32.mrb[0].mxu0
    %v5668 = vadd.f32 %v5559, %v5667
    %v5669 = vpop.f32.mrb[0].mxu0
    %v5670 = vadd.f32 %v5561, %v5669
    %5671 = vmatprep.mubr.f32.mxu0 0.0
    %v5672 = vand.u32 %v4887, 4294901760
    %5673 = vmatmul.mubr.f32.gmra.mrb[0].mxu0 %v5672
    %v5674 = vpop.f32.mrb[0].mxu0
    %v5675 = vadd.f32 %v5566, %v5674
    %v5676 = vpop.f32.mrb[0].mxu0
    %v5677 = vadd.f32 %v5568, %v5676
    %5678 = vmatprep.mubr.f32.mxu0 0.0
    %v5679 = vand.u32 %v4890, 4294901760
    %5680 = vmatmul.mubr.f32.gmra.mrb[0].mxu0 %v5679
    %v5681 = vpop.f32.mrb[0].mxu0
    %v5682 = vadd.f32 %v5573, %v5681
    %v5683 = vpop.f32.mrb[0].mxu0
    %v5684 = vadd.f32 %v5575, %v5683
    %5685 = vdwg.mxu0
    %v5687 = vsel %vm2369, %v5663, 0
    %v5690 = vsel %vm2369, %v5670, 0
    %v5693 = vsel %vm2369, %v5677, 0
    %v5696 = vsel %vm2369, %v5684, 0
    %5698 = vmatprep.subr.mxu0 0.0
    %v5699 = vand.u32 %v4856, 4294901760
    %5700 = vmatpush1.msra.mxu0 %v5699
    %5701 = vmatprep.subr.mxu0 0.0
    %v5702 = vand.u32 %v4857, 4294901760
    %5703 = vmatpush1.msra.mxu0 %v5702
    %5704 = vmatprep.subr.mxu0 0.0
    %v5705 = vand.u32 %v4858, 4294901760
    %5706 = vmatpush1.msra.mxu0 %v5705
    %5707 = vmatprep.subr.mxu0 0.0
    %v5708 = vand.u32 %v4859, 4294901760
    %5709 = vmatpush1.msra.mxu0 %v5708
    %5710 = vmatprep.subr.mxu0 0.0
    %v5711 = vand.u32 %v4860, 4294901760
    %5712 = vmatpush1.msra.mxu0 %v5711
    %5713 = vmatprep.subr.mxu0 0.0
    %v5714 = vand.u32 %v4861, 4294901760
    %5715 = vmatpush1.msra.mxu0 %v5714
    %5716 = vmatprep.subr.mxu0 0.0
    %v5717 = vand.u32 %v4862, 4294901760
    %5718 = vmatpush1.msra.mxu0 %v5717
    %5719 = vmatprep.subr.mxu0 0.0
    %v5720 = vand.u32 %v4863, 4294901760
    %5721 = vmatpush1.msra.mxu0 %v5720
    %5722 = vmatprep.subr.mxu0 0.0
    %v5723 = vand.u32 %v4864, 4294901760
    %5724 = vmatpush1.msra.mxu0 %v5723
    %5725 = vmatprep.subr.mxu0 0.0
    %v5726 = vand.u32 %v4865, 4294901760
    %5727 = vmatpush1.msra.mxu0 %v5726
    %5728 = vmatprep.subr.mxu0 0.0
    %v5729 = vand.u32 %v4866, 4294901760
    %5730 = vmatpush1.msra.mxu0 %v5729
    %5731 = vmatprep.subr.mxu0 0.0
    %v5732 = vand.u32 %v4867, 4294901760
    %5733 = vmatpush1.msra.mxu0 %v5732
    %5734 = vmatprep.subr.mxu0 0.0
    %v5735 = vand.u32 %v4868, 4294901760
    %5736 = vmatpush1.msra.mxu0 %v5735
    %5737 = vmatprep.subr.mxu0 0.0
    %v5738 = vand.u32 %v4869, 4294901760
    %5739 = vmatpush1.msra.mxu0 %v5738
    %5740 = vmatprep.subr.mxu0 0.0
    %v5741 = vand.u32 %v4870, 4294901760
    %5742 = vmatpush1.msra.mxu0 %v5741
    %5743 = vmatprep.subr.mxu0 0.0
    %v5744 = vand.u32 %v4871, 4294901760
    %5745 = vmatpush1.msra.mxu0 %v5744
    %5746 = vmatprep.subr.mxu0 0.0
    %v5747 = vand.u32 %v4872, 4294901760
    %5748 = vmatpush1.msra.mxu0 %v5747
    %5749 = vmatprep.subr.mxu0 0.0
    %v5750 = vand.u32 %v4873, 4294901760
    %5751 = vmatpush1.msra.mxu0 %v5750
    %5752 = vmatprep.subr.mxu0 0.0
    %v5753 = vand.u32 %v4874, 4294901760
    %5754 = vmatpush1.msra.mxu0 %v5753
    %5755 = vmatprep.subr.mxu0 0.0
    %v5756 = vand.u32 %v4875, 4294901760
    %5757 = vmatpush1.msra.mxu0 %v5756
    %5758 = vmatprep.subr.mxu0 0.0
    %v5759 = vand.u32 %v4876, 4294901760
    %5760 = vmatpush1.msra.mxu0 %v5759
    %5761 = vmatprep.subr.mxu0 0.0
    %v5762 = vand.u32 %v4877, 4294901760
    %5763 = vmatpush1.msra.mxu0 %v5762
    %5764 = vmatprep.subr.mxu0 0.0
    %v5765 = vand.u32 %v4878, 4294901760
    %5766 = vmatpush1.msra.mxu0 %v5765
    %5767 = vmatprep.subr.mxu0 0.0
    %v5768 = vand.u32 %v4879, 4294901760
    %5769 = vmatpush1.msra.mxu0 %v5768
    %5770 = vmatprep.subr.mxu0 0.0
    %5771 = vmatpush1.msra.mxu0 0.0
    %5772 = vmatprep.subr.mxu0 0.0
    %5773 = vmatpush1.msra.mxu0 0.0
    %5774 = vmatprep.subr.mxu0 0.0
    %5775 = vmatpush1.msra.mxu0 0.0
    %5776 = vmatprep.subr.mxu0 0.0
    %5777 = vmatpush1.msra.mxu0 0.0
    %5778 = vmatprep.subr.mxu0 0.0
    %5779 = vmatpush1.msra.mxu0 0.0
    %5780 = vmatprep.subr.mxu0 0.0
    %5781 = vmatpush1.msra.mxu0 0.0
    %5782 = vmatprep.subr.mxu0 0.0
    %5783 = vmatpush1.msra.mxu0 0.0
    %5784 = vmatprep.subr.mxu0 0.0
    %5785 = vmatpush1.msra.mxu0 0.0
    %v5786 = vand.u32 %v5687, 4294901760
    %v5787 = vsub.f32 %v5687, %v5786
    %v5788 = vand.u32 %v5787, 4294901760
    %v5789 = vsub.f32 %v5787, %v5788
    %v5790 = vand.u32 %v5789, 4294901760
    %5791 = vmatprep.mubr.f32.mxu0 %v5790
    %v5792 = vand.u32 %v5661, 4294901760
    %v5793 = vsub.f32 %v5661, %v5792
    %v5794 = vand.u32 %v5793, 4294901760
    %v5795 = vsub.f32 %v5793, %v5794
    %v5796 = vand.u32 %v5795, 4294901760
    %5797 = vmatmul.mubr.f32.gmra.mrb[0].mxu0 %v5796
    %v5798 = vpop.f32.mrb[0].mxu0
    %v5799 = vadd.f32 0.0, %v5798
    %v5800 = vpop.f32.mrb[0].mxu0
    %v5801 = vand.u32 %v5690, 4294901760
    %v5802 = vsub.f32 %v5690, %v5801
    %v5803 = vand.u32 %v5802, 4294901760
    %v5804 = vsub.f32 %v5802, %v5803
    %v5805 = vand.u32 %v5804, 4294901760
    %5806 = vmatprep.mubr.f32.mxu0 %v5805
    %v5807 = vand.u32 %v5668, 4294901760
    %v5808 = vsub.f32 %v5668, %v5807
    %v5809 = vand.u32 %v5808, 4294901760
    %v5810 = vsub.f32 %v5808, %v5809
    %v5811 = vand.u32 %v5810, 4294901760
    %5812 = vmatmul.mubr.f32.gmra.mrb[0].mxu0 %v5811
    %v5813 = vpop.f32.mrb[0].mxu0
    %v5814 = vadd.f32 0.0, %v5813
    %v5815 = vpop.f32.mrb[0].mxu0
    %v5816 = vand.u32 %v5693, 4294901760
    %v5817 = vsub.f32 %v5693, %v5816
    %v5818 = vand.u32 %v5817, 4294901760
    %v5819 = vsub.f32 %v5817, %v5818
    %v5820 = vand.u32 %v5819, 4294901760
    %5821 = vmatprep.mubr.f32.mxu0 %v5820
    %v5822 = vand.u32 %v5675, 4294901760
    %v5823 = vsub.f32 %v5675, %v5822
    %v5824 = vand.u32 %v5823, 4294901760
    %v5825 = vsub.f32 %v5823, %v5824
    %v5826 = vand.u32 %v5825, 4294901760
    %5827 = vmatmul.mubr.f32.gmra.mrb[0].mxu0 %v5826
    %v5828 = vpop.f32.mrb[0].mxu0
    %v5829 = vadd.f32 0.0, %v5828
    %v5830 = vpop.f32.mrb[0].mxu0
    %v5831 = vand.u32 %v5696, 4294901760
    %v5832 = vsub.f32 %v5696, %v5831
    %v5833 = vand.u32 %v5832, 4294901760
    %v5834 = vsub.f32 %v5832, %v5833
    %v5835 = vand.u32 %v5834, 4294901760
    %5836 = vmatprep.mubr.f32.mxu0 %v5835
    %v5837 = vand.u32 %v5682, 4294901760
    %v5838 = vsub.f32 %v5682, %v5837
    %v5839 = vand.u32 %v5838, 4294901760
    %v5840 = vsub.f32 %v5838, %v5839
    %v5841 = vand.u32 %v5840, 4294901760
    %5842 = vmatmul.mubr.f32.gmra.mrb[0].mxu0 %v5841
    %v5843 = vpop.f32.mrb[0].mxu0
    %v5844 = vadd.f32 0.0, %v5843
    %v5845 = vpop.f32.mrb[0].mxu0
    %5846 = vdwg.mxu0
    %5847 = vmatprep.subr.mxu0 0.0
    %v5848 = vand.u32 %v4856, 4294901760
    %v5849 = vsub.f32 %v4856, %v5848
    %v5850 = vand.u32 %v5849, 4294901760
    %v5851 = vsub.f32 %v5849, %v5850
    %v5852 = vand.u32 %v5851, 4294901760
    %5853 = vmatpush1.msra.mxu0 %v5852
    %5854 = vmatprep.subr.mxu0 0.0
    %v5855 = vand.u32 %v4857, 4294901760
    %v5856 = vsub.f32 %v4857, %v5855
    %v5857 = vand.u32 %v5856, 4294901760
    %v5858 = vsub.f32 %v5856, %v5857
    %v5859 = vand.u32 %v5858, 4294901760
    %5860 = vmatpush1.msra.mxu0 %v5859
    %5861 = vmatprep.subr.mxu0 0.0
    %v5862 = vand.u32 %v4858, 4294901760
    %v5863 = vsub.f32 %v4858, %v5862
    %v5864 = vand.u32 %v5863, 4294901760
    %v5865 = vsub.f32 %v5863, %v5864
    %v5866 = vand.u32 %v5865, 4294901760
    %5867 = vmatpush1.msra.mxu0 %v5866
    %5868 = vmatprep.subr.mxu0 0.0
    %v5869 = vand.u32 %v4859, 4294901760
    %v5870 = vsub.f32 %v4859, %v5869
    %v5871 = vand.u32 %v5870, 4294901760
    %v5872 = vsub.f32 %v5870, %v5871
    %v5873 = vand.u32 %v5872, 4294901760
    %5874 = vmatpush1.msra.mxu0 %v5873
    %5875 = vmatprep.subr.mxu0 0.0
    %v5876 = vand.u32 %v4860, 4294901760
    %v5877 = vsub.f32 %v4860, %v5876
    %v5878 = vand.u32 %v5877, 4294901760
    %v5879 = vsub.f32 %v5877, %v5878
    %v5880 = vand.u32 %v5879, 4294901760
    %5881 = vmatpush1.msra.mxu0 %v5880
    %5882 = vmatprep.subr.mxu0 0.0
    %v5883 = vand.u32 %v4861, 4294901760
    %v5884 = vsub.f32 %v4861, %v5883
    %v5885 = vand.u32 %v5884, 4294901760
    %v5886 = vsub.f32 %v5884, %v5885
    %v5887 = vand.u32 %v5886, 4294901760
    %5888 = vmatpush1.msra.mxu0 %v5887
    %5889 = vmatprep.subr.mxu0 0.0
    %v5890 = vand.u32 %v4862, 4294901760
    %v5891 = vsub.f32 %v4862, %v5890
    %v5892 = vand.u32 %v5891, 4294901760
    %v5893 = vsub.f32 %v5891, %v5892
    %v5894 = vand.u32 %v5893, 4294901760
    %5895 = vmatpush1.msra.mxu0 %v5894
    %5896 = vmatprep.subr.mxu0 0.0
    %v5897 = vand.u32 %v4863, 4294901760
    %v5898 = vsub.f32 %v4863, %v5897
    %v5899 = vand.u32 %v5898, 4294901760
    %v5900 = vsub.f32 %v5898, %v5899
    %v5901 = vand.u32 %v5900, 4294901760
    %5902 = vmatpush1.msra.mxu0 %v5901
    %5903 = vmatprep.subr.mxu0 0.0
    %v5904 = vand.u32 %v4864, 4294901760
    %v5905 = vsub.f32 %v4864, %v5904
    %v5906 = vand.u32 %v5905, 4294901760
    %v5907 = vsub.f32 %v5905, %v5906
    %v5908 = vand.u32 %v5907, 4294901760
    %5909 = vmatpush1.msra.mxu0 %v5908
    %5910 = vmatprep.subr.mxu0 0.0
    %v5911 = vand.u32 %v4865, 4294901760
    %v5912 = vsub.f32 %v4865, %v5911
    %v5913 = vand.u32 %v5912, 4294901760
    %v5914 = vsub.f32 %v5912, %v5913
    %v5915 = vand.u32 %v5914, 4294901760
    %5916 = vmatpush1.msra.mxu0 %v5915
    %5917 = vmatprep.subr.mxu0 0.0
    %v5918 = vand.u32 %v4866, 4294901760
    %v5919 = vsub.f32 %v4866, %v5918
    %v5920 = vand.u32 %v5919, 4294901760
    %v5921 = vsub.f32 %v5919, %v5920
    %v5922 = vand.u32 %v5921, 4294901760
    %5923 = vmatpush1.msra.mxu0 %v5922
    %5924 = vmatprep.subr.mxu0 0.0
    %v5925 = vand.u32 %v4867, 4294901760
    %v5926 = vsub.f32 %v4867, %v5925
    %v5927 = vand.u32 %v5926, 4294901760
    %v5928 = vsub.f32 %v5926, %v5927
    %v5929 = vand.u32 %v5928, 4294901760
    %5930 = vmatpush1.msra.mxu0 %v5929
    %5931 = vmatprep.subr.mxu0 0.0
    %v5932 = vand.u32 %v4868, 4294901760
    %v5933 = vsub.f32 %v4868, %v5932
    %v5934 = vand.u32 %v5933, 4294901760
    %v5935 = vsub.f32 %v5933, %v5934
    %v5936 = vand.u32 %v5935, 4294901760
    %5937 = vmatpush1.msra.mxu0 %v5936
    %5938 = vmatprep.subr.mxu0 0.0
    %v5939 = vand.u32 %v4869, 4294901760
    %v5940 = vsub.f32 %v4869, %v5939
    %v5941 = vand.u32 %v5940, 4294901760
    %v5942 = vsub.f32 %v5940, %v5941
    %v5943 = vand.u32 %v5942, 4294901760
    %5944 = vmatpush1.msra.mxu0 %v5943
    %5945 = vmatprep.subr.mxu0 0.0
    %v5946 = vand.u32 %v4870, 4294901760
    %v5947 = vsub.f32 %v4870, %v5946
    %v5948 = vand.u32 %v5947, 4294901760
    %v5949 = vsub.f32 %v5947, %v5948
    %v5950 = vand.u32 %v5949, 4294901760
    %5951 = vmatpush1.msra.mxu0 %v5950
    %5952 = vmatprep.subr.mxu0 0.0
    %v5953 = vand.u32 %v4871, 4294901760
    %v5954 = vsub.f32 %v4871, %v5953
    %v5955 = vand.u32 %v5954, 4294901760
    %v5956 = vsub.f32 %v5954, %v5955
    %v5957 = vand.u32 %v5956, 4294901760
    %5958 = vmatpush1.msra.mxu0 %v5957
    %5959 = vmatprep.subr.mxu0 0.0
    %v5960 = vand.u32 %v4872, 4294901760
    %v5961 = vsub.f32 %v4872, %v5960
    %v5962 = vand.u32 %v5961, 4294901760
    %v5963 = vsub.f32 %v5961, %v5962
    %v5964 = vand.u32 %v5963, 4294901760
    %5965 = vmatpush1.msra.mxu0 %v5964
    %5966 = vmatprep.subr.mxu0 0.0
    %v5967 = vand.u32 %v4873, 4294901760
    %v5968 = vsub.f32 %v4873, %v5967
    %v5969 = vand.u32 %v5968, 4294901760
    %v5970 = vsub.f32 %v5968, %v5969
    %v5971 = vand.u32 %v5970, 4294901760
    %5972 = vmatpush1.msra.mxu0 %v5971
    %5973 = vmatprep.subr.mxu0 0.0
    %v5974 = vand.u32 %v4874, 4294901760
    %v5975 = vsub.f32 %v4874, %v5974
    %v5976 = vand.u32 %v5975, 4294901760
    %v5977 = vsub.f32 %v5975, %v5976
    %v5978 = vand.u32 %v5977, 4294901760
    %5979 = vmatpush1.msra.mxu0 %v5978
    %5980 = vmatprep.subr.mxu0 0.0
    %v5981 = vand.u32 %v4875, 4294901760
    %v5982 = vsub.f32 %v4875, %v5981
    %v5983 = vand.u32 %v5982, 4294901760
    %v5984 = vsub.f32 %v5982, %v5983
    %v5985 = vand.u32 %v5984, 4294901760
    %5986 = vmatpush1.msra.mxu0 %v5985
    %5987 = vmatprep.subr.mxu0 0.0
    %v5988 = vand.u32 %v4876, 4294901760
    %v5989 = vsub.f32 %v4876, %v5988
    %v5990 = vand.u32 %v5989, 4294901760
    %v5991 = vsub.f32 %v5989, %v5990
    %v5992 = vand.u32 %v5991, 4294901760
    %5993 = vmatpush1.msra.mxu0 %v5992
    %5994 = vmatprep.subr.mxu0 0.0
    %v5995 = vand.u32 %v4877, 4294901760
    %v5996 = vsub.f32 %v4877, %v5995
    %v5997 = vand.u32 %v5996, 4294901760
    %v5998 = vsub.f32 %v5996, %v5997
    %v5999 = vand.u32 %v5998, 4294901760
    %6000 = vmatpush1.msra.mxu0 %v5999
    %6001 = vmatprep.subr.mxu0 0.0
    %v6002 = vand.u32 %v4878, 4294901760
    %v6003 = vsub.f32 %v4878, %v6002
    %v6004 = vand.u32 %v6003, 4294901760
    %v6005 = vsub.f32 %v6003, %v6004
    %v6006 = vand.u32 %v6005, 4294901760
    %6007 = vmatpush1.msra.mxu0 %v6006
    %6008 = vmatprep.subr.mxu0 0.0
    %v6009 = vand.u32 %v4879, 4294901760
    %v6010 = vsub.f32 %v4879, %v6009
    %v6011 = vand.u32 %v6010, 4294901760
    %v6012 = vsub.f32 %v6010, %v6011
    %v6013 = vand.u32 %v6012, 4294901760
    %6014 = vmatpush1.msra.mxu0 %v6013
    %6015 = vmatprep.subr.mxu0 0.0
    %6016 = vmatpush1.msra.mxu0 0.0
    %6017 = vmatprep.subr.mxu0 0.0
    %6018 = vmatpush1.msra.mxu0 0.0
    %6019 = vmatprep.subr.mxu0 0.0
    %6020 = vmatpush1.msra.mxu0 0.0
    %6021 = vmatprep.subr.mxu0 0.0
    %6022 = vmatpush1.msra.mxu0 0.0
    %6023 = vmatprep.subr.mxu0 0.0
    %6024 = vmatpush1.msra.mxu0 0.0
    %6025 = vmatprep.subr.mxu0 0.0
    %6026 = vmatpush1.msra.mxu0 0.0
    %6027 = vmatprep.subr.mxu0 0.0
    %6028 = vmatpush1.msra.mxu0 0.0
    %6029 = vmatprep.subr.mxu0 0.0
    %6030 = vmatpush1.msra.mxu0 0.0
    %v6031 = vand.u32 %v5687, 4294901760
    %6032 = vmatprep.mubr.f32.mxu0 %v6031
    %v6033 = vand.u32 %v5661, 4294901760
    %6034 = vmatmul.mubr.f32.gmra.mrb[0].mxu0 %v6033
    %v6035 = vpop.f32.mrb[0].mxu0
    %v6036 = vadd.f32 %v5799, %v6035
    %v6037 = vpop.f32.mrb[0].mxu0
    %v6038 = vand.u32 %v5690, 4294901760
    %6039 = vmatprep.mubr.f32.mxu0 %v6038
    %v6040 = vand.u32 %v5668, 4294901760
    %6041 = vmatmul.mubr.f32.gmra.mrb[0].mxu0 %v6040
    %v6042 = vpop.f32.mrb[0].mxu0
    %v6043 = vadd.f32 %v5814, %v6042
    %v6044 = vpop.f32.mrb[0].mxu0
    %v6045 = vand.u32 %v5693, 4294901760
    %6046 = vmatprep.mubr.f32.mxu0 %v6045
    %v6047 = vand.u32 %v5675, 4294901760
    %6048 = vmatmul.mubr.f32.gmra.mrb[0].mxu0 %v6047
    %v6049 = vpop.f32.mrb[0].mxu0
    %v6050 = vadd.f32 %v5829, %v6049
    %v6051 = vpop.f32.mrb[0].mxu0
    %v6052 = vand.u32 %v5696, 4294901760
    %6053 = vmatprep.mubr.f32.mxu0 %v6052
    %v6054 = vand.u32 %v5682, 4294901760
    %6055 = vmatmul.mubr.f32.gmra.mrb[0].mxu0 %v6054
    %v6056 = vpop.f32.mrb[0].mxu0
    %v6057 = vadd.f32 %v5844, %v6056
    %v6058 = vpop.f32.mrb[0].mxu0
    %6059 = vdwg.mxu0
    %6060 = vmatprep.subr.mxu0 0.0
    %v6061 = vand.u32 %v4856, 4294901760
    %v6062 = vsub.f32 %v4856, %v6061
    %6063 = vmatpush1.msra.mxu0 %v6062
    %6064 = vmatprep.subr.mxu0 0.0
    %v6065 = vand.u32 %v4857, 4294901760
    %v6066 = vsub.f32 %v4857, %v6065
    %6067 = vmatpush1.msra.mxu0 %v6066
    %6068 = vmatprep.subr.mxu0 0.0
    %v6069 = vand.u32 %v4858, 4294901760
    %v6070 = vsub.f32 %v4858, %v6069
    %6071 = vmatpush1.msra.mxu0 %v6070
    %6072 = vmatprep.subr.mxu0 0.0
    %v6073 = vand.u32 %v4859, 4294901760
    %v6074 = vsub.f32 %v4859, %v6073
    %6075 = vmatpush1.msra.mxu0 %v6074
    %6076 = vmatprep.subr.mxu0 0.0
    %v6077 = vand.u32 %v4860, 4294901760
    %v6078 = vsub.f32 %v4860, %v6077
    %6079 = vmatpush1.msra.mxu0 %v6078
    %6080 = vmatprep.subr.mxu0 0.0
    %v6081 = vand.u32 %v4861, 4294901760
    %v6082 = vsub.f32 %v4861, %v6081
    %6083 = vmatpush1.msra.mxu0 %v6082
    %6084 = vmatprep.subr.mxu0 0.0
    %v6085 = vand.u32 %v4862, 4294901760
    %v6086 = vsub.f32 %v4862, %v6085
    %6087 = vmatpush1.msra.mxu0 %v6086
    %6088 = vmatprep.subr.mxu0 0.0
    %v6089 = vand.u32 %v4863, 4294901760
    %v6090 = vsub.f32 %v4863, %v6089
    %6091 = vmatpush1.msra.mxu0 %v6090
    %6092 = vmatprep.subr.mxu0 0.0
    %v6093 = vand.u32 %v4864, 4294901760
    %v6094 = vsub.f32 %v4864, %v6093
    %6095 = vmatpush1.msra.mxu0 %v6094
    %6096 = vmatprep.subr.mxu0 0.0
    %v6097 = vand.u32 %v4865, 4294901760
    %v6098 = vsub.f32 %v4865, %v6097
    %6099 = vmatpush1.msra.mxu0 %v6098
    %6100 = vmatprep.subr.mxu0 0.0
    %v6101 = vand.u32 %v4866, 4294901760
    %v6102 = vsub.f32 %v4866, %v6101
    %6103 = vmatpush1.msra.mxu0 %v6102
    %6104 = vmatprep.subr.mxu0 0.0
    %v6105 = vand.u32 %v4867, 4294901760
    %v6106 = vsub.f32 %v4867, %v6105
    %6107 = vmatpush1.msra.mxu0 %v6106
    %6108 = vmatprep.subr.mxu0 0.0
    %v6109 = vand.u32 %v4868, 4294901760
    %v6110 = vsub.f32 %v4868, %v6109
    %6111 = vmatpush1.msra.mxu0 %v6110
    %6112 = vmatprep.subr.mxu0 0.0
    %v6113 = vand.u32 %v4869, 4294901760
    %v6114 = vsub.f32 %v4869, %v6113
    %6115 = vmatpush1.msra.mxu0 %v6114
    %6116 = vmatprep.subr.mxu0 0.0
    %v6117 = vand.u32 %v4870, 4294901760
    %v6118 = vsub.f32 %v4870, %v6117
    %6119 = vmatpush1.msra.mxu0 %v6118
    %6120 = vmatprep.subr.mxu0 0.0
    %v6121 = vand.u32 %v4871, 4294901760
    %v6122 = vsub.f32 %v4871, %v6121
    %6123 = vmatpush1.msra.mxu0 %v6122
    %6124 = vmatprep.subr.mxu0 0.0
    %v6125 = vand.u32 %v4872, 4294901760
    %v6126 = vsub.f32 %v4872, %v6125
    %6127 = vmatpush1.msra.mxu0 %v6126
    %6128 = vmatprep.subr.mxu0 0.0
    %v6129 = vand.u32 %v4873, 4294901760
    %v6130 = vsub.f32 %v4873, %v6129
    %6131 = vmatpush1.msra.mxu0 %v6130
    %6132 = vmatprep.subr.mxu0 0.0
    %v6133 = vand.u32 %v4874, 4294901760
    %v6134 = vsub.f32 %v4874, %v6133
    %6135 = vmatpush1.msra.mxu0 %v6134
    %6136 = vmatprep.subr.mxu0 0.0
    %v6137 = vand.u32 %v4875, 4294901760
    %v6138 = vsub.f32 %v4875, %v6137
    %6139 = vmatpush1.msra.mxu0 %v6138
    %6140 = vmatprep.subr.mxu0 0.0
    %v6141 = vand.u32 %v4876, 4294901760
    %v6142 = vsub.f32 %v4876, %v6141
    %6143 = vmatpush1.msra.mxu0 %v6142
    %6144 = vmatprep.subr.mxu0 0.0
    %v6145 = vand.u32 %v4877, 4294901760
    %v6146 = vsub.f32 %v4877, %v6145
    %6147 = vmatpush1.msra.mxu0 %v6146
    %6148 = vmatprep.subr.mxu0 0.0
    %v6149 = vand.u32 %v4878, 4294901760
    %v6150 = vsub.f32 %v4878, %v6149
    %6151 = vmatpush1.msra.mxu0 %v6150
    %6152 = vmatprep.subr.mxu0 0.0
    %v6153 = vand.u32 %v4879, 4294901760
    %v6154 = vsub.f32 %v4879, %v6153
    %6155 = vmatpush1.msra.mxu0 %v6154
    %6156 = vmatprep.subr.mxu0 0.0
    %6157 = vmatpush1.msra.mxu0 0.0
    %6158 = vmatprep.subr.mxu0 0.0
    %6159 = vmatpush1.msra.mxu0 0.0
    %6160 = vmatprep.subr.mxu0 0.0
    %6161 = vmatpush1.msra.mxu0 0.0
    %6162 = vmatprep.subr.mxu0 0.0
    %6163 = vmatpush1.msra.mxu0 0.0
    %6164 = vmatprep.subr.mxu0 0.0
    %6165 = vmatpush1.msra.mxu0 0.0
    %6166 = vmatprep.subr.mxu0 0.0
    %6167 = vmatpush1.msra.mxu0 0.0
    %6168 = vmatprep.subr.mxu0 0.0
    %6169 = vmatpush1.msra.mxu0 0.0
    %6170 = vmatprep.subr.mxu0 0.0
    %6171 = vmatpush1.msra.mxu0 0.0
    %v6172 = vand.u32 %v5687, 4294901760
    %v6173 = vsub.f32 %v5687, %v6172
    %6174 = vmatprep.mubr.f32.mxu0 %v6173
    %v6175 = vand.u32 %v5661, 4294901760
    %v6176 = vsub.f32 %v5661, %v6175
    %6177 = vmatmul.mubr.f32.gmra.mrb[0].mxu0 %v6176
    %v6178 = vpop.f32.mrb[0].mxu0
    %v6179 = vadd.f32 %v6036, %v6178
    %v6180 = vpop.f32.mrb[0].mxu0
    %v6181 = vand.u32 %v5690, 4294901760
    %v6182 = vsub.f32 %v5690, %v6181
    %6183 = vmatprep.mubr.f32.mxu0 %v6182
    %v6184 = vand.u32 %v5668, 4294901760
    %v6185 = vsub.f32 %v5668, %v6184
    %6186 = vmatmul.mubr.f32.gmra.mrb[0].mxu0 %v6185
    %v6187 = vpop.f32.mrb[0].mxu0
    %v6188 = vadd.f32 %v6043, %v6187
    %v6189 = vpop.f32.mrb[0].mxu0
    %v6190 = vand.u32 %v5693, 4294901760
    %v6191 = vsub.f32 %v5693, %v6190
    %6192 = vmatprep.mubr.f32.mxu0 %v6191
    %v6193 = vand.u32 %v5675, 4294901760
    %v6194 = vsub.f32 %v5675, %v6193
    %6195 = vmatmul.mubr.f32.gmra.mrb[0].mxu0 %v6194
    %v6196 = vpop.f32.mrb[0].mxu0
    %v6197 = vadd.f32 %v6050, %v6196
    %v6198 = vpop.f32.mrb[0].mxu0
    %v6199 = vand.u32 %v5696, 4294901760
    %v6200 = vsub.f32 %v5696, %v6199
    %6201 = vmatprep.mubr.f32.mxu0 %v6200
    %v6202 = vand.u32 %v5682, 4294901760
    %v6203 = vsub.f32 %v5682, %v6202
    %6204 = vmatmul.mubr.f32.gmra.mrb[0].mxu0 %v6203
    %v6205 = vpop.f32.mrb[0].mxu0
    %v6206 = vadd.f32 %v6057, %v6205
    %v6207 = vpop.f32.mrb[0].mxu0
    %6208 = vdwg.mxu0
    %6209 = vmatprep.subr.mxu0 0.0
    %v6210 = vand.u32 %v4856, 4294901760
    %6211 = vmatpush1.msra.mxu0 %v6210
    %6212 = vmatprep.subr.mxu0 0.0
    %v6213 = vand.u32 %v4857, 4294901760
    %6214 = vmatpush1.msra.mxu0 %v6213
    %6215 = vmatprep.subr.mxu0 0.0
    %v6216 = vand.u32 %v4858, 4294901760
    %6217 = vmatpush1.msra.mxu0 %v6216
    %6218 = vmatprep.subr.mxu0 0.0
    %v6219 = vand.u32 %v4859, 4294901760
    %6220 = vmatpush1.msra.mxu0 %v6219
    %6221 = vmatprep.subr.mxu0 0.0
    %v6222 = vand.u32 %v4860, 4294901760
    %6223 = vmatpush1.msra.mxu0 %v6222
    %6224 = vmatprep.subr.mxu0 0.0
    %v6225 = vand.u32 %v4861, 4294901760
    %6226 = vmatpush1.msra.mxu0 %v6225
    %6227 = vmatprep.subr.mxu0 0.0
    %v6228 = vand.u32 %v4862, 4294901760
    %6229 = vmatpush1.msra.mxu0 %v6228
    %6230 = vmatprep.subr.mxu0 0.0
    %v6231 = vand.u32 %v4863, 4294901760
    %6232 = vmatpush1.msra.mxu0 %v6231
    %6233 = vmatprep.subr.mxu0 0.0
    %v6234 = vand.u32 %v4864, 4294901760
    %6235 = vmatpush1.msra.mxu0 %v6234
    %6236 = vmatprep.subr.mxu0 0.0
    %v6237 = vand.u32 %v4865, 4294901760
    %6238 = vmatpush1.msra.mxu0 %v6237
    %6239 = vmatprep.subr.mxu0 0.0
    %v6240 = vand.u32 %v4866, 4294901760
    %6241 = vmatpush1.msra.mxu0 %v6240
    %6242 = vmatprep.subr.mxu0 0.0
    %v6243 = vand.u32 %v4867, 4294901760
    %6244 = vmatpush1.msra.mxu0 %v6243
    %6245 = vmatprep.subr.mxu0 0.0
    %v6246 = vand.u32 %v4868, 4294901760
    %6247 = vmatpush1.msra.mxu0 %v6246
    %6248 = vmatprep.subr.mxu0 0.0
    %v6249 = vand.u32 %v4869, 4294901760
    %6250 = vmatpush1.msra.mxu0 %v6249
    %6251 = vmatprep.subr.mxu0 0.0
    %v6252 = vand.u32 %v4870, 4294901760
    %6253 = vmatpush1.msra.mxu0 %v6252
    %6254 = vmatprep.subr.mxu0 0.0
    %v6255 = vand.u32 %v4871, 4294901760
    %6256 = vmatpush1.msra.mxu0 %v6255
    %6257 = vmatprep.subr.mxu0 0.0
    %v6258 = vand.u32 %v4872, 4294901760
    %6259 = vmatpush1.msra.mxu0 %v6258
    %6260 = vmatprep.subr.mxu0 0.0
    %v6261 = vand.u32 %v4873, 4294901760
    %6262 = vmatpush1.msra.mxu0 %v6261
    %6263 = vmatprep.subr.mxu0 0.0
    %v6264 = vand.u32 %v4874, 4294901760
    %6265 = vmatpush1.msra.mxu0 %v6264
    %6266 = vmatprep.subr.mxu0 0.0
    %v6267 = vand.u32 %v4875, 4294901760
    %6268 = vmatpush1.msra.mxu0 %v6267
    %6269 = vmatprep.subr.mxu0 0.0
    %v6270 = vand.u32 %v4876, 4294901760
    %6271 = vmatpush1.msra.mxu0 %v6270
    %6272 = vmatprep.subr.mxu0 0.0
    %v6273 = vand.u32 %v4877, 4294901760
    %6274 = vmatpush1.msra.mxu0 %v6273
    %6275 = vmatprep.subr.mxu0 0.0
    %v6276 = vand.u32 %v4878, 4294901760
    %6277 = vmatpush1.msra.mxu0 %v6276
    %6278 = vmatprep.subr.mxu0 0.0
    %v6279 = vand.u32 %v4879, 4294901760
    %6280 = vmatpush1.msra.mxu0 %v6279
    %6281 = vmatprep.subr.mxu0 0.0
    %6282 = vmatpush1.msra.mxu0 0.0
    %6283 = vmatprep.subr.mxu0 0.0
    %6284 = vmatpush1.msra.mxu0 0.0
    %6285 = vmatprep.subr.mxu0 0.0
    %6286 = vmatpush1.msra.mxu0 0.0
    %6287 = vmatprep.subr.mxu0 0.0
    %6288 = vmatpush1.msra.mxu0 0.0
    %6289 = vmatprep.subr.mxu0 0.0
    %6290 = vmatpush1.msra.mxu0 0.0
    %6291 = vmatprep.subr.mxu0 0.0
    %6292 = vmatpush1.msra.mxu0 0.0
    %6293 = vmatprep.subr.mxu0 0.0
    %6294 = vmatpush1.msra.mxu0 0.0
    %6295 = vmatprep.subr.mxu0 0.0
    %6296 = vmatpush1.msra.mxu0 0.0
    %v6297 = vand.u32 %v5687, 4294901760
    %v6298 = vsub.f32 %v5687, %v6297
    %v6299 = vand.u32 %v6298, 4294901760
    %6300 = vmatprep.mubr.f32.mxu0 %v6299
    %v6301 = vand.u32 %v5661, 4294901760
    %v6302 = vsub.f32 %v5661, %v6301
    %v6303 = vand.u32 %v6302, 4294901760
    %6304 = vmatmul.mubr.f32.gmra.mrb[0].mxu0 %v6303
    %v6305 = vpop.f32.mrb[0].mxu0
    %v6306 = vadd.f32 %v6179, %v6305
    %v6307 = vpop.f32.mrb[0].mxu0
    %v6308 = vand.u32 %v5690, 4294901760
    %v6309 = vsub.f32 %v5690, %v6308
    %v6310 = vand.u32 %v6309, 4294901760
    %6311 = vmatprep.mubr.f32.mxu0 %v6310
    %v6312 = vand.u32 %v5668, 4294901760
    %v6313 = vsub.f32 %v5668, %v6312
    %v6314 = vand.u32 %v6313, 4294901760
    %6315 = vmatmul.mubr.f32.gmra.mrb[0].mxu0 %v6314
    %v6316 = vpop.f32.mrb[0].mxu0
    %v6317 = vadd.f32 %v6188, %v6316
    %v6318 = vpop.f32.mrb[0].mxu0
    %v6319 = vand.u32 %v5693, 4294901760
    %v6320 = vsub.f32 %v5693, %v6319
    %v6321 = vand.u32 %v6320, 4294901760
    %6322 = vmatprep.mubr.f32.mxu0 %v6321
    %v6323 = vand.u32 %v5675, 4294901760
    %v6324 = vsub.f32 %v5675, %v6323
    %v6325 = vand.u32 %v6324, 4294901760
    %6326 = vmatmul.mubr.f32.gmra.mrb[0].mxu0 %v6325
    %v6327 = vpop.f32.mrb[0].mxu0
    %v6328 = vadd.f32 %v6197, %v6327
    %v6329 = vpop.f32.mrb[0].mxu0
    %v6330 = vand.u32 %v5696, 4294901760
    %v6331 = vsub.f32 %v5696, %v6330
    %v6332 = vand.u32 %v6331, 4294901760
    %6333 = vmatprep.mubr.f32.mxu0 %v6332
    %v6334 = vand.u32 %v5682, 4294901760
    %v6335 = vsub.f32 %v5682, %v6334
    %v6336 = vand.u32 %v6335, 4294901760
    %6337 = vmatmul.mubr.f32.gmra.mrb[0].mxu0 %v6336
    %v6338 = vpop.f32.mrb[0].mxu0
    %v6339 = vadd.f32 %v6206, %v6338
    %v6340 = vpop.f32.mrb[0].mxu0
    %6341 = vdwg.mxu0
    %6342 = vmatprep.subr.mxu0 0.0
    %v6343 = vand.u32 %v4856, 4294901760
    %v6344 = vsub.f32 %v4856, %v6343
    %v6345 = vand.u32 %v6344, 4294901760
    %6346 = vmatpush1.msra.mxu0 %v6345
    %6347 = vmatprep.subr.mxu0 0.0
    %v6348 = vand.u32 %v4857, 4294901760
    %v6349 = vsub.f32 %v4857, %v6348
    %v6350 = vand.u32 %v6349, 4294901760
    %6351 = vmatpush1.msra.mxu0 %v6350
    %6352 = vmatprep.subr.mxu0 0.0
    %v6353 = vand.u32 %v4858, 4294901760
    %v6354 = vsub.f32 %v4858, %v6353
    %v6355 = vand.u32 %v6354, 4294901760
    %6356 = vmatpush1.msra.mxu0 %v6355
    %6357 = vmatprep.subr.mxu0 0.0
    %v6358 = vand.u32 %v4859, 4294901760
    %v6359 = vsub.f32 %v4859, %v6358
    %v6360 = vand.u32 %v6359, 4294901760
    %6361 = vmatpush1.msra.mxu0 %v6360
    %6362 = vmatprep.subr.mxu0 0.0
    %v6363 = vand.u32 %v4860, 4294901760
    %v6364 = vsub.f32 %v4860, %v6363
    %v6365 = vand.u32 %v6364, 4294901760
    %6366 = vmatpush1.msra.mxu0 %v6365
    %6367 = vmatprep.subr.mxu0 0.0
    %v6368 = vand.u32 %v4861, 4294901760
    %v6369 = vsub.f32 %v4861, %v6368
    %v6370 = vand.u32 %v6369, 4294901760
    %6371 = vmatpush1.msra.mxu0 %v6370
    %6372 = vmatprep.subr.mxu0 0.0
    %v6373 = vand.u32 %v4862, 4294901760
    %v6374 = vsub.f32 %v4862, %v6373
    %v6375 = vand.u32 %v6374, 4294901760
    %6376 = vmatpush1.msra.mxu0 %v6375
    %6377 = vmatprep.subr.mxu0 0.0
    %v6378 = vand.u32 %v4863, 4294901760
    %v6379 = vsub.f32 %v4863, %v6378
    %v6380 = vand.u32 %v6379, 4294901760
    %6381 = vmatpush1.msra.mxu0 %v6380
    %6382 = vmatprep.subr.mxu0 0.0
    %v6383 = vand.u32 %v4864, 4294901760
    %v6384 = vsub.f32 %v4864, %v6383
    %v6385 = vand.u32 %v6384, 4294901760
    %6386 = vmatpush1.msra.mxu0 %v6385
    %6387 = vmatprep.subr.mxu0 0.0
    %v6388 = vand.u32 %v4865, 4294901760
    %v6389 = vsub.f32 %v4865, %v6388
    %v6390 = vand.u32 %v6389, 4294901760
    %6391 = vmatpush1.msra.mxu0 %v6390
    %6392 = vmatprep.subr.mxu0 0.0
    %v6393 = vand.u32 %v4866, 4294901760
    %v6394 = vsub.f32 %v4866, %v6393
    %v6395 = vand.u32 %v6394, 4294901760
    %6396 = vmatpush1.msra.mxu0 %v6395
    %6397 = vmatprep.subr.mxu0 0.0
    %v6398 = vand.u32 %v4867, 4294901760
    %v6399 = vsub.f32 %v4867, %v6398
    %v6400 = vand.u32 %v6399, 4294901760
    %6401 = vmatpush1.msra.mxu0 %v6400
    %6402 = vmatprep.subr.mxu0 0.0
    %v6403 = vand.u32 %v4868, 4294901760
    %v6404 = vsub.f32 %v4868, %v6403
    %v6405 = vand.u32 %v6404, 4294901760
    %6406 = vmatpush1.msra.mxu0 %v6405
    %6407 = vmatprep.subr.mxu0 0.0
    %v6408 = vand.u32 %v4869, 4294901760
    %v6409 = vsub.f32 %v4869, %v6408
    %v6410 = vand.u32 %v6409, 4294901760
    %6411 = vmatpush1.msra.mxu0 %v6410
    %6412 = vmatprep.subr.mxu0 0.0
    %v6413 = vand.u32 %v4870, 4294901760
    %v6414 = vsub.f32 %v4870, %v6413
    %v6415 = vand.u32 %v6414, 4294901760
    %6416 = vmatpush1.msra.mxu0 %v6415
    %6417 = vmatprep.subr.mxu0 0.0
    %v6418 = vand.u32 %v4871, 4294901760
    %v6419 = vsub.f32 %v4871, %v6418
    %v6420 = vand.u32 %v6419, 4294901760
    %6421 = vmatpush1.msra.mxu0 %v6420
    %6422 = vmatprep.subr.mxu0 0.0
    %v6423 = vand.u32 %v4872, 4294901760
    %v6424 = vsub.f32 %v4872, %v6423
    %v6425 = vand.u32 %v6424, 4294901760
    %6426 = vmatpush1.msra.mxu0 %v6425
    %6427 = vmatprep.subr.mxu0 0.0
    %v6428 = vand.u32 %v4873, 4294901760
    %v6429 = vsub.f32 %v4873, %v6428
    %v6430 = vand.u32 %v6429, 4294901760
    %6431 = vmatpush1.msra.mxu0 %v6430
    %6432 = vmatprep.subr.mxu0 0.0
    %v6433 = vand.u32 %v4874, 4294901760
    %v6434 = vsub.f32 %v4874, %v6433
    %v6435 = vand.u32 %v6434, 4294901760
    %6436 = vmatpush1.msra.mxu0 %v6435
    %6437 = vmatprep.subr.mxu0 0.0
    %v6438 = vand.u32 %v4875, 4294901760
    %v6439 = vsub.f32 %v4875, %v6438
    %v6440 = vand.u32 %v6439, 4294901760
    %6441 = vmatpush1.msra.mxu0 %v6440
    %6442 = vmatprep.subr.mxu0 0.0
    %v6443 = vand.u32 %v4876, 4294901760
    %v6444 = vsub.f32 %v4876, %v6443
    %v6445 = vand.u32 %v6444, 4294901760
    %6446 = vmatpush1.msra.mxu0 %v6445
    %6447 = vmatprep.subr.mxu0 0.0
    %v6448 = vand.u32 %v4877, 4294901760
    %v6449 = vsub.f32 %v4877, %v6448
    %v6450 = vand.u32 %v6449, 4294901760
    %6451 = vmatpush1.msra.mxu0 %v6450
    %6452 = vmatprep.subr.mxu0 0.0
    %v6453 = vand.u32 %v4878, 4294901760
    %v6454 = vsub.f32 %v4878, %v6453
    %v6455 = vand.u32 %v6454, 4294901760
    %6456 = vmatpush1.msra.mxu0 %v6455
    %6457 = vmatprep.subr.mxu0 0.0
    %v6458 = vand.u32 %v4879, 4294901760
    %v6459 = vsub.f32 %v4879, %v6458
    %v6460 = vand.u32 %v6459, 4294901760
    %6461 = vmatpush1.msra.mxu0 %v6460
    %6462 = vmatprep.subr.mxu0 0.0
    %6463 = vmatpush1.msra.mxu0 0.0
    %6464 = vmatprep.subr.mxu0 0.0
    %6465 = vmatpush1.msra.mxu0 0.0
    %6466 = vmatprep.subr.mxu0 0.0
    %6467 = vmatpush1.msra.mxu0 0.0
    %6468 = vmatprep.subr.mxu0 0.0
    %6469 = vmatpush1.msra.mxu0 0.0
    %6470 = vmatprep.subr.mxu0 0.0
    %6471 = vmatpush1.msra.mxu0 0.0
    %6472 = vmatprep.subr.mxu0 0.0
    %6473 = vmatpush1.msra.mxu0 0.0
    %6474 = vmatprep.subr.mxu0 0.0
    %6475 = vmatpush1.msra.mxu0 0.0
    %6476 = vmatprep.subr.mxu0 0.0
    %6477 = vmatpush1.msra.mxu0 0.0
    %v6478 = vand.u32 %v5687, 4294901760
    %6479 = vmatprep.mubr.f32.mxu0 %v6478
    %v6480 = vand.u32 %v5661, 4294901760
    %6481 = vmatmul.mubr.f32.gmra.mrb[0].mxu0 %v6480
    %v6482 = vpop.f32.mrb[0].mxu0
    %v6483 = vadd.f32 %v6306, %v6482
    %v6484 = vpop.f32.mrb[0].mxu0
    %v6485 = vand.u32 %v5690, 4294901760
    %6486 = vmatprep.mubr.f32.mxu0 %v6485
    %v6487 = vand.u32 %v5668, 4294901760
    %6488 = vmatmul.mubr.f32.gmra.mrb[0].mxu0 %v6487
    %v6489 = vpop.f32.mrb[0].mxu0
    %v6490 = vadd.f32 %v6317, %v6489
    %v6491 = vpop.f32.mrb[0].mxu0
    %v6492 = vand.u32 %v5693, 4294901760
    %6493 = vmatprep.mubr.f32.mxu0 %v6492
    %v6494 = vand.u32 %v5675, 4294901760
    %6495 = vmatmul.mubr.f32.gmra.mrb[0].mxu0 %v6494
    %v6496 = vpop.f32.mrb[0].mxu0
    %v6497 = vadd.f32 %v6328, %v6496
    %v6498 = vpop.f32.mrb[0].mxu0
    %v6499 = vand.u32 %v5696, 4294901760
    %6500 = vmatprep.mubr.f32.mxu0 %v6499
    %v6501 = vand.u32 %v5682, 4294901760
    %6502 = vmatmul.mubr.f32.gmra.mrb[0].mxu0 %v6501
    %v6503 = vpop.f32.mrb[0].mxu0
    %v6504 = vadd.f32 %v6339, %v6503
    %v6505 = vpop.f32.mrb[0].mxu0
    %6506 = vdwg.mxu0
    %6507 = vmatprep.subr.mxu0 0.0
    %v6508 = vand.u32 %v4856, 4294901760
    %6509 = vmatpush1.msra.mxu0 %v6508
    %6510 = vmatprep.subr.mxu0 0.0
    %v6511 = vand.u32 %v4857, 4294901760
    %6512 = vmatpush1.msra.mxu0 %v6511
    %6513 = vmatprep.subr.mxu0 0.0
    %v6514 = vand.u32 %v4858, 4294901760
    %6515 = vmatpush1.msra.mxu0 %v6514
    %6516 = vmatprep.subr.mxu0 0.0
    %v6517 = vand.u32 %v4859, 4294901760
    %6518 = vmatpush1.msra.mxu0 %v6517
    %6519 = vmatprep.subr.mxu0 0.0
    %v6520 = vand.u32 %v4860, 4294901760
    %6521 = vmatpush1.msra.mxu0 %v6520
    %6522 = vmatprep.subr.mxu0 0.0
    %v6523 = vand.u32 %v4861, 4294901760
    %6524 = vmatpush1.msra.mxu0 %v6523
    %6525 = vmatprep.subr.mxu0 0.0
    %v6526 = vand.u32 %v4862, 4294901760
    %6527 = vmatpush1.msra.mxu0 %v6526
    %6528 = vmatprep.subr.mxu0 0.0
    %v6529 = vand.u32 %v4863, 4294901760
    %6530 = vmatpush1.msra.mxu0 %v6529
    %6531 = vmatprep.subr.mxu0 0.0
    %v6532 = vand.u32 %v4864, 4294901760
    %6533 = vmatpush1.msra.mxu0 %v6532
    %6534 = vmatprep.subr.mxu0 0.0
    %v6535 = vand.u32 %v4865, 4294901760
    %6536 = vmatpush1.msra.mxu0 %v6535
    %6537 = vmatprep.subr.mxu0 0.0
    %v6538 = vand.u32 %v4866, 4294901760
    %6539 = vmatpush1.msra.mxu0 %v6538
    %6540 = vmatprep.subr.mxu0 0.0
    %v6541 = vand.u32 %v4867, 4294901760
    %6542 = vmatpush1.msra.mxu0 %v6541
    %6543 = vmatprep.subr.mxu0 0.0
    %v6544 = vand.u32 %v4868, 4294901760
    %6545 = vmatpush1.msra.mxu0 %v6544
    %6546 = vmatprep.subr.mxu0 0.0
    %v6547 = vand.u32 %v4869, 4294901760
    %6548 = vmatpush1.msra.mxu0 %v6547
    %6549 = vmatprep.subr.mxu0 0.0
    %v6550 = vand.u32 %v4870, 4294901760
    %6551 = vmatpush1.msra.mxu0 %v6550
    %6552 = vmatprep.subr.mxu0 0.0
    %v6553 = vand.u32 %v4871, 4294901760
    %6554 = vmatpush1.msra.mxu0 %v6553
    %6555 = vmatprep.subr.mxu0 0.0
    %v6556 = vand.u32 %v4872, 4294901760
    %6557 = vmatpush1.msra.mxu0 %v6556
    %6558 = vmatprep.subr.mxu0 0.0
    %v6559 = vand.u32 %v4873, 4294901760
    %6560 = vmatpush1.msra.mxu0 %v6559
    %6561 = vmatprep.subr.mxu0 0.0
    %v6562 = vand.u32 %v4874, 4294901760
    %6563 = vmatpush1.msra.mxu0 %v6562
    %6564 = vmatprep.subr.mxu0 0.0
    %v6565 = vand.u32 %v4875, 4294901760
    %6566 = vmatpush1.msra.mxu0 %v6565
    %6567 = vmatprep.subr.mxu0 0.0
    %v6568 = vand.u32 %v4876, 4294901760
    %6569 = vmatpush1.msra.mxu0 %v6568
    %6570 = vmatprep.subr.mxu0 0.0
    %v6571 = vand.u32 %v4877, 4294901760
    %6572 = vmatpush1.msra.mxu0 %v6571
    %6573 = vmatprep.subr.mxu0 0.0
    %v6574 = vand.u32 %v4878, 4294901760
    %6575 = vmatpush1.msra.mxu0 %v6574
    %6576 = vmatprep.subr.mxu0 0.0
    %v6577 = vand.u32 %v4879, 4294901760
    %6578 = vmatpush1.msra.mxu0 %v6577
    %6579 = vmatprep.subr.mxu0 0.0
    %6580 = vmatpush1.msra.mxu0 0.0
    %6581 = vmatprep.subr.mxu0 0.0
    %6582 = vmatpush1.msra.mxu0 0.0
    %6583 = vmatprep.subr.mxu0 0.0
    %6584 = vmatpush1.msra.mxu0 0.0
    %6585 = vmatprep.subr.mxu0 0.0
    %6586 = vmatpush1.msra.mxu0 0.0
    %6587 = vmatprep.subr.mxu0 0.0
    %6588 = vmatpush1.msra.mxu0 0.0
    %6589 = vmatprep.subr.mxu0 0.0
    %6590 = vmatpush1.msra.mxu0 0.0
    %6591 = vmatprep.subr.mxu0 0.0
    %6592 = vmatpush1.msra.mxu0 0.0
    %6593 = vmatprep.subr.mxu0 0.0
    %6594 = vmatpush1.msra.mxu0 0.0
    %v6595 = vand.u32 %v5687, 4294901760
    %6596 = vmatprep.mubr.f32.mxu0 %v6595
    %v6597 = vand.u32 %v5661, 4294901760
    %6598 = vmatmul.mubr.f32.gmra.mrb[0].mxu0 %v6597
    %v6599 = vpop.f32.mrb[0].mxu0
    %v6600 = vadd.f32 %v6483, %v6599
    %v6601 = vpop.f32.mrb[0].mxu0
    %v6602 = vand.u32 %v5690, 4294901760
    %6603 = vmatprep.mubr.f32.mxu0 %v6602
    %v6604 = vand.u32 %v5668, 4294901760
    %6605 = vmatmul.mubr.f32.gmra.mrb[0].mxu0 %v6604
    %v6606 = vpop.f32.mrb[0].mxu0
    %v6607 = vadd.f32 %v6490, %v6606
    %v6608 = vpop.f32.mrb[0].mxu0
    %v6609 = vand.u32 %v5693, 4294901760
    %6610 = vmatprep.mubr.f32.mxu0 %v6609
    %v6611 = vand.u32 %v5675, 4294901760
    %6612 = vmatmul.mubr.f32.gmra.mrb[0].mxu0 %v6611
    %v6613 = vpop.f32.mrb[0].mxu0
    %v6614 = vadd.f32 %v6497, %v6613
    %v6615 = vpop.f32.mrb[0].mxu0
    %v6616 = vand.u32 %v5696, 4294901760
    %6617 = vmatprep.mubr.f32.mxu0 %v6616
    %v6618 = vand.u32 %v5682, 4294901760
    %6619 = vmatmul.mubr.f32.gmra.mrb[0].mxu0 %v6618
    %v6620 = vpop.f32.mrb[0].mxu0
    %v6621 = vadd.f32 %v6504, %v6620
    %v6622 = vpop.f32.mrb[0].mxu0
    %6623 = vdwg.mxu0
    %v6624 = vld [vmem:[%s6] sm:$0xff]
    %v6625 = vld [vmem:[%s6 + $0x8] sm:$0xff]
    %v6626 = vld [vmem:[%s6 + $0x10] sm:$0xff]
    %v6627 = vld [vmem:[%s6 + $0x18] sm:$0xff]
    %v6628 = vld [vmem:[%s6 + $0x20] sm:$0xff]
    %v6629 = vld [vmem:[%s6 + $0x28] sm:$0xff]
    %v6630 = vld [vmem:[%s6 + $0x30] sm:$0xff]
    %v6631 = vld [vmem:[%s6 + $0x38] sm:$0xff]
    %v6632 = vld [vmem:[%s6 + $0x40] sm:$0xff]
    %v6633 = vld [vmem:[%s6 + $0x48] sm:$0xff]
    %v6634 = vld [vmem:[%s7] sm:$0xff]
    %v6635 = vld [vmem:[%s7 + $0x8] sm:$0xff]
    %v6636 = vld [vmem:[%s7 + $0x10] sm:$0xff]
    %v6637 = vld [vmem:[%s7 + $0x18] sm:$0xff]
    %v6638 = vld [vmem:[%s7 + $0x20] sm:$0xff]
    %v6639 = vld [vmem:[%s7 + $0x28] sm:$0xff]
    %v6640 = vld [vmem:[%s7 + $0x30] sm:$0xff]
    %v6641 = vld [vmem:[%s7 + $0x38] sm:$0xff]
    %v6642 = vld [vmem:[%s7 + $0x40] sm:$0xff]
    %v6643 = vld [vmem:[%s7 + $0x48] sm:$0xff]
    %v6644 = vld [vmem:[%s7 + $0x50] sm:$0xff]
    %v6645 = vld [vmem:[%s7 + $0x58] sm:$0xff]
    %v6646 = vmul.f32 %v6600, %v6600
    %v6647 = vmul.f32 %v6607, %v6607
    %v6648 = vmul.f32 %v6614, %v6614
    %v6649 = vmul.f32 %v6621, %v6621
    %v6650 = vmul.f32 %v6600, %v6614
    %v6651 = vmul.f32 %v6607, %v6621
    %vm6652 = vcmask 654336
    %v6654 = vsel %vm6652, %v6624, 0
    %v6657 = vsel %vm6652, %v6625, 0
    %v6660 = vsel %vm6652, %v6626, 0
    %v6663 = vsel %vm6652, %v6627, 0
    %v6666 = vsel %vm6652, %v6628, 0
    %v6669 = vsel %vm6652, %v6629, 0
    %v6672 = vsel %vm6652, %v6630, 0
    %v6675 = vsel %vm6652, %v6631, 0
    %v6678 = vsel %vm6652, %v6632, 0
    %v6681 = vsel %vm6652, %v6633, 0
    %6683 = vmatprep.subr.mxu0 0.0
    %v6684 = vand.u32 %v6600, 4294901760
    %6685 = vmatpush1.msra.mxu0 %v6684
    %6686 = vmatprep.subr.mxu0 0.0
    %v6687 = vand.u32 %v6607, 4294901760
    %6688 = vmatpush1.msra.mxu0 %v6687
    %6689 = vmatprep.subr.mxu0 0.0
    %v6690 = vand.u32 %v6614, 4294901760
    %6691 = vmatpush1.msra.mxu0 %v6690
    %6692 = vmatprep.subr.mxu0 0.0
    %v6693 = vand.u32 %v6621, 4294901760
    %6694 = vmatpush1.msra.mxu0 %v6693
    %6695 = vmatprep.subr.mxu0 0.0
    %v6696 = vand.u32 %v6646, 4294901760
    %6697 = vmatpush1.msra.mxu0 %v6696
    %6698 = vmatprep.subr.mxu0 0.0
    %v6699 = vand.u32 %v6647, 4294901760
    %6700 = vmatpush1.msra.mxu0 %v6699
    %6701 = vmatprep.subr.mxu0 0.0
    %v6702 = vand.u32 %v6648, 4294901760
    %6703 = vmatpush1.msra.mxu0 %v6702
    %6704 = vmatprep.subr.mxu0 0.0
    %v6705 = vand.u32 %v6649, 4294901760
    %6706 = vmatpush1.msra.mxu0 %v6705
    %6707 = vmatprep.subr.mxu0 0.0
    %v6708 = vand.u32 %v6650, 4294901760
    %6709 = vmatpush1.msra.mxu0 %v6708
    %6710 = vmatprep.subr.mxu0 0.0
    %v6711 = vand.u32 %v6651, 4294901760
    %6712 = vmatpush1.msra.mxu0 %v6711
    %6713 = vmatprep.subr.mxu0 0.0
    %6714 = vmatpush1.msra.mxu0 0.0
    %6715 = vmatprep.subr.mxu0 0.0
    %6716 = vmatpush1.msra.mxu0 0.0
    %6717 = vmatprep.subr.mxu0 0.0
    %6718 = vmatpush1.msra.mxu0 0.0
    %6719 = vmatprep.subr.mxu0 0.0
    %6720 = vmatpush1.msra.mxu0 0.0
    %6721 = vmatprep.subr.mxu0 0.0
    %6722 = vmatpush1.msra.mxu0 0.0
    %6723 = vmatprep.subr.mxu0 0.0
    %6724 = vmatpush1.msra.mxu0 0.0
    %6725 = vmatprep.subr.mxu0 0.0
    %6726 = vmatpush1.msra.mxu0 0.0
    %6727 = vmatprep.subr.mxu0 0.0
    %6728 = vmatpush1.msra.mxu0 0.0
    %6729 = vmatprep.subr.mxu0 0.0
    %6730 = vmatpush1.msra.mxu0 0.0
    %6731 = vmatprep.subr.mxu0 0.0
    %6732 = vmatpush1.msra.mxu0 0.0
    %6733 = vmatprep.subr.mxu0 0.0
    %6734 = vmatpush1.msra.mxu0 0.0
    %6735 = vmatprep.subr.mxu0 0.0
    %6736 = vmatpush1.msra.mxu0 0.0
    %6737 = vmatprep.subr.mxu0 0.0
    %6738 = vmatpush1.msra.mxu0 0.0
    %6739 = vmatprep.subr.mxu0 0.0
    %6740 = vmatpush1.msra.mxu0 0.0
    %6741 = vmatprep.subr.mxu0 0.0
    %6742 = vmatpush1.msra.mxu0 0.0
    %6743 = vmatprep.subr.mxu0 0.0
    %6744 = vmatpush1.msra.mxu0 0.0
    %6745 = vmatprep.subr.mxu0 0.0
    %6746 = vmatpush1.msra.mxu0 0.0
    %6747 = vmatprep.subr.mxu0 0.0
    %6748 = vmatpush1.msra.mxu0 0.0
    %6749 = vmatprep.subr.mxu0 0.0
    %6750 = vmatpush1.msra.mxu0 0.0
    %6751 = vmatprep.subr.mxu0 0.0
    %6752 = vmatpush1.msra.mxu0 0.0
    %6753 = vmatprep.subr.mxu0 0.0
    %6754 = vmatpush1.msra.mxu0 0.0
    %6755 = vmatprep.subr.mxu0 0.0
    %6756 = vmatpush1.msra.mxu0 0.0
    %6757 = vmatprep.mubr.f32.mxu0 0.0
    %v6758 = vand.u32 %v6654, 4294901760
    %v6759 = vsub.f32 %v6654, %v6758
    %v6760 = vand.u32 %v6759, 4294901760
    %v6761 = vsub.f32 %v6759, %v6760
    %v6762 = vand.u32 %v6761, 4294901760
    %6763 = vmatmul.mubr.f32.gmra.mrb[0].mxu0 %v6762
    %v6764 = vpop.f32.mrb[0].mxu0
    %v6765 = vadd.f32 0.0, %v6764
    %v6766 = vpop.f32.mrb[0].mxu0
    %6767 = vmatprep.mubr.f32.mxu0 0.0
    %v6768 = vand.u32 %v6657, 4294901760
    %v6769 = vsub.f32 %v6657, %v6768
    %v6770 = vand.u32 %v6769, 4294901760
    %v6771 = vsub.f32 %v6769, %v6770
    %v6772 = vand.u32 %v6771, 4294901760
    %6773 = vmatmul.mubr.f32.gmra.mrb[0].mxu0 %v6772
    %v6774 = vpop.f32.mrb[0].mxu0
    %v6775 = vadd.f32 0.0, %v6774
    %v6776 = vpop.f32.mrb[0].mxu0
    %6777 = vmatprep.mubr.f32.mxu0 0.0
    %v6778 = vand.u32 %v6660, 4294901760
    %v6779 = vsub.f32 %v6660, %v6778
    %v6780 = vand.u32 %v6779, 4294901760
    %v6781 = vsub.f32 %v6779, %v6780
    %v6782 = vand.u32 %v6781, 4294901760
    %6783 = vmatmul.mubr.f32.gmra.mrb[0].mxu0 %v6782
    %v6784 = vpop.f32.mrb[0].mxu0
    %v6785 = vadd.f32 0.0, %v6784
    %v6786 = vpop.f32.mrb[0].mxu0
    %6787 = vmatprep.mubr.f32.mxu0 0.0
    %v6788 = vand.u32 %v6663, 4294901760
    %v6789 = vsub.f32 %v6663, %v6788
    %v6790 = vand.u32 %v6789, 4294901760
    %v6791 = vsub.f32 %v6789, %v6790
    %v6792 = vand.u32 %v6791, 4294901760
    %6793 = vmatmul.mubr.f32.gmra.mrb[0].mxu0 %v6792
    %v6794 = vpop.f32.mrb[0].mxu0
    %v6795 = vadd.f32 0.0, %v6794
    %v6796 = vpop.f32.mrb[0].mxu0
    %6797 = vmatprep.mubr.f32.mxu0 0.0
    %v6798 = vand.u32 %v6666, 4294901760
    %v6799 = vsub.f32 %v6666, %v6798
    %v6800 = vand.u32 %v6799, 4294901760
    %v6801 = vsub.f32 %v6799, %v6800
    %v6802 = vand.u32 %v6801, 4294901760
    %6803 = vmatmul.mubr.f32.gmra.mrb[0].mxu0 %v6802
    %v6804 = vpop.f32.mrb[0].mxu0
    %v6805 = vadd.f32 0.0, %v6804
    %v6806 = vpop.f32.mrb[0].mxu0
    %6807 = vmatprep.mubr.f32.mxu0 0.0
    %v6808 = vand.u32 %v6669, 4294901760
    %v6809 = vsub.f32 %v6669, %v6808
    %v6810 = vand.u32 %v6809, 4294901760
    %v6811 = vsub.f32 %v6809, %v6810
    %v6812 = vand.u32 %v6811, 4294901760
    %6813 = vmatmul.mubr.f32.gmra.mrb[0].mxu0 %v6812
    %v6814 = vpop.f32.mrb[0].mxu0
    %v6815 = vadd.f32 0.0, %v6814
    %v6816 = vpop.f32.mrb[0].mxu0
    %6817 = vmatprep.mubr.f32.mxu0 0.0
    %v6818 = vand.u32 %v6672, 4294901760
    %v6819 = vsub.f32 %v6672, %v6818
    %v6820 = vand.u32 %v6819, 4294901760
    %v6821 = vsub.f32 %v6819, %v6820
    %v6822 = vand.u32 %v6821, 4294901760
    %6823 = vmatmul.mubr.f32.gmra.mrb[0].mxu0 %v6822
    %v6824 = vpop.f32.mrb[0].mxu0
    %v6825 = vadd.f32 0.0, %v6824
    %v6826 = vpop.f32.mrb[0].mxu0
    %6827 = vmatprep.mubr.f32.mxu0 0.0
    %v6828 = vand.u32 %v6675, 4294901760
    %v6829 = vsub.f32 %v6675, %v6828
    %v6830 = vand.u32 %v6829, 4294901760
    %v6831 = vsub.f32 %v6829, %v6830
    %v6832 = vand.u32 %v6831, 4294901760
    %6833 = vmatmul.mubr.f32.gmra.mrb[0].mxu0 %v6832
    %v6834 = vpop.f32.mrb[0].mxu0
    %v6835 = vadd.f32 0.0, %v6834
    %v6836 = vpop.f32.mrb[0].mxu0
    %6837 = vmatprep.mubr.f32.mxu0 0.0
    %v6838 = vand.u32 %v6678, 4294901760
    %v6839 = vsub.f32 %v6678, %v6838
    %v6840 = vand.u32 %v6839, 4294901760
    %v6841 = vsub.f32 %v6839, %v6840
    %v6842 = vand.u32 %v6841, 4294901760
    %6843 = vmatmul.mubr.f32.gmra.mrb[0].mxu0 %v6842
    %v6844 = vpop.f32.mrb[0].mxu0
    %v6845 = vadd.f32 0.0, %v6844
    %v6846 = vpop.f32.mrb[0].mxu0
    %6847 = vmatprep.mubr.f32.mxu0 0.0
    %v6848 = vand.u32 %v6681, 4294901760
    %v6849 = vsub.f32 %v6681, %v6848
    %v6850 = vand.u32 %v6849, 4294901760
    %v6851 = vsub.f32 %v6849, %v6850
    %v6852 = vand.u32 %v6851, 4294901760
    %6853 = vmatmul.mubr.f32.gmra.mrb[0].mxu0 %v6852
    %v6854 = vpop.f32.mrb[0].mxu0
    %v6855 = vadd.f32 0.0, %v6854
    %v6856 = vpop.f32.mrb[0].mxu0
    %6857 = vdwg.mxu0
    %6858 = vmatprep.subr.mxu0 0.0
    %v6859 = vand.u32 %v6600, 4294901760
    %v6860 = vsub.f32 %v6600, %v6859
    %v6861 = vand.u32 %v6860, 4294901760
    %v6862 = vsub.f32 %v6860, %v6861
    %v6863 = vand.u32 %v6862, 4294901760
    %6864 = vmatpush1.msra.mxu0 %v6863
    %6865 = vmatprep.subr.mxu0 0.0
    %v6866 = vand.u32 %v6607, 4294901760
    %v6867 = vsub.f32 %v6607, %v6866
    %v6868 = vand.u32 %v6867, 4294901760
    %v6869 = vsub.f32 %v6867, %v6868
    %v6870 = vand.u32 %v6869, 4294901760
    %6871 = vmatpush1.msra.mxu0 %v6870
    %6872 = vmatprep.subr.mxu0 0.0
    %v6873 = vand.u32 %v6614, 4294901760
    %v6874 = vsub.f32 %v6614, %v6873
    %v6875 = vand.u32 %v6874, 4294901760
    %v6876 = vsub.f32 %v6874, %v6875
    %v6877 = vand.u32 %v6876, 4294901760
    %6878 = vmatpush1.msra.mxu0 %v6877
    %6879 = vmatprep.subr.mxu0 0.0
    %v6880 = vand.u32 %v6621, 4294901760
    %v6881 = vsub.f32 %v6621, %v6880
    %v6882 = vand.u32 %v6881, 4294901760
    %v6883 = vsub.f32 %v6881, %v6882
    %v6884 = vand.u32 %v6883, 4294901760
    %6885 = vmatpush1.msra.mxu0 %v6884
    %6886 = vmatprep.subr.mxu0 0.0
    %v6887 = vand.u32 %v6646, 4294901760
    %v6888 = vsub.f32 %v6646, %v6887
    %v6889 = vand.u32 %v6888, 4294901760
    %v6890 = vsub.f32 %v6888, %v6889
    %v6891 = vand.u32 %v6890, 4294901760
    %6892 = vmatpush1.msra.mxu0 %v6891
    %6893 = vmatprep.subr.mxu0 0.0
    %v6894 = vand.u32 %v6647, 4294901760
    %v6895 = vsub.f32 %v6647, %v6894
    %v6896 = vand.u32 %v6895, 4294901760
    %v6897 = vsub.f32 %v6895, %v6896
    %v6898 = vand.u32 %v6897, 4294901760
    %6899 = vmatpush1.msra.mxu0 %v6898
    %6900 = vmatprep.subr.mxu0 0.0
    %v6901 = vand.u32 %v6648, 4294901760
    %v6902 = vsub.f32 %v6648, %v6901
    %v6903 = vand.u32 %v6902, 4294901760
    %v6904 = vsub.f32 %v6902, %v6903
    %v6905 = vand.u32 %v6904, 4294901760
    %6906 = vmatpush1.msra.mxu0 %v6905
    %6907 = vmatprep.subr.mxu0 0.0
    %v6908 = vand.u32 %v6649, 4294901760
    %v6909 = vsub.f32 %v6649, %v6908
    %v6910 = vand.u32 %v6909, 4294901760
    %v6911 = vsub.f32 %v6909, %v6910
    %v6912 = vand.u32 %v6911, 4294901760
    %6913 = vmatpush1.msra.mxu0 %v6912
    %6914 = vmatprep.subr.mxu0 0.0
    %v6915 = vand.u32 %v6650, 4294901760
    %v6916 = vsub.f32 %v6650, %v6915
    %v6917 = vand.u32 %v6916, 4294901760
    %v6918 = vsub.f32 %v6916, %v6917
    %v6919 = vand.u32 %v6918, 4294901760
    %6920 = vmatpush1.msra.mxu0 %v6919
    %6921 = vmatprep.subr.mxu0 0.0
    %v6922 = vand.u32 %v6651, 4294901760
    %v6923 = vsub.f32 %v6651, %v6922
    %v6924 = vand.u32 %v6923, 4294901760
    %v6925 = vsub.f32 %v6923, %v6924
    %v6926 = vand.u32 %v6925, 4294901760
    %6927 = vmatpush1.msra.mxu0 %v6926
    %6928 = vmatprep.subr.mxu0 0.0
    %6929 = vmatpush1.msra.mxu0 0.0
    %6930 = vmatprep.subr.mxu0 0.0
    %6931 = vmatpush1.msra.mxu0 0.0
    %6932 = vmatprep.subr.mxu0 0.0
    %6933 = vmatpush1.msra.mxu0 0.0
    %6934 = vmatprep.subr.mxu0 0.0
    %6935 = vmatpush1.msra.mxu0 0.0
    %6936 = vmatprep.subr.mxu0 0.0
    %6937 = vmatpush1.msra.mxu0 0.0
    %6938 = vmatprep.subr.mxu0 0.0
    %6939 = vmatpush1.msra.mxu0 0.0
    %6940 = vmatprep.subr.mxu0 0.0
    %6941 = vmatpush1.msra.mxu0 0.0
    %6942 = vmatprep.subr.mxu0 0.0
    %6943 = vmatpush1.msra.mxu0 0.0
    %6944 = vmatprep.subr.mxu0 0.0
    %6945 = vmatpush1.msra.mxu0 0.0
    %6946 = vmatprep.subr.mxu0 0.0
    %6947 = vmatpush1.msra.mxu0 0.0
    %6948 = vmatprep.subr.mxu0 0.0
    %6949 = vmatpush1.msra.mxu0 0.0
    %6950 = vmatprep.subr.mxu0 0.0
    %6951 = vmatpush1.msra.mxu0 0.0
    %6952 = vmatprep.subr.mxu0 0.0
    %6953 = vmatpush1.msra.mxu0 0.0
    %6954 = vmatprep.subr.mxu0 0.0
    %6955 = vmatpush1.msra.mxu0 0.0
    %6956 = vmatprep.subr.mxu0 0.0
    %6957 = vmatpush1.msra.mxu0 0.0
    %6958 = vmatprep.subr.mxu0 0.0
    %6959 = vmatpush1.msra.mxu0 0.0
    %6960 = vmatprep.subr.mxu0 0.0
    %6961 = vmatpush1.msra.mxu0 0.0
    %6962 = vmatprep.subr.mxu0 0.0
    %6963 = vmatpush1.msra.mxu0 0.0
    %6964 = vmatprep.subr.mxu0 0.0
    %6965 = vmatpush1.msra.mxu0 0.0
    %6966 = vmatprep.subr.mxu0 0.0
    %6967 = vmatpush1.msra.mxu0 0.0
    %6968 = vmatprep.subr.mxu0 0.0
    %6969 = vmatpush1.msra.mxu0 0.0
    %6970 = vmatprep.subr.mxu0 0.0
    %6971 = vmatpush1.msra.mxu0 0.0
    %6972 = vmatprep.mubr.f32.mxu0 0.0
    %v6973 = vand.u32 %v6654, 4294901760
    %6974 = vmatmul.mubr.f32.gmra.mrb[0].mxu0 %v6973
    %v6975 = vpop.f32.mrb[0].mxu0
    %v6976 = vadd.f32 %v6765, %v6975
    %v6977 = vpop.f32.mrb[0].mxu0
    %6978 = vmatprep.mubr.f32.mxu0 0.0
    %v6979 = vand.u32 %v6657, 4294901760
    %6980 = vmatmul.mubr.f32.gmra.mrb[0].mxu0 %v6979
    %v6981 = vpop.f32.mrb[0].mxu0
    %v6982 = vadd.f32 %v6775, %v6981
    %v6983 = vpop.f32.mrb[0].mxu0
    %6984 = vmatprep.mubr.f32.mxu0 0.0
    %v6985 = vand.u32 %v6660, 4294901760
    %6986 = vmatmul.mubr.f32.gmra.mrb[0].mxu0 %v6985
    %v6987 = vpop.f32.mrb[0].mxu0
    %v6988 = vadd.f32 %v6785, %v6987
    %v6989 = vpop.f32.mrb[0].mxu0
    %6990 = vmatprep.mubr.f32.mxu0 0.0
    %v6991 = vand.u32 %v6663, 4294901760
    %6992 = vmatmul.mubr.f32.gmra.mrb[0].mxu0 %v6991
    %v6993 = vpop.f32.mrb[0].mxu0
    %v6994 = vadd.f32 %v6795, %v6993
    %v6995 = vpop.f32.mrb[0].mxu0
    %6996 = vmatprep.mubr.f32.mxu0 0.0
    %v6997 = vand.u32 %v6666, 4294901760
    %6998 = vmatmul.mubr.f32.gmra.mrb[0].mxu0 %v6997
    %v6999 = vpop.f32.mrb[0].mxu0
    %v7000 = vadd.f32 %v6805, %v6999
    %v7001 = vpop.f32.mrb[0].mxu0
    %7002 = vmatprep.mubr.f32.mxu0 0.0
    %v7003 = vand.u32 %v6669, 4294901760
    %7004 = vmatmul.mubr.f32.gmra.mrb[0].mxu0 %v7003
    %v7005 = vpop.f32.mrb[0].mxu0
    %v7006 = vadd.f32 %v6815, %v7005
    %v7007 = vpop.f32.mrb[0].mxu0
    %7008 = vmatprep.mubr.f32.mxu0 0.0
    %v7009 = vand.u32 %v6672, 4294901760
    %7010 = vmatmul.mubr.f32.gmra.mrb[0].mxu0 %v7009
    %v7011 = vpop.f32.mrb[0].mxu0
    %v7012 = vadd.f32 %v6825, %v7011
    %v7013 = vpop.f32.mrb[0].mxu0
    %7014 = vmatprep.mubr.f32.mxu0 0.0
    %v7015 = vand.u32 %v6675, 4294901760
    %7016 = vmatmul.mubr.f32.gmra.mrb[0].mxu0 %v7015
    %v7017 = vpop.f32.mrb[0].mxu0
    %v7018 = vadd.f32 %v6835, %v7017
    %v7019 = vpop.f32.mrb[0].mxu0
    %7020 = vmatprep.mubr.f32.mxu0 0.0
    %v7021 = vand.u32 %v6678, 4294901760
    %7022 = vmatmul.mubr.f32.gmra.mrb[0].mxu0 %v7021
    %v7023 = vpop.f32.mrb[0].mxu0
    %v7024 = vadd.f32 %v6845, %v7023
    %v7025 = vpop.f32.mrb[0].mxu0
    %7026 = vmatprep.mubr.f32.mxu0 0.0
    %v7027 = vand.u32 %v6681, 4294901760
    %7028 = vmatmul.mubr.f32.gmra.mrb[0].mxu0 %v7027
    %v7029 = vpop.f32.mrb[0].mxu0
    %v7030 = vadd.f32 %v6855, %v7029
    %v7031 = vpop.f32.mrb[0].mxu0
    %7032 = vdwg.mxu0
    %7033 = vmatprep.subr.mxu0 0.0
    %v7034 = vand.u32 %v6600, 4294901760
    %v7035 = vsub.f32 %v6600, %v7034
    %7036 = vmatpush1.msra.mxu0 %v7035
    %7037 = vmatprep.subr.mxu0 0.0
    %v7038 = vand.u32 %v6607, 4294901760
    %v7039 = vsub.f32 %v6607, %v7038
    %7040 = vmatpush1.msra.mxu0 %v7039
    %7041 = vmatprep.subr.mxu0 0.0
    %v7042 = vand.u32 %v6614, 4294901760
    %v7043 = vsub.f32 %v6614, %v7042
    %7044 = vmatpush1.msra.mxu0 %v7043
    %7045 = vmatprep.subr.mxu0 0.0
    %v7046 = vand.u32 %v6621, 4294901760
    %v7047 = vsub.f32 %v6621, %v7046
    %7048 = vmatpush1.msra.mxu0 %v7047
    %7049 = vmatprep.subr.mxu0 0.0
    %v7050 = vand.u32 %v6646, 4294901760
    %v7051 = vsub.f32 %v6646, %v7050
    %7052 = vmatpush1.msra.mxu0 %v7051
    %7053 = vmatprep.subr.mxu0 0.0
    %v7054 = vand.u32 %v6647, 4294901760
    %v7055 = vsub.f32 %v6647, %v7054
    %7056 = vmatpush1.msra.mxu0 %v7055
    %7057 = vmatprep.subr.mxu0 0.0
    %v7058 = vand.u32 %v6648, 4294901760
    %v7059 = vsub.f32 %v6648, %v7058
    %7060 = vmatpush1.msra.mxu0 %v7059
    %7061 = vmatprep.subr.mxu0 0.0
    %v7062 = vand.u32 %v6649, 4294901760
    %v7063 = vsub.f32 %v6649, %v7062
    %7064 = vmatpush1.msra.mxu0 %v7063
    %7065 = vmatprep.subr.mxu0 0.0
    %v7066 = vand.u32 %v6650, 4294901760
    %v7067 = vsub.f32 %v6650, %v7066
    %7068 = vmatpush1.msra.mxu0 %v7067
    %7069 = vmatprep.subr.mxu0 0.0
    %v7070 = vand.u32 %v6651, 4294901760
    %v7071 = vsub.f32 %v6651, %v7070
    %7072 = vmatpush1.msra.mxu0 %v7071
    %7073 = vmatprep.subr.mxu0 0.0
    %7074 = vmatpush1.msra.mxu0 0.0
    %7075 = vmatprep.subr.mxu0 0.0
    %7076 = vmatpush1.msra.mxu0 0.0
    %7077 = vmatprep.subr.mxu0 0.0
    %7078 = vmatpush1.msra.mxu0 0.0
    %7079 = vmatprep.subr.mxu0 0.0
    %7080 = vmatpush1.msra.mxu0 0.0
    %7081 = vmatprep.subr.mxu0 0.0
    %7082 = vmatpush1.msra.mxu0 0.0
    %7083 = vmatprep.subr.mxu0 0.0
    %7084 = vmatpush1.msra.mxu0 0.0
    %7085 = vmatprep.subr.mxu0 0.0
    %7086 = vmatpush1.msra.mxu0 0.0
    %7087 = vmatprep.subr.mxu0 0.0
    %7088 = vmatpush1.msra.mxu0 0.0
    %7089 = vmatprep.subr.mxu0 0.0
    %7090 = vmatpush1.msra.mxu0 0.0
    %7091 = vmatprep.subr.mxu0 0.0
    %7092 = vmatpush1.msra.mxu0 0.0
    %7093 = vmatprep.subr.mxu0 0.0
    %7094 = vmatpush1.msra.mxu0 0.0
    %7095 = vmatprep.subr.mxu0 0.0
    %7096 = vmatpush1.msra.mxu0 0.0
    %7097 = vmatprep.subr.mxu0 0.0
    %7098 = vmatpush1.msra.mxu0 0.0
    %7099 = vmatprep.subr.mxu0 0.0
    %7100 = vmatpush1.msra.mxu0 0.0
    %7101 = vmatprep.subr.mxu0 0.0
    %7102 = vmatpush1.msra.mxu0 0.0
    %7103 = vmatprep.subr.mxu0 0.0
    %7104 = vmatpush1.msra.mxu0 0.0
    %7105 = vmatprep.subr.mxu0 0.0
    %7106 = vmatpush1.msra.mxu0 0.0
    %7107 = vmatprep.subr.mxu0 0.0
    %7108 = vmatpush1.msra.mxu0 0.0
    %7109 = vmatprep.subr.mxu0 0.0
    %7110 = vmatpush1.msra.mxu0 0.0
    %7111 = vmatprep.subr.mxu0 0.0
    %7112 = vmatpush1.msra.mxu0 0.0
    %7113 = vmatprep.subr.mxu0 0.0
    %7114 = vmatpush1.msra.mxu0 0.0
    %7115 = vmatprep.subr.mxu0 0.0
    %7116 = vmatpush1.msra.mxu0 0.0
    %7117 = vmatprep.mubr.f32.mxu0 0.0
    %v7118 = vand.u32 %v6654, 4294901760
    %v7119 = vsub.f32 %v6654, %v7118
    %7120 = vmatmul.mubr.f32.gmra.mrb[0].mxu0 %v7119
    %v7121 = vpop.f32.mrb[0].mxu0
    %v7122 = vadd.f32 %v6976, %v7121
    %v7123 = vpop.f32.mrb[0].mxu0
    %7124 = vmatprep.mubr.f32.mxu0 0.0
    %v7125 = vand.u32 %v6657, 4294901760
    %v7126 = vsub.f32 %v6657, %v7125
    %7127 = vmatmul.mubr.f32.gmra.mrb[0].mxu0 %v7126
    %v7128 = vpop.f32.mrb[0].mxu0
    %v7129 = vadd.f32 %v6982, %v7128
    %v7130 = vpop.f32.mrb[0].mxu0
    %7131 = vmatprep.mubr.f32.mxu0 0.0
    %v7132 = vand.u32 %v6660, 4294901760
    %v7133 = vsub.f32 %v6660, %v7132
    %7134 = vmatmul.mubr.f32.gmra.mrb[0].mxu0 %v7133
    %v7135 = vpop.f32.mrb[0].mxu0
    %v7136 = vadd.f32 %v6988, %v7135
    %v7137 = vpop.f32.mrb[0].mxu0
    %7138 = vmatprep.mubr.f32.mxu0 0.0
    %v7139 = vand.u32 %v6663, 4294901760
    %v7140 = vsub.f32 %v6663, %v7139
    %7141 = vmatmul.mubr.f32.gmra.mrb[0].mxu0 %v7140
    %v7142 = vpop.f32.mrb[0].mxu0
    %v7143 = vadd.f32 %v6994, %v7142
    %v7144 = vpop.f32.mrb[0].mxu0
    %7145 = vmatprep.mubr.f32.mxu0 0.0
    %v7146 = vand.u32 %v6666, 4294901760
    %v7147 = vsub.f32 %v6666, %v7146
    %7148 = vmatmul.mubr.f32.gmra.mrb[0].mxu0 %v7147
    %v7149 = vpop.f32.mrb[0].mxu0
    %v7150 = vadd.f32 %v7000, %v7149
    %v7151 = vpop.f32.mrb[0].mxu0
    %7152 = vmatprep.mubr.f32.mxu0 0.0
    %v7153 = vand.u32 %v6669, 4294901760
    %v7154 = vsub.f32 %v6669, %v7153
    %7155 = vmatmul.mubr.f32.gmra.mrb[0].mxu0 %v7154
    %v7156 = vpop.f32.mrb[0].mxu0
    %v7157 = vadd.f32 %v7006, %v7156
    %v7158 = vpop.f32.mrb[0].mxu0
    %7159 = vmatprep.mubr.f32.mxu0 0.0
    %v7160 = vand.u32 %v6672, 4294901760
    %v7161 = vsub.f32 %v6672, %v7160
    %7162 = vmatmul.mubr.f32.gmra.mrb[0].mxu0 %v7161
    %v7163 = vpop.f32.mrb[0].mxu0
    %v7164 = vadd.f32 %v7012, %v7163
    %v7165 = vpop.f32.mrb[0].mxu0
    %7166 = vmatprep.mubr.f32.mxu0 0.0
    %v7167 = vand.u32 %v6675, 4294901760
    %v7168 = vsub.f32 %v6675, %v7167
    %7169 = vmatmul.mubr.f32.gmra.mrb[0].mxu0 %v7168
    %v7170 = vpop.f32.mrb[0].mxu0
    %v7171 = vadd.f32 %v7018, %v7170
    %v7172 = vpop.f32.mrb[0].mxu0
    %7173 = vmatprep.mubr.f32.mxu0 0.0
    %v7174 = vand.u32 %v6678, 4294901760
    %v7175 = vsub.f32 %v6678, %v7174
    %7176 = vmatmul.mubr.f32.gmra.mrb[0].mxu0 %v7175
    %v7177 = vpop.f32.mrb[0].mxu0
    %v7178 = vadd.f32 %v7024, %v7177
    %v7179 = vpop.f32.mrb[0].mxu0
    %7180 = vmatprep.mubr.f32.mxu0 0.0
    %v7181 = vand.u32 %v6681, 4294901760
    %v7182 = vsub.f32 %v6681, %v7181
    %7183 = vmatmul.mubr.f32.gmra.mrb[0].mxu0 %v7182
    %v7184 = vpop.f32.mrb[0].mxu0
    %v7185 = vadd.f32 %v7030, %v7184
    %v7186 = vpop.f32.mrb[0].mxu0
    %7187 = vdwg.mxu0
    %7188 = vmatprep.subr.mxu0 0.0
    %v7189 = vand.u32 %v6600, 4294901760
    %7190 = vmatpush1.msra.mxu0 %v7189
    %7191 = vmatprep.subr.mxu0 0.0
    %v7192 = vand.u32 %v6607, 4294901760
    %7193 = vmatpush1.msra.mxu0 %v7192
    %7194 = vmatprep.subr.mxu0 0.0
    %v7195 = vand.u32 %v6614, 4294901760
    %7196 = vmatpush1.msra.mxu0 %v7195
    %7197 = vmatprep.subr.mxu0 0.0
    %v7198 = vand.u32 %v6621, 4294901760
    %7199 = vmatpush1.msra.mxu0 %v7198
    %7200 = vmatprep.subr.mxu0 0.0
    %v7201 = vand.u32 %v6646, 4294901760
    %7202 = vmatpush1.msra.mxu0 %v7201
    %7203 = vmatprep.subr.mxu0 0.0
    %v7204 = vand.u32 %v6647, 4294901760
    %7205 = vmatpush1.msra.mxu0 %v7204
    %7206 = vmatprep.subr.mxu0 0.0
    %v7207 = vand.u32 %v6648, 4294901760
    %7208 = vmatpush1.msra.mxu0 %v7207
    %7209 = vmatprep.subr.mxu0 0.0
    %v7210 = vand.u32 %v6649, 4294901760
    %7211 = vmatpush1.msra.mxu0 %v7210
    %7212 = vmatprep.subr.mxu0 0.0
    %v7213 = vand.u32 %v6650, 4294901760
    %7214 = vmatpush1.msra.mxu0 %v7213
    %7215 = vmatprep.subr.mxu0 0.0
    %v7216 = vand.u32 %v6651, 4294901760
    %7217 = vmatpush1.msra.mxu0 %v7216
    %7218 = vmatprep.subr.mxu0 0.0
    %7219 = vmatpush1.msra.mxu0 0.0
    %7220 = vmatprep.subr.mxu0 0.0
    %7221 = vmatpush1.msra.mxu0 0.0
    %7222 = vmatprep.subr.mxu0 0.0
    %7223 = vmatpush1.msra.mxu0 0.0
    %7224 = vmatprep.subr.mxu0 0.0
    %7225 = vmatpush1.msra.mxu0 0.0
    %7226 = vmatprep.subr.mxu0 0.0
    %7227 = vmatpush1.msra.mxu0 0.0
    %7228 = vmatprep.subr.mxu0 0.0
    %7229 = vmatpush1.msra.mxu0 0.0
    %7230 = vmatprep.subr.mxu0 0.0
    %7231 = vmatpush1.msra.mxu0 0.0
    %7232 = vmatprep.subr.mxu0 0.0
    %7233 = vmatpush1.msra.mxu0 0.0
    %7234 = vmatprep.subr.mxu0 0.0
    %7235 = vmatpush1.msra.mxu0 0.0
    %7236 = vmatprep.subr.mxu0 0.0
    %7237 = vmatpush1.msra.mxu0 0.0
    %7238 = vmatprep.subr.mxu0 0.0
    %7239 = vmatpush1.msra.mxu0 0.0
    %7240 = vmatprep.subr.mxu0 0.0
    %7241 = vmatpush1.msra.mxu0 0.0
    %7242 = vmatprep.subr.mxu0 0.0
    %7243 = vmatpush1.msra.mxu0 0.0
    %7244 = vmatprep.subr.mxu0 0.0
    %7245 = vmatpush1.msra.mxu0 0.0
    %7246 = vmatprep.subr.mxu0 0.0
    %7247 = vmatpush1.msra.mxu0 0.0
    %7248 = vmatprep.subr.mxu0 0.0
    %7249 = vmatpush1.msra.mxu0 0.0
    %7250 = vmatprep.subr.mxu0 0.0
    %7251 = vmatpush1.msra.mxu0 0.0
    %7252 = vmatprep.subr.mxu0 0.0
    %7253 = vmatpush1.msra.mxu0 0.0
    %7254 = vmatprep.subr.mxu0 0.0
    %7255 = vmatpush1.msra.mxu0 0.0
    %7256 = vmatprep.subr.mxu0 0.0
    %7257 = vmatpush1.msra.mxu0 0.0
    %7258 = vmatprep.subr.mxu0 0.0
    %7259 = vmatpush1.msra.mxu0 0.0
    %7260 = vmatprep.subr.mxu0 0.0
    %7261 = vmatpush1.msra.mxu0 0.0
    %7262 = vmatprep.mubr.f32.mxu0 0.0
    %v7263 = vand.u32 %v6654, 4294901760
    %v7264 = vsub.f32 %v6654, %v7263
    %v7265 = vand.u32 %v7264, 4294901760
    %7266 = vmatmul.mubr.f32.gmra.mrb[0].mxu0 %v7265
    %v7267 = vpop.f32.mrb[0].mxu0
    %v7268 = vadd.f32 %v7122, %v7267
    %v7269 = vpop.f32.mrb[0].mxu0
    %7270 = vmatprep.mubr.f32.mxu0 0.0
    %v7271 = vand.u32 %v6657, 4294901760
    %v7272 = vsub.f32 %v6657, %v7271
    %v7273 = vand.u32 %v7272, 4294901760
    %7274 = vmatmul.mubr.f32.gmra.mrb[0].mxu0 %v7273
    %v7275 = vpop.f32.mrb[0].mxu0
    %v7276 = vadd.f32 %v7129, %v7275
    %v7277 = vpop.f32.mrb[0].mxu0
    %7278 = vmatprep.mubr.f32.mxu0 0.0
    %v7279 = vand.u32 %v6660, 4294901760
    %v7280 = vsub.f32 %v6660, %v7279
    %v7281 = vand.u32 %v7280, 4294901760
    %7282 = vmatmul.mubr.f32.gmra.mrb[0].mxu0 %v7281
    %v7283 = vpop.f32.mrb[0].mxu0
    %v7284 = vadd.f32 %v7136, %v7283
    %v7285 = vpop.f32.mrb[0].mxu0
    %7286 = vmatprep.mubr.f32.mxu0 0.0
    %v7287 = vand.u32 %v6663, 4294901760
    %v7288 = vsub.f32 %v6663, %v7287
    %v7289 = vand.u32 %v7288, 4294901760
    %7290 = vmatmul.mubr.f32.gmra.mrb[0].mxu0 %v7289
    %v7291 = vpop.f32.mrb[0].mxu0
    %v7292 = vadd.f32 %v7143, %v7291
    %v7293 = vpop.f32.mrb[0].mxu0
    %7294 = vmatprep.mubr.f32.mxu0 0.0
    %v7295 = vand.u32 %v6666, 4294901760
    %v7296 = vsub.f32 %v6666, %v7295
    %v7297 = vand.u32 %v7296, 4294901760
    %7298 = vmatmul.mubr.f32.gmra.mrb[0].mxu0 %v7297
    %v7299 = vpop.f32.mrb[0].mxu0
    %v7300 = vadd.f32 %v7150, %v7299
    %v7301 = vpop.f32.mrb[0].mxu0
    %7302 = vmatprep.mubr.f32.mxu0 0.0
    %v7303 = vand.u32 %v6669, 4294901760
    %v7304 = vsub.f32 %v6669, %v7303
    %v7305 = vand.u32 %v7304, 4294901760
    %7306 = vmatmul.mubr.f32.gmra.mrb[0].mxu0 %v7305
    %v7307 = vpop.f32.mrb[0].mxu0
    %v7308 = vadd.f32 %v7157, %v7307
    %v7309 = vpop.f32.mrb[0].mxu0
    %7310 = vmatprep.mubr.f32.mxu0 0.0
    %v7311 = vand.u32 %v6672, 4294901760
    %v7312 = vsub.f32 %v6672, %v7311
    %v7313 = vand.u32 %v7312, 4294901760
    %7314 = vmatmul.mubr.f32.gmra.mrb[0].mxu0 %v7313
    %v7315 = vpop.f32.mrb[0].mxu0
    %v7316 = vadd.f32 %v7164, %v7315
    %v7317 = vpop.f32.mrb[0].mxu0
    %7318 = vmatprep.mubr.f32.mxu0 0.0
    %v7319 = vand.u32 %v6675, 4294901760
    %v7320 = vsub.f32 %v6675, %v7319
    %v7321 = vand.u32 %v7320, 4294901760
    %7322 = vmatmul.mubr.f32.gmra.mrb[0].mxu0 %v7321
    %v7323 = vpop.f32.mrb[0].mxu0
    %v7324 = vadd.f32 %v7171, %v7323
    %v7325 = vpop.f32.mrb[0].mxu0
    %7326 = vmatprep.mubr.f32.mxu0 0.0
    %v7327 = vand.u32 %v6678, 4294901760
    %v7328 = vsub.f32 %v6678, %v7327
    %v7329 = vand.u32 %v7328, 4294901760
    %7330 = vmatmul.mubr.f32.gmra.mrb[0].mxu0 %v7329
    %v7331 = vpop.f32.mrb[0].mxu0
    %v7332 = vadd.f32 %v7178, %v7331
    %v7333 = vpop.f32.mrb[0].mxu0
    %7334 = vmatprep.mubr.f32.mxu0 0.0
    %v7335 = vand.u32 %v6681, 4294901760
    %v7336 = vsub.f32 %v6681, %v7335
    %v7337 = vand.u32 %v7336, 4294901760
    %7338 = vmatmul.mubr.f32.gmra.mrb[0].mxu0 %v7337
    %v7339 = vpop.f32.mrb[0].mxu0
    %v7340 = vadd.f32 %v7185, %v7339
    %v7341 = vpop.f32.mrb[0].mxu0
    %7342 = vdwg.mxu0
    %7343 = vmatprep.subr.mxu0 0.0
    %v7344 = vand.u32 %v6600, 4294901760
    %v7345 = vsub.f32 %v6600, %v7344
    %v7346 = vand.u32 %v7345, 4294901760
    %7347 = vmatpush1.msra.mxu0 %v7346
    %7348 = vmatprep.subr.mxu0 0.0
    %v7349 = vand.u32 %v6607, 4294901760
    %v7350 = vsub.f32 %v6607, %v7349
    %v7351 = vand.u32 %v7350, 4294901760
    %7352 = vmatpush1.msra.mxu0 %v7351
    %7353 = vmatprep.subr.mxu0 0.0
    %v7354 = vand.u32 %v6614, 4294901760
    %v7355 = vsub.f32 %v6614, %v7354
    %v7356 = vand.u32 %v7355, 4294901760
    %7357 = vmatpush1.msra.mxu0 %v7356
    %7358 = vmatprep.subr.mxu0 0.0
    %v7359 = vand.u32 %v6621, 4294901760
    %v7360 = vsub.f32 %v6621, %v7359
    %v7361 = vand.u32 %v7360, 4294901760
    %7362 = vmatpush1.msra.mxu0 %v7361
    %7363 = vmatprep.subr.mxu0 0.0
    %v7364 = vand.u32 %v6646, 4294901760
    %v7365 = vsub.f32 %v6646, %v7364
    %v7366 = vand.u32 %v7365, 4294901760
    %7367 = vmatpush1.msra.mxu0 %v7366
    %7368 = vmatprep.subr.mxu0 0.0
    %v7369 = vand.u32 %v6647, 4294901760
    %v7370 = vsub.f32 %v6647, %v7369
    %v7371 = vand.u32 %v7370, 4294901760
    %7372 = vmatpush1.msra.mxu0 %v7371
    %7373 = vmatprep.subr.mxu0 0.0
    %v7374 = vand.u32 %v6648, 4294901760
    %v7375 = vsub.f32 %v6648, %v7374
    %v7376 = vand.u32 %v7375, 4294901760
    %7377 = vmatpush1.msra.mxu0 %v7376
    %7378 = vmatprep.subr.mxu0 0.0
    %v7379 = vand.u32 %v6649, 4294901760
    %v7380 = vsub.f32 %v6649, %v7379
    %v7381 = vand.u32 %v7380, 4294901760
    %7382 = vmatpush1.msra.mxu0 %v7381
    %7383 = vmatprep.subr.mxu0 0.0
    %v7384 = vand.u32 %v6650, 4294901760
    %v7385 = vsub.f32 %v6650, %v7384
    %v7386 = vand.u32 %v7385, 4294901760
    %7387 = vmatpush1.msra.mxu0 %v7386
    %7388 = vmatprep.subr.mxu0 0.0
    %v7389 = vand.u32 %v6651, 4294901760
    %v7390 = vsub.f32 %v6651, %v7389
    %v7391 = vand.u32 %v7390, 4294901760
    %7392 = vmatpush1.msra.mxu0 %v7391
    %7393 = vmatprep.subr.mxu0 0.0
    %7394 = vmatpush1.msra.mxu0 0.0
    %7395 = vmatprep.subr.mxu0 0.0
    %7396 = vmatpush1.msra.mxu0 0.0
    %7397 = vmatprep.subr.mxu0 0.0
    %7398 = vmatpush1.msra.mxu0 0.0
    %7399 = vmatprep.subr.mxu0 0.0
    %7400 = vmatpush1.msra.mxu0 0.0
    %7401 = vmatprep.subr.mxu0 0.0
    %7402 = vmatpush1.msra.mxu0 0.0
    %7403 = vmatprep.subr.mxu0 0.0
    %7404 = vmatpush1.msra.mxu0 0.0
    %7405 = vmatprep.subr.mxu0 0.0
    %7406 = vmatpush1.msra.mxu0 0.0
    %7407 = vmatprep.subr.mxu0 0.0
    %7408 = vmatpush1.msra.mxu0 0.0
    %7409 = vmatprep.subr.mxu0 0.0
    %7410 = vmatpush1.msra.mxu0 0.0
    %7411 = vmatprep.subr.mxu0 0.0
    %7412 = vmatpush1.msra.mxu0 0.0
    %7413 = vmatprep.subr.mxu0 0.0
    %7414 = vmatpush1.msra.mxu0 0.0
    %7415 = vmatprep.subr.mxu0 0.0
    %7416 = vmatpush1.msra.mxu0 0.0
    %7417 = vmatprep.subr.mxu0 0.0
    %7418 = vmatpush1.msra.mxu0 0.0
    %7419 = vmatprep.subr.mxu0 0.0
    %7420 = vmatpush1.msra.mxu0 0.0
    %7421 = vmatprep.subr.mxu0 0.0
    %7422 = vmatpush1.msra.mxu0 0.0
    %7423 = vmatprep.subr.mxu0 0.0
    %7424 = vmatpush1.msra.mxu0 0.0
    %7425 = vmatprep.subr.mxu0 0.0
    %7426 = vmatpush1.msra.mxu0 0.0
    %7427 = vmatprep.subr.mxu0 0.0
    %7428 = vmatpush1.msra.mxu0 0.0
    %7429 = vmatprep.subr.mxu0 0.0
    %7430 = vmatpush1.msra.mxu0 0.0
    %7431 = vmatprep.subr.mxu0 0.0
    %7432 = vmatpush1.msra.mxu0 0.0
    %7433 = vmatprep.subr.mxu0 0.0
    %7434 = vmatpush1.msra.mxu0 0.0
    %7435 = vmatprep.subr.mxu0 0.0
    %7436 = vmatpush1.msra.mxu0 0.0
    %7437 = vmatprep.mubr.f32.mxu0 0.0
    %v7438 = vand.u32 %v6654, 4294901760
    %7439 = vmatmul.mubr.f32.gmra.mrb[0].mxu0 %v7438
    %v7440 = vpop.f32.mrb[0].mxu0
    %v7441 = vadd.f32 %v7268, %v7440
    %v7442 = vpop.f32.mrb[0].mxu0
    %7443 = vmatprep.mubr.f32.mxu0 0.0
    %v7444 = vand.u32 %v6657, 4294901760
    %7445 = vmatmul.mubr.f32.gmra.mrb[0].mxu0 %v7444
    %v7446 = vpop.f32.mrb[0].mxu0
    %v7447 = vadd.f32 %v7276, %v7446
    %v7448 = vpop.f32.mrb[0].mxu0
    %7449 = vmatprep.mubr.f32.mxu0 0.0
    %v7450 = vand.u32 %v6660, 4294901760
    %7451 = vmatmul.mubr.f32.gmra.mrb[0].mxu0 %v7450
    %v7452 = vpop.f32.mrb[0].mxu0
    %v7453 = vadd.f32 %v7284, %v7452
    %v7454 = vpop.f32.mrb[0].mxu0
    %7455 = vmatprep.mubr.f32.mxu0 0.0
    %v7456 = vand.u32 %v6663, 4294901760
    %7457 = vmatmul.mubr.f32.gmra.mrb[0].mxu0 %v7456
    %v7458 = vpop.f32.mrb[0].mxu0
    %v7459 = vadd.f32 %v7292, %v7458
    %v7460 = vpop.f32.mrb[0].mxu0
    %7461 = vmatprep.mubr.f32.mxu0 0.0
    %v7462 = vand.u32 %v6666, 4294901760
    %7463 = vmatmul.mubr.f32.gmra.mrb[0].mxu0 %v7462
    %v7464 = vpop.f32.mrb[0].mxu0
    %v7465 = vadd.f32 %v7300, %v7464
    %v7466 = vpop.f32.mrb[0].mxu0
    %7467 = vmatprep.mubr.f32.mxu0 0.0
    %v7468 = vand.u32 %v6669, 4294901760
    %7469 = vmatmul.mubr.f32.gmra.mrb[0].mxu0 %v7468
    %v7470 = vpop.f32.mrb[0].mxu0
    %v7471 = vadd.f32 %v7308, %v7470
    %v7472 = vpop.f32.mrb[0].mxu0
    %7473 = vmatprep.mubr.f32.mxu0 0.0
    %v7474 = vand.u32 %v6672, 4294901760
    %7475 = vmatmul.mubr.f32.gmra.mrb[0].mxu0 %v7474
    %v7476 = vpop.f32.mrb[0].mxu0
    %v7477 = vadd.f32 %v7316, %v7476
    %v7478 = vpop.f32.mrb[0].mxu0
    %7479 = vmatprep.mubr.f32.mxu0 0.0
    %v7480 = vand.u32 %v6675, 4294901760
    %7481 = vmatmul.mubr.f32.gmra.mrb[0].mxu0 %v7480
    %v7482 = vpop.f32.mrb[0].mxu0
    %v7483 = vadd.f32 %v7324, %v7482
    %v7484 = vpop.f32.mrb[0].mxu0
    %7485 = vmatprep.mubr.f32.mxu0 0.0
    %v7486 = vand.u32 %v6678, 4294901760
    %7487 = vmatmul.mubr.f32.gmra.mrb[0].mxu0 %v7486
    %v7488 = vpop.f32.mrb[0].mxu0
    %v7489 = vadd.f32 %v7332, %v7488
    %v7490 = vpop.f32.mrb[0].mxu0
    %7491 = vmatprep.mubr.f32.mxu0 0.0
    %v7492 = vand.u32 %v6681, 4294901760
    %7493 = vmatmul.mubr.f32.gmra.mrb[0].mxu0 %v7492
    %v7494 = vpop.f32.mrb[0].mxu0
    %v7495 = vadd.f32 %v7340, %v7494
    %v7496 = vpop.f32.mrb[0].mxu0
    %7497 = vdwg.mxu0
    %7498 = vmatprep.subr.mxu0 0.0
    %v7499 = vand.u32 %v6600, 4294901760
    %7500 = vmatpush1.msra.mxu0 %v7499
    %7501 = vmatprep.subr.mxu0 0.0
    %v7502 = vand.u32 %v6607, 4294901760
    %7503 = vmatpush1.msra.mxu0 %v7502
    %7504 = vmatprep.subr.mxu0 0.0
    %v7505 = vand.u32 %v6614, 4294901760
    %7506 = vmatpush1.msra.mxu0 %v7505
    %7507 = vmatprep.subr.mxu0 0.0
    %v7508 = vand.u32 %v6621, 4294901760
    %7509 = vmatpush1.msra.mxu0 %v7508
    %7510 = vmatprep.subr.mxu0 0.0
    %v7511 = vand.u32 %v6646, 4294901760
    %7512 = vmatpush1.msra.mxu0 %v7511
    %7513 = vmatprep.subr.mxu0 0.0
    %v7514 = vand.u32 %v6647, 4294901760
    %7515 = vmatpush1.msra.mxu0 %v7514
    %7516 = vmatprep.subr.mxu0 0.0
    %v7517 = vand.u32 %v6648, 4294901760
    %7518 = vmatpush1.msra.mxu0 %v7517
    %7519 = vmatprep.subr.mxu0 0.0
    %v7520 = vand.u32 %v6649, 4294901760
    %7521 = vmatpush1.msra.mxu0 %v7520
    %7522 = vmatprep.subr.mxu0 0.0
    %v7523 = vand.u32 %v6650, 4294901760
    %7524 = vmatpush1.msra.mxu0 %v7523
    %7525 = vmatprep.subr.mxu0 0.0
    %v7526 = vand.u32 %v6651, 4294901760
    %7527 = vmatpush1.msra.mxu0 %v7526
    %7528 = vmatprep.subr.mxu0 0.0
    %7529 = vmatpush1.msra.mxu0 0.0
    %7530 = vmatprep.subr.mxu0 0.0
    %7531 = vmatpush1.msra.mxu0 0.0
    %7532 = vmatprep.subr.mxu0 0.0
    %7533 = vmatpush1.msra.mxu0 0.0
    %7534 = vmatprep.subr.mxu0 0.0
    %7535 = vmatpush1.msra.mxu0 0.0
    %7536 = vmatprep.subr.mxu0 0.0
    %7537 = vmatpush1.msra.mxu0 0.0
    %7538 = vmatprep.subr.mxu0 0.0
    %7539 = vmatpush1.msra.mxu0 0.0
    %7540 = vmatprep.subr.mxu0 0.0
    %7541 = vmatpush1.msra.mxu0 0.0
    %7542 = vmatprep.subr.mxu0 0.0
    %7543 = vmatpush1.msra.mxu0 0.0
    %7544 = vmatprep.subr.mxu0 0.0
    %7545 = vmatpush1.msra.mxu0 0.0
    %7546 = vmatprep.subr.mxu0 0.0
    %7547 = vmatpush1.msra.mxu0 0.0
    %7548 = vmatprep.subr.mxu0 0.0
    %7549 = vmatpush1.msra.mxu0 0.0
    %7550 = vmatprep.subr.mxu0 0.0
    %7551 = vmatpush1.msra.mxu0 0.0
    %7552 = vmatprep.subr.mxu0 0.0
    %7553 = vmatpush1.msra.mxu0 0.0
    %7554 = vmatprep.subr.mxu0 0.0
    %7555 = vmatpush1.msra.mxu0 0.0
    %7556 = vmatprep.subr.mxu0 0.0
    %7557 = vmatpush1.msra.mxu0 0.0
    %7558 = vmatprep.subr.mxu0 0.0
    %7559 = vmatpush1.msra.mxu0 0.0
    %7560 = vmatprep.subr.mxu0 0.0
    %7561 = vmatpush1.msra.mxu0 0.0
    %7562 = vmatprep.subr.mxu0 0.0
    %7563 = vmatpush1.msra.mxu0 0.0
    %7564 = vmatprep.subr.mxu0 0.0
    %7565 = vmatpush1.msra.mxu0 0.0
    %7566 = vmatprep.subr.mxu0 0.0
    %7567 = vmatpush1.msra.mxu0 0.0
    %7568 = vmatprep.subr.mxu0 0.0
    %7569 = vmatpush1.msra.mxu0 0.0
    %7570 = vmatprep.subr.mxu0 0.0
    %7571 = vmatpush1.msra.mxu0 0.0
    %7572 = vmatprep.mubr.f32.mxu0 0.0
    %v7573 = vand.u32 %v6654, 4294901760
    %7574 = vmatmul.mubr.f32.gmra.mrb[0].mxu0 %v7573
    %v7575 = vpop.f32.mrb[0].mxu0
    %v7576 = vadd.f32 %v7441, %v7575
    %v7577 = vpop.f32.mrb[0].mxu0
    %7578 = vmatprep.mubr.f32.mxu0 0.0
    %v7579 = vand.u32 %v6657, 4294901760
    %7580 = vmatmul.mubr.f32.gmra.mrb[0].mxu0 %v7579
    %v7581 = vpop.f32.mrb[0].mxu0
    %v7582 = vadd.f32 %v7447, %v7581
    %v7583 = vpop.f32.mrb[0].mxu0
    %7584 = vmatprep.mubr.f32.mxu0 0.0
    %v7585 = vand.u32 %v6660, 4294901760
    %7586 = vmatmul.mubr.f32.gmra.mrb[0].mxu0 %v7585
    %v7587 = vpop.f32.mrb[0].mxu0
    %v7588 = vadd.f32 %v7453, %v7587
    %v7589 = vpop.f32.mrb[0].mxu0
    %7590 = vmatprep.mubr.f32.mxu0 0.0
    %v7591 = vand.u32 %v6663, 4294901760
    %7592 = vmatmul.mubr.f32.gmra.mrb[0].mxu0 %v7591
    %v7593 = vpop.f32.mrb[0].mxu0
    %v7594 = vadd.f32 %v7459, %v7593
    %v7595 = vpop.f32.mrb[0].mxu0
    %7596 = vmatprep.mubr.f32.mxu0 0.0
    %v7597 = vand.u32 %v6666, 4294901760
    %7598 = vmatmul.mubr.f32.gmra.mrb[0].mxu0 %v7597
    %v7599 = vpop.f32.mrb[0].mxu0
    %v7600 = vadd.f32 %v7465, %v7599
    %v7601 = vpop.f32.mrb[0].mxu0
    %7602 = vmatprep.mubr.f32.mxu0 0.0
    %v7603 = vand.u32 %v6669, 4294901760
    %7604 = vmatmul.mubr.f32.gmra.mrb[0].mxu0 %v7603
    %v7605 = vpop.f32.mrb[0].mxu0
    %v7606 = vadd.f32 %v7471, %v7605
    %v7607 = vpop.f32.mrb[0].mxu0
    %7608 = vmatprep.mubr.f32.mxu0 0.0
    %v7609 = vand.u32 %v6672, 4294901760
    %7610 = vmatmul.mubr.f32.gmra.mrb[0].mxu0 %v7609
    %v7611 = vpop.f32.mrb[0].mxu0
    %v7612 = vadd.f32 %v7477, %v7611
    %v7613 = vpop.f32.mrb[0].mxu0
    %7614 = vmatprep.mubr.f32.mxu0 0.0
    %v7615 = vand.u32 %v6675, 4294901760
    %7616 = vmatmul.mubr.f32.gmra.mrb[0].mxu0 %v7615
    %v7617 = vpop.f32.mrb[0].mxu0
    %v7618 = vadd.f32 %v7483, %v7617
    %v7619 = vpop.f32.mrb[0].mxu0
    %7620 = vmatprep.mubr.f32.mxu0 0.0
    %v7621 = vand.u32 %v6678, 4294901760
    %7622 = vmatmul.mubr.f32.gmra.mrb[0].mxu0 %v7621
    %v7623 = vpop.f32.mrb[0].mxu0
    %v7624 = vadd.f32 %v7489, %v7623
    %v7625 = vpop.f32.mrb[0].mxu0
    %7626 = vmatprep.mubr.f32.mxu0 0.0
    %v7627 = vand.u32 %v6681, 4294901760
    %7628 = vmatmul.mubr.f32.gmra.mrb[0].mxu0 %v7627
    %v7629 = vpop.f32.mrb[0].mxu0
    %v7630 = vadd.f32 %v7495, %v7629
    %v7631 = vpop.f32.mrb[0].mxu0
    %7632 = vdwg.mxu0
    %vm7633 = vcmask 785408
    %v7635 = vsel %vm7633, %v7576, 0
    %v7638 = vsel %vm7633, %v7582, 0
    %v7641 = vsel %vm7633, %v7588, 0
    %v7644 = vsel %vm7633, %v7594, 0
    %v7647 = vsel %vm7633, %v7600, 0
    %v7650 = vsel %vm7633, %v7606, 0
    %v7653 = vsel %vm7633, %v7612, 0
    %v7656 = vsel %vm7633, %v7618, 0
    %v7659 = vsel %vm7633, %v7624, 0
    %v7662 = vsel %vm7633, %v7630, 0
    %7664 = vmatprep.subr.mxu0 0.0
    %v7665 = vand.u32 %v6634, 4294901760
    %7666 = vmatpush1.msra.mxu0 %v7665
    %7667 = vmatprep.subr.mxu0 0.0
    %v7668 = vand.u32 %v6635, 4294901760
    %7669 = vmatpush1.msra.mxu0 %v7668
    %7670 = vmatprep.subr.mxu0 0.0
    %v7671 = vand.u32 %v6636, 4294901760
    %7672 = vmatpush1.msra.mxu0 %v7671
    %7673 = vmatprep.subr.mxu0 0.0
    %v7674 = vand.u32 %v6637, 4294901760
    %7675 = vmatpush1.msra.mxu0 %v7674
    %7676 = vmatprep.subr.mxu0 0.0
    %v7677 = vand.u32 %v6638, 4294901760
    %7678 = vmatpush1.msra.mxu0 %v7677
    %7679 = vmatprep.subr.mxu0 0.0
    %v7680 = vand.u32 %v6639, 4294901760
    %7681 = vmatpush1.msra.mxu0 %v7680
    %7682 = vmatprep.subr.mxu0 0.0
    %v7683 = vand.u32 %v6640, 4294901760
    %7684 = vmatpush1.msra.mxu0 %v7683
    %7685 = vmatprep.subr.mxu0 0.0
    %v7686 = vand.u32 %v6641, 4294901760
    %7687 = vmatpush1.msra.mxu0 %v7686
    %7688 = vmatprep.subr.mxu0 0.0
    %v7689 = vand.u32 %v6642, 4294901760
    %7690 = vmatpush1.msra.mxu0 %v7689
    %7691 = vmatprep.subr.mxu0 0.0
    %v7692 = vand.u32 %v6643, 4294901760
    %7693 = vmatpush1.msra.mxu0 %v7692
    %7694 = vmatprep.subr.mxu0 0.0
    %v7695 = vand.u32 %v6644, 4294901760
    %7696 = vmatpush1.msra.mxu0 %v7695
    %7697 = vmatprep.subr.mxu0 0.0
    %v7698 = vand.u32 %v6645, 4294901760
    %7699 = vmatpush1.msra.mxu0 %v7698
    %7700 = vmatprep.subr.mxu0 0.0
    %7701 = vmatpush1.msra.mxu0 0.0
    %7702 = vmatprep.subr.mxu0 0.0
    %7703 = vmatpush1.msra.mxu0 0.0
    %7704 = vmatprep.subr.mxu0 0.0
    %7705 = vmatpush1.msra.mxu0 0.0
    %7706 = vmatprep.subr.mxu0 0.0
    %7707 = vmatpush1.msra.mxu0 0.0
    %7708 = vmatprep.subr.mxu0 0.0
    %7709 = vmatpush1.msra.mxu0 0.0
    %7710 = vmatprep.subr.mxu0 0.0
    %7711 = vmatpush1.msra.mxu0 0.0
    %7712 = vmatprep.subr.mxu0 0.0
    %7713 = vmatpush1.msra.mxu0 0.0
    %7714 = vmatprep.subr.mxu0 0.0
    %7715 = vmatpush1.msra.mxu0 0.0
    %7716 = vmatprep.subr.mxu0 0.0
    %7717 = vmatpush1.msra.mxu0 0.0
    %7718 = vmatprep.subr.mxu0 0.0
    %7719 = vmatpush1.msra.mxu0 0.0
    %7720 = vmatprep.subr.mxu0 0.0
    %7721 = vmatpush1.msra.mxu0 0.0
    %7722 = vmatprep.subr.mxu0 0.0
    %7723 = vmatpush1.msra.mxu0 0.0
    %7724 = vmatprep.subr.mxu0 0.0
    %7725 = vmatpush1.msra.mxu0 0.0
    %7726 = vmatprep.subr.mxu0 0.0
    %7727 = vmatpush1.msra.mxu0 0.0
    %7728 = vmatprep.subr.mxu0 0.0
    %7729 = vmatpush1.msra.mxu0 0.0
    %7730 = vmatprep.subr.mxu0 0.0
    %7731 = vmatpush1.msra.mxu0 0.0
    %7732 = vmatprep.subr.mxu0 0.0
    %7733 = vmatpush1.msra.mxu0 0.0
    %7734 = vmatprep.subr.mxu0 0.0
    %7735 = vmatpush1.msra.mxu0 0.0
    %7736 = vmatprep.subr.mxu0 0.0
    %7737 = vmatpush1.msra.mxu0 0.0
    %7738 = vmatprep.subr.mxu0 0.0
    %7739 = vmatpush1.msra.mxu0 0.0
    %7740 = vmatprep.mubr.f32.mxu0 0.0
    %v7741 = vand.u32 %v7635, 4294901760
    %v7742 = vsub.f32 %v7635, %v7741
    %v7743 = vand.u32 %v7742, 4294901760
    %v7744 = vsub.f32 %v7742, %v7743
    %v7745 = vand.u32 %v7744, 4294901760
    %7746 = vmatmul.mubr.f32.gmra.mrb[0].mxu0 %v7745
    %v7747 = vpop.f32.mrb[0].mxu0
    %v7748 = vadd.f32 0.0, %v7747
    %v7749 = vpop.f32.mrb[0].mxu0
    %7750 = vmatprep.mubr.f32.mxu0 0.0
    %v7751 = vand.u32 %v7638, 4294901760
    %v7752 = vsub.f32 %v7638, %v7751
    %v7753 = vand.u32 %v7752, 4294901760
    %v7754 = vsub.f32 %v7752, %v7753
    %v7755 = vand.u32 %v7754, 4294901760
    %7756 = vmatmul.mubr.f32.gmra.mrb[0].mxu0 %v7755
    %v7757 = vpop.f32.mrb[0].mxu0
    %v7758 = vadd.f32 0.0, %v7757
    %v7759 = vpop.f32.mrb[0].mxu0
    %7760 = vmatprep.mubr.f32.mxu0 0.0
    %v7761 = vand.u32 %v7641, 4294901760
    %v7762 = vsub.f32 %v7641, %v7761
    %v7763 = vand.u32 %v7762, 4294901760
    %v7764 = vsub.f32 %v7762, %v7763
    %v7765 = vand.u32 %v7764, 4294901760
    %7766 = vmatmul.mubr.f32.gmra.mrb[0].mxu0 %v7765
    %v7767 = vpop.f32.mrb[0].mxu0
    %v7768 = vadd.f32 0.0, %v7767
    %v7769 = vpop.f32.mrb[0].mxu0
    %7770 = vmatprep.mubr.f32.mxu0 0.0
    %v7771 = vand.u32 %v7644, 4294901760
    %v7772 = vsub.f32 %v7644, %v7771
    %v7773 = vand.u32 %v7772, 4294901760
    %v7774 = vsub.f32 %v7772, %v7773
    %v7775 = vand.u32 %v7774, 4294901760
    %7776 = vmatmul.mubr.f32.gmra.mrb[0].mxu0 %v7775
    %v7777 = vpop.f32.mrb[0].mxu0
    %v7778 = vadd.f32 0.0, %v7777
    %v7779 = vpop.f32.mrb[0].mxu0
    %7780 = vmatprep.mubr.f32.mxu0 0.0
    %v7781 = vand.u32 %v7647, 4294901760
    %v7782 = vsub.f32 %v7647, %v7781
    %v7783 = vand.u32 %v7782, 4294901760
    %v7784 = vsub.f32 %v7782, %v7783
    %v7785 = vand.u32 %v7784, 4294901760
    %7786 = vmatmul.mubr.f32.gmra.mrb[0].mxu0 %v7785
    %v7787 = vpop.f32.mrb[0].mxu0
    %v7788 = vadd.f32 0.0, %v7787
    %v7789 = vpop.f32.mrb[0].mxu0
    %7790 = vmatprep.mubr.f32.mxu0 0.0
    %v7791 = vand.u32 %v7650, 4294901760
    %v7792 = vsub.f32 %v7650, %v7791
    %v7793 = vand.u32 %v7792, 4294901760
    %v7794 = vsub.f32 %v7792, %v7793
    %v7795 = vand.u32 %v7794, 4294901760
    %7796 = vmatmul.mubr.f32.gmra.mrb[0].mxu0 %v7795
    %v7797 = vpop.f32.mrb[0].mxu0
    %v7798 = vadd.f32 0.0, %v7797
    %v7799 = vpop.f32.mrb[0].mxu0
    %7800 = vmatprep.mubr.f32.mxu0 0.0
    %v7801 = vand.u32 %v7653, 4294901760
    %v7802 = vsub.f32 %v7653, %v7801
    %v7803 = vand.u32 %v7802, 4294901760
    %v7804 = vsub.f32 %v7802, %v7803
    %v7805 = vand.u32 %v7804, 4294901760
    %7806 = vmatmul.mubr.f32.gmra.mrb[0].mxu0 %v7805
    %v7807 = vpop.f32.mrb[0].mxu0
    %v7808 = vadd.f32 0.0, %v7807
    %v7809 = vpop.f32.mrb[0].mxu0
    %7810 = vmatprep.mubr.f32.mxu0 0.0
    %v7811 = vand.u32 %v7656, 4294901760
    %v7812 = vsub.f32 %v7656, %v7811
    %v7813 = vand.u32 %v7812, 4294901760
    %v7814 = vsub.f32 %v7812, %v7813
    %v7815 = vand.u32 %v7814, 4294901760
    %7816 = vmatmul.mubr.f32.gmra.mrb[0].mxu0 %v7815
    %v7817 = vpop.f32.mrb[0].mxu0
    %v7818 = vadd.f32 0.0, %v7817
    %v7819 = vpop.f32.mrb[0].mxu0
    %7820 = vmatprep.mubr.f32.mxu0 0.0
    %v7821 = vand.u32 %v7659, 4294901760
    %v7822 = vsub.f32 %v7659, %v7821
    %v7823 = vand.u32 %v7822, 4294901760
    %v7824 = vsub.f32 %v7822, %v7823
    %v7825 = vand.u32 %v7824, 4294901760
    %7826 = vmatmul.mubr.f32.gmra.mrb[0].mxu0 %v7825
    %v7827 = vpop.f32.mrb[0].mxu0
    %v7828 = vadd.f32 0.0, %v7827
    %v7829 = vpop.f32.mrb[0].mxu0
    %7830 = vmatprep.mubr.f32.mxu0 0.0
    %v7831 = vand.u32 %v7662, 4294901760
    %v7832 = vsub.f32 %v7662, %v7831
    %v7833 = vand.u32 %v7832, 4294901760
    %v7834 = vsub.f32 %v7832, %v7833
    %v7835 = vand.u32 %v7834, 4294901760
    %7836 = vmatmul.mubr.f32.gmra.mrb[0].mxu0 %v7835
    %v7837 = vpop.f32.mrb[0].mxu0
    %v7838 = vadd.f32 0.0, %v7837
    %v7839 = vpop.f32.mrb[0].mxu0
    %7840 = vdwg.mxu0
    %7841 = vmatprep.subr.mxu0 0.0
    %v7842 = vand.u32 %v6634, 4294901760
    %v7843 = vsub.f32 %v6634, %v7842
    %v7844 = vand.u32 %v7843, 4294901760
    %v7845 = vsub.f32 %v7843, %v7844
    %v7846 = vand.u32 %v7845, 4294901760
    %7847 = vmatpush1.msra.mxu0 %v7846
    %7848 = vmatprep.subr.mxu0 0.0
    %v7849 = vand.u32 %v6635, 4294901760
    %v7850 = vsub.f32 %v6635, %v7849
    %v7851 = vand.u32 %v7850, 4294901760
    %v7852 = vsub.f32 %v7850, %v7851
    %v7853 = vand.u32 %v7852, 4294901760
    %7854 = vmatpush1.msra.mxu0 %v7853
    %7855 = vmatprep.subr.mxu0 0.0
    %v7856 = vand.u32 %v6636, 4294901760
    %v7857 = vsub.f32 %v6636, %v7856
    %v7858 = vand.u32 %v7857, 4294901760
    %v7859 = vsub.f32 %v7857, %v7858
    %v7860 = vand.u32 %v7859, 4294901760
    %7861 = vmatpush1.msra.mxu0 %v7860
    %7862 = vmatprep.subr.mxu0 0.0
    %v7863 = vand.u32 %v6637, 4294901760
    %v7864 = vsub.f32 %v6637, %v7863
    %v7865 = vand.u32 %v7864, 4294901760
    %v7866 = vsub.f32 %v7864, %v7865
    %v7867 = vand.u32 %v7866, 4294901760
    %7868 = vmatpush1.msra.mxu0 %v7867
    %7869 = vmatprep.subr.mxu0 0.0
    %v7870 = vand.u32 %v6638, 4294901760
    %v7871 = vsub.f32 %v6638, %v7870
    %v7872 = vand.u32 %v7871, 4294901760
    %v7873 = vsub.f32 %v7871, %v7872
    %v7874 = vand.u32 %v7873, 4294901760
    %7875 = vmatpush1.msra.mxu0 %v7874
    %7876 = vmatprep.subr.mxu0 0.0
    %v7877 = vand.u32 %v6639, 4294901760
    %v7878 = vsub.f32 %v6639, %v7877
    %v7879 = vand.u32 %v7878, 4294901760
    %v7880 = vsub.f32 %v7878, %v7879
    %v7881 = vand.u32 %v7880, 4294901760
    %7882 = vmatpush1.msra.mxu0 %v7881
    %7883 = vmatprep.subr.mxu0 0.0
    %v7884 = vand.u32 %v6640, 4294901760
    %v7885 = vsub.f32 %v6640, %v7884
    %v7886 = vand.u32 %v7885, 4294901760
    %v7887 = vsub.f32 %v7885, %v7886
    %v7888 = vand.u32 %v7887, 4294901760
    %7889 = vmatpush1.msra.mxu0 %v7888
    %7890 = vmatprep.subr.mxu0 0.0
    %v7891 = vand.u32 %v6641, 4294901760
    %v7892 = vsub.f32 %v6641, %v7891
    %v7893 = vand.u32 %v7892, 4294901760
    %v7894 = vsub.f32 %v7892, %v7893
    %v7895 = vand.u32 %v7894, 4294901760
    %7896 = vmatpush1.msra.mxu0 %v7895
    %7897 = vmatprep.subr.mxu0 0.0
    %v7898 = vand.u32 %v6642, 4294901760
    %v7899 = vsub.f32 %v6642, %v7898
    %v7900 = vand.u32 %v7899, 4294901760
    %v7901 = vsub.f32 %v7899, %v7900
    %v7902 = vand.u32 %v7901, 4294901760
    %7903 = vmatpush1.msra.mxu0 %v7902
    %7904 = vmatprep.subr.mxu0 0.0
    %v7905 = vand.u32 %v6643, 4294901760
    %v7906 = vsub.f32 %v6643, %v7905
    %v7907 = vand.u32 %v7906, 4294901760
    %v7908 = vsub.f32 %v7906, %v7907
    %v7909 = vand.u32 %v7908, 4294901760
    %7910 = vmatpush1.msra.mxu0 %v7909
    %7911 = vmatprep.subr.mxu0 0.0
    %v7912 = vand.u32 %v6644, 4294901760
    %v7913 = vsub.f32 %v6644, %v7912
    %v7914 = vand.u32 %v7913, 4294901760
    %v7915 = vsub.f32 %v7913, %v7914
    %v7916 = vand.u32 %v7915, 4294901760
    %7917 = vmatpush1.msra.mxu0 %v7916
    %7918 = vmatprep.subr.mxu0 0.0
    %v7919 = vand.u32 %v6645, 4294901760
    %v7920 = vsub.f32 %v6645, %v7919
    %v7921 = vand.u32 %v7920, 4294901760
    %v7922 = vsub.f32 %v7920, %v7921
    %v7923 = vand.u32 %v7922, 4294901760
    %7924 = vmatpush1.msra.mxu0 %v7923
    %7925 = vmatprep.subr.mxu0 0.0
    %7926 = vmatpush1.msra.mxu0 0.0
    %7927 = vmatprep.subr.mxu0 0.0
    %7928 = vmatpush1.msra.mxu0 0.0
    %7929 = vmatprep.subr.mxu0 0.0
    %7930 = vmatpush1.msra.mxu0 0.0
    %7931 = vmatprep.subr.mxu0 0.0
    %7932 = vmatpush1.msra.mxu0 0.0
    %7933 = vmatprep.subr.mxu0 0.0
    %7934 = vmatpush1.msra.mxu0 0.0
    %7935 = vmatprep.subr.mxu0 0.0
    %7936 = vmatpush1.msra.mxu0 0.0
    %7937 = vmatprep.subr.mxu0 0.0
    %7938 = vmatpush1.msra.mxu0 0.0
    %7939 = vmatprep.subr.mxu0 0.0
    %7940 = vmatpush1.msra.mxu0 0.0
    %7941 = vmatprep.subr.mxu0 0.0
    %7942 = vmatpush1.msra.mxu0 0.0
    %7943 = vmatprep.subr.mxu0 0.0
    %7944 = vmatpush1.msra.mxu0 0.0
    %7945 = vmatprep.subr.mxu0 0.0
    %7946 = vmatpush1.msra.mxu0 0.0
    %7947 = vmatprep.subr.mxu0 0.0
    %7948 = vmatpush1.msra.mxu0 0.0
    %7949 = vmatprep.subr.mxu0 0.0
    %7950 = vmatpush1.msra.mxu0 0.0
    %7951 = vmatprep.subr.mxu0 0.0
    %7952 = vmatpush1.msra.mxu0 0.0
    %7953 = vmatprep.subr.mxu0 0.0
    %7954 = vmatpush1.msra.mxu0 0.0
    %7955 = vmatprep.subr.mxu0 0.0
    %7956 = vmatpush1.msra.mxu0 0.0
    %7957 = vmatprep.subr.mxu0 0.0
    %7958 = vmatpush1.msra.mxu0 0.0
    %7959 = vmatprep.subr.mxu0 0.0
    %7960 = vmatpush1.msra.mxu0 0.0
    %7961 = vmatprep.subr.mxu0 0.0
    %7962 = vmatpush1.msra.mxu0 0.0
    %7963 = vmatprep.subr.mxu0 0.0
    %7964 = vmatpush1.msra.mxu0 0.0
    %7965 = vmatprep.mubr.f32.mxu0 0.0
    %v7966 = vand.u32 %v7635, 4294901760
    %7967 = vmatmul.mubr.f32.gmra.mrb[0].mxu0 %v7966
    %v7968 = vpop.f32.mrb[0].mxu0
    %v7969 = vadd.f32 %v7748, %v7968
    %v7970 = vpop.f32.mrb[0].mxu0
    %7971 = vmatprep.mubr.f32.mxu0 0.0
    %v7972 = vand.u32 %v7638, 4294901760
    %7973 = vmatmul.mubr.f32.gmra.mrb[0].mxu0 %v7972
    %v7974 = vpop.f32.mrb[0].mxu0
    %v7975 = vadd.f32 %v7758, %v7974
    %v7976 = vpop.f32.mrb[0].mxu0
    %7977 = vmatprep.mubr.f32.mxu0 0.0
    %v7978 = vand.u32 %v7641, 4294901760
    %7979 = vmatmul.mubr.f32.gmra.mrb[0].mxu0 %v7978
    %v7980 = vpop.f32.mrb[0].mxu0
    %v7981 = vadd.f32 %v7768, %v7980
    %v7982 = vpop.f32.mrb[0].mxu0
    %7983 = vmatprep.mubr.f32.mxu0 0.0
    %v7984 = vand.u32 %v7644, 4294901760
    %7985 = vmatmul.mubr.f32.gmra.mrb[0].mxu0 %v7984
    %v7986 = vpop.f32.mrb[0].mxu0
    %v7987 = vadd.f32 %v7778, %v7986
    %v7988 = vpop.f32.mrb[0].mxu0
    %7989 = vmatprep.mubr.f32.mxu0 0.0
    %v7990 = vand.u32 %v7647, 4294901760
    %7991 = vmatmul.mubr.f32.gmra.mrb[0].mxu0 %v7990
    %v7992 = vpop.f32.mrb[0].mxu0
    %v7993 = vadd.f32 %v7788, %v7992
    %v7994 = vpop.f32.mrb[0].mxu0
    %7995 = vmatprep.mubr.f32.mxu0 0.0
    %v7996 = vand.u32 %v7650, 4294901760
    %7997 = vmatmul.mubr.f32.gmra.mrb[0].mxu0 %v7996
    %v7998 = vpop.f32.mrb[0].mxu0
    %v7999 = vadd.f32 %v7798, %v7998
    %v8000 = vpop.f32.mrb[0].mxu0
    %8001 = vmatprep.mubr.f32.mxu0 0.0
    %v8002 = vand.u32 %v7653, 4294901760
    %8003 = vmatmul.mubr.f32.gmra.mrb[0].mxu0 %v8002
    %v8004 = vpop.f32.mrb[0].mxu0
    %v8005 = vadd.f32 %v7808, %v8004
    %v8006 = vpop.f32.mrb[0].mxu0
    %8007 = vmatprep.mubr.f32.mxu0 0.0
    %v8008 = vand.u32 %v7656, 4294901760
    %8009 = vmatmul.mubr.f32.gmra.mrb[0].mxu0 %v8008
    %v8010 = vpop.f32.mrb[0].mxu0
    %v8011 = vadd.f32 %v7818, %v8010
    %v8012 = vpop.f32.mrb[0].mxu0
    %8013 = vmatprep.mubr.f32.mxu0 0.0
    %v8014 = vand.u32 %v7659, 4294901760
    %8015 = vmatmul.mubr.f32.gmra.mrb[0].mxu0 %v8014
    %v8016 = vpop.f32.mrb[0].mxu0
    %v8017 = vadd.f32 %v7828, %v8016
    %v8018 = vpop.f32.mrb[0].mxu0
    %8019 = vmatprep.mubr.f32.mxu0 0.0
    %v8020 = vand.u32 %v7662, 4294901760
    %8021 = vmatmul.mubr.f32.gmra.mrb[0].mxu0 %v8020
    %v8022 = vpop.f32.mrb[0].mxu0
    %v8023 = vadd.f32 %v7838, %v8022
    %v8024 = vpop.f32.mrb[0].mxu0
    %8025 = vdwg.mxu0
    %8026 = vmatprep.subr.mxu0 0.0
    %v8027 = vand.u32 %v6634, 4294901760
    %v8028 = vsub.f32 %v6634, %v8027
    %8029 = vmatpush1.msra.mxu0 %v8028
    %8030 = vmatprep.subr.mxu0 0.0
    %v8031 = vand.u32 %v6635, 4294901760
    %v8032 = vsub.f32 %v6635, %v8031
    %8033 = vmatpush1.msra.mxu0 %v8032
    %8034 = vmatprep.subr.mxu0 0.0
    %v8035 = vand.u32 %v6636, 4294901760
    %v8036 = vsub.f32 %v6636, %v8035
    %8037 = vmatpush1.msra.mxu0 %v8036
    %8038 = vmatprep.subr.mxu0 0.0
    %v8039 = vand.u32 %v6637, 4294901760
    %v8040 = vsub.f32 %v6637, %v8039
    %8041 = vmatpush1.msra.mxu0 %v8040
    %8042 = vmatprep.subr.mxu0 0.0
    %v8043 = vand.u32 %v6638, 4294901760
    %v8044 = vsub.f32 %v6638, %v8043
    %8045 = vmatpush1.msra.mxu0 %v8044
    %8046 = vmatprep.subr.mxu0 0.0
    %v8047 = vand.u32 %v6639, 4294901760
    %v8048 = vsub.f32 %v6639, %v8047
    %8049 = vmatpush1.msra.mxu0 %v8048
    %8050 = vmatprep.subr.mxu0 0.0
    %v8051 = vand.u32 %v6640, 4294901760
    %v8052 = vsub.f32 %v6640, %v8051
    %8053 = vmatpush1.msra.mxu0 %v8052
    %8054 = vmatprep.subr.mxu0 0.0
    %v8055 = vand.u32 %v6641, 4294901760
    %v8056 = vsub.f32 %v6641, %v8055
    %8057 = vmatpush1.msra.mxu0 %v8056
    %8058 = vmatprep.subr.mxu0 0.0
    %v8059 = vand.u32 %v6642, 4294901760
    %v8060 = vsub.f32 %v6642, %v8059
    %8061 = vmatpush1.msra.mxu0 %v8060
    %8062 = vmatprep.subr.mxu0 0.0
    %v8063 = vand.u32 %v6643, 4294901760
    %v8064 = vsub.f32 %v6643, %v8063
    %8065 = vmatpush1.msra.mxu0 %v8064
    %8066 = vmatprep.subr.mxu0 0.0
    %v8067 = vand.u32 %v6644, 4294901760
    %v8068 = vsub.f32 %v6644, %v8067
    %8069 = vmatpush1.msra.mxu0 %v8068
    %8070 = vmatprep.subr.mxu0 0.0
    %v8071 = vand.u32 %v6645, 4294901760
    %v8072 = vsub.f32 %v6645, %v8071
    %8073 = vmatpush1.msra.mxu0 %v8072
    %8074 = vmatprep.subr.mxu0 0.0
    %8075 = vmatpush1.msra.mxu0 0.0
    %8076 = vmatprep.subr.mxu0 0.0
    %8077 = vmatpush1.msra.mxu0 0.0
    %8078 = vmatprep.subr.mxu0 0.0
    %8079 = vmatpush1.msra.mxu0 0.0
    %8080 = vmatprep.subr.mxu0 0.0
    %8081 = vmatpush1.msra.mxu0 0.0
    %8082 = vmatprep.subr.mxu0 0.0
    %8083 = vmatpush1.msra.mxu0 0.0
    %8084 = vmatprep.subr.mxu0 0.0
    %8085 = vmatpush1.msra.mxu0 0.0
    %8086 = vmatprep.subr.mxu0 0.0
    %8087 = vmatpush1.msra.mxu0 0.0
    %8088 = vmatprep.subr.mxu0 0.0
    %8089 = vmatpush1.msra.mxu0 0.0
    %8090 = vmatprep.subr.mxu0 0.0
    %8091 = vmatpush1.msra.mxu0 0.0
    %8092 = vmatprep.subr.mxu0 0.0
    %8093 = vmatpush1.msra.mxu0 0.0
    %8094 = vmatprep.subr.mxu0 0.0
    %8095 = vmatpush1.msra.mxu0 0.0
    %8096 = vmatprep.subr.mxu0 0.0
    %8097 = vmatpush1.msra.mxu0 0.0
    %8098 = vmatprep.subr.mxu0 0.0
    %8099 = vmatpush1.msra.mxu0 0.0
    %8100 = vmatprep.subr.mxu0 0.0
    %8101 = vmatpush1.msra.mxu0 0.0
    %8102 = vmatprep.subr.mxu0 0.0
    %8103 = vmatpush1.msra.mxu0 0.0
    %8104 = vmatprep.subr.mxu0 0.0
    %8105 = vmatpush1.msra.mxu0 0.0
    %8106 = vmatprep.subr.mxu0 0.0
    %8107 = vmatpush1.msra.mxu0 0.0
    %8108 = vmatprep.subr.mxu0 0.0
    %8109 = vmatpush1.msra.mxu0 0.0
    %8110 = vmatprep.subr.mxu0 0.0
    %8111 = vmatpush1.msra.mxu0 0.0
    %8112 = vmatprep.subr.mxu0 0.0
    %8113 = vmatpush1.msra.mxu0 0.0
    %8114 = vmatprep.mubr.f32.mxu0 0.0
    %v8115 = vand.u32 %v7635, 4294901760
    %v8116 = vsub.f32 %v7635, %v8115
    %8117 = vmatmul.mubr.f32.gmra.mrb[0].mxu0 %v8116
    %v8118 = vpop.f32.mrb[0].mxu0
    %v8119 = vadd.f32 %v7969, %v8118
    %v8120 = vpop.f32.mrb[0].mxu0
    %8121 = vmatprep.mubr.f32.mxu0 0.0
    %v8122 = vand.u32 %v7638, 4294901760
    %v8123 = vsub.f32 %v7638, %v8122
    %8124 = vmatmul.mubr.f32.gmra.mrb[0].mxu0 %v8123
    %v8125 = vpop.f32.mrb[0].mxu0
    %v8126 = vadd.f32 %v7975, %v8125
    %v8127 = vpop.f32.mrb[0].mxu0
    %8128 = vmatprep.mubr.f32.mxu0 0.0
    %v8129 = vand.u32 %v7641, 4294901760
    %v8130 = vsub.f32 %v7641, %v8129
    %8131 = vmatmul.mubr.f32.gmra.mrb[0].mxu0 %v8130
    %v8132 = vpop.f32.mrb[0].mxu0
    %v8133 = vadd.f32 %v7981, %v8132
    %v8134 = vpop.f32.mrb[0].mxu0
    %8135 = vmatprep.mubr.f32.mxu0 0.0
    %v8136 = vand.u32 %v7644, 4294901760
    %v8137 = vsub.f32 %v7644, %v8136
    %8138 = vmatmul.mubr.f32.gmra.mrb[0].mxu0 %v8137
    %v8139 = vpop.f32.mrb[0].mxu0
    %v8140 = vadd.f32 %v7987, %v8139
    %v8141 = vpop.f32.mrb[0].mxu0
    %8142 = vmatprep.mubr.f32.mxu0 0.0
    %v8143 = vand.u32 %v7647, 4294901760
    %v8144 = vsub.f32 %v7647, %v8143
    %8145 = vmatmul.mubr.f32.gmra.mrb[0].mxu0 %v8144
    %v8146 = vpop.f32.mrb[0].mxu0
    %v8147 = vadd.f32 %v7993, %v8146
    %v8148 = vpop.f32.mrb[0].mxu0
    %8149 = vmatprep.mubr.f32.mxu0 0.0
    %v8150 = vand.u32 %v7650, 4294901760
    %v8151 = vsub.f32 %v7650, %v8150
    %8152 = vmatmul.mubr.f32.gmra.mrb[0].mxu0 %v8151
    %v8153 = vpop.f32.mrb[0].mxu0
    %v8154 = vadd.f32 %v7999, %v8153
    %v8155 = vpop.f32.mrb[0].mxu0
    %8156 = vmatprep.mubr.f32.mxu0 0.0
    %v8157 = vand.u32 %v7653, 4294901760
    %v8158 = vsub.f32 %v7653, %v8157
    %8159 = vmatmul.mubr.f32.gmra.mrb[0].mxu0 %v8158
    %v8160 = vpop.f32.mrb[0].mxu0
    %v8161 = vadd.f32 %v8005, %v8160
    %v8162 = vpop.f32.mrb[0].mxu0
    %8163 = vmatprep.mubr.f32.mxu0 0.0
    %v8164 = vand.u32 %v7656, 4294901760
    %v8165 = vsub.f32 %v7656, %v8164
    %8166 = vmatmul.mubr.f32.gmra.mrb[0].mxu0 %v8165
    %v8167 = vpop.f32.mrb[0].mxu0
    %v8168 = vadd.f32 %v8011, %v8167
    %v8169 = vpop.f32.mrb[0].mxu0
    %8170 = vmatprep.mubr.f32.mxu0 0.0
    %v8171 = vand.u32 %v7659, 4294901760
    %v8172 = vsub.f32 %v7659, %v8171
    %8173 = vmatmul.mubr.f32.gmra.mrb[0].mxu0 %v8172
    %v8174 = vpop.f32.mrb[0].mxu0
    %v8175 = vadd.f32 %v8017, %v8174
    %v8176 = vpop.f32.mrb[0].mxu0
    %8177 = vmatprep.mubr.f32.mxu0 0.0
    %v8178 = vand.u32 %v7662, 4294901760
    %v8179 = vsub.f32 %v7662, %v8178
    %8180 = vmatmul.mubr.f32.gmra.mrb[0].mxu0 %v8179
    %v8181 = vpop.f32.mrb[0].mxu0
    %v8182 = vadd.f32 %v8023, %v8181
    %v8183 = vpop.f32.mrb[0].mxu0
    %8184 = vdwg.mxu0
    %8185 = vmatprep.subr.mxu0 0.0
    %v8186 = vand.u32 %v6634, 4294901760
    %8187 = vmatpush1.msra.mxu0 %v8186
    %8188 = vmatprep.subr.mxu0 0.0
    %v8189 = vand.u32 %v6635, 4294901760
    %8190 = vmatpush1.msra.mxu0 %v8189
    %8191 = vmatprep.subr.mxu0 0.0
    %v8192 = vand.u32 %v6636, 4294901760
    %8193 = vmatpush1.msra.mxu0 %v8192
    %8194 = vmatprep.subr.mxu0 0.0
    %v8195 = vand.u32 %v6637, 4294901760
    %8196 = vmatpush1.msra.mxu0 %v8195
    %8197 = vmatprep.subr.mxu0 0.0
    %v8198 = vand.u32 %v6638, 4294901760
    %8199 = vmatpush1.msra.mxu0 %v8198
    %8200 = vmatprep.subr.mxu0 0.0
    %v8201 = vand.u32 %v6639, 4294901760
    %8202 = vmatpush1.msra.mxu0 %v8201
    %8203 = vmatprep.subr.mxu0 0.0
    %v8204 = vand.u32 %v6640, 4294901760
    %8205 = vmatpush1.msra.mxu0 %v8204
    %8206 = vmatprep.subr.mxu0 0.0
    %v8207 = vand.u32 %v6641, 4294901760
    %8208 = vmatpush1.msra.mxu0 %v8207
    %8209 = vmatprep.subr.mxu0 0.0
    %v8210 = vand.u32 %v6642, 4294901760
    %8211 = vmatpush1.msra.mxu0 %v8210
    %8212 = vmatprep.subr.mxu0 0.0
    %v8213 = vand.u32 %v6643, 4294901760
    %8214 = vmatpush1.msra.mxu0 %v8213
    %8215 = vmatprep.subr.mxu0 0.0
    %v8216 = vand.u32 %v6644, 4294901760
    %8217 = vmatpush1.msra.mxu0 %v8216
    %8218 = vmatprep.subr.mxu0 0.0
    %v8219 = vand.u32 %v6645, 4294901760
    %8220 = vmatpush1.msra.mxu0 %v8219
    %8221 = vmatprep.subr.mxu0 0.0
    %8222 = vmatpush1.msra.mxu0 0.0
    %8223 = vmatprep.subr.mxu0 0.0
    %8224 = vmatpush1.msra.mxu0 0.0
    %8225 = vmatprep.subr.mxu0 0.0
    %8226 = vmatpush1.msra.mxu0 0.0
    %8227 = vmatprep.subr.mxu0 0.0
    %8228 = vmatpush1.msra.mxu0 0.0
    %8229 = vmatprep.subr.mxu0 0.0
    %8230 = vmatpush1.msra.mxu0 0.0
    %8231 = vmatprep.subr.mxu0 0.0
    %8232 = vmatpush1.msra.mxu0 0.0
    %8233 = vmatprep.subr.mxu0 0.0
    %8234 = vmatpush1.msra.mxu0 0.0
    %8235 = vmatprep.subr.mxu0 0.0
    %8236 = vmatpush1.msra.mxu0 0.0
    %8237 = vmatprep.subr.mxu0 0.0
    %8238 = vmatpush1.msra.mxu0 0.0
    %8239 = vmatprep.subr.mxu0 0.0
    %8240 = vmatpush1.msra.mxu0 0.0
    %8241 = vmatprep.subr.mxu0 0.0
    %8242 = vmatpush1.msra.mxu0 0.0
    %8243 = vmatprep.subr.mxu0 0.0
    %8244 = vmatpush1.msra.mxu0 0.0
    %8245 = vmatprep.subr.mxu0 0.0
    %8246 = vmatpush1.msra.mxu0 0.0
    %8247 = vmatprep.subr.mxu0 0.0
    %8248 = vmatpush1.msra.mxu0 0.0
    %8249 = vmatprep.subr.mxu0 0.0
    %8250 = vmatpush1.msra.mxu0 0.0
    %8251 = vmatprep.subr.mxu0 0.0
    %8252 = vmatpush1.msra.mxu0 0.0
    %8253 = vmatprep.subr.mxu0 0.0
    %8254 = vmatpush1.msra.mxu0 0.0
    %8255 = vmatprep.subr.mxu0 0.0
    %8256 = vmatpush1.msra.mxu0 0.0
    %8257 = vmatprep.subr.mxu0 0.0
    %8258 = vmatpush1.msra.mxu0 0.0
    %8259 = vmatprep.subr.mxu0 0.0
    %8260 = vmatpush1.msra.mxu0 0.0
    %8261 = vmatprep.mubr.f32.mxu0 0.0
    %v8262 = vand.u32 %v7635, 4294901760
    %v8263 = vsub.f32 %v7635, %v8262
    %v8264 = vand.u32 %v8263, 4294901760
    %8265 = vmatmul.mubr.f32.gmra.mrb[0].mxu0 %v8264
    %v8266 = vpop.f32.mrb[0].mxu0
    %v8267 = vadd.f32 %v8119, %v8266
    %v8268 = vpop.f32.mrb[0].mxu0
    %8269 = vmatprep.mubr.f32.mxu0 0.0
    %v8270 = vand.u32 %v7638, 4294901760
    %v8271 = vsub.f32 %v7638, %v8270
    %v8272 = vand.u32 %v8271, 4294901760
    %8273 = vmatmul.mubr.f32.gmra.mrb[0].mxu0 %v8272
    %v8274 = vpop.f32.mrb[0].mxu0
    %v8275 = vadd.f32 %v8126, %v8274
    %v8276 = vpop.f32.mrb[0].mxu0
    %8277 = vmatprep.mubr.f32.mxu0 0.0
    %v8278 = vand.u32 %v7641, 4294901760
    %v8279 = vsub.f32 %v7641, %v8278
    %v8280 = vand.u32 %v8279, 4294901760
    %8281 = vmatmul.mubr.f32.gmra.mrb[0].mxu0 %v8280
    %v8282 = vpop.f32.mrb[0].mxu0
    %v8283 = vadd.f32 %v8133, %v8282
    %v8284 = vpop.f32.mrb[0].mxu0
    %8285 = vmatprep.mubr.f32.mxu0 0.0
    %v8286 = vand.u32 %v7644, 4294901760
    %v8287 = vsub.f32 %v7644, %v8286
    %v8288 = vand.u32 %v8287, 4294901760
    %8289 = vmatmul.mubr.f32.gmra.mrb[0].mxu0 %v8288
    %v8290 = vpop.f32.mrb[0].mxu0
    %v8291 = vadd.f32 %v8140, %v8290
    %v8292 = vpop.f32.mrb[0].mxu0
    %8293 = vmatprep.mubr.f32.mxu0 0.0
    %v8294 = vand.u32 %v7647, 4294901760
    %v8295 = vsub.f32 %v7647, %v8294
    %v8296 = vand.u32 %v8295, 4294901760
    %8297 = vmatmul.mubr.f32.gmra.mrb[0].mxu0 %v8296
    %v8298 = vpop.f32.mrb[0].mxu0
    %v8299 = vadd.f32 %v8147, %v8298
    %v8300 = vpop.f32.mrb[0].mxu0
    %8301 = vmatprep.mubr.f32.mxu0 0.0
    %v8302 = vand.u32 %v7650, 4294901760
    %v8303 = vsub.f32 %v7650, %v8302
    %v8304 = vand.u32 %v8303, 4294901760
    %8305 = vmatmul.mubr.f32.gmra.mrb[0].mxu0 %v8304
    %v8306 = vpop.f32.mrb[0].mxu0
    %v8307 = vadd.f32 %v8154, %v8306
    %v8308 = vpop.f32.mrb[0].mxu0
    %8309 = vmatprep.mubr.f32.mxu0 0.0
    %v8310 = vand.u32 %v7653, 4294901760
    %v8311 = vsub.f32 %v7653, %v8310
    %v8312 = vand.u32 %v8311, 4294901760
    %8313 = vmatmul.mubr.f32.gmra.mrb[0].mxu0 %v8312
    %v8314 = vpop.f32.mrb[0].mxu0
    %v8315 = vadd.f32 %v8161, %v8314
    %v8316 = vpop.f32.mrb[0].mxu0
    %8317 = vmatprep.mubr.f32.mxu0 0.0
    %v8318 = vand.u32 %v7656, 4294901760
    %v8319 = vsub.f32 %v7656, %v8318
    %v8320 = vand.u32 %v8319, 4294901760
    %8321 = vmatmul.mubr.f32.gmra.mrb[0].mxu0 %v8320
    %v8322 = vpop.f32.mrb[0].mxu0
    %v8323 = vadd.f32 %v8168, %v8322
    %v8324 = vpop.f32.mrb[0].mxu0
    %8325 = vmatprep.mubr.f32.mxu0 0.0
    %v8326 = vand.u32 %v7659, 4294901760
    %v8327 = vsub.f32 %v7659, %v8326
    %v8328 = vand.u32 %v8327, 4294901760
    %8329 = vmatmul.mubr.f32.gmra.mrb[0].mxu0 %v8328
    %v8330 = vpop.f32.mrb[0].mxu0
    %v8331 = vadd.f32 %v8175, %v8330
    %v8332 = vpop.f32.mrb[0].mxu0
    %8333 = vmatprep.mubr.f32.mxu0 0.0
    %v8334 = vand.u32 %v7662, 4294901760
    %v8335 = vsub.f32 %v7662, %v8334
    %v8336 = vand.u32 %v8335, 4294901760
    %8337 = vmatmul.mubr.f32.gmra.mrb[0].mxu0 %v8336
    %v8338 = vpop.f32.mrb[0].mxu0
    %v8339 = vadd.f32 %v8182, %v8338
    %v8340 = vpop.f32.mrb[0].mxu0
    %8341 = vdwg.mxu0
    %8342 = vmatprep.subr.mxu0 0.0
    %v8343 = vand.u32 %v6634, 4294901760
    %v8344 = vsub.f32 %v6634, %v8343
    %v8345 = vand.u32 %v8344, 4294901760
    %8346 = vmatpush1.msra.mxu0 %v8345
    %8347 = vmatprep.subr.mxu0 0.0
    %v8348 = vand.u32 %v6635, 4294901760
    %v8349 = vsub.f32 %v6635, %v8348
    %v8350 = vand.u32 %v8349, 4294901760
    %8351 = vmatpush1.msra.mxu0 %v8350
    %8352 = vmatprep.subr.mxu0 0.0
    %v8353 = vand.u32 %v6636, 4294901760
    %v8354 = vsub.f32 %v6636, %v8353
    %v8355 = vand.u32 %v8354, 4294901760
    %8356 = vmatpush1.msra.mxu0 %v8355
    %8357 = vmatprep.subr.mxu0 0.0
    %v8358 = vand.u32 %v6637, 4294901760
    %v8359 = vsub.f32 %v6637, %v8358
    %v8360 = vand.u32 %v8359, 4294901760
    %8361 = vmatpush1.msra.mxu0 %v8360
    %8362 = vmatprep.subr.mxu0 0.0
    %v8363 = vand.u32 %v6638, 4294901760
    %v8364 = vsub.f32 %v6638, %v8363
    %v8365 = vand.u32 %v8364, 4294901760
    %8366 = vmatpush1.msra.mxu0 %v8365
    %8367 = vmatprep.subr.mxu0 0.0
    %v8368 = vand.u32 %v6639, 4294901760
    %v8369 = vsub.f32 %v6639, %v8368
    %v8370 = vand.u32 %v8369, 4294901760
    %8371 = vmatpush1.msra.mxu0 %v8370
    %8372 = vmatprep.subr.mxu0 0.0
    %v8373 = vand.u32 %v6640, 4294901760
    %v8374 = vsub.f32 %v6640, %v8373
    %v8375 = vand.u32 %v8374, 4294901760
    %8376 = vmatpush1.msra.mxu0 %v8375
    %8377 = vmatprep.subr.mxu0 0.0
    %v8378 = vand.u32 %v6641, 4294901760
    %v8379 = vsub.f32 %v6641, %v8378
    %v8380 = vand.u32 %v8379, 4294901760
    %8381 = vmatpush1.msra.mxu0 %v8380
    %8382 = vmatprep.subr.mxu0 0.0
    %v8383 = vand.u32 %v6642, 4294901760
    %v8384 = vsub.f32 %v6642, %v8383
    %v8385 = vand.u32 %v8384, 4294901760
    %8386 = vmatpush1.msra.mxu0 %v8385
    %8387 = vmatprep.subr.mxu0 0.0
    %v8388 = vand.u32 %v6643, 4294901760
    %v8389 = vsub.f32 %v6643, %v8388
    %v8390 = vand.u32 %v8389, 4294901760
    %8391 = vmatpush1.msra.mxu0 %v8390
    %8392 = vmatprep.subr.mxu0 0.0
    %v8393 = vand.u32 %v6644, 4294901760
    %v8394 = vsub.f32 %v6644, %v8393
    %v8395 = vand.u32 %v8394, 4294901760
    %8396 = vmatpush1.msra.mxu0 %v8395
    %8397 = vmatprep.subr.mxu0 0.0
    %v8398 = vand.u32 %v6645, 4294901760
    %v8399 = vsub.f32 %v6645, %v8398
    %v8400 = vand.u32 %v8399, 4294901760
    %8401 = vmatpush1.msra.mxu0 %v8400
    %8402 = vmatprep.subr.mxu0 0.0
    %8403 = vmatpush1.msra.mxu0 0.0
    %8404 = vmatprep.subr.mxu0 0.0
    %8405 = vmatpush1.msra.mxu0 0.0
    %8406 = vmatprep.subr.mxu0 0.0
    %8407 = vmatpush1.msra.mxu0 0.0
    %8408 = vmatprep.subr.mxu0 0.0
    %8409 = vmatpush1.msra.mxu0 0.0
    %8410 = vmatprep.subr.mxu0 0.0
    %8411 = vmatpush1.msra.mxu0 0.0
    %8412 = vmatprep.subr.mxu0 0.0
    %8413 = vmatpush1.msra.mxu0 0.0
    %8414 = vmatprep.subr.mxu0 0.0
    %8415 = vmatpush1.msra.mxu0 0.0
    %8416 = vmatprep.subr.mxu0 0.0
    %8417 = vmatpush1.msra.mxu0 0.0
    %8418 = vmatprep.subr.mxu0 0.0
    %8419 = vmatpush1.msra.mxu0 0.0
    %8420 = vmatprep.subr.mxu0 0.0
    %8421 = vmatpush1.msra.mxu0 0.0
    %8422 = vmatprep.subr.mxu0 0.0
    %8423 = vmatpush1.msra.mxu0 0.0
    %8424 = vmatprep.subr.mxu0 0.0
    %8425 = vmatpush1.msra.mxu0 0.0
    %8426 = vmatprep.subr.mxu0 0.0
    %8427 = vmatpush1.msra.mxu0 0.0
    %8428 = vmatprep.subr.mxu0 0.0
    %8429 = vmatpush1.msra.mxu0 0.0
    %8430 = vmatprep.subr.mxu0 0.0
    %8431 = vmatpush1.msra.mxu0 0.0
    %8432 = vmatprep.subr.mxu0 0.0
    %8433 = vmatpush1.msra.mxu0 0.0
    %8434 = vmatprep.subr.mxu0 0.0
    %8435 = vmatpush1.msra.mxu0 0.0
    %8436 = vmatprep.subr.mxu0 0.0
    %8437 = vmatpush1.msra.mxu0 0.0
    %8438 = vmatprep.subr.mxu0 0.0
    %8439 = vmatpush1.msra.mxu0 0.0
    %8440 = vmatprep.subr.mxu0 0.0
    %8441 = vmatpush1.msra.mxu0 0.0
    %8442 = vmatprep.mubr.f32.mxu0 0.0
    %v8443 = vand.u32 %v7635, 4294901760
    %8444 = vmatmul.mubr.f32.gmra.mrb[0].mxu0 %v8443
    %v8445 = vpop.f32.mrb[0].mxu0
    %v8446 = vadd.f32 %v8267, %v8445
    %v8447 = vpop.f32.mrb[0].mxu0
    %8448 = vmatprep.mubr.f32.mxu0 0.0
    %v8449 = vand.u32 %v7638, 4294901760
    %8450 = vmatmul.mubr.f32.gmra.mrb[0].mxu0 %v8449
    %v8451 = vpop.f32.mrb[0].mxu0
    %v8452 = vadd.f32 %v8275, %v8451
    %v8453 = vpop.f32.mrb[0].mxu0
    %8454 = vmatprep.mubr.f32.mxu0 0.0
    %v8455 = vand.u32 %v7641, 4294901760
    %8456 = vmatmul.mubr.f32.gmra.mrb[0].mxu0 %v8455
    %v8457 = vpop.f32.mrb[0].mxu0
    %v8458 = vadd.f32 %v8283, %v8457
    %v8459 = vpop.f32.mrb[0].mxu0
    %8460 = vmatprep.mubr.f32.mxu0 0.0
    %v8461 = vand.u32 %v7644, 4294901760
    %8462 = vmatmul.mubr.f32.gmra.mrb[0].mxu0 %v8461
    %v8463 = vpop.f32.mrb[0].mxu0
    %v8464 = vadd.f32 %v8291, %v8463
    %v8465 = vpop.f32.mrb[0].mxu0
    %8466 = vmatprep.mubr.f32.mxu0 0.0
    %v8467 = vand.u32 %v7647, 4294901760
    %8468 = vmatmul.mubr.f32.gmra.mrb[0].mxu0 %v8467
    %v8469 = vpop.f32.mrb[0].mxu0
    %v8470 = vadd.f32 %v8299, %v8469
    %v8471 = vpop.f32.mrb[0].mxu0
    %8472 = vmatprep.mubr.f32.mxu0 0.0
    %v8473 = vand.u32 %v7650, 4294901760
    %8474 = vmatmul.mubr.f32.gmra.mrb[0].mxu0 %v8473
    %v8475 = vpop.f32.mrb[0].mxu0
    %v8476 = vadd.f32 %v8307, %v8475
    %v8477 = vpop.f32.mrb[0].mxu0
    %8478 = vmatprep.mubr.f32.mxu0 0.0
    %v8479 = vand.u32 %v7653, 4294901760
    %8480 = vmatmul.mubr.f32.gmra.mrb[0].mxu0 %v8479
    %v8481 = vpop.f32.mrb[0].mxu0
    %v8482 = vadd.f32 %v8315, %v8481
    %v8483 = vpop.f32.mrb[0].mxu0
    %8484 = vmatprep.mubr.f32.mxu0 0.0
    %v8485 = vand.u32 %v7656, 4294901760
    %8486 = vmatmul.mubr.f32.gmra.mrb[0].mxu0 %v8485
    %v8487 = vpop.f32.mrb[0].mxu0
    %v8488 = vadd.f32 %v8323, %v8487
    %v8489 = vpop.f32.mrb[0].mxu0
    %8490 = vmatprep.mubr.f32.mxu0 0.0
    %v8491 = vand.u32 %v7659, 4294901760
    %8492 = vmatmul.mubr.f32.gmra.mrb[0].mxu0 %v8491
    %v8493 = vpop.f32.mrb[0].mxu0
    %v8494 = vadd.f32 %v8331, %v8493
    %v8495 = vpop.f32.mrb[0].mxu0
    %8496 = vmatprep.mubr.f32.mxu0 0.0
    %v8497 = vand.u32 %v7662, 4294901760
    %8498 = vmatmul.mubr.f32.gmra.mrb[0].mxu0 %v8497
    %v8499 = vpop.f32.mrb[0].mxu0
    %v8500 = vadd.f32 %v8339, %v8499
    %v8501 = vpop.f32.mrb[0].mxu0
    %8502 = vdwg.mxu0
    %8503 = vmatprep.subr.mxu0 0.0
    %v8504 = vand.u32 %v6634, 4294901760
    %8505 = vmatpush1.msra.mxu0 %v8504
    %8506 = vmatprep.subr.mxu0 0.0
    %v8507 = vand.u32 %v6635, 4294901760
    %8508 = vmatpush1.msra.mxu0 %v8507
    %8509 = vmatprep.subr.mxu0 0.0
    %v8510 = vand.u32 %v6636, 4294901760
    %8511 = vmatpush1.msra.mxu0 %v8510
    %8512 = vmatprep.subr.mxu0 0.0
    %v8513 = vand.u32 %v6637, 4294901760
    %8514 = vmatpush1.msra.mxu0 %v8513
    %8515 = vmatprep.subr.mxu0 0.0
    %v8516 = vand.u32 %v6638, 4294901760
    %8517 = vmatpush1.msra.mxu0 %v8516
    %8518 = vmatprep.subr.mxu0 0.0
    %v8519 = vand.u32 %v6639, 4294901760
    %8520 = vmatpush1.msra.mxu0 %v8519
    %8521 = vmatprep.subr.mxu0 0.0
    %v8522 = vand.u32 %v6640, 4294901760
    %8523 = vmatpush1.msra.mxu0 %v8522
    %8524 = vmatprep.subr.mxu0 0.0
    %v8525 = vand.u32 %v6641, 4294901760
    %8526 = vmatpush1.msra.mxu0 %v8525
    %8527 = vmatprep.subr.mxu0 0.0
    %v8528 = vand.u32 %v6642, 4294901760
    %8529 = vmatpush1.msra.mxu0 %v8528
    %8530 = vmatprep.subr.mxu0 0.0
    %v8531 = vand.u32 %v6643, 4294901760
    %8532 = vmatpush1.msra.mxu0 %v8531
    %8533 = vmatprep.subr.mxu0 0.0
    %v8534 = vand.u32 %v6644, 4294901760
    %8535 = vmatpush1.msra.mxu0 %v8534
    %8536 = vmatprep.subr.mxu0 0.0
    %v8537 = vand.u32 %v6645, 4294901760
    %8538 = vmatpush1.msra.mxu0 %v8537
    %8539 = vmatprep.subr.mxu0 0.0
    %8540 = vmatpush1.msra.mxu0 0.0
    %8541 = vmatprep.subr.mxu0 0.0
    %8542 = vmatpush1.msra.mxu0 0.0
    %8543 = vmatprep.subr.mxu0 0.0
    %8544 = vmatpush1.msra.mxu0 0.0
    %8545 = vmatprep.subr.mxu0 0.0
    %8546 = vmatpush1.msra.mxu0 0.0
    %8547 = vmatprep.subr.mxu0 0.0
    %8548 = vmatpush1.msra.mxu0 0.0
    %8549 = vmatprep.subr.mxu0 0.0
    %8550 = vmatpush1.msra.mxu0 0.0
    %8551 = vmatprep.subr.mxu0 0.0
    %8552 = vmatpush1.msra.mxu0 0.0
    %8553 = vmatprep.subr.mxu0 0.0
    %8554 = vmatpush1.msra.mxu0 0.0
    %8555 = vmatprep.subr.mxu0 0.0
    %8556 = vmatpush1.msra.mxu0 0.0
    %8557 = vmatprep.subr.mxu0 0.0
    %8558 = vmatpush1.msra.mxu0 0.0
    %8559 = vmatprep.subr.mxu0 0.0
    %8560 = vmatpush1.msra.mxu0 0.0
    %8561 = vmatprep.subr.mxu0 0.0
    %8562 = vmatpush1.msra.mxu0 0.0
    %8563 = vmatprep.subr.mxu0 0.0
    %8564 = vmatpush1.msra.mxu0 0.0
    %8565 = vmatprep.subr.mxu0 0.0
    %8566 = vmatpush1.msra.mxu0 0.0
    %8567 = vmatprep.subr.mxu0 0.0
    %8568 = vmatpush1.msra.mxu0 0.0
    %8569 = vmatprep.subr.mxu0 0.0
    %8570 = vmatpush1.msra.mxu0 0.0
    %8571 = vmatprep.subr.mxu0 0.0
    %8572 = vmatpush1.msra.mxu0 0.0
    %8573 = vmatprep.subr.mxu0 0.0
    %8574 = vmatpush1.msra.mxu0 0.0
    %8575 = vmatprep.subr.mxu0 0.0
    %8576 = vmatpush1.msra.mxu0 0.0
    %8577 = vmatprep.subr.mxu0 0.0
    %8578 = vmatpush1.msra.mxu0 0.0
    %8579 = vmatprep.mubr.f32.mxu0 0.0
    %v8580 = vand.u32 %v7635, 4294901760
    %8581 = vmatmul.mubr.f32.gmra.mrb[0].mxu0 %v8580
    %v8582 = vpop.f32.mrb[0].mxu0
    %v8583 = vadd.f32 %v8446, %v8582
    %v8584 = vpop.f32.mrb[0].mxu0
    %8585 = vmatprep.mubr.f32.mxu0 0.0
    %v8586 = vand.u32 %v7638, 4294901760
    %8587 = vmatmul.mubr.f32.gmra.mrb[0].mxu0 %v8586
    %v8588 = vpop.f32.mrb[0].mxu0
    %v8589 = vadd.f32 %v8452, %v8588
    %v8590 = vpop.f32.mrb[0].mxu0
    %8591 = vmatprep.mubr.f32.mxu0 0.0
    %v8592 = vand.u32 %v7641, 4294901760
    %8593 = vmatmul.mubr.f32.gmra.mrb[0].mxu0 %v8592
    %v8594 = vpop.f32.mrb[0].mxu0
    %v8595 = vadd.f32 %v8458, %v8594
    %v8596 = vpop.f32.mrb[0].mxu0
    %8597 = vmatprep.mubr.f32.mxu0 0.0
    %v8598 = vand.u32 %v7644, 4294901760
    %8599 = vmatmul.mubr.f32.gmra.mrb[0].mxu0 %v8598
    %v8600 = vpop.f32.mrb[0].mxu0
    %v8601 = vadd.f32 %v8464, %v8600
    %v8602 = vpop.f32.mrb[0].mxu0
    %8603 = vmatprep.mubr.f32.mxu0 0.0
    %v8604 = vand.u32 %v7647, 4294901760
    %8605 = vmatmul.mubr.f32.gmra.mrb[0].mxu0 %v8604
    %v8606 = vpop.f32.mrb[0].mxu0
    %v8607 = vadd.f32 %v8470, %v8606
    %v8608 = vpop.f32.mrb[0].mxu0
    %8609 = vmatprep.mubr.f32.mxu0 0.0
    %v8610 = vand.u32 %v7650, 4294901760
    %8611 = vmatmul.mubr.f32.gmra.mrb[0].mxu0 %v8610
    %v8612 = vpop.f32.mrb[0].mxu0
    %v8613 = vadd.f32 %v8476, %v8612
    %v8614 = vpop.f32.mrb[0].mxu0
    %8615 = vmatprep.mubr.f32.mxu0 0.0
    %v8616 = vand.u32 %v7653, 4294901760
    %8617 = vmatmul.mubr.f32.gmra.mrb[0].mxu0 %v8616
    %v8618 = vpop.f32.mrb[0].mxu0
    %v8619 = vadd.f32 %v8482, %v8618
    %v8620 = vpop.f32.mrb[0].mxu0
    %8621 = vmatprep.mubr.f32.mxu0 0.0
    %v8622 = vand.u32 %v7656, 4294901760
    %8623 = vmatmul.mubr.f32.gmra.mrb[0].mxu0 %v8622
    %v8624 = vpop.f32.mrb[0].mxu0
    %v8625 = vadd.f32 %v8488, %v8624
    %v8626 = vpop.f32.mrb[0].mxu0
    %8627 = vmatprep.mubr.f32.mxu0 0.0
    %v8628 = vand.u32 %v7659, 4294901760
    %8629 = vmatmul.mubr.f32.gmra.mrb[0].mxu0 %v8628
    %v8630 = vpop.f32.mrb[0].mxu0
    %v8631 = vadd.f32 %v8494, %v8630
    %v8632 = vpop.f32.mrb[0].mxu0
    %8633 = vmatprep.mubr.f32.mxu0 0.0
    %v8634 = vand.u32 %v7662, 4294901760
    %8635 = vmatmul.mubr.f32.gmra.mrb[0].mxu0 %v8634
    %v8636 = vpop.f32.mrb[0].mxu0
    %v8637 = vadd.f32 %v8500, %v8636
    %v8638 = vpop.f32.mrb[0].mxu0
    %8639 = vdwg.mxu0
    %v8640 = vmul.f32 %v8583, %v8583
    %v8641 = vmul.f32 %v8589, %v8589
    %v8642 = vmul.f32 %v8595, %v8595
    %v8643 = vmul.f32 %v8601, %v8601
    %v8644 = vmul.f32 %v8583, %v8595
    %v8645 = vmul.f32 %v8589, %v8601
    %v8646 = vsub.f32 %v8607, %v8640
    %v8647 = vsub.f32 %v8613, %v8641
    %v8648 = vsub.f32 %v8619, %v8642
    %v8649 = vsub.f32 %v8625, %v8643
    %v8650 = vsub.f32 %v8631, %v8644
    %v8651 = vsub.f32 %v8637, %v8645
    %v8652 = vmul.f32 %v8644, 2.0
    %v8653 = vmul.f32 %v8645, 2.0
    %v8654 = vadd.f32 %v8652, 0.0025
    %v8655 = vadd.f32 %v8653, 0.0025
    %v8656 = vmul.f32 %v8650, 2.0
    %v8657 = vmul.f32 %v8651, 2.0
    %v8658 = vadd.f32 %v8656, 0.0064
    %v8659 = vadd.f32 %v8657, 0.0064
    %v8660 = vmul.f32 %v8654, %v8658
    %v8661 = vmul.f32 %v8655, %v8659
    %v8662 = vadd.f32 %v8640, %v8642
    %v8663 = vadd.f32 %v8641, %v8643
    %v8664 = vadd.f32 %v8662, 0.0025
    %v8665 = vadd.f32 %v8663, 0.0025
    %v8666 = vadd.f32 %v8646, %v8648
    %v8667 = vadd.f32 %v8647, %v8649
    %v8668 = vadd.f32 %v8666, 0.0064
    %v8669 = vadd.f32 %v8667, 0.0064
    %v8670 = vmul.f32 %v8664, %v8668
    %v8671 = vmul.f32 %v8665, %v8669
    %v8672 = vrcp.pop %v8670
    %v8673 = vmul.f32 %v8660, %v8672
    %v8674 = vrcp.pop %v8671
    %v8675 = vmul.f32 %v8661, %v8674
    %v8676 = vsel %vm7633, %v8673, 0.0
    %v8677 = vsel %vm7633, %v8675, 0.0
    %v8678 = vadd.f32 %v8676, %v8677
    %8679 = vadd.xlane.f32.xlu0 %v8678
    %v8680 = vpop.xlane.xlu0 %8679
    %v8681 = vrot.slane %v8680, 4
    %v8682 = vadd.f32 %v8680, %v8681
    %v8683 = vrot.slane %v8682, 2
    %v8684 = vadd.f32 %v8682, %v8683
    %v8685 = vrot.slane %v8684, 1
    %v8686 = vadd.f32 %v8684, %v8685
    %s8687 = vtos %v8686
    %s8688 = smul.f32 %s8687, 0.0006510417
    %s8689 = ssub.f32 1.0, %s8688
    %s8690 = smul.f32 %s8689, 0.5
    %s8691 = sadd.f32 %s4851, %s8690
    %s8692 = smul.f32 %s8691, 0.5
    %s8693 = scalar_lea.smem [#allocation2], 0
    %8694 = sst [smem:[%s8693]] %s8692
    // Predicated region
    $region34: #{ssim_loss.1} parent=1 // pred_check
      _
    $region35: #{ssim_loss.1} parent=1 // pred_check_branch
      %8696 = sbr.rel (0) target = $region37
    $region36: #{ssim_loss.1} parent=1 // pred_region
      %s8698 = ssub.s32 16, 16
      %8699 = vsyncadd [#allocation3], %s8698
      %8702 = dma.smem_to_hbm [#allocation2], 16, %s8, [#allocation3]
    $region37: #{ssim_loss.1} parent=1 // pred_fallthru
      _
    // Predicated region
    $region38: #{ssim_loss.1} parent=1 // pred_check
      _
    $region39: #{ssim_loss.1} parent=1 // pred_check_branch
      %8704 = sbr.rel (0) target = $region41
    $region40: #{ssim_loss.1} parent=1 // pred_region
      %8705 = dma.done [#allocation3], 16
    $region41: #{ssim_loss.1} parent=1 // pred_fallthru
      _
    %8706 = sfence
    %8707 = vsyncpa [#allocation3], 1

</llo_original>
